<compile_context>
chip_gen: v7x
topology: tpu7x:2x2x1
jax: 0.10.0
libtpu: 0.0.40
codegen_flags: <defaults>
</compile_context>

<pallas_src>
import functools

import jax
import jax.numpy as jnp
from jax.experimental import pallas as pl
from jax.experimental.pallas import tpu as pltpu

LEAKY_SLOPE = 0.1
BN_EPS = 1e-3


# ---------------------------------------------------------------------------
# Fused kernel: 1x1 conv+BN+leaky -> 3x3 conv+BN+leaky -> residual add
# ---------------------------------------------------------------------------
def _res_layer_kernel(xt_ref, w1_ref, b1_ref, w2_ref, b2_ref, o_ref, acc_ref,
                      *, H, W, tm):
    """One (tm x W) output row-tile of the ResLayer.

    xt_ref : (1, tm+2, W+2, C)  overlapping window of the zero-padded input
    w1_ref : (C, C2)            1x1 conv weight with BN scale folded in
    b1_ref : (1, C2)            folded BN bias for DBL_1
    w2_ref : (3, 3, C2, C)      3x3 conv weight (HWIO) with BN scale folded in
    b2_ref : (1, C)             folded BN bias for DBL_2
    o_ref  : (1, tm, W, C)      output tile (residual already added)
    acc_ref: (tm*W, C) f32      VMEM scratch accumulator for the 9 taps
    """
    i = pl.program_id(1)                      # row-tile index within the image
    C = xt_ref.shape[-1]
    C2 = w1_ref.shape[-1]
    Wp = W + 2

    xb = xt_ref[0]                            # (tm+2, W+2, C)

    # ---- DBL_1: 1x1 conv (as channel matmul) + bias + LeakyReLU -----------
    # TODO(synk): on v6e/v7x cast xb/w1/w2 to bfloat16 for the MXU (keep the
    # f32 preferred_element_type accumulation) once a relaxed tolerance is OK.
    h = jnp.dot(xb.reshape((tm + 2) * Wp, C), w1_ref[...],
                preferred_element_type=jnp.float32)
    h = h + b1_ref[...]
    h = jnp.where(h > 0, h, LEAKY_SLOPE * h)
    h = h.reshape(tm + 2, Wp, C2)

    # The 3x3 conv zero-pads h (not x), so positions that correspond to the
    # spatial padding (and to rows past the real H when H % tm != 0) must be
    # forced to zero after the pointwise DBL_1.
    gr = jax.lax.broadcasted_iota(jnp.int32, (tm + 2, Wp, 1), 0) + i * tm
    gc = jax.lax.broadcasted_iota(jnp.int32, (tm + 2, Wp, 1), 1)
    valid = (gr >= 1) & (gr <= H) & (gc >= 1) & (gc <= W)
    h = jnp.where(valid, h, 0.0)

    # ---- DBL_2: 3x3 'same' conv as 9 shifted matmuls into a VMEM scratch ---
    for dy in range(3):
        for dx in range(3):
            patch = h[dy:dy + tm, dx:dx + W, :].reshape(tm * W, C2)
            tap = jnp.dot(patch, w2_ref[dy, dx],
                          preferred_element_type=jnp.float32)
            if dy == 0 and dx == 0:
                acc_ref[...] = tap            # init on first tap
            else:
                acc_ref[...] += tap

    y = acc_ref[...] + b2_ref[...]
    y = jnp.where(y > 0, y, LEAKY_SLOPE * y)

    # ---- residual add: the residual rows are the interior of the x window --
    res = xb[1:tm + 1, 1:W + 1, :].astype(jnp.float32).reshape(tm * W, C)
    o_ref[...] = (y + res).reshape(1, tm, W, C).astype(o_ref.dtype)


def _pick_row_tile(H, W):
    """Row-tile so the flattened matmul M dim is >= ~512 rows (multiple of 8)."""
    tm = max(8, -(-512 // max(W, 1)))
    tm = -(-tm // 8) * 8
    tm = min(tm, -(-H // 8) * 8)
    return tm


# ---------------------------------------------------------------------------
# Wrapper (ResLayer forward)
# ---------------------------------------------------------------------------
def res_layer_forward(x_nchw, params, *, row_tile=None):
    """x_nchw: (N, C, H, W) float32.  Returns (N, C, H, W)."""
    w1, s1, b1, w2, s2, b2 = params
    N, C, H, W = x_nchw.shape
    C2 = w1.shape[1]

    # Fold the BN scale into the conv weights on the host (free at runtime);
    # only the bias-add stays in the kernel.
    w1f = (w1 * s1).astype(jnp.float32)                   # (C, C2) * (1, C2)
    w2f = (w2 * s2.reshape(1, 1, 1, C)).astype(jnp.float32)

    # TODO(synk): keep the whole network NHWC so these per-layer NCHW<->NHWC
    # transposes happen once at model entry/exit instead of every ResLayer.
    x = jnp.transpose(x_nchw, (0, 2, 3, 1))               # NCHW -> NHWC

    tm = _pick_row_tile(H, W) if row_tile is None else row_tile
    n_tiles = -(-H // tm)
    Hpad = n_tiles * tm

    # Zero-pad spatially once and materialize overlapping (tm+2)-row windows
    # (the 1-row halo the 3x3 conv needs) so every grid step is a simple
    # blocked DMA that Pallas can double-buffer.
    xp = jnp.pad(x, ((0, 0), (1, Hpad - H + 1), (1, 1), (0, 0)))
    rows = (jnp.arange(n_tiles) * tm)[:, None] + jnp.arange(tm + 2)[None, :]
    xt = xp[:, rows].reshape(N * n_tiles, tm + 2, W + 2, C)

    kernel = functools.partial(_res_layer_kernel, H=H, W=W, tm=tm)
    out = pl.pallas_call(
        kernel,
        out_shape=jax.ShapeDtypeStruct((N, Hpad, W, C), jnp.float32),
        grid=(N, n_tiles),
        in_specs=[
            pl.BlockSpec((1, tm + 2, W + 2, C),
                         lambda n, i: (n * n_tiles + i, 0, 0, 0)),
            pl.BlockSpec((C, C2), lambda n, i: (0, 0)),
            pl.BlockSpec((1, C2), lambda n, i: (0, 0)),
            pl.BlockSpec((3, 3, C2, C), lambda n, i: (0, 0, 0, 0)),
            pl.BlockSpec((1, C), lambda n, i: (0, 0)),
        ],
        out_specs=pl.BlockSpec((1, tm, W, C), lambda n, i: (n, i, 0, 0)),
        scratch_shapes=[pltpu.VMEM((tm * W, C), jnp.float32)],
        compiler_params=pltpu.CompilerParams(
            dimension_semantics=("parallel", "parallel"),
            vmem_limit_bytes=32 * 1024 * 1024,
        ),
    )(xt, w1f, b1, w2f, b2)

    out = out[:, :H]                                      # drop ragged-H pad
    return jnp.transpose(out, (0, 3, 1, 2))               # NHWC -> NCHW


# ---------------------------------------------------------------------------
# Deterministic parameter construction (synthetic, not a checkpoint)
# ---------------------------------------------------------------------------
def make_params(key, num_filters):
    # TODO(synk): real Darknet channel counts (64..1024) are already MXU/lane
    # friendly; the toy C=4 test here is not padded to 128 lanes.
    C, C2 = num_filters, num_filters // 2
    ks = jax.random.split(key, 10)

    def fold_bn(gamma, beta, mean, var):
        scale = gamma / jnp.sqrt(var + BN_EPS)
        bias = beta - mean * scale
        return scale.reshape(1, -1), bias.reshape(1, -1)

    # 1x1 conv: PyTorch weight (C2, C, 1, 1) -> ours (C_in, C_out) = (C, C2)
    w1 = jax.random.normal(ks[0], (C, C2), jnp.float32) * 0.3
    s1, b1 = fold_bn(1.0 + 0.1 * jax.random.normal(ks[1], (C2,), jnp.float32),
                     0.1 * jax.random.normal(ks[2], (C2,), jnp.float32),
                     0.1 * jax.random.normal(ks[3], (C2,), jnp.float32),
                     jax.random.uniform(ks[4], (C2,), jnp.float32, 0.5, 1.5))

    # 3x3 conv: PyTorch weight (C, C2, 3, 3) -> HWIO (3, 3, C2, C)
    w2 = jax.random.normal(ks[5], (3, 3, C2, C), jnp.float32) * 0.3
    s2, b2 = fold_bn(1.0 + 0.1 * jax.random.normal(ks[6], (C,), jnp.float32),
                     0.1 * jax.random.normal(ks[7], (C,), jnp.float32),
                     0.1 * jax.random.normal(ks[8], (C,), jnp.float32),
                     jax.random.uniform(ks[9], (C,), jnp.float32, 0.5, 1.5))
    return (w1, s1, b1, w2, s2, b2)


# Pure-JAX reference for verification.
def res_layer_ref(x_nchw, params):
    w1, s1, b1, w2, s2, b2 = params
    x = jnp.transpose(x_nchw, (0, 2, 3, 1))
    dn = ('NHWC', 'HWIO', 'NHWC')
    h = jax.lax.conv_general_dilated(x, w1.reshape(1, 1, *w1.shape),
                                     (1, 1), 'VALID', dimension_numbers=dn)
    h = h * s1 + b1
    h = jnp.where(h > 0, h, LEAKY_SLOPE * h)
    y = jax.lax.conv_general_dilated(h, w2, (1, 1), ((1, 1), (1, 1)),
                                     dimension_numbers=dn)
    y = y * s2 + b2
    y = jnp.where(y > 0, y, LEAKY_SLOPE * y)
    return jnp.transpose(x + y, (0, 3, 1, 2))


if __name__ == "__main__":
    key = jax.random.PRNGKey(0)
    k_x, k_p, k_x2 = jax.random.split(key, 3)

    N, C, H, W = 2, 4, 16, 16          # num_filters = 4
    x = jax.random.normal(k_x, (N, C, H, W), jnp.float32)
    params = make_params(k_p, C)
    ref = res_layer_ref(x, params)

    # Default tiling (single row-tile at this small H).
    out = jax.jit(res_layer_forward)(x, params)
    out = jax.block_until_ready(out)
    assert out.shape == (N, C, H, W)
    assert jnp.allclose(out, ref, atol=1e-3, rtol=1e-3), "mismatch (default tile)"

    # Multi-row-tile path (exercises the halo windows across tiles).
    out_t = jax.jit(res_layer_forward, static_argnames=("row_tile",))(
        x, params, row_tile=8)
    out_t = jax.block_until_ready(out_t)
    assert jnp.allclose(out_t, ref, atol=1e-3, rtol=1e-3), "mismatch (tiled)"

    # Ragged H (H not a multiple of the row tile) exercises tail masking.
    x2 = jax.random.normal(k_x2, (1, C, 12, 16), jnp.float32)
    out2 = res_layer_forward(x2, params, row_tile=8)
    out2 = jax.block_until_ready(out2)
    ref2 = res_layer_ref(x2, params)
    assert jnp.allclose(out2, ref2, atol=1e-3, rtol=1e-3), "mismatch (ragged H)"

    print("KERNEL_OK")
</pallas_src>

<mosaic_0001>
module attributes {stable_mosaic.version = 11 : i64} {
  func.func @_res_layer_kernel(%arg0: i32, %arg1: i32, %arg2: memref<1x18x18x4xf32, #tpu.memory_space<vmem>>, %arg3: memref<4x2xf32, #tpu.memory_space<vmem>>, %arg4: memref<1x2xf32, #tpu.memory_space<vmem>>, %arg5: memref<3x3x2x4xf32, #tpu.memory_space<vmem>>, %arg6: memref<1x4xf32, #tpu.memory_space<vmem>>, %arg7: memref<1x16x16x4xf32, #tpu.memory_space<vmem>>, %arg8: memref<256x4xf32, #tpu.memory_space<vmem>>) attributes {dimension_semantics = [#tpu.dimension_semantics<parallel>, #tpu.dimension_semantics<parallel>], iteration_bounds = array<i64: 2, 1>, scalar_prefetch = 0 : i64, scratch_operands = 1 : i64, tpu.core_type = #tpu.core_type<tc>, window_params = [{transform_indices = @transform_0, window_bounds = array<i64: 1, 18, 18, 4>}, {pipeline_mode = #tpu.pipeline_mode<synchronous>, transform_indices = @transform_1, window_bounds = array<i64: 4, 2>}, {pipeline_mode = #tpu.pipeline_mode<synchronous>, transform_indices = @transform_2, window_bounds = array<i64: 1, 2>}, {pipeline_mode = #tpu.pipeline_mode<synchronous>, transform_indices = @transform_3, window_bounds = array<i64: 3, 3, 2, 4>}, {pipeline_mode = #tpu.pipeline_mode<synchronous>, transform_indices = @transform_4, window_bounds = array<i64: 1, 4>}, {transform_indices = @transform_5, window_bounds = array<i64: 1, 16, 16, 4>}]} {
    %c0 = arith.constant 0 : index
    %c0_0 = arith.constant 0 : index
    %c0_1 = arith.constant 0 : index
    %c0_2 = arith.constant 0 : index
    %0 = vector.load %arg2[%c0, %c0_0, %c0_1, %c0_2] : memref<1x18x18x4xf32, #tpu.memory_space<vmem>>, vector<1x18x18x4xf32>
    %1 = vector.shape_cast %0 : vector<1x18x18x4xf32> to vector<18x18x4xf32>
    %2 = vector.shape_cast %1 : vector<18x18x4xf32> to vector<324x4xf32>
    %c0_3 = arith.constant 0 : index
    %c0_4 = arith.constant 0 : index
    %3 = vector.load %arg3[%c0_3, %c0_4] : memref<4x2xf32, #tpu.memory_space<vmem>>, vector<4x2xf32>
    %cst = arith.constant dense<0.000000e+00> : vector<324x2xf32>
    %4 = tpu.matmul %2, %3, %cst {dimension_numbers = #tpu.dot_dimension_numbers<[1], [0], [0], [1], [0, 0, 1, 1], [], []>} : vector<324x4xf32>, vector<4x2xf32>, vector<324x2xf32> -> vector<324x2xf32>
    %c0_5 = arith.constant 0 : index
    %c0_6 = arith.constant 0 : index
    %5 = vector.load %arg4[%c0_5, %c0_6] : memref<1x2xf32, #tpu.memory_space<vmem>>, vector<1x2xf32>
    %6 = vector.broadcast %5 : vector<1x2xf32> to vector<324x2xf32>
    %7 = arith.addf %4, %6 : vector<324x2xf32>
    %cst_7 = arith.constant 0.000000e+00 : f32
    %8 = vector.broadcast %cst_7 : f32 to vector<324x2xf32>
    %9 = arith.cmpf ogt, %7, %8 : vector<324x2xf32>
    %cst_8 = arith.constant 1.000000e-01 : f32
    %10 = vector.broadcast %cst_8 : f32 to vector<324x2xf32>
    %11 = arith.mulf %10, %7 : vector<324x2xf32>
    %12 = arith.select %9, %7, %11 : vector<324x2xi1>, vector<324x2xf32>
    %13 = vector.shape_cast %12 : vector<324x2xf32> to vector<18x18x2xf32>
    %14 = tpu.iota {dimensions = array<i32: 0>} : vector<18x18x1xi32>
    %c16_i32 = arith.constant 16 : i32
    %15 = arith.muli %arg1, %c16_i32 : i32
    %16 = vector.broadcast %15 : i32 to vector<18x18x1xi32>
    %17 = arith.addi %14, %16 : vector<18x18x1xi32>
    %18 = tpu.iota {dimensions = array<i32: 1>} : vector<18x18x1xi32>
    %c1_i32 = arith.constant 1 : i32
    %19 = vector.broadcast %c1_i32 : i32 to vector<18x18x1xi32>
    %20 = arith.cmpi sge, %17, %19 : vector<18x18x1xi32>
    %c16_i32_9 = arith.constant 16 : i32
    %21 = vector.broadcast %c16_i32_9 : i32 to vector<18x18x1xi32>
    %22 = arith.cmpi sle, %17, %21 : vector<18x18x1xi32>
    %23 = arith.andi %20, %22 : vector<18x18x1xi1>
    %c1_i32_10 = arith.constant 1 : i32
    %24 = vector.broadcast %c1_i32_10 : i32 to vector<18x18x1xi32>
    %25 = arith.cmpi sge, %18, %24 : vector<18x18x1xi32>
    %26 = arith.andi %23, %25 : vector<18x18x1xi1>
    %c16_i32_11 = arith.constant 16 : i32
    %27 = vector.broadcast %c16_i32_11 : i32 to vector<18x18x1xi32>
    %28 = arith.cmpi sle, %18, %27 : vector<18x18x1xi32>
    %29 = arith.andi %26, %28 : vector<18x18x1xi1>
    %cst_12 = arith.constant 0.000000e+00 : f32
    %30 = vector.shape_cast %29 : vector<18x18x1xi1> to vector<18x18x1xi1>
    %31 = vector.broadcast %30 : vector<18x18x1xi1> to vector<18x18x2xi1>
    %32 = vector.broadcast %cst_12 : f32 to vector<18x18x2xf32>
    %33 = arith.select %31, %13, %32 : vector<18x18x2xi1>, vector<18x18x2xf32>
    %34 = vector.extract_strided_slice %33 {offsets = [0, 0, 0], sizes = [16, 16, 2], strides = [1, 1, 1]} : vector<18x18x2xf32> to vector<16x16x2xf32>
    %35 = vector.shape_cast %34 : vector<16x16x2xf32> to vector<256x2xf32>
    %c0_13 = arith.constant 0 : index
    %c0_14 = arith.constant 0 : index
    %c0_15 = arith.constant 0 : index
    %c0_16 = arith.constant 0 : index
    %36 = vector.load %arg5[%c0_13, %c0_14, %c0_15, %c0_16] : memref<3x3x2x4xf32, #tpu.memory_space<vmem>>, vector<1x1x2x4xf32>
    %37 = vector.shape_cast %36 : vector<1x1x2x4xf32> to vector<2x4xf32>
    %cst_17 = arith.constant dense<0.000000e+00> : vector<256x4xf32>
    %38 = tpu.matmul %35, %37, %cst_17 {dimension_numbers = #tpu.dot_dimension_numbers<[1], [0], [0], [1], [0, 0, 1, 1], [], []>} : vector<256x2xf32>, vector<2x4xf32>, vector<256x4xf32> -> vector<256x4xf32>
    %c0_18 = arith.constant 0 : index
    %c0_19 = arith.constant 0 : index
    %39 = vector.load %arg8[%c0_18, %c0_19] : memref<256x4xf32, #tpu.memory_space<vmem>>, vector<256x4xf32>
    tpu.vector_store %arg8[%c0_18, %c0_19], %38 {strides = array<i32>} : memref<256x4xf32, #tpu.memory_space<vmem>>, vector<256x4xf32>,
    %40 = vector.extract_strided_slice %33 {offsets = [0, 1, 0], sizes = [16, 16, 2], strides = [1, 1, 1]} : vector<18x18x2xf32> to vector<16x16x2xf32>
    %41 = vector.shape_cast %40 : vector<16x16x2xf32> to vector<256x2xf32>
    %c0_20 = arith.constant 0 : index
    %c1 = arith.constant 1 : index
    %c0_21 = arith.constant 0 : index
    %c0_22 = arith.constant 0 : index
    %42 = vector.load %arg5[%c0_20, %c1, %c0_21, %c0_22] : memref<3x3x2x4xf32, #tpu.memory_space<vmem>>, vector<1x1x2x4xf32>
    %43 = vector.shape_cast %42 : vector<1x1x2x4xf32> to vector<2x4xf32>
    %cst_23 = arith.constant dense<0.000000e+00> : vector<256x4xf32>
    %44 = tpu.matmul %41, %43, %cst_23 {dimension_numbers = #tpu.dot_dimension_numbers<[1], [0], [0], [1], [0, 0, 1, 1], [], []>} : vector<256x2xf32>, vector<2x4xf32>, vector<256x4xf32> -> vector<256x4xf32>
    %c0_24 = arith.constant 0 : index
    %c0_25 = arith.constant 0 : index
    %45 = vector.load %arg8[%c0_24, %c0_25] : memref<256x4xf32, #tpu.memory_space<vmem>>, vector<256x4xf32>
    %46 = arith.addf %45, %44 : vector<256x4xf32>
    %c0_26 = arith.constant 0 : index
    %c0_27 = arith.constant 0 : index
    %47 = vector.load %arg8[%c0_26, %c0_27] : memref<256x4xf32, #tpu.memory_space<vmem>>, vector<256x4xf32>
    tpu.vector_store %arg8[%c0_26, %c0_27], %46 {strides = array<i32>} : memref<256x4xf32, #tpu.memory_space<vmem>>, vector<256x4xf32>,
    %48 = vector.extract_strided_slice %33 {offsets = [0, 2, 0], sizes = [16, 16, 2], strides = [1, 1, 1]} : vector<18x18x2xf32> to vector<16x16x2xf32>
    %49 = vector.shape_cast %48 : vector<16x16x2xf32> to vector<256x2xf32>
    %c0_28 = arith.constant 0 : index
    %c2 = arith.constant 2 : index
    %c0_29 = arith.constant 0 : index
    %c0_30 = arith.constant 0 : index
    %50 = vector.load %arg5[%c0_28, %c2, %c0_29, %c0_30] : memref<3x3x2x4xf32, #tpu.memory_space<vmem>>, vector<1x1x2x4xf32>
    %51 = vector.shape_cast %50 : vector<1x1x2x4xf32> to vector<2x4xf32>
    %cst_31 = arith.constant dense<0.000000e+00> : vector<256x4xf32>
    %52 = tpu.matmul %49, %51, %cst_31 {dimension_numbers = #tpu.dot_dimension_numbers<[1], [0], [0], [1], [0, 0, 1, 1], [], []>} : vector<256x2xf32>, vector<2x4xf32>, vector<256x4xf32> -> vector<256x4xf32>
    %c0_32 = arith.constant 0 : index
    %c0_33 = arith.constant 0 : index
    %53 = vector.load %arg8[%c0_32, %c0_33] : memref<256x4xf32, #tpu.memory_space<vmem>>, vector<256x4xf32>
    %54 = arith.addf %53, %52 : vector<256x4xf32>
    %c0_34 = arith.constant 0 : index
    %c0_35 = arith.constant 0 : index
    %55 = vector.load %arg8[%c0_34, %c0_35] : memref<256x4xf32, #tpu.memory_space<vmem>>, vector<256x4xf32>
    tpu.vector_store %arg8[%c0_34, %c0_35], %54 {strides = array<i32>} : memref<256x4xf32, #tpu.memory_space<vmem>>, vector<256x4xf32>,
    %56 = vector.extract_strided_slice %33 {offsets = [1, 0, 0], sizes = [16, 16, 2], strides = [1, 1, 1]} : vector<18x18x2xf32> to vector<16x16x2xf32>
    %57 = vector.shape_cast %56 : vector<16x16x2xf32> to vector<256x2xf32>
    %c1_36 = arith.constant 1 : index
    %c0_37 = arith.constant 0 : index
    %c0_38 = arith.constant 0 : index
    %c0_39 = arith.constant 0 : index
    %58 = vector.load %arg5[%c1_36, %c0_37, %c0_38, %c0_39] : memref<3x3x2x4xf32, #tpu.memory_space<vmem>>, vector<1x1x2x4xf32>
    %59 = vector.shape_cast %58 : vector<1x1x2x4xf32> to vector<2x4xf32>
    %cst_40 = arith.constant dense<0.000000e+00> : vector<256x4xf32>
    %60 = tpu.matmul %57, %59, %cst_40 {dimension_numbers = #tpu.dot_dimension_numbers<[1], [0], [0], [1], [0, 0, 1, 1], [], []>} : vector<256x2xf32>, vector<2x4xf32>, vector<256x4xf32> -> vector<256x4xf32>
    %c0_41 = arith.constant 0 : index
    %c0_42 = arith.constant 0 : index
    %61 = vector.load %arg8[%c0_41, %c0_42] : memref<256x4xf32, #tpu.memory_space<vmem>>, vector<256x4xf32>
    %62 = arith.addf %61, %60 : vector<256x4xf32>
    %c0_43 = arith.constant 0 : index
    %c0_44 = arith.constant 0 : index
    %63 = vector.load %arg8[%c0_43, %c0_44] : memref<256x4xf32, #tpu.memory_space<vmem>>, vector<256x4xf32>
    tpu.vector_store %arg8[%c0_43, %c0_44], %62 {strides = array<i32>} : memref<256x4xf32, #tpu.memory_space<vmem>>, vector<256x4xf32>,
    %64 = vector.extract_strided_slice %33 {offsets = [1, 1, 0], sizes = [16, 16, 2], strides = [1, 1, 1]} : vector<18x18x2xf32> to vector<16x16x2xf32>
    %65 = vector.shape_cast %64 : vector<16x16x2xf32> to vector<256x2xf32>
    %c1_45 = arith.constant 1 : index
    %c1_46 = arith.constant 1 : index
    %c0_47 = arith.constant 0 : index
    %c0_48 = arith.constant 0 : index
    %66 = vector.load %arg5[%c1_45, %c1_46, %c0_47, %c0_48] : memref<3x3x2x4xf32, #tpu.memory_space<vmem>>, vector<1x1x2x4xf32>
    %67 = vector.shape_cast %66 : vector<1x1x2x4xf32> to vector<2x4xf32>
    %cst_49 = arith.constant dense<0.000000e+00> : vector<256x4xf32>
    %68 = tpu.matmul %65, %67, %cst_49 {dimension_numbers = #tpu.dot_dimension_numbers<[1], [0], [0], [1], [0, 0, 1, 1], [], []>} : vector<256x2xf32>, vector<2x4xf32>, vector<256x4xf32> -> vector<256x4xf32>
    %c0_50 = arith.constant 0 : index
    %c0_51 = arith.constant 0 : index
    %69 = vector.load %arg8[%c0_50, %c0_51] : memref<256x4xf32, #tpu.memory_space<vmem>>, vector<256x4xf32>
    %70 = arith.addf %69, %68 : vector<256x4xf32>
    %c0_52 = arith.constant 0 : index
    %c0_53 = arith.constant 0 : index
    %71 = vector.load %arg8[%c0_52, %c0_53] : memref<256x4xf32, #tpu.memory_space<vmem>>, vector<256x4xf32>
    tpu.vector_store %arg8[%c0_52, %c0_53], %70 {strides = array<i32>} : memref<256x4xf32, #tpu.memory_space<vmem>>, vector<256x4xf32>,
    %72 = vector.extract_strided_slice %33 {offsets = [1, 2, 0], sizes = [16, 16, 2], strides = [1, 1, 1]} : vector<18x18x2xf32> to vector<16x16x2xf32>
    %73 = vector.shape_cast %72 : vector<16x16x2xf32> to vector<256x2xf32>
    %c1_54 = arith.constant 1 : index
    %c2_55 = arith.constant 2 : index
    %c0_56 = arith.constant 0 : index
    %c0_57 = arith.constant 0 : index
    %74 = vector.load %arg5[%c1_54, %c2_55, %c0_56, %c0_57] : memref<3x3x2x4xf32, #tpu.memory_space<vmem>>, vector<1x1x2x4xf32>
    %75 = vector.shape_cast %74 : vector<1x1x2x4xf32> to vector<2x4xf32>
    %cst_58 = arith.constant dense<0.000000e+00> : vector<256x4xf32>
    %76 = tpu.matmul %73, %75, %cst_58 {dimension_numbers = #tpu.dot_dimension_numbers<[1], [0], [0], [1], [0, 0, 1, 1], [], []>} : vector<256x2xf32>, vector<2x4xf32>, vector<256x4xf32> -> vector<256x4xf32>
    %c0_59 = arith.constant 0 : index
    %c0_60 = arith.constant 0 : index
    %77 = vector.load %arg8[%c0_59, %c0_60] : memref<256x4xf32, #tpu.memory_space<vmem>>, vector<256x4xf32>
    %78 = arith.addf %77, %76 : vector<256x4xf32>
    %c0_61 = arith.constant 0 : index
    %c0_62 = arith.constant 0 : index
    %79 = vector.load %arg8[%c0_61, %c0_62] : memref<256x4xf32, #tpu.memory_space<vmem>>, vector<256x4xf32>
    tpu.vector_store %arg8[%c0_61, %c0_62], %78 {strides = array<i32>} : memref<256x4xf32, #tpu.memory_space<vmem>>, vector<256x4xf32>,
    %80 = vector.extract_strided_slice %33 {offsets = [2, 0, 0], sizes = [16, 16, 2], strides = [1, 1, 1]} : vector<18x18x2xf32> to vector<16x16x2xf32>
    %81 = vector.shape_cast %80 : vector<16x16x2xf32> to vector<256x2xf32>
    %c2_63 = arith.constant 2 : index
    %c0_64 = arith.constant 0 : index
    %c0_65 = arith.constant 0 : index
    %c0_66 = arith.constant 0 : index
    %82 = vector.load %arg5[%c2_63, %c0_64, %c0_65, %c0_66] : memref<3x3x2x4xf32, #tpu.memory_space<vmem>>, vector<1x1x2x4xf32>
    %83 = vector.shape_cast %82 : vector<1x1x2x4xf32> to vector<2x4xf32>
    %cst_67 = arith.constant dense<0.000000e+00> : vector<256x4xf32>
    %84 = tpu.matmul %81, %83, %cst_67 {dimension_numbers = #tpu.dot_dimension_numbers<[1], [0], [0], [1], [0, 0, 1, 1], [], []>} : vector<256x2xf32>, vector<2x4xf32>, vector<256x4xf32> -> vector<256x4xf32>
    %c0_68 = arith.constant 0 : index
    %c0_69 = arith.constant 0 : index
    %85 = vector.load %arg8[%c0_68, %c0_69] : memref<256x4xf32, #tpu.memory_space<vmem>>, vector<256x4xf32>
    %86 = arith.addf %85, %84 : vector<256x4xf32>
    %c0_70 = arith.constant 0 : index
    %c0_71 = arith.constant 0 : index
    %87 = vector.load %arg8[%c0_70, %c0_71] : memref<256x4xf32, #tpu.memory_space<vmem>>, vector<256x4xf32>
    tpu.vector_store %arg8[%c0_70, %c0_71], %86 {strides = array<i32>} : memref<256x4xf32, #tpu.memory_space<vmem>>, vector<256x4xf32>,
    %88 = vector.extract_strided_slice %33 {offsets = [2, 1, 0], sizes = [16, 16, 2], strides = [1, 1, 1]} : vector<18x18x2xf32> to vector<16x16x2xf32>
    %89 = vector.shape_cast %88 : vector<16x16x2xf32> to vector<256x2xf32>
    %c2_72 = arith.constant 2 : index
    %c1_73 = arith.constant 1 : index
    %c0_74 = arith.constant 0 : index
    %c0_75 = arith.constant 0 : index
    %90 = vector.load %arg5[%c2_72, %c1_73, %c0_74, %c0_75] : memref<3x3x2x4xf32, #tpu.memory_space<vmem>>, vector<1x1x2x4xf32>
    %91 = vector.shape_cast %90 : vector<1x1x2x4xf32> to vector<2x4xf32>
    %cst_76 = arith.constant dense<0.000000e+00> : vector<256x4xf32>
    %92 = tpu.matmul %89, %91, %cst_76 {dimension_numbers = #tpu.dot_dimension_numbers<[1], [0], [0], [1], [0, 0, 1, 1], [], []>} : vector<256x2xf32>, vector<2x4xf32>, vector<256x4xf32> -> vector<256x4xf32>
    %c0_77 = arith.constant 0 : index
    %c0_78 = arith.constant 0 : index
    %93 = vector.load %arg8[%c0_77, %c0_78] : memref<256x4xf32, #tpu.memory_space<vmem>>, vector<256x4xf32>
    %94 = arith.addf %93, %92 : vector<256x4xf32>
    %c0_79 = arith.constant 0 : index
    %c0_80 = arith.constant 0 : index
    %95 = vector.load %arg8[%c0_79, %c0_80] : memref<256x4xf32, #tpu.memory_space<vmem>>, vector<256x4xf32>
    tpu.vector_store %arg8[%c0_79, %c0_80], %94 {strides = array<i32>} : memref<256x4xf32, #tpu.memory_space<vmem>>, vector<256x4xf32>,
    %96 = vector.extract_strided_slice %33 {offsets = [2, 2, 0], sizes = [16, 16, 2], strides = [1, 1, 1]} : vector<18x18x2xf32> to vector<16x16x2xf32>
    %97 = vector.shape_cast %96 : vector<16x16x2xf32> to vector<256x2xf32>
    %c2_81 = arith.constant 2 : index
    %c2_82 = arith.constant 2 : index
    %c0_83 = arith.constant 0 : index
    %c0_84 = arith.constant 0 : index
    %98 = vector.load %arg5[%c2_81, %c2_82, %c0_83, %c0_84] : memref<3x3x2x4xf32, #tpu.memory_space<vmem>>, vector<1x1x2x4xf32>
    %99 = vector.shape_cast %98 : vector<1x1x2x4xf32> to vector<2x4xf32>
    %cst_85 = arith.constant dense<0.000000e+00> : vector<256x4xf32>
    %100 = tpu.matmul %97, %99, %cst_85 {dimension_numbers = #tpu.dot_dimension_numbers<[1], [0], [0], [1], [0, 0, 1, 1], [], []>} : vector<256x2xf32>, vector<2x4xf32>, vector<256x4xf32> -> vector<256x4xf32>
    %c0_86 = arith.constant 0 : index
    %c0_87 = arith.constant 0 : index
    %101 = vector.load %arg8[%c0_86, %c0_87] : memref<256x4xf32, #tpu.memory_space<vmem>>, vector<256x4xf32>
    %102 = arith.addf %101, %100 : vector<256x4xf32>
    %c0_88 = arith.constant 0 : index
    %c0_89 = arith.constant 0 : index
    %103 = vector.load %arg8[%c0_88, %c0_89] : memref<256x4xf32, #tpu.memory_space<vmem>>, vector<256x4xf32>
    tpu.vector_store %arg8[%c0_88, %c0_89], %102 {strides = array<i32>} : memref<256x4xf32, #tpu.memory_space<vmem>>, vector<256x4xf32>,
    %c0_90 = arith.constant 0 : index
    %c0_91 = arith.constant 0 : index
    %104 = vector.load %arg8[%c0_90, %c0_91] : memref<256x4xf32, #tpu.memory_space<vmem>>, vector<256x4xf32>
    %c0_92 = arith.constant 0 : index
    %c0_93 = arith.constant 0 : index
    %105 = vector.load %arg6[%c0_92, %c0_93] : memref<1x4xf32, #tpu.memory_space<vmem>>, vector<1x4xf32>
    %106 = vector.broadcast %105 : vector<1x4xf32> to vector<256x4xf32>
    %107 = arith.addf %104, %106 : vector<256x4xf32>
    %cst_94 = arith.constant 0.000000e+00 : f32
    %108 = vector.broadcast %cst_94 : f32 to vector<256x4xf32>
    %109 = arith.cmpf ogt, %107, %108 : vector<256x4xf32>
    %cst_95 = arith.constant 1.000000e-01 : f32
    %110 = vector.broadcast %cst_95 : f32 to vector<256x4xf32>
    %111 = arith.mulf %110, %107 : vector<256x4xf32>
    %112 = arith.select %109, %107, %111 : vector<256x4xi1>, vector<256x4xf32>
    %113 = vector.extract_strided_slice %1 {offsets = [1, 1, 0], sizes = [16, 16, 4], strides = [1, 1, 1]} : vector<18x18x4xf32> to vector<16x16x4xf32>
    %114 = vector.shape_cast %113 : vector<16x16x4xf32> to vector<256x4xf32>
    %115 = arith.addf %112, %114 : vector<256x4xf32>
    %116 = vector.shape_cast %115 : vector<256x4xf32> to vector<1x16x16x4xf32>
    %c0_96 = arith.constant 0 : index
    %c0_97 = arith.constant 0 : index
    %c0_98 = arith.constant 0 : index
    %c0_99 = arith.constant 0 : index
    %117 = vector.load %arg7[%c0_96, %c0_97, %c0_98, %c0_99] : memref<1x16x16x4xf32, #tpu.memory_space<vmem>>, vector<1x16x16x4xf32>
    tpu.vector_store %arg7[%c0_96, %c0_97, %c0_98, %c0_99], %116 {strides = array<i32>} : memref<1x16x16x4xf32, #tpu.memory_space<vmem>>, vector<1x16x16x4xf32>,
    return
  }
  func.func @transform_0(%arg0: i32, %arg1: i32) -> (i32, i32, i32, i32) {
    %c1_i32 = arith.constant 1 : i32
    %0 = arith.muli %arg0, %c1_i32 : i32
    %1 = arith.addi %0, %arg1 : i32
    %c0_i32 = arith.constant 0 : i32
    %c0_i32_0 = arith.constant 0 : i32
    %c0_i32_1 = arith.constant 0 : i32
    %c0_i32_2 = arith.constant 0 : i32
    return %1, %c0_i32, %c0_i32_0, %c0_i32_1 : i32, i32, i32, i32
  }
  func.func @transform_1(%arg0: i32, %arg1: i32) -> (i32, i32) {
    %c0_i32 = arith.constant 0 : i32
    %c0_i32_0 = arith.constant 0 : i32
    %c0_i32_1 = arith.constant 0 : i32
    return %c0_i32, %c0_i32_0 : i32, i32
  }
  func.func @transform_2(%arg0: i32, %arg1: i32) -> (i32, i32) {
    %c0_i32 = arith.constant 0 : i32
    %c0_i32_0 = arith.constant 0 : i32
    %c0_i32_1 = arith.constant 0 : i32
    return %c0_i32, %c0_i32_0 : i32, i32
  }
  func.func @transform_3(%arg0: i32, %arg1: i32) -> (i32, i32, i32, i32) {
    %c0_i32 = arith.constant 0 : i32
    %c0_i32_0 = arith.constant 0 : i32
    %c0_i32_1 = arith.constant 0 : i32
    %c0_i32_2 = arith.constant 0 : i32
    %c0_i32_3 = arith.constant 0 : i32
    return %c0_i32, %c0_i32_0, %c0_i32_1, %c0_i32_2 : i32, i32, i32, i32
  }
  func.func @transform_4(%arg0: i32, %arg1: i32) -> (i32, i32) {
    %c0_i32 = arith.constant 0 : i32
    %c0_i32_0 = arith.constant 0 : i32
    %c0_i32_1 = arith.constant 0 : i32
    return %c0_i32, %c0_i32_0 : i32, i32
  }
  func.func @transform_5(%arg0: i32, %arg1: i32) -> (i32, i32, i32, i32) {
    %c0_i32 = arith.constant 0 : i32
    %c0_i32_0 = arith.constant 0 : i32
    %c0_i32_1 = arith.constant 0 : i32
    return %arg0, %arg1, %c0_i32, %c0_i32_0 : i32, i32, i32, i32
  }
}

</mosaic_0001>

<llo_original>
// kernel: res_layer_forward.1
$region0: #{res_layer_forward.1}
  #allocation0 [shape = 'u32[]', space=smem, size = 0x4, offset = 0x4, fixed_abs, tag = 'smem constant byte address 0x4 - core index']
  #allocation1 [shape = 'u32[144,128]{1,0:T(1,128)}', space=vmem, size = 0x12000, scoped, tag = 'internal scratch']
  #allocation2 [shape = 'f32[256,4]{1,0:T(8,128)}', space=vmem, size = 0x20000, scoped, tag = 'scratch operand']
  %s0 = inlined_call_operand.vmem [shape: f32[2,18,18,4], index: 0, kind: input, shape index: {}]
  %s1 = inlined_call_operand.vmem [shape: f32[4,2], index: 1, kind: input, shape index: {}]
  %s2 = inlined_call_operand.vmem [shape: f32[1,2], index: 2, kind: input, shape index: {}]
  %s3 = inlined_call_operand.vmem [shape: f32[3,3,2,4], index: 3, kind: input, shape index: {}]
  %s4 = inlined_call_operand.vmem [shape: f32[1,4], index: 4, kind: input, shape index: {}]
  %s5 = inlined_call_operand.vmem [shape: f32[2,16,16,4], index: 5, kind: output, shape index: {}]
  %s6 = sld [smem:[#allocation0]]
  $region53: #{res_layer_forward.1} parent=0
    _
  %s8 = ssub.s32 1, %s6
  %s9 = scalar_select 0, %s8, %s6
  loop: start=0, step=1, limit=4
  $region2: #{res_layer_forward.1} parent=0 // loop_pre_header
    _
  $region3: #{res_layer_forward.1} parent=0 // loop_header
    %s11 = sphi 0, %s15
    %p12 = scmp.ge.s32.totalorder %s11, 4
    %s18 = sphi 0, %s30
    %s19 = sphi 0, %s26
    %s20 = sphi 0, %s18
    %s21 = sphi 0, %s19
    %s22 = sphi 0, %s20
    %s23 = sphi 0, %s21
    %s35 = sphi 0, %s37
    %s38 = sphi 0, %s35
    %s39 = sphi 0, %s38
    %s55 = sphi 0, %s39
    %s59 = sphi 0, %s59
    %s61 = sphi 0, %s59
    %s62 = sphi 0, %s61
    %s76 = sphi 0, %s62
    %s80 = sphi 0, %s80
    %s82 = sphi 0, %s80
    %s83 = sphi 0, %s82
    %s97 = sphi 0, %s83
    %s101 = sphi 0, %s101
    %s103 = sphi 0, %s101
    %s104 = sphi 0, %s103
    %s118 = sphi 0, %s104
    %s122 = sphi 0, %s122
    %s124 = sphi 0, %s122
    %s125 = sphi 0, %s124
    %s139 = sphi 0, %s125
    %s147 = sphi 0, %s149
    %s150 = sphi 0, %s147
    %s151 = sphi 0, %s150
    %s167 = sphi 0, %s151
  $region4: #{res_layer_forward.1} parent=0 // loop_header_branch
    %14 = sbr.rel (%p12) target = $region8
  $region5: #{res_layer_forward.1} parent=0 // loop_body
    %s16 = ssub.s32 %s11, 1
    %s17 = ssub.s32 %s11, 2
    %s24 = sadd.s32 1, %s19
    %p25 = scmp.ge.s32.totalorder %s24, 1
    %s26 = scalar_select %p25, 0, %s24
    %s27 = sadd.s32 1, %s18
    %s28 = scalar_select %p25, %s27, %s18
    %p29 = scmp.ge.s32.totalorder %s28, 2
    %s30 = scalar_select %p29, 0, %s28
    %s31 = sadd.s32 %s18, %s19
    %s32 = sadd.s32 %s30, %s26
    %s33 = ssub.s32 %s31, %s32
    %p34 = scmp.eq.s32.totalorder %s33, 0
    %s36 = sadd.s32 %s35, 1
    %s37 = scalar_select %p34, %s35, %s36
    %p40 = pneg %p34
    %p41 = scmp.eq.s32.totalorder %s11, 1
    %p42 = por %p40, %p41
    %p43 = scmp.ne.s32.totalorder %s35, %s38
    %p44 = scmp.eq.s32.totalorder %s11, 0
    %p45 = por %p43, %p44
    %p46 = scmp.ne.s32.totalorder %s35, %s38
    %p47 = scmp.eq.s32.totalorder %s16, 1
    %p48 = por %p46, %p47
    %p49 = scmp.ne.s32.totalorder %s38, %s39
    %p50 = scmp.eq.s32.totalorder %s16, 0
    %p51 = por %p49, %p50
    %p52 = scmp.ne.s32.totalorder %s38, %s39
    %p53 = scmp.eq.s32.totalorder %s17, 1
    %p54 = por %p52, %p53
    %p56 = scmp.ne.s32.totalorder %s39, %s55
    %p57 = scmp.eq.s32.totalorder %s17, 0
    %p58 = por %p56, %p57
    %s60 = sadd.s32 %s59, 1
    %p63 = scmp.eq.s32.totalorder %s11, 1
    %p64 = scmp.ne.s32.totalorder %s59, %s61
    %p65 = scmp.eq.s32.totalorder %s11, 0
    %p66 = por %p64, %p65
    %p67 = scmp.ne.s32.totalorder %s59, %s61
    %p68 = scmp.eq.s32.totalorder %s16, 1
    %p69 = por %p67, %p68
    %p70 = scmp.ne.s32.totalorder %s61, %s62
    %p71 = scmp.eq.s32.totalorder %s16, 0
    %p72 = por %p70, %p71
    %p73 = scmp.ne.s32.totalorder %s61, %s62
    %p74 = scmp.eq.s32.totalorder %s17, 1
    %p75 = por %p73, %p74
    %p77 = scmp.ne.s32.totalorder %s62, %s76
    %p78 = scmp.eq.s32.totalorder %s17, 0
    %p79 = por %p77, %p78
    %s81 = sadd.s32 %s80, 1
    %p84 = scmp.eq.s32.totalorder %s11, 1
    %p85 = scmp.ne.s32.totalorder %s80, %s82
    %p86 = scmp.eq.s32.totalorder %s11, 0
    %p87 = por %p85, %p86
    %p88 = scmp.ne.s32.totalorder %s80, %s82
    %p89 = scmp.eq.s32.totalorder %s16, 1
    %p90 = por %p88, %p89
    %p91 = scmp.ne.s32.totalorder %s82, %s83
    %p92 = scmp.eq.s32.totalorder %s16, 0
    %p93 = por %p91, %p92
    %p94 = scmp.ne.s32.totalorder %s82, %s83
    %p95 = scmp.eq.s32.totalorder %s17, 1
    %p96 = por %p94, %p95
    %p98 = scmp.ne.s32.totalorder %s83, %s97
    %p99 = scmp.eq.s32.totalorder %s17, 0
    %p100 = por %p98, %p99
    %s102 = sadd.s32 %s101, 1
    %p105 = scmp.eq.s32.totalorder %s11, 1
    %p106 = scmp.ne.s32.totalorder %s101, %s103
    %p107 = scmp.eq.s32.totalorder %s11, 0
    %p108 = por %p106, %p107
    %p109 = scmp.ne.s32.totalorder %s101, %s103
    %p110 = scmp.eq.s32.totalorder %s16, 1
    %p111 = por %p109, %p110
    %p112 = scmp.ne.s32.totalorder %s103, %s104
    %p113 = scmp.eq.s32.totalorder %s16, 0
    %p114 = por %p112, %p113
    %p115 = scmp.ne.s32.totalorder %s103, %s104
    %p116 = scmp.eq.s32.totalorder %s17, 1
    %p117 = por %p115, %p116
    %p119 = scmp.ne.s32.totalorder %s104, %s118
    %p120 = scmp.eq.s32.totalorder %s17, 0
    %p121 = por %p119, %p120
    %s123 = sadd.s32 %s122, 1
    %p126 = scmp.eq.s32.totalorder %s11, 1
    %p127 = scmp.ne.s32.totalorder %s122, %s124
    %p128 = scmp.eq.s32.totalorder %s11, 0
    %p129 = por %p127, %p128
    %p130 = scmp.ne.s32.totalorder %s122, %s124
    %p131 = scmp.eq.s32.totalorder %s16, 1
    %p132 = por %p130, %p131
    %p133 = scmp.ne.s32.totalorder %s124, %s125
    %p134 = scmp.eq.s32.totalorder %s16, 0
    %p135 = por %p133, %p134
    %p136 = scmp.ne.s32.totalorder %s124, %s125
    %p137 = scmp.eq.s32.totalorder %s17, 1
    %p138 = por %p136, %p137
    %p140 = scmp.ne.s32.totalorder %s125, %s139
    %p141 = scmp.eq.s32.totalorder %s17, 0
    %p142 = por %p140, %p141
    %s143 = ssub.s32 %s18, %s30
    %s144 = ssub.s32 %s19, %s26
    %s145 = sor.u32 %s143, %s144
    %p146 = scmp.eq.s32.totalorder %s145, 0
    %s148 = sadd.s32 %s147, 1
    %s149 = scalar_select %p146, %s147, %s148
    %p152 = pneg %p146
    %p153 = scmp.eq.s32.totalorder %s11, 1
    %p154 = por %p152, %p153
    %p155 = scmp.ne.s32.totalorder %s147, %s150
    %p156 = scmp.eq.s32.totalorder %s11, 0
    %p157 = por %p155, %p156
    %p158 = scmp.ne.s32.totalorder %s147, %s150
    %p159 = scmp.eq.s32.totalorder %s16, 1
    %p160 = por %p158, %p159
    %p161 = scmp.ne.s32.totalorder %s150, %s151
    %p162 = scmp.eq.s32.totalorder %s16, 0
    %p163 = por %p161, %p162
    %p164 = scmp.ne.s32.totalorder %s150, %s151
    %p165 = scmp.eq.s32.totalorder %s17, 1
    %p166 = por %p164, %p165
    %p168 = scmp.ne.s32.totalorder %s151, %s167
    %p169 = scmp.eq.s32.totalorder %s17, 0
    %p170 = por %p168, %p169
    %p171 = scmp.le.s32.totalorder 1, %s11
    %p172 = scmp.lt.s32.totalorder %s11, 3
    %p173 = pnand %p171, %p172
    %p174 = pneg %p173
    // Predicated region
    $region9: #{res_layer_forward.1} parent=5 // pred_check
      _
    $region10: #{res_layer_forward.1} parent=5 // pred_check_branch
      %176 = sbr.rel (%p173) target = $region12
    $region11: #{res_layer_forward.1} parent=5 // pred_region
      %s177 = ssub.s32 %s11, 1
      // Predicated region
      $region13: #{res_layer_forward.1} parent=11 // pred_check
        %p178 = pneg %p72
      $region14: #{res_layer_forward.1} parent=11 // pred_check_branch
        %180 = sbr.rel (%p178) target = $region16
      $region15: #{res_layer_forward.1} parent=11 // pred_region
        _
      $region16: #{res_layer_forward.1} parent=11 // pred_fallthru
        _
      // Predicated region
      $region17: #{res_layer_forward.1} parent=11 // pred_check
        %p181 = pneg %p93
      $region18: #{res_layer_forward.1} parent=11 // pred_check_branch
        %183 = sbr.rel (%p181) target = $region20
      $region19: #{res_layer_forward.1} parent=11 // pred_region
        _
      $region20: #{res_layer_forward.1} parent=11 // pred_fallthru
        _
      // Predicated region
      $region21: #{res_layer_forward.1} parent=11 // pred_check
        %p184 = pneg %p114
      $region22: #{res_layer_forward.1} parent=11 // pred_check_branch
        %186 = sbr.rel (%p184) target = $region24
      $region23: #{res_layer_forward.1} parent=11 // pred_region
        _
      $region24: #{res_layer_forward.1} parent=11 // pred_fallthru
        _
      // Predicated region
      $region25: #{res_layer_forward.1} parent=11 // pred_check
        %p187 = pneg %p135
      $region26: #{res_layer_forward.1} parent=11 // pred_check_branch
        %189 = sbr.rel (%p187) target = $region28
      $region27: #{res_layer_forward.1} parent=11 // pred_region
        _
      $region28: #{res_layer_forward.1} parent=11 // pred_fallthru
        _
    $region12: #{res_layer_forward.1} parent=5 // pred_fallthru
      _
    %p190 = scmp.lt.s32.totalorder %s11, 2
    // Predicated region
    $region29: #{res_layer_forward.1} parent=5 // pred_check
      %p191 = pneg %p190
    $region30: #{res_layer_forward.1} parent=5 // pred_check_branch
      %193 = sbr.rel (%p191) target = $region32
    $region31: #{res_layer_forward.1} parent=5 // pred_region
      // Predicated region
      $region33: #{res_layer_forward.1} parent=31 // pred_check
        %p194 = pneg %p45
      $region34: #{res_layer_forward.1} parent=31 // pred_check_branch
        %196 = sbr.rel (%p194) target = $region36
      $region35: #{res_layer_forward.1} parent=31 // pred_region
        %s197 = sadd.s32 %s18, %s19
        %p198 = scmp.lt.s32.totalorder %s197, 1
        %s199 = scalar_select %p198, %s197, 1
        %s200 = smul.addr %s199, 54
        %s201 = smul.addr %s200, 8
        %s202 = scalar_lea.vmem %s0, %s201
        %s203 = sadd.s32 %s18, %s19
      $region36: #{res_layer_forward.1} parent=31 // pred_fallthru
        _
    $region32: #{res_layer_forward.1} parent=5 // pred_fallthru
      _
    %p204 = scmp.le.s32.totalorder 1, %s11
    %p205 = scmp.lt.s32.totalorder %s11, 3
    %p206 = pnand %p204, %p205
    %p207 = pneg %p206
    // Predicated region
    $region37: #{res_layer_forward.1} parent=5 // pred_check
      _
    $region38: #{res_layer_forward.1} parent=5 // pred_check_branch
      %209 = sbr.rel (%p206) target = $region40
    $region39: #{res_layer_forward.1} parent=5 // pred_region
      %s210 = ssub.s32 %s11, 1
      %s211 = sadd.s32 %s20, %s21
      %p212 = scmp.lt.s32.totalorder %s211, 1
      %s213 = scalar_select %p212, %s211, 1
      %s214 = smul.addr %s213, 54
      %s215 = smul.addr %s214, 8
      %s216 = scalar_lea.vmem %s0, %s215
      %p217 = pneg %p51
      %p218 = pneg %p48
      %p219 = pneg %p72
      %p220 = pneg %p69
      %p221 = pneg %p93
      %p222 = pneg %p90
      %p223 = pneg %p114
      %p224 = pneg %p111
      %p225 = pneg %p135
      %p226 = pneg %p132
      %p227 = pneg %p163
      %p228 = pneg %p160
      %s229 = smul.u32 16, %s21
      %p230 = scmp.lt.s32.totalorder %s20, 1
      %s231 = scalar_select %p230, %s20, 1
      %p232 = scmp.lt.s32.totalorder %s229, 15
      %s233 = scalar_select %p232, %s229, 15
      %s234 = smul.addr %s233, 2
      %s235 = smul.addr %s231, 32
      %s236 = sadd.s32 %s234, %s235
      %s237 = smul.addr %s236, 8
      %s238 = scalar_lea.vmem %s5, %s237
      %s239 = sadd.s32 %s20, %s21
      %p240 = scmp.lt.s32.totalorder %s239, 1
      %s241 = scalar_select %p240, %s239, 1
      %s242 = smul.addr %s241, 54
      %s243 = smul.addr %s242, 8
      %s244 = scalar_lea.vmem %s0, %s243
      %s245 = sadd.s32 %s20, %s21
      %s246 = smul.u32 16, %s21
      %p247 = scmp.lt.s32.totalorder %s20, 1
      %s248 = scalar_select %p247, %s20, 1
      %p249 = scmp.lt.s32.totalorder %s246, 15
      %s250 = scalar_select %p249, %s246, 15
      %s251 = smul.addr %s250, 2
      %s252 = smul.addr %s248, 32
      %s253 = sadd.s32 %s251, %s252
      %s254 = smul.addr %s253, 8
      %s255 = scalar_lea.vmem %s5, %s254
      %s256 = smul.u32 16, %s21
      %v257 = vld [vmem:[%s244] sm:$0xff]
      %v258 = vld [vmem:[%s244 + $0x8] sm:$0xff]
      %v259 = vld [vmem:[%s244 + $0x10] sm:$0x3]
      %v260 = vld [vmem:[%s244 + $0x18] sm:$0xff]
      %v261 = vld [vmem:[%s244 + $0x20] sm:$0xff]
      %v262 = vld [vmem:[%s244 + $0x28] sm:$0x3]
      %v263 = vld [vmem:[%s244 + $0x30] sm:$0xff]
      %v264 = vld [vmem:[%s244 + $0x38] sm:$0xff]
      %v265 = vld [vmem:[%s244 + $0x40] sm:$0x3]
      %v266 = vld [vmem:[%s244 + $0x48] sm:$0xff]
      %v267 = vld [vmem:[%s244 + $0x50] sm:$0xff]
      %v268 = vld [vmem:[%s244 + $0x58] sm:$0x3]
      %v269 = vld [vmem:[%s244 + $0x60] sm:$0xff]
      %v270 = vld [vmem:[%s244 + $0x68] sm:$0xff]
      %v271 = vld [vmem:[%s244 + $0x70] sm:$0x3]
      %v272 = vld [vmem:[%s244 + $0x78] sm:$0xff]
      %v273 = vld [vmem:[%s244 + $0x80] sm:$0xff]
      %v274 = vld [vmem:[%s244 + $0x88] sm:$0x3]
      %v275 = vld [vmem:[%s244 + $0x90] sm:$0xff]
      %v276 = vld [vmem:[%s244 + $0x98] sm:$0xff]
      %v277 = vld [vmem:[%s244 + $0xa0] sm:$0x3]
      %v278 = vld [vmem:[%s244 + $0xa8] sm:$0xff]
      %v279 = vld [vmem:[%s244 + $0xb0] sm:$0xff]
      %v280 = vld [vmem:[%s244 + $0xb8] sm:$0x3]
      %v281 = vld [vmem:[%s244 + $0xc0] sm:$0xff]
      %v282 = vld [vmem:[%s244 + $0xc8] sm:$0xff]
      %v283 = vld [vmem:[%s244 + $0xd0] sm:$0x3]
      %v284 = vld [vmem:[%s244 + $0xd8] sm:$0xff]
      %v285 = vld [vmem:[%s244 + $0xe0] sm:$0xff]
      %v286 = vld [vmem:[%s244 + $0xe8] sm:$0x3]
      %v287 = vld [vmem:[%s244 + $0xf0] sm:$0xff]
      %v288 = vld [vmem:[%s244 + $0xf8] sm:$0xff]
      %v289 = vld [vmem:[%s244 + $0x100] sm:$0x3]
      %v290 = vld [vmem:[%s244 + $0x108] sm:$0xff]
      %v291 = vld [vmem:[%s244 + $0x110] sm:$0xff]
      %v292 = vld [vmem:[%s244 + $0x118] sm:$0x3]
      %v293 = vld [vmem:[%s244 + $0x120] sm:$0xff]
      %v294 = vld [vmem:[%s244 + $0x128] sm:$0xff]
      %v295 = vld [vmem:[%s244 + $0x130] sm:$0x3]
      %v296 = vld [vmem:[%s244 + $0x138] sm:$0xff]
      %v297 = vld [vmem:[%s244 + $0x140] sm:$0xff]
      %v298 = vld [vmem:[%s244 + $0x148] sm:$0x3]
      %v299 = vld [vmem:[%s244 + $0x150] sm:$0xff]
      %v300 = vld [vmem:[%s244 + $0x158] sm:$0xff]
      %v301 = vld [vmem:[%s244 + $0x160] sm:$0x3]
      %v302 = vld [vmem:[%s244 + $0x168] sm:$0xff]
      %v303 = vld [vmem:[%s244 + $0x170] sm:$0xff]
      %v304 = vld [vmem:[%s244 + $0x178] sm:$0x3]
      %v305 = vld [vmem:[%s244 + $0x180] sm:$0xff]
      %v306 = vld [vmem:[%s244 + $0x188] sm:$0xff]
      %v307 = vld [vmem:[%s244 + $0x190] sm:$0x3]
      %v308 = vld [vmem:[%s244 + $0x198] sm:$0xff]
      %v309 = vld [vmem:[%s244 + $0x1a0] sm:$0xff]
      %v310 = vld [vmem:[%s244 + $0x1a8] sm:$0x3]
      %v365 = vcombine.high %v257, %v257
      %v367 = vunpack.c.l.s4 1983009808
      %v368 = vunpack.c.0.s8 %v367
      %v369 = vlaneseq
      %v370 = vshrl.u32 %v369, 7
      %v371 = vsub.s32 %v368, %v370
      %v372 = vrot.slane %v257, %v371
      %v374 = vunpack.c.l.s4 1983009808
      %v375 = vunpack.c.0.s8 %v374
      %v376 = vlaneseq
      %v377 = vshrl.u32 %v376, 7
      %v378 = vsub.s32 %v375, %v377
      %v379 = vrot.slane %v365, %v378
      %v380 = vcombine.high %v372, %v372
      %v381 = vcombine.high %v379, %v379
      %v382 = vcombine.high %v258, %v258
      %v384 = vunpack.c.l.s4 1983009808
      %v385 = vunpack.c.0.s8 %v384
      %v386 = vlaneseq
      %v387 = vshrl.u32 %v386, 7
      %v388 = vsub.s32 %v385, %v387
      %v389 = vrot.slane %v258, %v388
      %v391 = vunpack.c.l.s4 1983009808
      %v392 = vunpack.c.0.s8 %v391
      %v393 = vlaneseq
      %v394 = vshrl.u32 %v393, 7
      %v395 = vsub.s32 %v392, %v394
      %v396 = vrot.slane %v382, %v395
      %v397 = vcombine.high %v389, %v389
      %v398 = vcombine.high %v396, %v396
      %v400 = vunpack.c.l.s4 1983009808
      %v401 = vunpack.c.0.s8 %v400
      %v402 = vlaneseq
      %v403 = vshrl.u32 %v402, 7
      %v404 = vsub.s32 %v401, %v403
      %v405 = vrot.slane %v259, %v404
      %v406 = vcombine.high %v260, %v260
      %v408 = vunpack.c.l.s4 1983009808
      %v409 = vunpack.c.0.s8 %v408
      %v410 = vlaneseq
      %v411 = vshrl.u32 %v410, 7
      %v412 = vsub.s32 %v409, %v411
      %v413 = vrot.slane %v260, %v412
      %v415 = vunpack.c.l.s4 1983009808
      %v416 = vunpack.c.0.s8 %v415
      %v417 = vlaneseq
      %v418 = vshrl.u32 %v417, 7
      %v419 = vsub.s32 %v416, %v418
      %v420 = vrot.slane %v406, %v419
      %v421 = vcombine.high %v413, %v413
      %v422 = vcombine.high %v420, %v420
      %v423 = vcombine.high %v261, %v261
      %v425 = vunpack.c.l.s4 1983009808
      %v426 = vunpack.c.0.s8 %v425
      %v427 = vlaneseq
      %v428 = vshrl.u32 %v427, 7
      %v429 = vsub.s32 %v426, %v428
      %v430 = vrot.slane %v261, %v429
      %v432 = vunpack.c.l.s4 1983009808
      %v433 = vunpack.c.0.s8 %v432
      %v434 = vlaneseq
      %v435 = vshrl.u32 %v434, 7
      %v436 = vsub.s32 %v433, %v435
      %v437 = vrot.slane %v423, %v436
      %v438 = vcombine.high %v430, %v430
      %v439 = vcombine.high %v437, %v437
      %v441 = vunpack.c.l.s4 1983009808
      %v442 = vunpack.c.0.s8 %v441
      %v443 = vlaneseq
      %v444 = vshrl.u32 %v443, 7
      %v445 = vsub.s32 %v442, %v444
      %v446 = vrot.slane %v262, %v445
      %v447 = vcombine.high %v263, %v263
      %v449 = vunpack.c.l.s4 1983009808
      %v450 = vunpack.c.0.s8 %v449
      %v451 = vlaneseq
      %v452 = vshrl.u32 %v451, 7
      %v453 = vsub.s32 %v450, %v452
      %v454 = vrot.slane %v263, %v453
      %v456 = vunpack.c.l.s4 1983009808
      %v457 = vunpack.c.0.s8 %v456
      %v458 = vlaneseq
      %v459 = vshrl.u32 %v458, 7
      %v460 = vsub.s32 %v457, %v459
      %v461 = vrot.slane %v447, %v460
      %v462 = vcombine.high %v454, %v454
      %v463 = vcombine.high %v461, %v461
      %v464 = vcombine.high %v264, %v264
      %v466 = vunpack.c.l.s4 1983009808
      %v467 = vunpack.c.0.s8 %v466
      %v468 = vlaneseq
      %v469 = vshrl.u32 %v468, 7
      %v470 = vsub.s32 %v467, %v469
      %v471 = vrot.slane %v264, %v470
      %v473 = vunpack.c.l.s4 1983009808
      %v474 = vunpack.c.0.s8 %v473
      %v475 = vlaneseq
      %v476 = vshrl.u32 %v475, 7
      %v477 = vsub.s32 %v474, %v476
      %v478 = vrot.slane %v464, %v477
      %v479 = vcombine.high %v471, %v471
      %v480 = vcombine.high %v478, %v478
      %v482 = vunpack.c.l.s4 1983009808
      %v483 = vunpack.c.0.s8 %v482
      %v484 = vlaneseq
      %v485 = vshrl.u32 %v484, 7
      %v486 = vsub.s32 %v483, %v485
      %v487 = vrot.slane %v265, %v486
      %v488 = vcombine.high %v266, %v266
      %v490 = vunpack.c.l.s4 1983009808
      %v491 = vunpack.c.0.s8 %v490
      %v492 = vlaneseq
      %v493 = vshrl.u32 %v492, 7
      %v494 = vsub.s32 %v491, %v493
      %v495 = vrot.slane %v266, %v494
      %v497 = vunpack.c.l.s4 1983009808
      %v498 = vunpack.c.0.s8 %v497
      %v499 = vlaneseq
      %v500 = vshrl.u32 %v499, 7
      %v501 = vsub.s32 %v498, %v500
      %v502 = vrot.slane %v488, %v501
      %v503 = vcombine.high %v495, %v495
      %v504 = vcombine.high %v502, %v502
      %v505 = vcombine.high %v267, %v267
      %v507 = vunpack.c.l.s4 1983009808
      %v508 = vunpack.c.0.s8 %v507
      %v509 = vlaneseq
      %v510 = vshrl.u32 %v509, 7
      %v511 = vsub.s32 %v508, %v510
      %v512 = vrot.slane %v267, %v511
      %v514 = vunpack.c.l.s4 1983009808
      %v515 = vunpack.c.0.s8 %v514
      %v516 = vlaneseq
      %v517 = vshrl.u32 %v516, 7
      %v518 = vsub.s32 %v515, %v517
      %v519 = vrot.slane %v505, %v518
      %v520 = vcombine.high %v512, %v512
      %v521 = vcombine.high %v519, %v519
      %v523 = vunpack.c.l.s4 1983009808
      %v524 = vunpack.c.0.s8 %v523
      %v525 = vlaneseq
      %v526 = vshrl.u32 %v525, 7
      %v527 = vsub.s32 %v524, %v526
      %v528 = vrot.slane %v268, %v527
      %v529 = vcombine.high %v269, %v269
      %v531 = vunpack.c.l.s4 1983009808
      %v532 = vunpack.c.0.s8 %v531
      %v533 = vlaneseq
      %v534 = vshrl.u32 %v533, 7
      %v535 = vsub.s32 %v532, %v534
      %v536 = vrot.slane %v269, %v535
      %v538 = vunpack.c.l.s4 1983009808
      %v539 = vunpack.c.0.s8 %v538
      %v540 = vlaneseq
      %v541 = vshrl.u32 %v540, 7
      %v542 = vsub.s32 %v539, %v541
      %v543 = vrot.slane %v529, %v542
      %v544 = vcombine.high %v536, %v536
      %v545 = vcombine.high %v543, %v543
      %v546 = vcombine.high %v270, %v270
      %v548 = vunpack.c.l.s4 1983009808
      %v549 = vunpack.c.0.s8 %v548
      %v550 = vlaneseq
      %v551 = vshrl.u32 %v550, 7
      %v552 = vsub.s32 %v549, %v551
      %v553 = vrot.slane %v270, %v552
      %v555 = vunpack.c.l.s4 1983009808
      %v556 = vunpack.c.0.s8 %v555
      %v557 = vlaneseq
      %v558 = vshrl.u32 %v557, 7
      %v559 = vsub.s32 %v556, %v558
      %v560 = vrot.slane %v546, %v559
      %v561 = vcombine.high %v553, %v553
      %v562 = vcombine.high %v560, %v560
      %v564 = vunpack.c.l.s4 1983009808
      %v565 = vunpack.c.0.s8 %v564
      %v566 = vlaneseq
      %v567 = vshrl.u32 %v566, 7
      %v568 = vsub.s32 %v565, %v567
      %v569 = vrot.slane %v271, %v568
      %v570 = vcombine.high %v272, %v272
      %v572 = vunpack.c.l.s4 1983009808
      %v573 = vunpack.c.0.s8 %v572
      %v574 = vlaneseq
      %v575 = vshrl.u32 %v574, 7
      %v576 = vsub.s32 %v573, %v575
      %v577 = vrot.slane %v272, %v576
      %v579 = vunpack.c.l.s4 1983009808
      %v580 = vunpack.c.0.s8 %v579
      %v581 = vlaneseq
      %v582 = vshrl.u32 %v581, 7
      %v583 = vsub.s32 %v580, %v582
      %v584 = vrot.slane %v570, %v583
      %v585 = vcombine.high %v577, %v577
      %v586 = vcombine.high %v584, %v584
      %v587 = vcombine.high %v273, %v273
      %v589 = vunpack.c.l.s4 1983009808
      %v590 = vunpack.c.0.s8 %v589
      %v591 = vlaneseq
      %v592 = vshrl.u32 %v591, 7
      %v593 = vsub.s32 %v590, %v592
      %v594 = vrot.slane %v273, %v593
      %v596 = vunpack.c.l.s4 1983009808
      %v597 = vunpack.c.0.s8 %v596
      %v598 = vlaneseq
      %v599 = vshrl.u32 %v598, 7
      %v600 = vsub.s32 %v597, %v599
      %v601 = vrot.slane %v587, %v600
      %v602 = vcombine.high %v594, %v594
      %v603 = vcombine.high %v601, %v601
      %v605 = vunpack.c.l.s4 1983009808
      %v606 = vunpack.c.0.s8 %v605
      %v607 = vlaneseq
      %v608 = vshrl.u32 %v607, 7
      %v609 = vsub.s32 %v606, %v608
      %v610 = vrot.slane %v274, %v609
      %v611 = vcombine.high %v275, %v275
      %v613 = vunpack.c.l.s4 1983009808
      %v614 = vunpack.c.0.s8 %v613
      %v615 = vlaneseq
      %v616 = vshrl.u32 %v615, 7
      %v617 = vsub.s32 %v614, %v616
      %v618 = vrot.slane %v275, %v617
      %v620 = vunpack.c.l.s4 1983009808
      %v621 = vunpack.c.0.s8 %v620
      %v622 = vlaneseq
      %v623 = vshrl.u32 %v622, 7
      %v624 = vsub.s32 %v621, %v623
      %v625 = vrot.slane %v611, %v624
      %v626 = vcombine.high %v618, %v618
      %v627 = vcombine.high %v625, %v625
      %v628 = vcombine.high %v276, %v276
      %v630 = vunpack.c.l.s4 1983009808
      %v631 = vunpack.c.0.s8 %v630
      %v632 = vlaneseq
      %v633 = vshrl.u32 %v632, 7
      %v634 = vsub.s32 %v631, %v633
      %v635 = vrot.slane %v276, %v634
      %v637 = vunpack.c.l.s4 1983009808
      %v638 = vunpack.c.0.s8 %v637
      %v639 = vlaneseq
      %v640 = vshrl.u32 %v639, 7
      %v641 = vsub.s32 %v638, %v640
      %v642 = vrot.slane %v628, %v641
      %v643 = vcombine.high %v635, %v635
      %v644 = vcombine.high %v642, %v642
      %v646 = vunpack.c.l.s4 1983009808
      %v647 = vunpack.c.0.s8 %v646
      %v648 = vlaneseq
      %v649 = vshrl.u32 %v648, 7
      %v650 = vsub.s32 %v647, %v649
      %v651 = vrot.slane %v277, %v650
      %v652 = vcombine.high %v278, %v278
      %v654 = vunpack.c.l.s4 1983009808
      %v655 = vunpack.c.0.s8 %v654
      %v656 = vlaneseq
      %v657 = vshrl.u32 %v656, 7
      %v658 = vsub.s32 %v655, %v657
      %v659 = vrot.slane %v278, %v658
      %v661 = vunpack.c.l.s4 1983009808
      %v662 = vunpack.c.0.s8 %v661
      %v663 = vlaneseq
      %v664 = vshrl.u32 %v663, 7
      %v665 = vsub.s32 %v662, %v664
      %v666 = vrot.slane %v652, %v665
      %v667 = vcombine.high %v659, %v659
      %v668 = vcombine.high %v666, %v666
      %v669 = vcombine.high %v279, %v279
      %v671 = vunpack.c.l.s4 1983009808
      %v672 = vunpack.c.0.s8 %v671
      %v673 = vlaneseq
      %v674 = vshrl.u32 %v673, 7
      %v675 = vsub.s32 %v672, %v674
      %v676 = vrot.slane %v279, %v675
      %v678 = vunpack.c.l.s4 1983009808
      %v679 = vunpack.c.0.s8 %v678
      %v680 = vlaneseq
      %v681 = vshrl.u32 %v680, 7
      %v682 = vsub.s32 %v679, %v681
      %v683 = vrot.slane %v669, %v682
      %v684 = vcombine.high %v676, %v676
      %v685 = vcombine.high %v683, %v683
      %v687 = vunpack.c.l.s4 1983009808
      %v688 = vunpack.c.0.s8 %v687
      %v689 = vlaneseq
      %v690 = vshrl.u32 %v689, 7
      %v691 = vsub.s32 %v688, %v690
      %v692 = vrot.slane %v280, %v691
      %v693 = vcombine.high %v281, %v281
      %v695 = vunpack.c.l.s4 1983009808
      %v696 = vunpack.c.0.s8 %v695
      %v697 = vlaneseq
      %v698 = vshrl.u32 %v697, 7
      %v699 = vsub.s32 %v696, %v698
      %v700 = vrot.slane %v281, %v699
      %v702 = vunpack.c.l.s4 1983009808
      %v703 = vunpack.c.0.s8 %v702
      %v704 = vlaneseq
      %v705 = vshrl.u32 %v704, 7
      %v706 = vsub.s32 %v703, %v705
      %v707 = vrot.slane %v693, %v706
      %v708 = vcombine.high %v700, %v700
      %v709 = vcombine.high %v707, %v707
      %v710 = vcombine.high %v282, %v282
      %v712 = vunpack.c.l.s4 1983009808
      %v713 = vunpack.c.0.s8 %v712
      %v714 = vlaneseq
      %v715 = vshrl.u32 %v714, 7
      %v716 = vsub.s32 %v713, %v715
      %v717 = vrot.slane %v282, %v716
      %v719 = vunpack.c.l.s4 1983009808
      %v720 = vunpack.c.0.s8 %v719
      %v721 = vlaneseq
      %v722 = vshrl.u32 %v721, 7
      %v723 = vsub.s32 %v720, %v722
      %v724 = vrot.slane %v710, %v723
      %v725 = vcombine.high %v717, %v717
      %v726 = vcombine.high %v724, %v724
      %v728 = vunpack.c.l.s4 1983009808
      %v729 = vunpack.c.0.s8 %v728
      %v730 = vlaneseq
      %v731 = vshrl.u32 %v730, 7
      %v732 = vsub.s32 %v729, %v731
      %v733 = vrot.slane %v283, %v732
      %v734 = vcombine.high %v284, %v284
      %v736 = vunpack.c.l.s4 1983009808
      %v737 = vunpack.c.0.s8 %v736
      %v738 = vlaneseq
      %v739 = vshrl.u32 %v738, 7
      %v740 = vsub.s32 %v737, %v739
      %v741 = vrot.slane %v284, %v740
      %v743 = vunpack.c.l.s4 1983009808
      %v744 = vunpack.c.0.s8 %v743
      %v745 = vlaneseq
      %v746 = vshrl.u32 %v745, 7
      %v747 = vsub.s32 %v744, %v746
      %v748 = vrot.slane %v734, %v747
      %v749 = vcombine.high %v741, %v741
      %v750 = vcombine.high %v748, %v748
      %v751 = vcombine.high %v285, %v285
      %v753 = vunpack.c.l.s4 1983009808
      %v754 = vunpack.c.0.s8 %v753
      %v755 = vlaneseq
      %v756 = vshrl.u32 %v755, 7
      %v757 = vsub.s32 %v754, %v756
      %v758 = vrot.slane %v285, %v757
      %v760 = vunpack.c.l.s4 1983009808
      %v761 = vunpack.c.0.s8 %v760
      %v762 = vlaneseq
      %v763 = vshrl.u32 %v762, 7
      %v764 = vsub.s32 %v761, %v763
      %v765 = vrot.slane %v751, %v764
      %v766 = vcombine.high %v758, %v758
      %v767 = vcombine.high %v765, %v765
      %v769 = vunpack.c.l.s4 1983009808
      %v770 = vunpack.c.0.s8 %v769
      %v771 = vlaneseq
      %v772 = vshrl.u32 %v771, 7
      %v773 = vsub.s32 %v770, %v772
      %v774 = vrot.slane %v286, %v773
      %v775 = vcombine.high %v287, %v287
      %v777 = vunpack.c.l.s4 1983009808
      %v778 = vunpack.c.0.s8 %v777
      %v779 = vlaneseq
      %v780 = vshrl.u32 %v779, 7
      %v781 = vsub.s32 %v778, %v780
      %v782 = vrot.slane %v287, %v781
      %v784 = vunpack.c.l.s4 1983009808
      %v785 = vunpack.c.0.s8 %v784
      %v786 = vlaneseq
      %v787 = vshrl.u32 %v786, 7
      %v788 = vsub.s32 %v785, %v787
      %v789 = vrot.slane %v775, %v788
      %v790 = vcombine.high %v782, %v782
      %v791 = vcombine.high %v789, %v789
      %v792 = vcombine.high %v288, %v288
      %v794 = vunpack.c.l.s4 1983009808
      %v795 = vunpack.c.0.s8 %v794
      %v796 = vlaneseq
      %v797 = vshrl.u32 %v796, 7
      %v798 = vsub.s32 %v795, %v797
      %v799 = vrot.slane %v288, %v798
      %v801 = vunpack.c.l.s4 1983009808
      %v802 = vunpack.c.0.s8 %v801
      %v803 = vlaneseq
      %v804 = vshrl.u32 %v803, 7
      %v805 = vsub.s32 %v802, %v804
      %v806 = vrot.slane %v792, %v805
      %v807 = vcombine.high %v799, %v799
      %v808 = vcombine.high %v806, %v806
      %v810 = vunpack.c.l.s4 1983009808
      %v811 = vunpack.c.0.s8 %v810
      %v812 = vlaneseq
      %v813 = vshrl.u32 %v812, 7
      %v814 = vsub.s32 %v811, %v813
      %v815 = vrot.slane %v289, %v814
      %v816 = vcombine.high %v290, %v290
      %v818 = vunpack.c.l.s4 1983009808
      %v819 = vunpack.c.0.s8 %v818
      %v820 = vlaneseq
      %v821 = vshrl.u32 %v820, 7
      %v822 = vsub.s32 %v819, %v821
      %v823 = vrot.slane %v290, %v822
      %v825 = vunpack.c.l.s4 1983009808
      %v826 = vunpack.c.0.s8 %v825
      %v827 = vlaneseq
      %v828 = vshrl.u32 %v827, 7
      %v829 = vsub.s32 %v826, %v828
      %v830 = vrot.slane %v816, %v829
      %v831 = vcombine.high %v823, %v823
      %v832 = vcombine.high %v830, %v830
      %v833 = vcombine.high %v291, %v291
      %v835 = vunpack.c.l.s4 1983009808
      %v836 = vunpack.c.0.s8 %v835
      %v837 = vlaneseq
      %v838 = vshrl.u32 %v837, 7
      %v839 = vsub.s32 %v836, %v838
      %v840 = vrot.slane %v291, %v839
      %v842 = vunpack.c.l.s4 1983009808
      %v843 = vunpack.c.0.s8 %v842
      %v844 = vlaneseq
      %v845 = vshrl.u32 %v844, 7
      %v846 = vsub.s32 %v843, %v845
      %v847 = vrot.slane %v833, %v846
      %v848 = vcombine.high %v840, %v840
      %v849 = vcombine.high %v847, %v847
      %v851 = vunpack.c.l.s4 1983009808
      %v852 = vunpack.c.0.s8 %v851
      %v853 = vlaneseq
      %v854 = vshrl.u32 %v853, 7
      %v855 = vsub.s32 %v852, %v854
      %v856 = vrot.slane %v292, %v855
      %v857 = vcombine.high %v293, %v293
      %v859 = vunpack.c.l.s4 1983009808
      %v860 = vunpack.c.0.s8 %v859
      %v861 = vlaneseq
      %v862 = vshrl.u32 %v861, 7
      %v863 = vsub.s32 %v860, %v862
      %v864 = vrot.slane %v293, %v863
      %v866 = vunpack.c.l.s4 1983009808
      %v867 = vunpack.c.0.s8 %v866
      %v868 = vlaneseq
      %v869 = vshrl.u32 %v868, 7
      %v870 = vsub.s32 %v867, %v869
      %v871 = vrot.slane %v857, %v870
      %v872 = vcombine.high %v864, %v864
      %v873 = vcombine.high %v871, %v871
      %v874 = vcombine.high %v294, %v294
      %v876 = vunpack.c.l.s4 1983009808
      %v877 = vunpack.c.0.s8 %v876
      %v878 = vlaneseq
      %v879 = vshrl.u32 %v878, 7
      %v880 = vsub.s32 %v877, %v879
      %v881 = vrot.slane %v294, %v880
      %v883 = vunpack.c.l.s4 1983009808
      %v884 = vunpack.c.0.s8 %v883
      %v885 = vlaneseq
      %v886 = vshrl.u32 %v885, 7
      %v887 = vsub.s32 %v884, %v886
      %v888 = vrot.slane %v874, %v887
      %v889 = vcombine.high %v881, %v881
      %v890 = vcombine.high %v888, %v888
      %v892 = vunpack.c.l.s4 1983009808
      %v893 = vunpack.c.0.s8 %v892
      %v894 = vlaneseq
      %v895 = vshrl.u32 %v894, 7
      %v896 = vsub.s32 %v893, %v895
      %v897 = vrot.slane %v295, %v896
      %v898 = vcombine.high %v296, %v296
      %v900 = vunpack.c.l.s4 1983009808
      %v901 = vunpack.c.0.s8 %v900
      %v902 = vlaneseq
      %v903 = vshrl.u32 %v902, 7
      %v904 = vsub.s32 %v901, %v903
      %v905 = vrot.slane %v296, %v904
      %v907 = vunpack.c.l.s4 1983009808
      %v908 = vunpack.c.0.s8 %v907
      %v909 = vlaneseq
      %v910 = vshrl.u32 %v909, 7
      %v911 = vsub.s32 %v908, %v910
      %v912 = vrot.slane %v898, %v911
      %v913 = vcombine.high %v905, %v905
      %v914 = vcombine.high %v912, %v912
      %v915 = vcombine.high %v297, %v297
      %v917 = vunpack.c.l.s4 1983009808
      %v918 = vunpack.c.0.s8 %v917
      %v919 = vlaneseq
      %v920 = vshrl.u32 %v919, 7
      %v921 = vsub.s32 %v918, %v920
      %v922 = vrot.slane %v297, %v921
      %v924 = vunpack.c.l.s4 1983009808
      %v925 = vunpack.c.0.s8 %v924
      %v926 = vlaneseq
      %v927 = vshrl.u32 %v926, 7
      %v928 = vsub.s32 %v925, %v927
      %v929 = vrot.slane %v915, %v928
      %v930 = vcombine.high %v922, %v922
      %v931 = vcombine.high %v929, %v929
      %v933 = vunpack.c.l.s4 1983009808
      %v934 = vunpack.c.0.s8 %v933
      %v935 = vlaneseq
      %v936 = vshrl.u32 %v935, 7
      %v937 = vsub.s32 %v934, %v936
      %v938 = vrot.slane %v298, %v937
      %v939 = vcombine.high %v299, %v299
      %v941 = vunpack.c.l.s4 1983009808
      %v942 = vunpack.c.0.s8 %v941
      %v943 = vlaneseq
      %v944 = vshrl.u32 %v943, 7
      %v945 = vsub.s32 %v942, %v944
      %v946 = vrot.slane %v299, %v945
      %v948 = vunpack.c.l.s4 1983009808
      %v949 = vunpack.c.0.s8 %v948
      %v950 = vlaneseq
      %v951 = vshrl.u32 %v950, 7
      %v952 = vsub.s32 %v949, %v951
      %v953 = vrot.slane %v939, %v952
      %v954 = vcombine.high %v946, %v946
      %v955 = vcombine.high %v953, %v953
      %v956 = vcombine.high %v300, %v300
      %v958 = vunpack.c.l.s4 1983009808
      %v959 = vunpack.c.0.s8 %v958
      %v960 = vlaneseq
      %v961 = vshrl.u32 %v960, 7
      %v962 = vsub.s32 %v959, %v961
      %v963 = vrot.slane %v300, %v962
      %v965 = vunpack.c.l.s4 1983009808
      %v966 = vunpack.c.0.s8 %v965
      %v967 = vlaneseq
      %v968 = vshrl.u32 %v967, 7
      %v969 = vsub.s32 %v966, %v968
      %v970 = vrot.slane %v956, %v969
      %v971 = vcombine.high %v963, %v963
      %v972 = vcombine.high %v970, %v970
      %v974 = vunpack.c.l.s4 1983009808
      %v975 = vunpack.c.0.s8 %v974
      %v976 = vlaneseq
      %v977 = vshrl.u32 %v976, 7
      %v978 = vsub.s32 %v975, %v977
      %v979 = vrot.slane %v301, %v978
      %v980 = vcombine.high %v302, %v302
      %v982 = vunpack.c.l.s4 1983009808
      %v983 = vunpack.c.0.s8 %v982
      %v984 = vlaneseq
      %v985 = vshrl.u32 %v984, 7
      %v986 = vsub.s32 %v983, %v985
      %v987 = vrot.slane %v302, %v986
      %v989 = vunpack.c.l.s4 1983009808
      %v990 = vunpack.c.0.s8 %v989
      %v991 = vlaneseq
      %v992 = vshrl.u32 %v991, 7
      %v993 = vsub.s32 %v990, %v992
      %v994 = vrot.slane %v980, %v993
      %v995 = vcombine.high %v987, %v987
      %v996 = vcombine.high %v994, %v994
      %v997 = vcombine.high %v303, %v303
      %v999 = vunpack.c.l.s4 1983009808
      %v1000 = vunpack.c.0.s8 %v999
      %v1001 = vlaneseq
      %v1002 = vshrl.u32 %v1001, 7
      %v1003 = vsub.s32 %v1000, %v1002
      %v1004 = vrot.slane %v303, %v1003
      %v1006 = vunpack.c.l.s4 1983009808
      %v1007 = vunpack.c.0.s8 %v1006
      %v1008 = vlaneseq
      %v1009 = vshrl.u32 %v1008, 7
      %v1010 = vsub.s32 %v1007, %v1009
      %v1011 = vrot.slane %v997, %v1010
      %v1012 = vcombine.high %v1004, %v1004
      %v1013 = vcombine.high %v1011, %v1011
      %v1015 = vunpack.c.l.s4 1983009808
      %v1016 = vunpack.c.0.s8 %v1015
      %v1017 = vlaneseq
      %v1018 = vshrl.u32 %v1017, 7
      %v1019 = vsub.s32 %v1016, %v1018
      %v1020 = vrot.slane %v304, %v1019
      %v1021 = vcombine.high %v305, %v305
      %v1023 = vunpack.c.l.s4 1983009808
      %v1024 = vunpack.c.0.s8 %v1023
      %v1025 = vlaneseq
      %v1026 = vshrl.u32 %v1025, 7
      %v1027 = vsub.s32 %v1024, %v1026
      %v1028 = vrot.slane %v305, %v1027
      %v1030 = vunpack.c.l.s4 1983009808
      %v1031 = vunpack.c.0.s8 %v1030
      %v1032 = vlaneseq
      %v1033 = vshrl.u32 %v1032, 7
      %v1034 = vsub.s32 %v1031, %v1033
      %v1035 = vrot.slane %v1021, %v1034
      %v1036 = vcombine.high %v1028, %v1028
      %v1037 = vcombine.high %v1035, %v1035
      %v1038 = vcombine.high %v306, %v306
      %v1040 = vunpack.c.l.s4 1983009808
      %v1041 = vunpack.c.0.s8 %v1040
      %v1042 = vlaneseq
      %v1043 = vshrl.u32 %v1042, 7
      %v1044 = vsub.s32 %v1041, %v1043
      %v1045 = vrot.slane %v306, %v1044
      %v1047 = vunpack.c.l.s4 1983009808
      %v1048 = vunpack.c.0.s8 %v1047
      %v1049 = vlaneseq
      %v1050 = vshrl.u32 %v1049, 7
      %v1051 = vsub.s32 %v1048, %v1050
      %v1052 = vrot.slane %v1038, %v1051
      %v1053 = vcombine.high %v1045, %v1045
      %v1054 = vcombine.high %v1052, %v1052
      %v1056 = vunpack.c.l.s4 1983009808
      %v1057 = vunpack.c.0.s8 %v1056
      %v1058 = vlaneseq
      %v1059 = vshrl.u32 %v1058, 7
      %v1060 = vsub.s32 %v1057, %v1059
      %v1061 = vrot.slane %v307, %v1060
      %v1062 = vcombine.high %v308, %v308
      %v1064 = vunpack.c.l.s4 1983009808
      %v1065 = vunpack.c.0.s8 %v1064
      %v1066 = vlaneseq
      %v1067 = vshrl.u32 %v1066, 7
      %v1068 = vsub.s32 %v1065, %v1067
      %v1069 = vrot.slane %v308, %v1068
      %v1071 = vunpack.c.l.s4 1983009808
      %v1072 = vunpack.c.0.s8 %v1071
      %v1073 = vlaneseq
      %v1074 = vshrl.u32 %v1073, 7
      %v1075 = vsub.s32 %v1072, %v1074
      %v1076 = vrot.slane %v1062, %v1075
      %v1077 = vcombine.high %v1069, %v1069
      %v1078 = vcombine.high %v1076, %v1076
      %v1079 = vcombine.high %v309, %v309
      %v1081 = vunpack.c.l.s4 1983009808
      %v1082 = vunpack.c.0.s8 %v1081
      %v1083 = vlaneseq
      %v1084 = vshrl.u32 %v1083, 7
      %v1085 = vsub.s32 %v1082, %v1084
      %v1086 = vrot.slane %v309, %v1085
      %v1088 = vunpack.c.l.s4 1983009808
      %v1089 = vunpack.c.0.s8 %v1088
      %v1090 = vlaneseq
      %v1091 = vshrl.u32 %v1090, 7
      %v1092 = vsub.s32 %v1089, %v1091
      %v1093 = vrot.slane %v1079, %v1092
      %v1094 = vcombine.high %v1086, %v1086
      %v1095 = vcombine.high %v1093, %v1093
      %v1097 = vunpack.c.l.s4 1983009808
      %v1098 = vunpack.c.0.s8 %v1097
      %v1099 = vlaneseq
      %v1100 = vshrl.u32 %v1099, 7
      %v1101 = vsub.s32 %v1098, %v1100
      %v1102 = vrot.slane %v310, %v1101
      %v1103 = vld [vmem:[%s1] sm:$0xf]
      %v1104 = vld [vmem:[%s2] sm:$0x1]
      %v1106 = vlaneseq
      %v1107 = vshrl.u32 %v1106, 7
      %v1108 = vsub.s32 0, %v1107
      %v1109 = vrot.slane %v1104, %v1108
      %v1111 = vcombine.low %v372, %v380
      %v1112 = vcombine.low %v379, %v381
      %v1114 = vunpack.c.l.s4 1983009808
      %v1115 = vunpack.c.0.s8 %v1114
      %v1116 = vlaneseq
      %v1117 = vshrl.u32 %v1116, 7
      %v1118 = vsub.s32 %v1115, %v1117
      %v1119 = vrot.slane %v1111, %v1118
      %v1121 = vunpack.c.l.s4 1983009808
      %v1122 = vunpack.c.0.s8 %v1121
      %v1123 = vlaneseq
      %v1124 = vshrl.u32 %v1123, 7
      %v1125 = vsub.s32 %v1122, %v1124
      %v1126 = vrot.slane %v1112, %v1125
      %v1127 = vcombine.low %v1119, %v1126
      %v1128 = vcombine.low %v389, %v397
      %v1129 = vcombine.low %v396, %v398
      %v1131 = vunpack.c.l.s4 1983009808
      %v1132 = vunpack.c.0.s8 %v1131
      %v1133 = vlaneseq
      %v1134 = vshrl.u32 %v1133, 7
      %v1135 = vsub.s32 %v1132, %v1134
      %v1136 = vrot.slane %v1128, %v1135
      %v1138 = vunpack.c.l.s4 1983009808
      %v1139 = vunpack.c.0.s8 %v1138
      %v1140 = vlaneseq
      %v1141 = vshrl.u32 %v1140, 7
      %v1142 = vsub.s32 %v1139, %v1141
      %v1143 = vrot.slane %v1129, %v1142
      %v1144 = vcombine.low %v1136, %v1143
      %v1145 = vcombine.low %v405, %v413
      %v1146 = vcombine.low %v421, %v420
      %v1148 = vunpack.c.l.s4 1983009808
      %v1149 = vunpack.c.0.s8 %v1148
      %v1150 = vlaneseq
      %v1151 = vshrl.u32 %v1150, 7
      %v1152 = vsub.s32 %v1149, %v1151
      %v1153 = vrot.slane %v1145, %v1152
      %v1155 = vunpack.c.l.s4 1983009808
      %v1156 = vunpack.c.0.s8 %v1155
      %v1157 = vlaneseq
      %v1158 = vshrl.u32 %v1157, 7
      %v1159 = vsub.s32 %v1156, %v1158
      %v1160 = vrot.slane %v1146, %v1159
      %v1161 = vcombine.low %v1153, %v1160
      %v1162 = vcombine.low %v422, %v430
      %v1163 = vcombine.low %v438, %v437
      %v1165 = vunpack.c.l.s4 1983009808
      %v1166 = vunpack.c.0.s8 %v1165
      %v1167 = vlaneseq
      %v1168 = vshrl.u32 %v1167, 7
      %v1169 = vsub.s32 %v1166, %v1168
      %v1170 = vrot.slane %v1162, %v1169
      %v1172 = vunpack.c.l.s4 1983009808
      %v1173 = vunpack.c.0.s8 %v1172
      %v1174 = vlaneseq
      %v1175 = vshrl.u32 %v1174, 7
      %v1176 = vsub.s32 %v1173, %v1175
      %v1177 = vrot.slane %v1163, %v1176
      %v1178 = vcombine.low %v1170, %v1177
      %v1179 = vcombine.low %v439, %v446
      %v1180 = vcombine.low %v454, %v462
      %v1182 = vunpack.c.l.s4 1983009808
      %v1183 = vunpack.c.0.s8 %v1182
      %v1184 = vlaneseq
      %v1185 = vshrl.u32 %v1184, 7
      %v1186 = vsub.s32 %v1183, %v1185
      %v1187 = vrot.slane %v1179, %v1186
      %v1189 = vunpack.c.l.s4 1983009808
      %v1190 = vunpack.c.0.s8 %v1189
      %v1191 = vlaneseq
      %v1192 = vshrl.u32 %v1191, 7
      %v1193 = vsub.s32 %v1190, %v1192
      %v1194 = vrot.slane %v1180, %v1193
      %v1195 = vcombine.low %v1187, %v1194
      %v1196 = vcombine.low %v461, %v463
      %v1197 = vcombine.low %v471, %v479
      %v1199 = vunpack.c.l.s4 1983009808
      %v1200 = vunpack.c.0.s8 %v1199
      %v1201 = vlaneseq
      %v1202 = vshrl.u32 %v1201, 7
      %v1203 = vsub.s32 %v1200, %v1202
      %v1204 = vrot.slane %v1196, %v1203
      %v1206 = vunpack.c.l.s4 1983009808
      %v1207 = vunpack.c.0.s8 %v1206
      %v1208 = vlaneseq
      %v1209 = vshrl.u32 %v1208, 7
      %v1210 = vsub.s32 %v1207, %v1209
      %v1211 = vrot.slane %v1197, %v1210
      %v1212 = vcombine.low %v1204, %v1211
      %v1213 = vcombine.low %v478, %v480
      %v1214 = vcombine.low %v487, %v495
      %v1216 = vunpack.c.l.s4 1983009808
      %v1217 = vunpack.c.0.s8 %v1216
      %v1218 = vlaneseq
      %v1219 = vshrl.u32 %v1218, 7
      %v1220 = vsub.s32 %v1217, %v1219
      %v1221 = vrot.slane %v1213, %v1220
      %v1223 = vunpack.c.l.s4 1983009808
      %v1224 = vunpack.c.0.s8 %v1223
      %v1225 = vlaneseq
      %v1226 = vshrl.u32 %v1225, 7
      %v1227 = vsub.s32 %v1224, %v1226
      %v1228 = vrot.slane %v1214, %v1227
      %v1229 = vcombine.low %v1221, %v1228
      %v1230 = vcombine.low %v503, %v502
      %v1231 = vcombine.low %v504, %v512
      %v1233 = vunpack.c.l.s4 1983009808
      %v1234 = vunpack.c.0.s8 %v1233
      %v1235 = vlaneseq
      %v1236 = vshrl.u32 %v1235, 7
      %v1237 = vsub.s32 %v1234, %v1236
      %v1238 = vrot.slane %v1230, %v1237
      %v1240 = vunpack.c.l.s4 1983009808
      %v1241 = vunpack.c.0.s8 %v1240
      %v1242 = vlaneseq
      %v1243 = vshrl.u32 %v1242, 7
      %v1244 = vsub.s32 %v1241, %v1243
      %v1245 = vrot.slane %v1231, %v1244
      %v1246 = vcombine.low %v1238, %v1245
      %v1247 = vcombine.low %v520, %v519
      %v1248 = vcombine.low %v521, %v528
      %v1250 = vunpack.c.l.s4 1983009808
      %v1251 = vunpack.c.0.s8 %v1250
      %v1252 = vlaneseq
      %v1253 = vshrl.u32 %v1252, 7
      %v1254 = vsub.s32 %v1251, %v1253
      %v1255 = vrot.slane %v1247, %v1254
      %v1257 = vunpack.c.l.s4 1983009808
      %v1258 = vunpack.c.0.s8 %v1257
      %v1259 = vlaneseq
      %v1260 = vshrl.u32 %v1259, 7
      %v1261 = vsub.s32 %v1258, %v1260
      %v1262 = vrot.slane %v1248, %v1261
      %v1263 = vcombine.low %v1255, %v1262
      %v1264 = vcombine.low %v536, %v544
      %v1265 = vcombine.low %v543, %v545
      %v1267 = vunpack.c.l.s4 1983009808
      %v1268 = vunpack.c.0.s8 %v1267
      %v1269 = vlaneseq
      %v1270 = vshrl.u32 %v1269, 7
      %v1271 = vsub.s32 %v1268, %v1270
      %v1272 = vrot.slane %v1264, %v1271
      %v1274 = vunpack.c.l.s4 1983009808
      %v1275 = vunpack.c.0.s8 %v1274
      %v1276 = vlaneseq
      %v1277 = vshrl.u32 %v1276, 7
      %v1278 = vsub.s32 %v1275, %v1277
      %v1279 = vrot.slane %v1265, %v1278
      %v1280 = vcombine.low %v1272, %v1279
      %v1281 = vcombine.low %v553, %v561
      %v1282 = vcombine.low %v560, %v562
      %v1284 = vunpack.c.l.s4 1983009808
      %v1285 = vunpack.c.0.s8 %v1284
      %v1286 = vlaneseq
      %v1287 = vshrl.u32 %v1286, 7
      %v1288 = vsub.s32 %v1285, %v1287
      %v1289 = vrot.slane %v1281, %v1288
      %v1291 = vunpack.c.l.s4 1983009808
      %v1292 = vunpack.c.0.s8 %v1291
      %v1293 = vlaneseq
      %v1294 = vshrl.u32 %v1293, 7
      %v1295 = vsub.s32 %v1292, %v1294
      %v1296 = vrot.slane %v1282, %v1295
      %v1297 = vcombine.low %v1289, %v1296
      %v1298 = vcombine.low %v569, %v577
      %v1299 = vcombine.low %v585, %v584
      %v1301 = vunpack.c.l.s4 1983009808
      %v1302 = vunpack.c.0.s8 %v1301
      %v1303 = vlaneseq
      %v1304 = vshrl.u32 %v1303, 7
      %v1305 = vsub.s32 %v1302, %v1304
      %v1306 = vrot.slane %v1298, %v1305
      %v1308 = vunpack.c.l.s4 1983009808
      %v1309 = vunpack.c.0.s8 %v1308
      %v1310 = vlaneseq
      %v1311 = vshrl.u32 %v1310, 7
      %v1312 = vsub.s32 %v1309, %v1311
      %v1313 = vrot.slane %v1299, %v1312
      %v1314 = vcombine.low %v1306, %v1313
      %v1315 = vcombine.low %v586, %v594
      %v1316 = vcombine.low %v602, %v601
      %v1318 = vunpack.c.l.s4 1983009808
      %v1319 = vunpack.c.0.s8 %v1318
      %v1320 = vlaneseq
      %v1321 = vshrl.u32 %v1320, 7
      %v1322 = vsub.s32 %v1319, %v1321
      %v1323 = vrot.slane %v1315, %v1322
      %v1325 = vunpack.c.l.s4 1983009808
      %v1326 = vunpack.c.0.s8 %v1325
      %v1327 = vlaneseq
      %v1328 = vshrl.u32 %v1327, 7
      %v1329 = vsub.s32 %v1326, %v1328
      %v1330 = vrot.slane %v1316, %v1329
      %v1331 = vcombine.low %v1323, %v1330
      %v1332 = vcombine.low %v603, %v610
      %v1333 = vcombine.low %v618, %v626
      %v1335 = vunpack.c.l.s4 1983009808
      %v1336 = vunpack.c.0.s8 %v1335
      %v1337 = vlaneseq
      %v1338 = vshrl.u32 %v1337, 7
      %v1339 = vsub.s32 %v1336, %v1338
      %v1340 = vrot.slane %v1332, %v1339
      %v1342 = vunpack.c.l.s4 1983009808
      %v1343 = vunpack.c.0.s8 %v1342
      %v1344 = vlaneseq
      %v1345 = vshrl.u32 %v1344, 7
      %v1346 = vsub.s32 %v1343, %v1345
      %v1347 = vrot.slane %v1333, %v1346
      %v1348 = vcombine.low %v1340, %v1347
      %v1349 = vcombine.low %v625, %v627
      %v1350 = vcombine.low %v635, %v643
      %v1352 = vunpack.c.l.s4 1983009808
      %v1353 = vunpack.c.0.s8 %v1352
      %v1354 = vlaneseq
      %v1355 = vshrl.u32 %v1354, 7
      %v1356 = vsub.s32 %v1353, %v1355
      %v1357 = vrot.slane %v1349, %v1356
      %v1359 = vunpack.c.l.s4 1983009808
      %v1360 = vunpack.c.0.s8 %v1359
      %v1361 = vlaneseq
      %v1362 = vshrl.u32 %v1361, 7
      %v1363 = vsub.s32 %v1360, %v1362
      %v1364 = vrot.slane %v1350, %v1363
      %v1365 = vcombine.low %v1357, %v1364
      %v1366 = vcombine.low %v642, %v644
      %v1367 = vcombine.low %v651, %v659
      %v1369 = vunpack.c.l.s4 1983009808
      %v1370 = vunpack.c.0.s8 %v1369
      %v1371 = vlaneseq
      %v1372 = vshrl.u32 %v1371, 7
      %v1373 = vsub.s32 %v1370, %v1372
      %v1374 = vrot.slane %v1366, %v1373
      %v1376 = vunpack.c.l.s4 1983009808
      %v1377 = vunpack.c.0.s8 %v1376
      %v1378 = vlaneseq
      %v1379 = vshrl.u32 %v1378, 7
      %v1380 = vsub.s32 %v1377, %v1379
      %v1381 = vrot.slane %v1367, %v1380
      %v1382 = vcombine.low %v1374, %v1381
      %v1383 = vcombine.low %v667, %v666
      %v1384 = vcombine.low %v668, %v676
      %v1386 = vunpack.c.l.s4 1983009808
      %v1387 = vunpack.c.0.s8 %v1386
      %v1388 = vlaneseq
      %v1389 = vshrl.u32 %v1388, 7
      %v1390 = vsub.s32 %v1387, %v1389
      %v1391 = vrot.slane %v1383, %v1390
      %v1393 = vunpack.c.l.s4 1983009808
      %v1394 = vunpack.c.0.s8 %v1393
      %v1395 = vlaneseq
      %v1396 = vshrl.u32 %v1395, 7
      %v1397 = vsub.s32 %v1394, %v1396
      %v1398 = vrot.slane %v1384, %v1397
      %v1399 = vcombine.low %v1391, %v1398
      %v1400 = vcombine.low %v684, %v683
      %v1401 = vcombine.low %v685, %v692
      %v1403 = vunpack.c.l.s4 1983009808
      %v1404 = vunpack.c.0.s8 %v1403
      %v1405 = vlaneseq
      %v1406 = vshrl.u32 %v1405, 7
      %v1407 = vsub.s32 %v1404, %v1406
      %v1408 = vrot.slane %v1400, %v1407
      %v1410 = vunpack.c.l.s4 1983009808
      %v1411 = vunpack.c.0.s8 %v1410
      %v1412 = vlaneseq
      %v1413 = vshrl.u32 %v1412, 7
      %v1414 = vsub.s32 %v1411, %v1413
      %v1415 = vrot.slane %v1401, %v1414
      %v1416 = vcombine.low %v1408, %v1415
      %v1417 = vcombine.low %v700, %v708
      %v1418 = vcombine.low %v707, %v709
      %v1420 = vunpack.c.l.s4 1983009808
      %v1421 = vunpack.c.0.s8 %v1420
      %v1422 = vlaneseq
      %v1423 = vshrl.u32 %v1422, 7
      %v1424 = vsub.s32 %v1421, %v1423
      %v1425 = vrot.slane %v1417, %v1424
      %v1427 = vunpack.c.l.s4 1983009808
      %v1428 = vunpack.c.0.s8 %v1427
      %v1429 = vlaneseq
      %v1430 = vshrl.u32 %v1429, 7
      %v1431 = vsub.s32 %v1428, %v1430
      %v1432 = vrot.slane %v1418, %v1431
      %v1433 = vcombine.low %v1425, %v1432
      %v1434 = vcombine.low %v717, %v725
      %v1435 = vcombine.low %v724, %v726
      %v1437 = vunpack.c.l.s4 1983009808
      %v1438 = vunpack.c.0.s8 %v1437
      %v1439 = vlaneseq
      %v1440 = vshrl.u32 %v1439, 7
      %v1441 = vsub.s32 %v1438, %v1440
      %v1442 = vrot.slane %v1434, %v1441
      %v1444 = vunpack.c.l.s4 1983009808
      %v1445 = vunpack.c.0.s8 %v1444
      %v1446 = vlaneseq
      %v1447 = vshrl.u32 %v1446, 7
      %v1448 = vsub.s32 %v1445, %v1447
      %v1449 = vrot.slane %v1435, %v1448
      %v1450 = vcombine.low %v1442, %v1449
      %v1451 = vcombine.low %v733, %v741
      %v1452 = vcombine.low %v749, %v748
      %v1454 = vunpack.c.l.s4 1983009808
      %v1455 = vunpack.c.0.s8 %v1454
      %v1456 = vlaneseq
      %v1457 = vshrl.u32 %v1456, 7
      %v1458 = vsub.s32 %v1455, %v1457
      %v1459 = vrot.slane %v1451, %v1458
      %v1461 = vunpack.c.l.s4 1983009808
      %v1462 = vunpack.c.0.s8 %v1461
      %v1463 = vlaneseq
      %v1464 = vshrl.u32 %v1463, 7
      %v1465 = vsub.s32 %v1462, %v1464
      %v1466 = vrot.slane %v1452, %v1465
      %v1467 = vcombine.low %v1459, %v1466
      %v1468 = vcombine.low %v750, %v758
      %v1469 = vcombine.low %v766, %v765
      %v1471 = vunpack.c.l.s4 1983009808
      %v1472 = vunpack.c.0.s8 %v1471
      %v1473 = vlaneseq
      %v1474 = vshrl.u32 %v1473, 7
      %v1475 = vsub.s32 %v1472, %v1474
      %v1476 = vrot.slane %v1468, %v1475
      %v1478 = vunpack.c.l.s4 1983009808
      %v1479 = vunpack.c.0.s8 %v1478
      %v1480 = vlaneseq
      %v1481 = vshrl.u32 %v1480, 7
      %v1482 = vsub.s32 %v1479, %v1481
      %v1483 = vrot.slane %v1469, %v1482
      %v1484 = vcombine.low %v1476, %v1483
      %v1485 = vcombine.low %v767, %v774
      %v1486 = vcombine.low %v782, %v790
      %v1488 = vunpack.c.l.s4 1983009808
      %v1489 = vunpack.c.0.s8 %v1488
      %v1490 = vlaneseq
      %v1491 = vshrl.u32 %v1490, 7
      %v1492 = vsub.s32 %v1489, %v1491
      %v1493 = vrot.slane %v1485, %v1492
      %v1495 = vunpack.c.l.s4 1983009808
      %v1496 = vunpack.c.0.s8 %v1495
      %v1497 = vlaneseq
      %v1498 = vshrl.u32 %v1497, 7
      %v1499 = vsub.s32 %v1496, %v1498
      %v1500 = vrot.slane %v1486, %v1499
      %v1501 = vcombine.low %v1493, %v1500
      %v1502 = vcombine.low %v789, %v791
      %v1503 = vcombine.low %v799, %v807
      %v1505 = vunpack.c.l.s4 1983009808
      %v1506 = vunpack.c.0.s8 %v1505
      %v1507 = vlaneseq
      %v1508 = vshrl.u32 %v1507, 7
      %v1509 = vsub.s32 %v1506, %v1508
      %v1510 = vrot.slane %v1502, %v1509
      %v1512 = vunpack.c.l.s4 1983009808
      %v1513 = vunpack.c.0.s8 %v1512
      %v1514 = vlaneseq
      %v1515 = vshrl.u32 %v1514, 7
      %v1516 = vsub.s32 %v1513, %v1515
      %v1517 = vrot.slane %v1503, %v1516
      %v1518 = vcombine.low %v1510, %v1517
      %v1519 = vcombine.low %v806, %v808
      %v1520 = vcombine.low %v815, %v823
      %v1522 = vunpack.c.l.s4 1983009808
      %v1523 = vunpack.c.0.s8 %v1522
      %v1524 = vlaneseq
      %v1525 = vshrl.u32 %v1524, 7
      %v1526 = vsub.s32 %v1523, %v1525
      %v1527 = vrot.slane %v1519, %v1526
      %v1529 = vunpack.c.l.s4 1983009808
      %v1530 = vunpack.c.0.s8 %v1529
      %v1531 = vlaneseq
      %v1532 = vshrl.u32 %v1531, 7
      %v1533 = vsub.s32 %v1530, %v1532
      %v1534 = vrot.slane %v1520, %v1533
      %v1535 = vcombine.low %v1527, %v1534
      %v1536 = vcombine.low %v831, %v830
      %v1537 = vcombine.low %v832, %v840
      %v1539 = vunpack.c.l.s4 1983009808
      %v1540 = vunpack.c.0.s8 %v1539
      %v1541 = vlaneseq
      %v1542 = vshrl.u32 %v1541, 7
      %v1543 = vsub.s32 %v1540, %v1542
      %v1544 = vrot.slane %v1536, %v1543
      %v1546 = vunpack.c.l.s4 1983009808
      %v1547 = vunpack.c.0.s8 %v1546
      %v1548 = vlaneseq
      %v1549 = vshrl.u32 %v1548, 7
      %v1550 = vsub.s32 %v1547, %v1549
      %v1551 = vrot.slane %v1537, %v1550
      %v1552 = vcombine.low %v1544, %v1551
      %v1553 = vcombine.low %v848, %v847
      %v1554 = vcombine.low %v849, %v856
      %v1556 = vunpack.c.l.s4 1983009808
      %v1557 = vunpack.c.0.s8 %v1556
      %v1558 = vlaneseq
      %v1559 = vshrl.u32 %v1558, 7
      %v1560 = vsub.s32 %v1557, %v1559
      %v1561 = vrot.slane %v1553, %v1560
      %v1563 = vunpack.c.l.s4 1983009808
      %v1564 = vunpack.c.0.s8 %v1563
      %v1565 = vlaneseq
      %v1566 = vshrl.u32 %v1565, 7
      %v1567 = vsub.s32 %v1564, %v1566
      %v1568 = vrot.slane %v1554, %v1567
      %v1569 = vcombine.low %v1561, %v1568
      %v1570 = vcombine.low %v864, %v872
      %v1571 = vcombine.low %v871, %v873
      %v1573 = vunpack.c.l.s4 1983009808
      %v1574 = vunpack.c.0.s8 %v1573
      %v1575 = vlaneseq
      %v1576 = vshrl.u32 %v1575, 7
      %v1577 = vsub.s32 %v1574, %v1576
      %v1578 = vrot.slane %v1570, %v1577
      %v1580 = vunpack.c.l.s4 1983009808
      %v1581 = vunpack.c.0.s8 %v1580
      %v1582 = vlaneseq
      %v1583 = vshrl.u32 %v1582, 7
      %v1584 = vsub.s32 %v1581, %v1583
      %v1585 = vrot.slane %v1571, %v1584
      %v1586 = vcombine.low %v1578, %v1585
      %v1587 = vcombine.low %v881, %v889
      %v1588 = vcombine.low %v888, %v890
      %v1590 = vunpack.c.l.s4 1983009808
      %v1591 = vunpack.c.0.s8 %v1590
      %v1592 = vlaneseq
      %v1593 = vshrl.u32 %v1592, 7
      %v1594 = vsub.s32 %v1591, %v1593
      %v1595 = vrot.slane %v1587, %v1594
      %v1597 = vunpack.c.l.s4 1983009808
      %v1598 = vunpack.c.0.s8 %v1597
      %v1599 = vlaneseq
      %v1600 = vshrl.u32 %v1599, 7
      %v1601 = vsub.s32 %v1598, %v1600
      %v1602 = vrot.slane %v1588, %v1601
      %v1603 = vcombine.low %v1595, %v1602
      %v1604 = vcombine.low %v897, %v905
      %v1605 = vcombine.low %v913, %v912
      %v1607 = vunpack.c.l.s4 1983009808
      %v1608 = vunpack.c.0.s8 %v1607
      %v1609 = vlaneseq
      %v1610 = vshrl.u32 %v1609, 7
      %v1611 = vsub.s32 %v1608, %v1610
      %v1612 = vrot.slane %v1604, %v1611
      %v1614 = vunpack.c.l.s4 1983009808
      %v1615 = vunpack.c.0.s8 %v1614
      %v1616 = vlaneseq
      %v1617 = vshrl.u32 %v1616, 7
      %v1618 = vsub.s32 %v1615, %v1617
      %v1619 = vrot.slane %v1605, %v1618
      %v1620 = vcombine.low %v1612, %v1619
      %v1621 = vcombine.low %v914, %v922
      %v1622 = vcombine.low %v930, %v929
      %v1624 = vunpack.c.l.s4 1983009808
      %v1625 = vunpack.c.0.s8 %v1624
      %v1626 = vlaneseq
      %v1627 = vshrl.u32 %v1626, 7
      %v1628 = vsub.s32 %v1625, %v1627
      %v1629 = vrot.slane %v1621, %v1628
      %v1631 = vunpack.c.l.s4 1983009808
      %v1632 = vunpack.c.0.s8 %v1631
      %v1633 = vlaneseq
      %v1634 = vshrl.u32 %v1633, 7
      %v1635 = vsub.s32 %v1632, %v1634
      %v1636 = vrot.slane %v1622, %v1635
      %v1637 = vcombine.low %v1629, %v1636
      %v1638 = vcombine.low %v931, %v938
      %v1639 = vcombine.low %v946, %v954
      %v1641 = vunpack.c.l.s4 1983009808
      %v1642 = vunpack.c.0.s8 %v1641
      %v1643 = vlaneseq
      %v1644 = vshrl.u32 %v1643, 7
      %v1645 = vsub.s32 %v1642, %v1644
      %v1646 = vrot.slane %v1638, %v1645
      %v1648 = vunpack.c.l.s4 1983009808
      %v1649 = vunpack.c.0.s8 %v1648
      %v1650 = vlaneseq
      %v1651 = vshrl.u32 %v1650, 7
      %v1652 = vsub.s32 %v1649, %v1651
      %v1653 = vrot.slane %v1639, %v1652
      %v1654 = vcombine.low %v1646, %v1653
      %v1655 = vcombine.low %v953, %v955
      %v1656 = vcombine.low %v963, %v971
      %v1658 = vunpack.c.l.s4 1983009808
      %v1659 = vunpack.c.0.s8 %v1658
      %v1660 = vlaneseq
      %v1661 = vshrl.u32 %v1660, 7
      %v1662 = vsub.s32 %v1659, %v1661
      %v1663 = vrot.slane %v1655, %v1662
      %v1665 = vunpack.c.l.s4 1983009808
      %v1666 = vunpack.c.0.s8 %v1665
      %v1667 = vlaneseq
      %v1668 = vshrl.u32 %v1667, 7
      %v1669 = vsub.s32 %v1666, %v1668
      %v1670 = vrot.slane %v1656, %v1669
      %v1671 = vcombine.low %v1663, %v1670
      %v1672 = vcombine.low %v970, %v972
      %v1673 = vcombine.low %v979, %v987
      %v1675 = vunpack.c.l.s4 1983009808
      %v1676 = vunpack.c.0.s8 %v1675
      %v1677 = vlaneseq
      %v1678 = vshrl.u32 %v1677, 7
      %v1679 = vsub.s32 %v1676, %v1678
      %v1680 = vrot.slane %v1672, %v1679
      %v1682 = vunpack.c.l.s4 1983009808
      %v1683 = vunpack.c.0.s8 %v1682
      %v1684 = vlaneseq
      %v1685 = vshrl.u32 %v1684, 7
      %v1686 = vsub.s32 %v1683, %v1685
      %v1687 = vrot.slane %v1673, %v1686
      %v1688 = vcombine.low %v1680, %v1687
      %v1689 = vcombine.low %v995, %v994
      %v1690 = vcombine.low %v996, %v1004
      %v1692 = vunpack.c.l.s4 1983009808
      %v1693 = vunpack.c.0.s8 %v1692
      %v1694 = vlaneseq
      %v1695 = vshrl.u32 %v1694, 7
      %v1696 = vsub.s32 %v1693, %v1695
      %v1697 = vrot.slane %v1689, %v1696
      %v1699 = vunpack.c.l.s4 1983009808
      %v1700 = vunpack.c.0.s8 %v1699
      %v1701 = vlaneseq
      %v1702 = vshrl.u32 %v1701, 7
      %v1703 = vsub.s32 %v1700, %v1702
      %v1704 = vrot.slane %v1690, %v1703
      %v1705 = vcombine.low %v1697, %v1704
      %v1706 = vcombine.low %v1012, %v1011
      %v1707 = vcombine.low %v1013, %v1020
      %v1709 = vunpack.c.l.s4 1983009808
      %v1710 = vunpack.c.0.s8 %v1709
      %v1711 = vlaneseq
      %v1712 = vshrl.u32 %v1711, 7
      %v1713 = vsub.s32 %v1710, %v1712
      %v1714 = vrot.slane %v1706, %v1713
      %v1716 = vunpack.c.l.s4 1983009808
      %v1717 = vunpack.c.0.s8 %v1716
      %v1718 = vlaneseq
      %v1719 = vshrl.u32 %v1718, 7
      %v1720 = vsub.s32 %v1717, %v1719
      %v1721 = vrot.slane %v1707, %v1720
      %v1722 = vcombine.low %v1714, %v1721
      %v1723 = vcombine.low %v1028, %v1036
      %v1724 = vcombine.low %v1035, %v1037
      %v1726 = vunpack.c.l.s4 1983009808
      %v1727 = vunpack.c.0.s8 %v1726
      %v1728 = vlaneseq
      %v1729 = vshrl.u32 %v1728, 7
      %v1730 = vsub.s32 %v1727, %v1729
      %v1731 = vrot.slane %v1723, %v1730
      %v1733 = vunpack.c.l.s4 1983009808
      %v1734 = vunpack.c.0.s8 %v1733
      %v1735 = vlaneseq
      %v1736 = vshrl.u32 %v1735, 7
      %v1737 = vsub.s32 %v1734, %v1736
      %v1738 = vrot.slane %v1724, %v1737
      %v1739 = vcombine.low %v1731, %v1738
      %v1740 = vcombine.low %v1045, %v1053
      %v1741 = vcombine.low %v1052, %v1054
      %v1743 = vunpack.c.l.s4 1983009808
      %v1744 = vunpack.c.0.s8 %v1743
      %v1745 = vlaneseq
      %v1746 = vshrl.u32 %v1745, 7
      %v1747 = vsub.s32 %v1744, %v1746
      %v1748 = vrot.slane %v1740, %v1747
      %v1750 = vunpack.c.l.s4 1983009808
      %v1751 = vunpack.c.0.s8 %v1750
      %v1752 = vlaneseq
      %v1753 = vshrl.u32 %v1752, 7
      %v1754 = vsub.s32 %v1751, %v1753
      %v1755 = vrot.slane %v1741, %v1754
      %v1756 = vcombine.low %v1748, %v1755
      %v1757 = vcombine.low %v1061, %v1069
      %v1758 = vcombine.low %v1077, %v1076
      %v1760 = vunpack.c.l.s4 1983009808
      %v1761 = vunpack.c.0.s8 %v1760
      %v1762 = vlaneseq
      %v1763 = vshrl.u32 %v1762, 7
      %v1764 = vsub.s32 %v1761, %v1763
      %v1765 = vrot.slane %v1757, %v1764
      %v1767 = vunpack.c.l.s4 1983009808
      %v1768 = vunpack.c.0.s8 %v1767
      %v1769 = vlaneseq
      %v1770 = vshrl.u32 %v1769, 7
      %v1771 = vsub.s32 %v1768, %v1770
      %v1772 = vrot.slane %v1758, %v1771
      %v1773 = vcombine.low %v1765, %v1772
      %v1774 = vcombine.low %v1078, %v1086
      %v1775 = vcombine.low %v1094, %v1093
      %v1777 = vunpack.c.l.s4 1983009808
      %v1778 = vunpack.c.0.s8 %v1777
      %v1779 = vlaneseq
      %v1780 = vshrl.u32 %v1779, 7
      %v1781 = vsub.s32 %v1778, %v1780
      %v1782 = vrot.slane %v1774, %v1781
      %v1784 = vunpack.c.l.s4 1983009808
      %v1785 = vunpack.c.0.s8 %v1784
      %v1786 = vlaneseq
      %v1787 = vshrl.u32 %v1786, 7
      %v1788 = vsub.s32 %v1785, %v1787
      %v1789 = vrot.slane %v1775, %v1788
      %v1790 = vcombine.low %v1782, %v1789
      %v1791 = vcombine.low %v1095, %v1102
      %v1793 = vunpack.c.l.s4 1983009808
      %v1794 = vunpack.c.0.s8 %v1793
      %v1795 = vlaneseq
      %v1796 = vshrl.u32 %v1795, 7
      %v1797 = vsub.s32 %v1794, %v1796
      %v1798 = vrot.slane %v1791, %v1797
      %vm1799 = vcmask 31744
      %v1800 = vsel %vm1799, %v1127, 0
      %v1802 = vsel %vm1799, %v1144, 0
      %v1804 = vsel %vm1799, %v1161, 0
      %v1806 = vsel %vm1799, %v1178, 0
      %v1808 = vsel %vm1799, %v1195, 0
      %v1810 = vsel %vm1799, %v1212, 0
      %v1812 = vsel %vm1799, %v1229, 0
      %v1814 = vsel %vm1799, %v1246, 0
      %v1816 = vsel %vm1799, %v1263, 0
      %v1818 = vsel %vm1799, %v1280, 0
      %v1820 = vsel %vm1799, %v1297, 0
      %v1822 = vsel %vm1799, %v1314, 0
      %v1824 = vsel %vm1799, %v1331, 0
      %v1826 = vsel %vm1799, %v1348, 0
      %v1828 = vsel %vm1799, %v1365, 0
      %v1830 = vsel %vm1799, %v1382, 0
      %v1832 = vsel %vm1799, %v1399, 0
      %v1834 = vsel %vm1799, %v1416, 0
      %v1836 = vsel %vm1799, %v1433, 0
      %v1838 = vsel %vm1799, %v1450, 0
      %v1840 = vsel %vm1799, %v1467, 0
      %v1842 = vsel %vm1799, %v1484, 0
      %v1844 = vsel %vm1799, %v1501, 0
      %v1846 = vsel %vm1799, %v1518, 0
      %v1848 = vsel %vm1799, %v1535, 0
      %v1850 = vsel %vm1799, %v1552, 0
      %v1852 = vsel %vm1799, %v1569, 0
      %v1854 = vsel %vm1799, %v1586, 0
      %v1856 = vsel %vm1799, %v1603, 0
      %v1858 = vsel %vm1799, %v1620, 0
      %v1860 = vsel %vm1799, %v1637, 0
      %v1862 = vsel %vm1799, %v1654, 0
      %v1864 = vsel %vm1799, %v1671, 0
      %v1866 = vsel %vm1799, %v1688, 0
      %v1868 = vsel %vm1799, %v1705, 0
      %v1870 = vsel %vm1799, %v1722, 0
      %v1872 = vsel %vm1799, %v1739, 0
      %v1874 = vsel %vm1799, %v1756, 0
      %v1876 = vsel %vm1799, %v1773, 0
      %v1878 = vsel %vm1799, %v1790, 0
      %v1880 = vsel %vm1799, %v1798, 0
      %vm1882 = vcmask 1043456
      %v1884 = vsel %vm1882, %v1103, 0
      %1886 = vmatprep.subr.mxu0 0.0
      %1887 = vmatpush1.msra.mxu0 %v1884
      %1888 = vmatprep.subr.mxu0 0.0
      %1889 = vmatpush1.msra.mxu0 0.0
      %1890 = vmatprep.subr.mxu0 0.0
      %1891 = vmatpush1.msra.mxu0 0.0
      %1892 = vmatprep.subr.mxu0 0.0
      %1893 = vmatpush1.msra.mxu0 0.0
      %1894 = vmatprep.subr.mxu0 0.0
      %1895 = vmatpush1.msra.mxu0 0.0
      %1896 = vmatprep.subr.mxu0 0.0
      %1897 = vmatpush1.msra.mxu0 0.0
      %1898 = vmatprep.subr.mxu0 0.0
      %1899 = vmatpush1.msra.mxu0 0.0
      %1900 = vmatprep.subr.mxu0 0.0
      %1901 = vmatpush1.msra.mxu0 0.0
      %1902 = vmatprep.subr.mxu0 0.0
      %1903 = vmatpush1.msra.mxu0 0.0
      %1904 = vmatprep.subr.mxu0 0.0
      %1905 = vmatpush1.msra.mxu0 0.0
      %1906 = vmatprep.subr.mxu0 0.0
      %1907 = vmatpush1.msra.mxu0 0.0
      %1908 = vmatprep.subr.mxu0 0.0
      %1909 = vmatpush1.msra.mxu0 0.0
      %1910 = vmatprep.subr.mxu0 0.0
      %1911 = vmatpush1.msra.mxu0 0.0
      %1912 = vmatprep.subr.mxu0 0.0
      %1913 = vmatpush1.msra.mxu0 0.0
      %1914 = vmatprep.subr.mxu0 0.0
      %1915 = vmatpush1.msra.mxu0 0.0
      %1916 = vmatprep.subr.mxu0 0.0
      %1917 = vmatpush1.msra.mxu0 0.0
      %1918 = vmatprep.subr.mxu0 0.0
      %1919 = vmatpush1.msra.mxu0 0.0
      %1920 = vmatprep.subr.mxu0 0.0
      %1921 = vmatpush1.msra.mxu0 0.0
      %1922 = vmatprep.subr.mxu0 0.0
      %1923 = vmatpush1.msra.mxu0 0.0
      %1924 = vmatprep.subr.mxu0 0.0
      %1925 = vmatpush1.msra.mxu0 0.0
      %1926 = vmatprep.subr.mxu0 0.0
      %1927 = vmatpush1.msra.mxu0 0.0
      %1928 = vmatprep.subr.mxu0 0.0
      %1929 = vmatpush1.msra.mxu0 0.0
      %1930 = vmatprep.subr.mxu0 0.0
      %1931 = vmatpush1.msra.mxu0 0.0
      %1932 = vmatprep.subr.mxu0 0.0
      %1933 = vmatpush1.msra.mxu0 0.0
      %1934 = vmatprep.subr.mxu0 0.0
      %1935 = vmatpush1.msra.mxu0 0.0
      %1936 = vmatprep.subr.mxu0 0.0
      %1937 = vmatpush1.msra.mxu0 0.0
      %1938 = vmatprep.subr.mxu0 0.0
      %1939 = vmatpush1.msra.mxu0 0.0
      %1940 = vmatprep.subr.mxu0 0.0
      %1941 = vmatpush1.msra.mxu0 0.0
      %1942 = vmatprep.subr.mxu0 0.0
      %1943 = vmatpush1.msra.mxu0 0.0
      %1944 = vmatprep.subr.mxu0 0.0
      %1945 = vmatpush1.msra.mxu0 0.0
      %1946 = vmatprep.subr.mxu0 0.0
      %1947 = vmatpush1.msra.mxu0 0.0
      %1948 = vmatprep.subr.mxu0 0.0
      %1949 = vmatpush1.msra.mxu0 0.0
      %1950 = vmatprep.mubr.f32.mxu0 0.0
      %1951 = vmatmul.mubr.f32.gmra.mrb[0].mxu0 %v1800
      %v1952 = vpop.f32.mrb[0].mxu0
      %v1953 = vadd.f32 %v1109, %v1952
      %v1954 = vpop.f32.mrb[0].mxu0
      %1955 = vmatprep.mubr.f32.mxu0 0.0
      %1956 = vmatmul.mubr.f32.gmra.mrb[0].mxu0 %v1802
      %v1957 = vpop.f32.mrb[0].mxu0
      %v1958 = vadd.f32 %v1109, %v1957
      %v1959 = vpop.f32.mrb[0].mxu0
      %1960 = vmatprep.mubr.f32.mxu0 0.0
      %1961 = vmatmul.mubr.f32.gmra.mrb[0].mxu0 %v1804
      %v1962 = vpop.f32.mrb[0].mxu0
      %v1963 = vadd.f32 %v1109, %v1962
      %v1964 = vpop.f32.mrb[0].mxu0
      %1965 = vmatprep.mubr.f32.mxu0 0.0
      %1966 = vmatmul.mubr.f32.gmra.mrb[0].mxu0 %v1806
      %v1967 = vpop.f32.mrb[0].mxu0
      %v1968 = vadd.f32 %v1109, %v1967
      %v1969 = vpop.f32.mrb[0].mxu0
      %1970 = vmatprep.mubr.f32.mxu0 0.0
      %1971 = vmatmul.mubr.f32.gmra.mrb[0].mxu0 %v1808
      %v1972 = vpop.f32.mrb[0].mxu0
      %v1973 = vadd.f32 %v1109, %v1972
      %v1974 = vpop.f32.mrb[0].mxu0
      %1975 = vmatprep.mubr.f32.mxu0 0.0
      %1976 = vmatmul.mubr.f32.gmra.mrb[0].mxu0 %v1810
      %v1977 = vpop.f32.mrb[0].mxu0
      %v1978 = vadd.f32 %v1109, %v1977
      %v1979 = vpop.f32.mrb[0].mxu0
      %1980 = vmatprep.mubr.f32.mxu0 0.0
      %1981 = vmatmul.mubr.f32.gmra.mrb[0].mxu0 %v1812
      %v1982 = vpop.f32.mrb[0].mxu0
      %v1983 = vadd.f32 %v1109, %v1982
      %v1984 = vpop.f32.mrb[0].mxu0
      %1985 = vmatprep.mubr.f32.mxu0 0.0
      %1986 = vmatmul.mubr.f32.gmra.mrb[0].mxu0 %v1814
      %v1987 = vpop.f32.mrb[0].mxu0
      %v1988 = vadd.f32 %v1109, %v1987
      %v1989 = vpop.f32.mrb[0].mxu0
      %1990 = vmatprep.mubr.f32.mxu0 0.0
      %1991 = vmatmul.mubr.f32.gmra.mrb[0].mxu0 %v1816
      %v1992 = vpop.f32.mrb[0].mxu0
      %v1993 = vadd.f32 %v1109, %v1992
      %v1994 = vpop.f32.mrb[0].mxu0
      %1995 = vmatprep.mubr.f32.mxu0 0.0
      %1996 = vmatmul.mubr.f32.gmra.mrb[0].mxu0 %v1818
      %v1997 = vpop.f32.mrb[0].mxu0
      %v1998 = vadd.f32 %v1109, %v1997
      %v1999 = vpop.f32.mrb[0].mxu0
      %2000 = vmatprep.mubr.f32.mxu0 0.0
      %2001 = vmatmul.mubr.f32.gmra.mrb[0].mxu0 %v1820
      %v2002 = vpop.f32.mrb[0].mxu0
      %v2003 = vadd.f32 %v1109, %v2002
      %v2004 = vpop.f32.mrb[0].mxu0
      %2005 = vmatprep.mubr.f32.mxu0 0.0
      %2006 = vmatmul.mubr.f32.gmra.mrb[0].mxu0 %v1822
      %v2007 = vpop.f32.mrb[0].mxu0
      %v2008 = vadd.f32 %v1109, %v2007
      %v2009 = vpop.f32.mrb[0].mxu0
      %2010 = vmatprep.mubr.f32.mxu0 0.0
      %2011 = vmatmul.mubr.f32.gmra.mrb[0].mxu0 %v1824
      %v2012 = vpop.f32.mrb[0].mxu0
      %v2013 = vadd.f32 %v1109, %v2012
      %v2014 = vpop.f32.mrb[0].mxu0
      %2015 = vmatprep.mubr.f32.mxu0 0.0
      %2016 = vmatmul.mubr.f32.gmra.mrb[0].mxu0 %v1826
      %v2017 = vpop.f32.mrb[0].mxu0
      %v2018 = vadd.f32 %v1109, %v2017
      %v2019 = vpop.f32.mrb[0].mxu0
      %2020 = vmatprep.mubr.f32.mxu0 0.0
      %2021 = vmatmul.mubr.f32.gmra.mrb[0].mxu0 %v1828
      %v2022 = vpop.f32.mrb[0].mxu0
      %v2023 = vadd.f32 %v1109, %v2022
      %v2024 = vpop.f32.mrb[0].mxu0
      %2025 = vmatprep.mubr.f32.mxu0 0.0
      %2026 = vmatmul.mubr.f32.gmra.mrb[0].mxu0 %v1830
      %v2027 = vpop.f32.mrb[0].mxu0
      %v2028 = vadd.f32 %v1109, %v2027
      %v2029 = vpop.f32.mrb[0].mxu0
      %2030 = vmatprep.mubr.f32.mxu0 0.0
      %2031 = vmatmul.mubr.f32.gmra.mrb[0].mxu0 %v1832
      %v2032 = vpop.f32.mrb[0].mxu0
      %v2033 = vadd.f32 %v1109, %v2032
      %v2034 = vpop.f32.mrb[0].mxu0
      %2035 = vmatprep.mubr.f32.mxu0 0.0
      %2036 = vmatmul.mubr.f32.gmra.mrb[0].mxu0 %v1834
      %v2037 = vpop.f32.mrb[0].mxu0
      %v2038 = vadd.f32 %v1109, %v2037
      %v2039 = vpop.f32.mrb[0].mxu0
      %2040 = vmatprep.mubr.f32.mxu0 0.0
      %2041 = vmatmul.mubr.f32.gmra.mrb[0].mxu0 %v1836
      %v2042 = vpop.f32.mrb[0].mxu0
      %v2043 = vadd.f32 %v1109, %v2042
      %v2044 = vpop.f32.mrb[0].mxu0
      %2045 = vmatprep.mubr.f32.mxu0 0.0
      %2046 = vmatmul.mubr.f32.gmra.mrb[0].mxu0 %v1838
      %v2047 = vpop.f32.mrb[0].mxu0
      %v2048 = vadd.f32 %v1109, %v2047
      %v2049 = vpop.f32.mrb[0].mxu0
      %2050 = vmatprep.mubr.f32.mxu0 0.0
      %2051 = vmatmul.mubr.f32.gmra.mrb[0].mxu0 %v1840
      %v2052 = vpop.f32.mrb[0].mxu0
      %v2053 = vadd.f32 %v1109, %v2052
      %v2054 = vpop.f32.mrb[0].mxu0
      %2055 = vmatprep.mubr.f32.mxu0 0.0
      %2056 = vmatmul.mubr.f32.gmra.mrb[0].mxu0 %v1842
      %v2057 = vpop.f32.mrb[0].mxu0
      %v2058 = vadd.f32 %v1109, %v2057
      %v2059 = vpop.f32.mrb[0].mxu0
      %2060 = vmatprep.mubr.f32.mxu0 0.0
      %2061 = vmatmul.mubr.f32.gmra.mrb[0].mxu0 %v1844
      %v2062 = vpop.f32.mrb[0].mxu0
      %v2063 = vadd.f32 %v1109, %v2062
      %v2064 = vpop.f32.mrb[0].mxu0
      %2065 = vmatprep.mubr.f32.mxu0 0.0
      %2066 = vmatmul.mubr.f32.gmra.mrb[0].mxu0 %v1846
      %v2067 = vpop.f32.mrb[0].mxu0
      %v2068 = vadd.f32 %v1109, %v2067
      %v2069 = vpop.f32.mrb[0].mxu0
      %2070 = vmatprep.mubr.f32.mxu0 0.0
      %2071 = vmatmul.mubr.f32.gmra.mrb[0].mxu0 %v1848
      %v2072 = vpop.f32.mrb[0].mxu0
      %v2073 = vadd.f32 %v1109, %v2072
      %v2074 = vpop.f32.mrb[0].mxu0
      %2075 = vmatprep.mubr.f32.mxu0 0.0
      %2076 = vmatmul.mubr.f32.gmra.mrb[0].mxu0 %v1850
      %v2077 = vpop.f32.mrb[0].mxu0
      %v2078 = vadd.f32 %v1109, %v2077
      %v2079 = vpop.f32.mrb[0].mxu0
      %2080 = vmatprep.mubr.f32.mxu0 0.0
      %2081 = vmatmul.mubr.f32.gmra.mrb[0].mxu0 %v1852
      %v2082 = vpop.f32.mrb[0].mxu0
      %v2083 = vadd.f32 %v1109, %v2082
      %v2084 = vpop.f32.mrb[0].mxu0
      %2085 = vmatprep.mubr.f32.mxu0 0.0
      %2086 = vmatmul.mubr.f32.gmra.mrb[0].mxu0 %v1854
      %v2087 = vpop.f32.mrb[0].mxu0
      %v2088 = vadd.f32 %v1109, %v2087
      %v2089 = vpop.f32.mrb[0].mxu0
      %2090 = vmatprep.mubr.f32.mxu0 0.0
      %2091 = vmatmul.mubr.f32.gmra.mrb[0].mxu0 %v1856
      %v2092 = vpop.f32.mrb[0].mxu0
      %v2093 = vadd.f32 %v1109, %v2092
      %v2094 = vpop.f32.mrb[0].mxu0
      %2095 = vmatprep.mubr.f32.mxu0 0.0
      %2096 = vmatmul.mubr.f32.gmra.mrb[0].mxu0 %v1858
      %v2097 = vpop.f32.mrb[0].mxu0
      %v2098 = vadd.f32 %v1109, %v2097
      %v2099 = vpop.f32.mrb[0].mxu0
      %2100 = vmatprep.mubr.f32.mxu0 0.0
      %2101 = vmatmul.mubr.f32.gmra.mrb[0].mxu0 %v1860
      %v2102 = vpop.f32.mrb[0].mxu0
      %v2103 = vadd.f32 %v1109, %v2102
      %v2104 = vpop.f32.mrb[0].mxu0
      %2105 = vmatprep.mubr.f32.mxu0 0.0
      %2106 = vmatmul.mubr.f32.gmra.mrb[0].mxu0 %v1862
      %v2107 = vpop.f32.mrb[0].mxu0
      %v2108 = vadd.f32 %v1109, %v2107
      %v2109 = vpop.f32.mrb[0].mxu0
      %2110 = vmatprep.mubr.f32.mxu0 0.0
      %2111 = vmatmul.mubr.f32.gmra.mrb[0].mxu0 %v1864
      %v2112 = vpop.f32.mrb[0].mxu0
      %v2113 = vadd.f32 %v1109, %v2112
      %v2114 = vpop.f32.mrb[0].mxu0
      %2115 = vmatprep.mubr.f32.mxu0 0.0
      %2116 = vmatmul.mubr.f32.gmra.mrb[0].mxu0 %v1866
      %v2117 = vpop.f32.mrb[0].mxu0
      %v2118 = vadd.f32 %v1109, %v2117
      %v2119 = vpop.f32.mrb[0].mxu0
      %2120 = vmatprep.mubr.f32.mxu0 0.0
      %2121 = vmatmul.mubr.f32.gmra.mrb[0].mxu0 %v1868
      %v2122 = vpop.f32.mrb[0].mxu0
      %v2123 = vadd.f32 %v1109, %v2122
      %v2124 = vpop.f32.mrb[0].mxu0
      %2125 = vmatprep.mubr.f32.mxu0 0.0
      %2126 = vmatmul.mubr.f32.gmra.mrb[0].mxu0 %v1870
      %v2127 = vpop.f32.mrb[0].mxu0
      %v2128 = vadd.f32 %v1109, %v2127
      %v2129 = vpop.f32.mrb[0].mxu0
      %2130 = vmatprep.mubr.f32.mxu0 0.0
      %2131 = vmatmul.mubr.f32.gmra.mrb[0].mxu0 %v1872
      %v2132 = vpop.f32.mrb[0].mxu0
      %v2133 = vadd.f32 %v1109, %v2132
      %v2134 = vpop.f32.mrb[0].mxu0
      %2135 = vmatprep.mubr.f32.mxu0 0.0
      %2136 = vmatmul.mubr.f32.gmra.mrb[0].mxu0 %v1874
      %v2137 = vpop.f32.mrb[0].mxu0
      %v2138 = vadd.f32 %v1109, %v2137
      %v2139 = vpop.f32.mrb[0].mxu0
      %2140 = vmatprep.mubr.f32.mxu0 0.0
      %2141 = vmatmul.mubr.f32.gmra.mrb[0].mxu0 %v1876
      %v2142 = vpop.f32.mrb[0].mxu0
      %v2143 = vadd.f32 %v1109, %v2142
      %v2144 = vpop.f32.mrb[0].mxu0
      %2145 = vmatprep.mubr.f32.mxu0 0.0
      %2146 = vmatmul.mubr.f32.gmra.mrb[0].mxu0 %v1878
      %v2147 = vpop.f32.mrb[0].mxu0
      %v2148 = vadd.f32 %v1109, %v2147
      %v2149 = vpop.f32.mrb[0].mxu0
      %2150 = vmatprep.mubr.f32.mxu0 0.0
      %2151 = vmatmul.mubr.f32.gmra.mrb[0].mxu0 %v1880
      %v2152 = vpop.f32.mrb[0].mxu0
      %v2153 = vadd.f32 %v1109, %v2152
      %v2154 = vpop.f32.mrb[0].mxu0
      %2155 = vdwg.mxu0
      %vm2156 = vcmp.gt.f32.partialorder %v1953, 0.0
      %vm2157 = vcmp.gt.f32.partialorder %v1958, 0.0
      %vm2158 = vcmp.gt.f32.partialorder %v1963, 0.0
      %vm2159 = vcmp.gt.f32.partialorder %v1968, 0.0
      %vm2160 = vcmp.gt.f32.partialorder %v1973, 0.0
      %vm2161 = vcmp.gt.f32.partialorder %v1978, 0.0
      %vm2162 = vcmp.gt.f32.partialorder %v1983, 0.0
      %vm2163 = vcmp.gt.f32.partialorder %v1988, 0.0
      %vm2164 = vcmp.gt.f32.partialorder %v1993, 0.0
      %vm2165 = vcmp.gt.f32.partialorder %v1998, 0.0
      %vm2166 = vcmp.gt.f32.partialorder %v2003, 0.0
      %vm2167 = vcmp.gt.f32.partialorder %v2008, 0.0
      %vm2168 = vcmp.gt.f32.partialorder %v2013, 0.0
      %vm2169 = vcmp.gt.f32.partialorder %v2018, 0.0
      %vm2170 = vcmp.gt.f32.partialorder %v2023, 0.0
      %vm2171 = vcmp.gt.f32.partialorder %v2028, 0.0
      %vm2172 = vcmp.gt.f32.partialorder %v2033, 0.0
      %vm2173 = vcmp.gt.f32.partialorder %v2038, 0.0
      %vm2174 = vcmp.gt.f32.partialorder %v2043, 0.0
      %vm2175 = vcmp.gt.f32.partialorder %v2048, 0.0
      %vm2176 = vcmp.gt.f32.partialorder %v2053, 0.0
      %vm2177 = vcmp.gt.f32.partialorder %v2058, 0.0
      %vm2178 = vcmp.gt.f32.partialorder %v2063, 0.0
      %vm2179 = vcmp.gt.f32.partialorder %v2068, 0.0
      %vm2180 = vcmp.gt.f32.partialorder %v2073, 0.0
      %vm2181 = vcmp.gt.f32.partialorder %v2078, 0.0
      %vm2182 = vcmp.gt.f32.partialorder %v2083, 0.0
      %vm2183 = vcmp.gt.f32.partialorder %v2088, 0.0
      %vm2184 = vcmp.gt.f32.partialorder %v2093, 0.0
      %vm2185 = vcmp.gt.f32.partialorder %v2098, 0.0
      %vm2186 = vcmp.gt.f32.partialorder %v2103, 0.0
      %vm2187 = vcmp.gt.f32.partialorder %v2108, 0.0
      %vm2188 = vcmp.gt.f32.partialorder %v2113, 0.0
      %vm2189 = vcmp.gt.f32.partialorder %v2118, 0.0
      %vm2190 = vcmp.gt.f32.partialorder %v2123, 0.0
      %vm2191 = vcmp.gt.f32.partialorder %v2128, 0.0
      %vm2192 = vcmp.gt.f32.partialorder %v2133, 0.0
      %vm2193 = vcmp.gt.f32.partialorder %v2138, 0.0
      %vm2194 = vcmp.gt.f32.partialorder %v2143, 0.0
      %vm2195 = vcmp.gt.f32.partialorder %v2148, 0.0
      %vm2196 = vcmp.gt.f32.partialorder %v2153, 0.0
      %v2197 = vmul.f32 %v1953, 0.1
      %v2198 = vmul.f32 %v1958, 0.1
      %v2199 = vmul.f32 %v1963, 0.1
      %v2200 = vmul.f32 %v1968, 0.1
      %v2201 = vmul.f32 %v1973, 0.1
      %v2202 = vmul.f32 %v1978, 0.1
      %v2203 = vmul.f32 %v1983, 0.1
      %v2204 = vmul.f32 %v1988, 0.1
      %v2205 = vmul.f32 %v1993, 0.1
      %v2206 = vmul.f32 %v1998, 0.1
      %v2207 = vmul.f32 %v2003, 0.1
      %v2208 = vmul.f32 %v2008, 0.1
      %v2209 = vmul.f32 %v2013, 0.1
      %v2210 = vmul.f32 %v2018, 0.1
      %v2211 = vmul.f32 %v2023, 0.1
      %v2212 = vmul.f32 %v2028, 0.1
      %v2213 = vmul.f32 %v2033, 0.1
      %v2214 = vmul.f32 %v2038, 0.1
      %v2215 = vmul.f32 %v2043, 0.1
      %v2216 = vmul.f32 %v2048, 0.1
      %v2217 = vmul.f32 %v2053, 0.1
      %v2218 = vmul.f32 %v2058, 0.1
      %v2219 = vmul.f32 %v2063, 0.1
      %v2220 = vmul.f32 %v2068, 0.1
      %v2221 = vmul.f32 %v2073, 0.1
      %v2222 = vmul.f32 %v2078, 0.1
      %v2223 = vmul.f32 %v2083, 0.1
      %v2224 = vmul.f32 %v2088, 0.1
      %v2225 = vmul.f32 %v2093, 0.1
      %v2226 = vmul.f32 %v2098, 0.1
      %v2227 = vmul.f32 %v2103, 0.1
      %v2228 = vmul.f32 %v2108, 0.1
      %v2229 = vmul.f32 %v2113, 0.1
      %v2230 = vmul.f32 %v2118, 0.1
      %v2231 = vmul.f32 %v2123, 0.1
      %v2232 = vmul.f32 %v2128, 0.1
      %v2233 = vmul.f32 %v2133, 0.1
      %v2234 = vmul.f32 %v2138, 0.1
      %v2235 = vmul.f32 %v2143, 0.1
      %v2236 = vmul.f32 %v2148, 0.1
      %v2237 = vmul.f32 %v2153, 0.1
      %v2238 = vsel %vm2156, %v1953, %v2197
      %v2239 = vsel %vm2157, %v1958, %v2198
      %v2240 = vsel %vm2158, %v1963, %v2199
      %v2241 = vsel %vm2159, %v1968, %v2200
      %v2242 = vsel %vm2160, %v1973, %v2201
      %v2243 = vsel %vm2161, %v1978, %v2202
      %v2244 = vsel %vm2162, %v1983, %v2203
      %v2245 = vsel %vm2163, %v1988, %v2204
      %v2246 = vsel %vm2164, %v1993, %v2205
      %v2247 = vsel %vm2165, %v1998, %v2206
      %v2248 = vsel %vm2166, %v2003, %v2207
      %v2249 = vsel %vm2167, %v2008, %v2208
      %v2250 = vsel %vm2168, %v2013, %v2209
      %v2251 = vsel %vm2169, %v2018, %v2210
      %v2252 = vsel %vm2170, %v2023, %v2211
      %v2253 = vsel %vm2171, %v2028, %v2212
      %v2254 = vsel %vm2172, %v2033, %v2213
      %v2255 = vsel %vm2173, %v2038, %v2214
      %v2256 = vsel %vm2174, %v2043, %v2215
      %v2257 = vsel %vm2175, %v2048, %v2216
      %v2258 = vsel %vm2176, %v2053, %v2217
      %v2259 = vsel %vm2177, %v2058, %v2218
      %v2260 = vsel %vm2178, %v2063, %v2219
      %v2261 = vsel %vm2179, %v2068, %v2220
      %v2262 = vsel %vm2180, %v2073, %v2221
      %v2263 = vsel %vm2181, %v2078, %v2222
      %v2264 = vsel %vm2182, %v2083, %v2223
      %v2265 = vsel %vm2183, %v2088, %v2224
      %v2266 = vsel %vm2184, %v2093, %v2225
      %v2267 = vsel %vm2185, %v2098, %v2226
      %v2268 = vsel %vm2186, %v2103, %v2227
      %v2269 = vsel %vm2187, %v2108, %v2228
      %v2270 = vsel %vm2188, %v2113, %v2229
      %v2271 = vsel %vm2189, %v2118, %v2230
      %v2272 = vsel %vm2190, %v2123, %v2231
      %v2273 = vsel %vm2191, %v2128, %v2232
      %v2274 = vsel %vm2192, %v2133, %v2233
      %v2275 = vsel %vm2193, %v2138, %v2234
      %v2276 = vsel %vm2194, %v2143, %v2235
      %v2277 = vsel %vm2195, %v2148, %v2236
      %v2278 = vsel %vm2196, %v2153, %v2237
      %v2320 = vcombine.high %v2238, %v2238
      %v2322 = vunpack.c.l.s4 1983009808
      %v2323 = vunpack.c.0.s8 %v2322
      %v2324 = vlaneseq
      %v2325 = vshrl.u32 %v2324, 7
      %v2326 = vsub.s32 %v2323, %v2325
      %v2327 = vrot.slane %v2238, %v2326
      %v2329 = vunpack.c.l.s4 1983009808
      %v2330 = vunpack.c.0.s8 %v2329
      %v2331 = vlaneseq
      %v2332 = vshrl.u32 %v2331, 7
      %v2333 = vsub.s32 %v2330, %v2332
      %v2334 = vrot.slane %v2320, %v2333
      %v2335 = vcombine.high %v2327, %v2327
      %v2336 = vcombine.high %v2334, %v2334
      %v2337 = vcombine.high %v2239, %v2239
      %v2339 = vunpack.c.l.s4 1983009808
      %v2340 = vunpack.c.0.s8 %v2339
      %v2341 = vlaneseq
      %v2342 = vshrl.u32 %v2341, 7
      %v2343 = vsub.s32 %v2340, %v2342
      %v2344 = vrot.slane %v2239, %v2343
      %v2346 = vunpack.c.l.s4 1983009808
      %v2347 = vunpack.c.0.s8 %v2346
      %v2348 = vlaneseq
      %v2349 = vshrl.u32 %v2348, 7
      %v2350 = vsub.s32 %v2347, %v2349
      %v2351 = vrot.slane %v2337, %v2350
      %v2352 = vcombine.high %v2344, %v2344
      %v2353 = vcombine.high %v2351, %v2351
      %v2354 = vcombine.high %v2240, %v2240
      %v2356 = vunpack.c.l.s4 1983009808
      %v2357 = vunpack.c.0.s8 %v2356
      %v2358 = vlaneseq
      %v2359 = vshrl.u32 %v2358, 7
      %v2360 = vsub.s32 %v2357, %v2359
      %v2361 = vrot.slane %v2240, %v2360
      %v2363 = vunpack.c.l.s4 1983009808
      %v2364 = vunpack.c.0.s8 %v2363
      %v2365 = vlaneseq
      %v2366 = vshrl.u32 %v2365, 7
      %v2367 = vsub.s32 %v2364, %v2366
      %v2368 = vrot.slane %v2354, %v2367
      %v2369 = vcombine.high %v2361, %v2361
      %v2370 = vcombine.high %v2368, %v2368
      %v2371 = vcombine.high %v2241, %v2241
      %v2373 = vunpack.c.l.s4 1983009808
      %v2374 = vunpack.c.0.s8 %v2373
      %v2375 = vlaneseq
      %v2376 = vshrl.u32 %v2375, 7
      %v2377 = vsub.s32 %v2374, %v2376
      %v2378 = vrot.slane %v2241, %v2377
      %v2380 = vunpack.c.l.s4 1983009808
      %v2381 = vunpack.c.0.s8 %v2380
      %v2382 = vlaneseq
      %v2383 = vshrl.u32 %v2382, 7
      %v2384 = vsub.s32 %v2381, %v2383
      %v2385 = vrot.slane %v2371, %v2384
      %v2386 = vcombine.high %v2378, %v2378
      %v2387 = vcombine.high %v2385, %v2385
      %v2388 = vcombine.high %v2242, %v2242
      %v2390 = vunpack.c.l.s4 1983009808
      %v2391 = vunpack.c.0.s8 %v2390
      %v2392 = vlaneseq
      %v2393 = vshrl.u32 %v2392, 7
      %v2394 = vsub.s32 %v2391, %v2393
      %v2395 = vrot.slane %v2242, %v2394
      %v2397 = vunpack.c.l.s4 1983009808
      %v2398 = vunpack.c.0.s8 %v2397
      %v2399 = vlaneseq
      %v2400 = vshrl.u32 %v2399, 7
      %v2401 = vsub.s32 %v2398, %v2400
      %v2402 = vrot.slane %v2388, %v2401
      %v2403 = vcombine.high %v2395, %v2395
      %v2404 = vcombine.high %v2402, %v2402
      %v2405 = vcombine.high %v2243, %v2243
      %v2407 = vunpack.c.l.s4 1983009808
      %v2408 = vunpack.c.0.s8 %v2407
      %v2409 = vlaneseq
      %v2410 = vshrl.u32 %v2409, 7
      %v2411 = vsub.s32 %v2408, %v2410
      %v2412 = vrot.slane %v2243, %v2411
      %v2414 = vunpack.c.l.s4 1983009808
      %v2415 = vunpack.c.0.s8 %v2414
      %v2416 = vlaneseq
      %v2417 = vshrl.u32 %v2416, 7
      %v2418 = vsub.s32 %v2415, %v2417
      %v2419 = vrot.slane %v2405, %v2418
      %v2420 = vcombine.high %v2412, %v2412
      %v2421 = vcombine.high %v2419, %v2419
      %v2422 = vcombine.high %v2244, %v2244
      %v2424 = vunpack.c.l.s4 1983009808
      %v2425 = vunpack.c.0.s8 %v2424
      %v2426 = vlaneseq
      %v2427 = vshrl.u32 %v2426, 7
      %v2428 = vsub.s32 %v2425, %v2427
      %v2429 = vrot.slane %v2244, %v2428
      %v2431 = vunpack.c.l.s4 1983009808
      %v2432 = vunpack.c.0.s8 %v2431
      %v2433 = vlaneseq
      %v2434 = vshrl.u32 %v2433, 7
      %v2435 = vsub.s32 %v2432, %v2434
      %v2436 = vrot.slane %v2422, %v2435
      %v2437 = vcombine.high %v2429, %v2429
      %v2438 = vcombine.high %v2436, %v2436
      %v2439 = vcombine.high %v2245, %v2245
      %v2441 = vunpack.c.l.s4 1983009808
      %v2442 = vunpack.c.0.s8 %v2441
      %v2443 = vlaneseq
      %v2444 = vshrl.u32 %v2443, 7
      %v2445 = vsub.s32 %v2442, %v2444
      %v2446 = vrot.slane %v2245, %v2445
      %v2448 = vunpack.c.l.s4 1983009808
      %v2449 = vunpack.c.0.s8 %v2448
      %v2450 = vlaneseq
      %v2451 = vshrl.u32 %v2450, 7
      %v2452 = vsub.s32 %v2449, %v2451
      %v2453 = vrot.slane %v2439, %v2452
      %v2454 = vcombine.high %v2446, %v2446
      %v2455 = vcombine.high %v2453, %v2453
      %v2456 = vcombine.high %v2246, %v2246
      %v2458 = vunpack.c.l.s4 1983009808
      %v2459 = vunpack.c.0.s8 %v2458
      %v2460 = vlaneseq
      %v2461 = vshrl.u32 %v2460, 7
      %v2462 = vsub.s32 %v2459, %v2461
      %v2463 = vrot.slane %v2246, %v2462
      %v2465 = vunpack.c.l.s4 1983009808
      %v2466 = vunpack.c.0.s8 %v2465
      %v2467 = vlaneseq
      %v2468 = vshrl.u32 %v2467, 7
      %v2469 = vsub.s32 %v2466, %v2468
      %v2470 = vrot.slane %v2456, %v2469
      %v2471 = vcombine.high %v2463, %v2463
      %v2472 = vcombine.high %v2470, %v2470
      %v2473 = vcombine.high %v2247, %v2247
      %v2475 = vunpack.c.l.s4 1983009808
      %v2476 = vunpack.c.0.s8 %v2475
      %v2477 = vlaneseq
      %v2478 = vshrl.u32 %v2477, 7
      %v2479 = vsub.s32 %v2476, %v2478
      %v2480 = vrot.slane %v2247, %v2479
      %v2482 = vunpack.c.l.s4 1983009808
      %v2483 = vunpack.c.0.s8 %v2482
      %v2484 = vlaneseq
      %v2485 = vshrl.u32 %v2484, 7
      %v2486 = vsub.s32 %v2483, %v2485
      %v2487 = vrot.slane %v2473, %v2486
      %v2488 = vcombine.high %v2480, %v2480
      %v2489 = vcombine.high %v2487, %v2487
      %v2490 = vcombine.high %v2248, %v2248
      %v2492 = vunpack.c.l.s4 1983009808
      %v2493 = vunpack.c.0.s8 %v2492
      %v2494 = vlaneseq
      %v2495 = vshrl.u32 %v2494, 7
      %v2496 = vsub.s32 %v2493, %v2495
      %v2497 = vrot.slane %v2248, %v2496
      %v2499 = vunpack.c.l.s4 1983009808
      %v2500 = vunpack.c.0.s8 %v2499
      %v2501 = vlaneseq
      %v2502 = vshrl.u32 %v2501, 7
      %v2503 = vsub.s32 %v2500, %v2502
      %v2504 = vrot.slane %v2490, %v2503
      %v2505 = vcombine.high %v2497, %v2497
      %v2506 = vcombine.high %v2504, %v2504
      %v2507 = vcombine.high %v2249, %v2249
      %v2509 = vunpack.c.l.s4 1983009808
      %v2510 = vunpack.c.0.s8 %v2509
      %v2511 = vlaneseq
      %v2512 = vshrl.u32 %v2511, 7
      %v2513 = vsub.s32 %v2510, %v2512
      %v2514 = vrot.slane %v2249, %v2513
      %v2516 = vunpack.c.l.s4 1983009808
      %v2517 = vunpack.c.0.s8 %v2516
      %v2518 = vlaneseq
      %v2519 = vshrl.u32 %v2518, 7
      %v2520 = vsub.s32 %v2517, %v2519
      %v2521 = vrot.slane %v2507, %v2520
      %v2522 = vcombine.high %v2514, %v2514
      %v2523 = vcombine.high %v2521, %v2521
      %v2524 = vcombine.high %v2250, %v2250
      %v2526 = vunpack.c.l.s4 1983009808
      %v2527 = vunpack.c.0.s8 %v2526
      %v2528 = vlaneseq
      %v2529 = vshrl.u32 %v2528, 7
      %v2530 = vsub.s32 %v2527, %v2529
      %v2531 = vrot.slane %v2250, %v2530
      %v2533 = vunpack.c.l.s4 1983009808
      %v2534 = vunpack.c.0.s8 %v2533
      %v2535 = vlaneseq
      %v2536 = vshrl.u32 %v2535, 7
      %v2537 = vsub.s32 %v2534, %v2536
      %v2538 = vrot.slane %v2524, %v2537
      %v2539 = vcombine.high %v2531, %v2531
      %v2540 = vcombine.high %v2538, %v2538
      %v2541 = vcombine.high %v2251, %v2251
      %v2543 = vunpack.c.l.s4 1983009808
      %v2544 = vunpack.c.0.s8 %v2543
      %v2545 = vlaneseq
      %v2546 = vshrl.u32 %v2545, 7
      %v2547 = vsub.s32 %v2544, %v2546
      %v2548 = vrot.slane %v2251, %v2547
      %v2550 = vunpack.c.l.s4 1983009808
      %v2551 = vunpack.c.0.s8 %v2550
      %v2552 = vlaneseq
      %v2553 = vshrl.u32 %v2552, 7
      %v2554 = vsub.s32 %v2551, %v2553
      %v2555 = vrot.slane %v2541, %v2554
      %v2556 = vcombine.high %v2548, %v2548
      %v2557 = vcombine.high %v2555, %v2555
      %v2558 = vcombine.high %v2252, %v2252
      %v2560 = vunpack.c.l.s4 1983009808
      %v2561 = vunpack.c.0.s8 %v2560
      %v2562 = vlaneseq
      %v2563 = vshrl.u32 %v2562, 7
      %v2564 = vsub.s32 %v2561, %v2563
      %v2565 = vrot.slane %v2252, %v2564
      %v2567 = vunpack.c.l.s4 1983009808
      %v2568 = vunpack.c.0.s8 %v2567
      %v2569 = vlaneseq
      %v2570 = vshrl.u32 %v2569, 7
      %v2571 = vsub.s32 %v2568, %v2570
      %v2572 = vrot.slane %v2558, %v2571
      %v2573 = vcombine.high %v2565, %v2565
      %v2574 = vcombine.high %v2572, %v2572
      %v2575 = vcombine.high %v2253, %v2253
      %v2577 = vunpack.c.l.s4 1983009808
      %v2578 = vunpack.c.0.s8 %v2577
      %v2579 = vlaneseq
      %v2580 = vshrl.u32 %v2579, 7
      %v2581 = vsub.s32 %v2578, %v2580
      %v2582 = vrot.slane %v2253, %v2581
      %v2584 = vunpack.c.l.s4 1983009808
      %v2585 = vunpack.c.0.s8 %v2584
      %v2586 = vlaneseq
      %v2587 = vshrl.u32 %v2586, 7
      %v2588 = vsub.s32 %v2585, %v2587
      %v2589 = vrot.slane %v2575, %v2588
      %v2590 = vcombine.high %v2582, %v2582
      %v2591 = vcombine.high %v2589, %v2589
      %v2592 = vcombine.high %v2254, %v2254
      %v2594 = vunpack.c.l.s4 1983009808
      %v2595 = vunpack.c.0.s8 %v2594
      %v2596 = vlaneseq
      %v2597 = vshrl.u32 %v2596, 7
      %v2598 = vsub.s32 %v2595, %v2597
      %v2599 = vrot.slane %v2254, %v2598
      %v2601 = vunpack.c.l.s4 1983009808
      %v2602 = vunpack.c.0.s8 %v2601
      %v2603 = vlaneseq
      %v2604 = vshrl.u32 %v2603, 7
      %v2605 = vsub.s32 %v2602, %v2604
      %v2606 = vrot.slane %v2592, %v2605
      %v2607 = vcombine.high %v2599, %v2599
      %v2608 = vcombine.high %v2606, %v2606
      %v2609 = vcombine.high %v2255, %v2255
      %v2611 = vunpack.c.l.s4 1983009808
      %v2612 = vunpack.c.0.s8 %v2611
      %v2613 = vlaneseq
      %v2614 = vshrl.u32 %v2613, 7
      %v2615 = vsub.s32 %v2612, %v2614
      %v2616 = vrot.slane %v2255, %v2615
      %v2618 = vunpack.c.l.s4 1983009808
      %v2619 = vunpack.c.0.s8 %v2618
      %v2620 = vlaneseq
      %v2621 = vshrl.u32 %v2620, 7
      %v2622 = vsub.s32 %v2619, %v2621
      %v2623 = vrot.slane %v2609, %v2622
      %v2624 = vcombine.high %v2616, %v2616
      %v2625 = vcombine.high %v2623, %v2623
      %v2626 = vcombine.high %v2256, %v2256
      %v2628 = vunpack.c.l.s4 1983009808
      %v2629 = vunpack.c.0.s8 %v2628
      %v2630 = vlaneseq
      %v2631 = vshrl.u32 %v2630, 7
      %v2632 = vsub.s32 %v2629, %v2631
      %v2633 = vrot.slane %v2256, %v2632
      %v2635 = vunpack.c.l.s4 1983009808
      %v2636 = vunpack.c.0.s8 %v2635
      %v2637 = vlaneseq
      %v2638 = vshrl.u32 %v2637, 7
      %v2639 = vsub.s32 %v2636, %v2638
      %v2640 = vrot.slane %v2626, %v2639
      %v2641 = vcombine.high %v2633, %v2633
      %v2642 = vcombine.high %v2640, %v2640
      %v2643 = vcombine.high %v2257, %v2257
      %v2645 = vunpack.c.l.s4 1983009808
      %v2646 = vunpack.c.0.s8 %v2645
      %v2647 = vlaneseq
      %v2648 = vshrl.u32 %v2647, 7
      %v2649 = vsub.s32 %v2646, %v2648
      %v2650 = vrot.slane %v2257, %v2649
      %v2652 = vunpack.c.l.s4 1983009808
      %v2653 = vunpack.c.0.s8 %v2652
      %v2654 = vlaneseq
      %v2655 = vshrl.u32 %v2654, 7
      %v2656 = vsub.s32 %v2653, %v2655
      %v2657 = vrot.slane %v2643, %v2656
      %v2658 = vcombine.high %v2650, %v2650
      %v2659 = vcombine.high %v2657, %v2657
      %v2660 = vcombine.high %v2258, %v2258
      %v2662 = vunpack.c.l.s4 1983009808
      %v2663 = vunpack.c.0.s8 %v2662
      %v2664 = vlaneseq
      %v2665 = vshrl.u32 %v2664, 7
      %v2666 = vsub.s32 %v2663, %v2665
      %v2667 = vrot.slane %v2258, %v2666
      %v2669 = vunpack.c.l.s4 1983009808
      %v2670 = vunpack.c.0.s8 %v2669
      %v2671 = vlaneseq
      %v2672 = vshrl.u32 %v2671, 7
      %v2673 = vsub.s32 %v2670, %v2672
      %v2674 = vrot.slane %v2660, %v2673
      %v2675 = vcombine.high %v2667, %v2667
      %v2676 = vcombine.high %v2674, %v2674
      %v2677 = vcombine.high %v2259, %v2259
      %v2679 = vunpack.c.l.s4 1983009808
      %v2680 = vunpack.c.0.s8 %v2679
      %v2681 = vlaneseq
      %v2682 = vshrl.u32 %v2681, 7
      %v2683 = vsub.s32 %v2680, %v2682
      %v2684 = vrot.slane %v2259, %v2683
      %v2686 = vunpack.c.l.s4 1983009808
      %v2687 = vunpack.c.0.s8 %v2686
      %v2688 = vlaneseq
      %v2689 = vshrl.u32 %v2688, 7
      %v2690 = vsub.s32 %v2687, %v2689
      %v2691 = vrot.slane %v2677, %v2690
      %v2692 = vcombine.high %v2684, %v2684
      %v2693 = vcombine.high %v2691, %v2691
      %v2694 = vcombine.high %v2260, %v2260
      %v2696 = vunpack.c.l.s4 1983009808
      %v2697 = vunpack.c.0.s8 %v2696
      %v2698 = vlaneseq
      %v2699 = vshrl.u32 %v2698, 7
      %v2700 = vsub.s32 %v2697, %v2699
      %v2701 = vrot.slane %v2260, %v2700
      %v2703 = vunpack.c.l.s4 1983009808
      %v2704 = vunpack.c.0.s8 %v2703
      %v2705 = vlaneseq
      %v2706 = vshrl.u32 %v2705, 7
      %v2707 = vsub.s32 %v2704, %v2706
      %v2708 = vrot.slane %v2694, %v2707
      %v2709 = vcombine.high %v2701, %v2701
      %v2710 = vcombine.high %v2708, %v2708
      %v2711 = vcombine.high %v2261, %v2261
      %v2713 = vunpack.c.l.s4 1983009808
      %v2714 = vunpack.c.0.s8 %v2713
      %v2715 = vlaneseq
      %v2716 = vshrl.u32 %v2715, 7
      %v2717 = vsub.s32 %v2714, %v2716
      %v2718 = vrot.slane %v2261, %v2717
      %v2720 = vunpack.c.l.s4 1983009808
      %v2721 = vunpack.c.0.s8 %v2720
      %v2722 = vlaneseq
      %v2723 = vshrl.u32 %v2722, 7
      %v2724 = vsub.s32 %v2721, %v2723
      %v2725 = vrot.slane %v2711, %v2724
      %v2726 = vcombine.high %v2718, %v2718
      %v2727 = vcombine.high %v2725, %v2725
      %v2728 = vcombine.high %v2262, %v2262
      %v2730 = vunpack.c.l.s4 1983009808
      %v2731 = vunpack.c.0.s8 %v2730
      %v2732 = vlaneseq
      %v2733 = vshrl.u32 %v2732, 7
      %v2734 = vsub.s32 %v2731, %v2733
      %v2735 = vrot.slane %v2262, %v2734
      %v2737 = vunpack.c.l.s4 1983009808
      %v2738 = vunpack.c.0.s8 %v2737
      %v2739 = vlaneseq
      %v2740 = vshrl.u32 %v2739, 7
      %v2741 = vsub.s32 %v2738, %v2740
      %v2742 = vrot.slane %v2728, %v2741
      %v2743 = vcombine.high %v2735, %v2735
      %v2744 = vcombine.high %v2742, %v2742
      %v2745 = vcombine.high %v2263, %v2263
      %v2747 = vunpack.c.l.s4 1983009808
      %v2748 = vunpack.c.0.s8 %v2747
      %v2749 = vlaneseq
      %v2750 = vshrl.u32 %v2749, 7
      %v2751 = vsub.s32 %v2748, %v2750
      %v2752 = vrot.slane %v2263, %v2751
      %v2754 = vunpack.c.l.s4 1983009808
      %v2755 = vunpack.c.0.s8 %v2754
      %v2756 = vlaneseq
      %v2757 = vshrl.u32 %v2756, 7
      %v2758 = vsub.s32 %v2755, %v2757
      %v2759 = vrot.slane %v2745, %v2758
      %v2760 = vcombine.high %v2752, %v2752
      %v2761 = vcombine.high %v2759, %v2759
      %v2762 = vcombine.high %v2264, %v2264
      %v2764 = vunpack.c.l.s4 1983009808
      %v2765 = vunpack.c.0.s8 %v2764
      %v2766 = vlaneseq
      %v2767 = vshrl.u32 %v2766, 7
      %v2768 = vsub.s32 %v2765, %v2767
      %v2769 = vrot.slane %v2264, %v2768
      %v2771 = vunpack.c.l.s4 1983009808
      %v2772 = vunpack.c.0.s8 %v2771
      %v2773 = vlaneseq
      %v2774 = vshrl.u32 %v2773, 7
      %v2775 = vsub.s32 %v2772, %v2774
      %v2776 = vrot.slane %v2762, %v2775
      %v2777 = vcombine.high %v2769, %v2769
      %v2778 = vcombine.high %v2776, %v2776
      %v2779 = vcombine.high %v2265, %v2265
      %v2781 = vunpack.c.l.s4 1983009808
      %v2782 = vunpack.c.0.s8 %v2781
      %v2783 = vlaneseq
      %v2784 = vshrl.u32 %v2783, 7
      %v2785 = vsub.s32 %v2782, %v2784
      %v2786 = vrot.slane %v2265, %v2785
      %v2788 = vunpack.c.l.s4 1983009808
      %v2789 = vunpack.c.0.s8 %v2788
      %v2790 = vlaneseq
      %v2791 = vshrl.u32 %v2790, 7
      %v2792 = vsub.s32 %v2789, %v2791
      %v2793 = vrot.slane %v2779, %v2792
      %v2794 = vcombine.high %v2786, %v2786
      %v2795 = vcombine.high %v2793, %v2793
      %v2796 = vcombine.high %v2266, %v2266
      %v2798 = vunpack.c.l.s4 1983009808
      %v2799 = vunpack.c.0.s8 %v2798
      %v2800 = vlaneseq
      %v2801 = vshrl.u32 %v2800, 7
      %v2802 = vsub.s32 %v2799, %v2801
      %v2803 = vrot.slane %v2266, %v2802
      %v2805 = vunpack.c.l.s4 1983009808
      %v2806 = vunpack.c.0.s8 %v2805
      %v2807 = vlaneseq
      %v2808 = vshrl.u32 %v2807, 7
      %v2809 = vsub.s32 %v2806, %v2808
      %v2810 = vrot.slane %v2796, %v2809
      %v2811 = vcombine.high %v2803, %v2803
      %v2812 = vcombine.high %v2810, %v2810
      %v2813 = vcombine.high %v2267, %v2267
      %v2815 = vunpack.c.l.s4 1983009808
      %v2816 = vunpack.c.0.s8 %v2815
      %v2817 = vlaneseq
      %v2818 = vshrl.u32 %v2817, 7
      %v2819 = vsub.s32 %v2816, %v2818
      %v2820 = vrot.slane %v2267, %v2819
      %v2822 = vunpack.c.l.s4 1983009808
      %v2823 = vunpack.c.0.s8 %v2822
      %v2824 = vlaneseq
      %v2825 = vshrl.u32 %v2824, 7
      %v2826 = vsub.s32 %v2823, %v2825
      %v2827 = vrot.slane %v2813, %v2826
      %v2828 = vcombine.high %v2820, %v2820
      %v2829 = vcombine.high %v2827, %v2827
      %v2830 = vcombine.high %v2268, %v2268
      %v2832 = vunpack.c.l.s4 1983009808
      %v2833 = vunpack.c.0.s8 %v2832
      %v2834 = vlaneseq
      %v2835 = vshrl.u32 %v2834, 7
      %v2836 = vsub.s32 %v2833, %v2835
      %v2837 = vrot.slane %v2268, %v2836
      %v2839 = vunpack.c.l.s4 1983009808
      %v2840 = vunpack.c.0.s8 %v2839
      %v2841 = vlaneseq
      %v2842 = vshrl.u32 %v2841, 7
      %v2843 = vsub.s32 %v2840, %v2842
      %v2844 = vrot.slane %v2830, %v2843
      %v2845 = vcombine.high %v2837, %v2837
      %v2846 = vcombine.high %v2844, %v2844
      %v2847 = vcombine.high %v2269, %v2269
      %v2849 = vunpack.c.l.s4 1983009808
      %v2850 = vunpack.c.0.s8 %v2849
      %v2851 = vlaneseq
      %v2852 = vshrl.u32 %v2851, 7
      %v2853 = vsub.s32 %v2850, %v2852
      %v2854 = vrot.slane %v2269, %v2853
      %v2856 = vunpack.c.l.s4 1983009808
      %v2857 = vunpack.c.0.s8 %v2856
      %v2858 = vlaneseq
      %v2859 = vshrl.u32 %v2858, 7
      %v2860 = vsub.s32 %v2857, %v2859
      %v2861 = vrot.slane %v2847, %v2860
      %v2862 = vcombine.high %v2854, %v2854
      %v2863 = vcombine.high %v2861, %v2861
      %v2864 = vcombine.high %v2270, %v2270
      %v2866 = vunpack.c.l.s4 1983009808
      %v2867 = vunpack.c.0.s8 %v2866
      %v2868 = vlaneseq
      %v2869 = vshrl.u32 %v2868, 7
      %v2870 = vsub.s32 %v2867, %v2869
      %v2871 = vrot.slane %v2270, %v2870
      %v2873 = vunpack.c.l.s4 1983009808
      %v2874 = vunpack.c.0.s8 %v2873
      %v2875 = vlaneseq
      %v2876 = vshrl.u32 %v2875, 7
      %v2877 = vsub.s32 %v2874, %v2876
      %v2878 = vrot.slane %v2864, %v2877
      %v2879 = vcombine.high %v2871, %v2871
      %v2880 = vcombine.high %v2878, %v2878
      %v2881 = vcombine.high %v2271, %v2271
      %v2883 = vunpack.c.l.s4 1983009808
      %v2884 = vunpack.c.0.s8 %v2883
      %v2885 = vlaneseq
      %v2886 = vshrl.u32 %v2885, 7
      %v2887 = vsub.s32 %v2884, %v2886
      %v2888 = vrot.slane %v2271, %v2887
      %v2890 = vunpack.c.l.s4 1983009808
      %v2891 = vunpack.c.0.s8 %v2890
      %v2892 = vlaneseq
      %v2893 = vshrl.u32 %v2892, 7
      %v2894 = vsub.s32 %v2891, %v2893
      %v2895 = vrot.slane %v2881, %v2894
      %v2896 = vcombine.high %v2888, %v2888
      %v2897 = vcombine.high %v2895, %v2895
      %v2898 = vcombine.high %v2272, %v2272
      %v2900 = vunpack.c.l.s4 1983009808
      %v2901 = vunpack.c.0.s8 %v2900
      %v2902 = vlaneseq
      %v2903 = vshrl.u32 %v2902, 7
      %v2904 = vsub.s32 %v2901, %v2903
      %v2905 = vrot.slane %v2272, %v2904
      %v2907 = vunpack.c.l.s4 1983009808
      %v2908 = vunpack.c.0.s8 %v2907
      %v2909 = vlaneseq
      %v2910 = vshrl.u32 %v2909, 7
      %v2911 = vsub.s32 %v2908, %v2910
      %v2912 = vrot.slane %v2898, %v2911
      %v2913 = vcombine.high %v2905, %v2905
      %v2914 = vcombine.high %v2912, %v2912
      %v2915 = vcombine.high %v2273, %v2273
      %v2917 = vunpack.c.l.s4 1983009808
      %v2918 = vunpack.c.0.s8 %v2917
      %v2919 = vlaneseq
      %v2920 = vshrl.u32 %v2919, 7
      %v2921 = vsub.s32 %v2918, %v2920
      %v2922 = vrot.slane %v2273, %v2921
      %v2924 = vunpack.c.l.s4 1983009808
      %v2925 = vunpack.c.0.s8 %v2924
      %v2926 = vlaneseq
      %v2927 = vshrl.u32 %v2926, 7
      %v2928 = vsub.s32 %v2925, %v2927
      %v2929 = vrot.slane %v2915, %v2928
      %v2930 = vcombine.high %v2922, %v2922
      %v2931 = vcombine.high %v2929, %v2929
      %v2932 = vcombine.high %v2274, %v2274
      %v2934 = vunpack.c.l.s4 1983009808
      %v2935 = vunpack.c.0.s8 %v2934
      %v2936 = vlaneseq
      %v2937 = vshrl.u32 %v2936, 7
      %v2938 = vsub.s32 %v2935, %v2937
      %v2939 = vrot.slane %v2274, %v2938
      %v2941 = vunpack.c.l.s4 1983009808
      %v2942 = vunpack.c.0.s8 %v2941
      %v2943 = vlaneseq
      %v2944 = vshrl.u32 %v2943, 7
      %v2945 = vsub.s32 %v2942, %v2944
      %v2946 = vrot.slane %v2932, %v2945
      %v2947 = vcombine.high %v2939, %v2939
      %v2948 = vcombine.high %v2946, %v2946
      %v2949 = vcombine.high %v2275, %v2275
      %v2951 = vunpack.c.l.s4 1983009808
      %v2952 = vunpack.c.0.s8 %v2951
      %v2953 = vlaneseq
      %v2954 = vshrl.u32 %v2953, 7
      %v2955 = vsub.s32 %v2952, %v2954
      %v2956 = vrot.slane %v2275, %v2955
      %v2958 = vunpack.c.l.s4 1983009808
      %v2959 = vunpack.c.0.s8 %v2958
      %v2960 = vlaneseq
      %v2961 = vshrl.u32 %v2960, 7
      %v2962 = vsub.s32 %v2959, %v2961
      %v2963 = vrot.slane %v2949, %v2962
      %v2964 = vcombine.high %v2956, %v2956
      %v2965 = vcombine.high %v2963, %v2963
      %v2966 = vcombine.high %v2276, %v2276
      %v2968 = vunpack.c.l.s4 1983009808
      %v2969 = vunpack.c.0.s8 %v2968
      %v2970 = vlaneseq
      %v2971 = vshrl.u32 %v2970, 7
      %v2972 = vsub.s32 %v2969, %v2971
      %v2973 = vrot.slane %v2276, %v2972
      %v2975 = vunpack.c.l.s4 1983009808
      %v2976 = vunpack.c.0.s8 %v2975
      %v2977 = vlaneseq
      %v2978 = vshrl.u32 %v2977, 7
      %v2979 = vsub.s32 %v2976, %v2978
      %v2980 = vrot.slane %v2966, %v2979
      %v2981 = vcombine.high %v2973, %v2973
      %v2982 = vcombine.high %v2980, %v2980
      %v2983 = vcombine.high %v2277, %v2277
      %v2985 = vunpack.c.l.s4 1983009808
      %v2986 = vunpack.c.0.s8 %v2985
      %v2987 = vlaneseq
      %v2988 = vshrl.u32 %v2987, 7
      %v2989 = vsub.s32 %v2986, %v2988
      %v2990 = vrot.slane %v2277, %v2989
      %v2992 = vunpack.c.l.s4 1983009808
      %v2993 = vunpack.c.0.s8 %v2992
      %v2994 = vlaneseq
      %v2995 = vshrl.u32 %v2994, 7
      %v2996 = vsub.s32 %v2993, %v2995
      %v2997 = vrot.slane %v2983, %v2996
      %v2998 = vcombine.high %v2990, %v2990
      %v2999 = vcombine.high %v2997, %v2997
      %v3001 = vunpack.c.l.s4 1983009808
      %v3002 = vunpack.c.0.s8 %v3001
      %v3003 = vlaneseq
      %v3004 = vshrl.u32 %v3003, 7
      %v3005 = vsub.s32 %v3002, %v3004
      %v3006 = vrot.slane %v2278, %v3005
      %v3007 = vcombine.high %v3006, %v3006
      %s3008 = smul.u32 %s21, 16
      %v3009 = vstv %s3008
      %v3010 = vadd.s32 %v3009, 1
      %v3011 = vadd.s32 %v3009, 2
      %v3012 = vadd.s32 %v3009, 3
      %v3013 = vadd.s32 %v3009, 4
      %v3014 = vadd.s32 %v3009, 5
      %v3015 = vadd.s32 %v3009, 6
      %v3016 = vadd.s32 %v3009, 7
      %v3017 = vadd.s32 %v3009, 8
      %v3018 = vadd.s32 %v3009, 9
      %v3019 = vadd.s32 %v3009, 10
      %v3020 = vadd.s32 %v3009, 11
      %v3021 = vadd.s32 %v3009, 12
      %v3022 = vadd.s32 %v3009, 13
      %v3023 = vadd.s32 %v3009, 14
      %v3024 = vadd.s32 %v3009, 15
      %v3025 = vadd.s32 %v3009, 16
      %v3026 = vadd.s32 %v3009, 17
      %v3027 = vlaneseq
      %v3028 = vshrl.u32 %v3027, 7
      %v3029 = vadd.s32 %v3028, 8
      %v3030 = vadd.s32 %v3028, 16
      %vm3031 = vcmp.ge.s32.totalorder %v3009, 1
      %vm3032 = vcmp.ge.s32.totalorder %v3010, 1
      %vm3033 = vcmp.ge.s32.totalorder %v3011, 1
      %vm3034 = vcmp.ge.s32.totalorder %v3012, 1
      %vm3035 = vcmp.ge.s32.totalorder %v3013, 1
      %vm3036 = vcmp.ge.s32.totalorder %v3014, 1
      %vm3037 = vcmp.ge.s32.totalorder %v3015, 1
      %vm3038 = vcmp.ge.s32.totalorder %v3016, 1
      %vm3039 = vcmp.ge.s32.totalorder %v3017, 1
      %vm3040 = vcmp.ge.s32.totalorder %v3018, 1
      %vm3041 = vcmp.ge.s32.totalorder %v3019, 1
      %vm3042 = vcmp.ge.s32.totalorder %v3020, 1
      %vm3043 = vcmp.ge.s32.totalorder %v3021, 1
      %vm3044 = vcmp.ge.s32.totalorder %v3022, 1
      %vm3045 = vcmp.ge.s32.totalorder %v3023, 1
      %vm3046 = vcmp.ge.s32.totalorder %v3024, 1
      %vm3047 = vcmp.ge.s32.totalorder %v3025, 1
      %vm3048 = vcmp.ge.s32.totalorder %v3026, 1
      %vm3049 = vcmp.le.s32.totalorder %v3009, 16
      %vm3050 = vcmp.le.s32.totalorder %v3010, 16
      %vm3051 = vcmp.le.s32.totalorder %v3011, 16
      %vm3052 = vcmp.le.s32.totalorder %v3012, 16
      %vm3053 = vcmp.le.s32.totalorder %v3013, 16
      %vm3054 = vcmp.le.s32.totalorder %v3014, 16
      %vm3055 = vcmp.le.s32.totalorder %v3015, 16
      %vm3056 = vcmp.le.s32.totalorder %v3016, 16
      %vm3057 = vcmp.le.s32.totalorder %v3017, 16
      %vm3058 = vcmp.le.s32.totalorder %v3018, 16
      %vm3059 = vcmp.le.s32.totalorder %v3019, 16
      %vm3060 = vcmp.le.s32.totalorder %v3020, 16
      %vm3061 = vcmp.le.s32.totalorder %v3021, 16
      %vm3062 = vcmp.le.s32.totalorder %v3022, 16
      %vm3063 = vcmp.le.s32.totalorder %v3023, 16
      %vm3064 = vcmp.le.s32.totalorder %v3024, 16
      %vm3065 = vcmp.le.s32.totalorder %v3025, 16
      %vm3066 = vcmp.le.s32.totalorder %v3026, 16
      %vm3067 = vmand %vm3031, %vm3049
      %vm3068 = vmand %vm3032, %vm3050
      %vm3069 = vmand %vm3033, %vm3051
      %vm3070 = vmand %vm3034, %vm3052
      %vm3071 = vmand %vm3035, %vm3053
      %vm3072 = vmand %vm3036, %vm3054
      %vm3073 = vmand %vm3037, %vm3055
      %vm3074 = vmand %vm3038, %vm3056
      %vm3075 = vmand %vm3039, %vm3057
      %vm3076 = vmand %vm3040, %vm3058
      %vm3077 = vmand %vm3041, %vm3059
      %vm3078 = vmand %vm3042, %vm3060
      %vm3079 = vmand %vm3043, %vm3061
      %vm3080 = vmand %vm3044, %vm3062
      %vm3081 = vmand %vm3045, %vm3063
      %vm3082 = vmand %vm3046, %vm3064
      %vm3083 = vmand %vm3047, %vm3065
      %vm3084 = vmand %vm3048, %vm3066
      %vm3085 = vcmp.ge.s32.totalorder %v3028, 1
      %vm3086 = vcmp.ge.s32.totalorder %v3029, 1
      %vm3087 = vcmp.ge.s32.totalorder %v3030, 1
      %vm3088 = vmand %vm3067, %vm3085
      %vm3089 = vmand %vm3067, %vm3086
      %vm3090 = vmand %vm3067, %vm3087
      %vm3091 = vmand %vm3068, %vm3085
      %vm3092 = vmand %vm3068, %vm3086
      %vm3093 = vmand %vm3068, %vm3087
      %vm3094 = vmand %vm3069, %vm3085
      %vm3095 = vmand %vm3069, %vm3086
      %vm3096 = vmand %vm3069, %vm3087
      %vm3097 = vmand %vm3070, %vm3085
      %vm3098 = vmand %vm3070, %vm3086
      %vm3099 = vmand %vm3070, %vm3087
      %vm3100 = vmand %vm3071, %vm3085
      %vm3101 = vmand %vm3071, %vm3086
      %vm3102 = vmand %vm3071, %vm3087
      %vm3103 = vmand %vm3072, %vm3085
      %vm3104 = vmand %vm3072, %vm3086
      %vm3105 = vmand %vm3072, %vm3087
      %vm3106 = vmand %vm3073, %vm3085
      %vm3107 = vmand %vm3073, %vm3086
      %vm3108 = vmand %vm3073, %vm3087
      %vm3109 = vmand %vm3074, %vm3085
      %vm3110 = vmand %vm3074, %vm3086
      %vm3111 = vmand %vm3074, %vm3087
      %vm3112 = vmand %vm3075, %vm3085
      %vm3113 = vmand %vm3075, %vm3086
      %vm3114 = vmand %vm3075, %vm3087
      %vm3115 = vmand %vm3076, %vm3085
      %vm3116 = vmand %vm3076, %vm3086
      %vm3117 = vmand %vm3076, %vm3087
      %vm3118 = vmand %vm3077, %vm3085
      %vm3119 = vmand %vm3077, %vm3086
      %vm3120 = vmand %vm3077, %vm3087
      %vm3121 = vmand %vm3078, %vm3085
      %vm3122 = vmand %vm3078, %vm3086
      %vm3123 = vmand %vm3078, %vm3087
      %vm3124 = vmand %vm3079, %vm3085
      %vm3125 = vmand %vm3079, %vm3086
      %vm3126 = vmand %vm3079, %vm3087
      %vm3127 = vmand %vm3080, %vm3085
      %vm3128 = vmand %vm3080, %vm3086
      %vm3129 = vmand %vm3080, %vm3087
      %vm3130 = vmand %vm3081, %vm3085
      %vm3131 = vmand %vm3081, %vm3086
      %vm3132 = vmand %vm3081, %vm3087
      %vm3133 = vmand %vm3082, %vm3085
      %vm3134 = vmand %vm3082, %vm3086
      %vm3135 = vmand %vm3082, %vm3087
      %vm3136 = vmand %vm3083, %vm3085
      %vm3137 = vmand %vm3083, %vm3086
      %vm3138 = vmand %vm3083, %vm3087
      %vm3139 = vmand %vm3084, %vm3085
      %vm3140 = vmand %vm3084, %vm3086
      %vm3141 = vmand %vm3084, %vm3087
      %vm3142 = vcmp.le.s32.totalorder %v3028, 16
      %vm3143 = vcmp.le.s32.totalorder %v3029, 16
      %vm3144 = vcmp.le.s32.totalorder %v3030, 16
      %vm3145 = vmand %vm3088, %vm3142
      %vm3146 = vmand %vm3089, %vm3143
      %vm3147 = vmand %vm3090, %vm3144
      %vm3148 = vmand %vm3091, %vm3142
      %vm3149 = vmand %vm3092, %vm3143
      %vm3150 = vmand %vm3093, %vm3144
      %vm3151 = vmand %vm3094, %vm3142
      %vm3152 = vmand %vm3095, %vm3143
      %vm3153 = vmand %vm3096, %vm3144
      %vm3154 = vmand %vm3097, %vm3142
      %vm3155 = vmand %vm3098, %vm3143
      %vm3156 = vmand %vm3099, %vm3144
      %vm3157 = vmand %vm3100, %vm3142
      %vm3158 = vmand %vm3101, %vm3143
      %vm3159 = vmand %vm3102, %vm3144
      %vm3160 = vmand %vm3103, %vm3142
      %vm3161 = vmand %vm3104, %vm3143
      %vm3162 = vmand %vm3105, %vm3144
      %vm3163 = vmand %vm3106, %vm3142
      %vm3164 = vmand %vm3107, %vm3143
      %vm3165 = vmand %vm3108, %vm3144
      %vm3166 = vmand %vm3109, %vm3142
      %vm3167 = vmand %vm3110, %vm3143
      %vm3168 = vmand %vm3111, %vm3144
      %vm3169 = vmand %vm3112, %vm3142
      %vm3170 = vmand %vm3113, %vm3143
      %vm3171 = vmand %vm3114, %vm3144
      %vm3172 = vmand %vm3115, %vm3142
      %vm3173 = vmand %vm3116, %vm3143
      %vm3174 = vmand %vm3117, %vm3144
      %vm3175 = vmand %vm3118, %vm3142
      %vm3176 = vmand %vm3119, %vm3143
      %vm3177 = vmand %vm3120, %vm3144
      %vm3178 = vmand %vm3121, %vm3142
      %vm3179 = vmand %vm3122, %vm3143
      %vm3180 = vmand %vm3123, %vm3144
      %vm3181 = vmand %vm3124, %vm3142
      %vm3182 = vmand %vm3125, %vm3143
      %vm3183 = vmand %vm3126, %vm3144
      %vm3184 = vmand %vm3127, %vm3142
      %vm3185 = vmand %vm3128, %vm3143
      %vm3186 = vmand %vm3129, %vm3144
      %vm3187 = vmand %vm3130, %vm3142
      %vm3188 = vmand %vm3131, %vm3143
      %vm3189 = vmand %vm3132, %vm3144
      %vm3190 = vmand %vm3133, %vm3142
      %vm3191 = vmand %vm3134, %vm3143
      %vm3192 = vmand %vm3135, %vm3144
      %vm3193 = vmand %vm3136, %vm3142
      %vm3194 = vmand %vm3137, %vm3143
      %vm3195 = vmand %vm3138, %vm3144
      %vm3196 = vmand %vm3139, %vm3142
      %vm3197 = vmand %vm3140, %vm3143
      %vm3198 = vmand %vm3141, %vm3144
      %v3199 = vsel %vm3145, 1, 0
      %v3200 = vsel %vm3146, 1, 0
      %v3201 = vsel %vm3147, 1, 0
      %v3202 = vsel %vm3148, 1, 0
      %v3203 = vsel %vm3149, 1, 0
      %v3204 = vsel %vm3150, 1, 0
      %v3205 = vsel %vm3151, 1, 0
      %v3206 = vsel %vm3152, 1, 0
      %v3207 = vsel %vm3153, 1, 0
      %v3208 = vsel %vm3154, 1, 0
      %v3209 = vsel %vm3155, 1, 0
      %v3210 = vsel %vm3156, 1, 0
      %v3211 = vsel %vm3157, 1, 0
      %v3212 = vsel %vm3158, 1, 0
      %v3213 = vsel %vm3159, 1, 0
      %v3214 = vsel %vm3160, 1, 0
      %v3215 = vsel %vm3161, 1, 0
      %v3216 = vsel %vm3162, 1, 0
      %v3217 = vsel %vm3163, 1, 0
      %v3218 = vsel %vm3164, 1, 0
      %v3219 = vsel %vm3165, 1, 0
      %v3220 = vsel %vm3166, 1, 0
      %v3221 = vsel %vm3167, 1, 0
      %v3222 = vsel %vm3168, 1, 0
      %v3223 = vsel %vm3169, 1, 0
      %v3224 = vsel %vm3170, 1, 0
      %v3225 = vsel %vm3171, 1, 0
      %v3226 = vsel %vm3172, 1, 0
      %v3227 = vsel %vm3173, 1, 0
      %v3228 = vsel %vm3174, 1, 0
      %v3229 = vsel %vm3175, 1, 0
      %v3230 = vsel %vm3176, 1, 0
      %v3231 = vsel %vm3177, 1, 0
      %v3232 = vsel %vm3178, 1, 0
      %v3233 = vsel %vm3179, 1, 0
      %v3234 = vsel %vm3180, 1, 0
      %v3235 = vsel %vm3181, 1, 0
      %v3236 = vsel %vm3182, 1, 0
      %v3237 = vsel %vm3183, 1, 0
      %v3238 = vsel %vm3184, 1, 0
      %v3239 = vsel %vm3185, 1, 0
      %v3240 = vsel %vm3186, 1, 0
      %v3241 = vsel %vm3187, 1, 0
      %v3242 = vsel %vm3188, 1, 0
      %v3243 = vsel %vm3189, 1, 0
      %v3244 = vsel %vm3190, 1, 0
      %v3245 = vsel %vm3191, 1, 0
      %v3246 = vsel %vm3192, 1, 0
      %v3247 = vsel %vm3193, 1, 0
      %v3248 = vsel %vm3194, 1, 0
      %v3249 = vsel %vm3195, 1, 0
      %v3250 = vsel %vm3196, 1, 0
      %v3251 = vsel %vm3197, 1, 0
      %v3252 = vsel %vm3198, 1, 0
      %vm3253 = vcmp.eq.s32.totalorder %v3199, 1
      %vm3254 = vcmp.eq.s32.totalorder %v3200, 1
      %vm3255 = vcmp.eq.s32.totalorder %v3201, 1
      %vm3256 = vcmp.eq.s32.totalorder %v3202, 1
      %vm3257 = vcmp.eq.s32.totalorder %v3203, 1
      %vm3258 = vcmp.eq.s32.totalorder %v3204, 1
      %vm3259 = vcmp.eq.s32.totalorder %v3205, 1
      %vm3260 = vcmp.eq.s32.totalorder %v3206, 1
      %vm3261 = vcmp.eq.s32.totalorder %v3207, 1
      %vm3262 = vcmp.eq.s32.totalorder %v3208, 1
      %vm3263 = vcmp.eq.s32.totalorder %v3209, 1
      %vm3264 = vcmp.eq.s32.totalorder %v3210, 1
      %vm3265 = vcmp.eq.s32.totalorder %v3211, 1
      %vm3266 = vcmp.eq.s32.totalorder %v3212, 1
      %vm3267 = vcmp.eq.s32.totalorder %v3213, 1
      %vm3268 = vcmp.eq.s32.totalorder %v3214, 1
      %vm3269 = vcmp.eq.s32.totalorder %v3215, 1
      %vm3270 = vcmp.eq.s32.totalorder %v3216, 1
      %vm3271 = vcmp.eq.s32.totalorder %v3217, 1
      %vm3272 = vcmp.eq.s32.totalorder %v3218, 1
      %vm3273 = vcmp.eq.s32.totalorder %v3219, 1
      %vm3274 = vcmp.eq.s32.totalorder %v3220, 1
      %vm3275 = vcmp.eq.s32.totalorder %v3221, 1
      %vm3276 = vcmp.eq.s32.totalorder %v3222, 1
      %vm3277 = vcmp.eq.s32.totalorder %v3223, 1
      %vm3278 = vcmp.eq.s32.totalorder %v3224, 1
      %vm3279 = vcmp.eq.s32.totalorder %v3225, 1
      %vm3280 = vcmp.eq.s32.totalorder %v3226, 1
      %vm3281 = vcmp.eq.s32.totalorder %v3227, 1
      %vm3282 = vcmp.eq.s32.totalorder %v3228, 1
      %vm3283 = vcmp.eq.s32.totalorder %v3229, 1
      %vm3284 = vcmp.eq.s32.totalorder %v3230, 1
      %vm3285 = vcmp.eq.s32.totalorder %v3231, 1
      %vm3286 = vcmp.eq.s32.totalorder %v3232, 1
      %vm3287 = vcmp.eq.s32.totalorder %v3233, 1
      %vm3288 = vcmp.eq.s32.totalorder %v3234, 1
      %vm3289 = vcmp.eq.s32.totalorder %v3235, 1
      %vm3290 = vcmp.eq.s32.totalorder %v3236, 1
      %vm3291 = vcmp.eq.s32.totalorder %v3237, 1
      %vm3292 = vcmp.eq.s32.totalorder %v3238, 1
      %vm3293 = vcmp.eq.s32.totalorder %v3239, 1
      %vm3294 = vcmp.eq.s32.totalorder %v3240, 1
      %vm3295 = vcmp.eq.s32.totalorder %v3241, 1
      %vm3296 = vcmp.eq.s32.totalorder %v3242, 1
      %vm3297 = vcmp.eq.s32.totalorder %v3243, 1
      %vm3298 = vcmp.eq.s32.totalorder %v3244, 1
      %vm3299 = vcmp.eq.s32.totalorder %v3245, 1
      %vm3300 = vcmp.eq.s32.totalorder %v3246, 1
      %vm3301 = vcmp.eq.s32.totalorder %v3247, 1
      %vm3302 = vcmp.eq.s32.totalorder %v3248, 1
      %vm3303 = vcmp.eq.s32.totalorder %v3249, 1
      %vm3304 = vcmp.eq.s32.totalorder %v3250, 1
      %vm3305 = vcmp.eq.s32.totalorder %v3251, 1
      %vm3306 = vcmp.eq.s32.totalorder %v3252, 1
      %v3307 = vcombine.low %v2327, %v2335
      %v3308 = vcombine.low %v2334, %v2336
      %v3310 = vunpack.c.l.s4 1983009808
      %v3311 = vunpack.c.0.s8 %v3310
      %v3312 = vlaneseq
      %v3313 = vshrl.u32 %v3312, 7
      %v3314 = vsub.s32 %v3311, %v3313
      %v3315 = vrot.slane %v3307, %v3314
      %v3317 = vunpack.c.l.s4 1983009808
      %v3318 = vunpack.c.0.s8 %v3317
      %v3319 = vlaneseq
      %v3320 = vshrl.u32 %v3319, 7
      %v3321 = vsub.s32 %v3318, %v3320
      %v3322 = vrot.slane %v3308, %v3321
      %v3323 = vcombine.low %v3315, %v3322
      %v3324 = vcombine.low %v2344, %v2352
      %v3325 = vcombine.low %v2351, %v2353
      %v3327 = vunpack.c.l.s4 1983009808
      %v3328 = vunpack.c.0.s8 %v3327
      %v3329 = vlaneseq
      %v3330 = vshrl.u32 %v3329, 7
      %v3331 = vsub.s32 %v3328, %v3330
      %v3332 = vrot.slane %v3324, %v3331
      %v3334 = vunpack.c.l.s4 1983009808
      %v3335 = vunpack.c.0.s8 %v3334
      %v3336 = vlaneseq
      %v3337 = vshrl.u32 %v3336, 7
      %v3338 = vsub.s32 %v3335, %v3337
      %v3339 = vrot.slane %v3325, %v3338
      %v3340 = vcombine.low %v3332, %v3339
      %v3342 = vunpack.c.l.s4 1983009808
      %v3343 = vunpack.c.0.s8 %v3342
      %v3344 = vlaneseq
      %v3345 = vshrl.u32 %v3344, 7
      %v3346 = vsub.s32 %v3343, %v3345
      %v3347 = vrot.slane %v2361, %v3346
      %v3348 = vcombine.low %v2369, %v2368
      %v3349 = vcombine.low %v2370, %v2378
      %v3351 = vunpack.c.l.s4 1983009808
      %v3352 = vunpack.c.0.s8 %v3351
      %v3353 = vlaneseq
      %v3354 = vshrl.u32 %v3353, 7
      %v3355 = vsub.s32 %v3352, %v3354
      %v3356 = vrot.slane %v3348, %v3355
      %v3358 = vunpack.c.l.s4 1983009808
      %v3359 = vunpack.c.0.s8 %v3358
      %v3360 = vlaneseq
      %v3361 = vshrl.u32 %v3360, 7
      %v3362 = vsub.s32 %v3359, %v3361
      %v3363 = vrot.slane %v3349, %v3362
      %v3364 = vcombine.low %v3356, %v3363
      %v3365 = vcombine.low %v2386, %v2385
      %v3366 = vcombine.low %v2387, %v2395
      %v3368 = vunpack.c.l.s4 1983009808
      %v3369 = vunpack.c.0.s8 %v3368
      %v3370 = vlaneseq
      %v3371 = vshrl.u32 %v3370, 7
      %v3372 = vsub.s32 %v3369, %v3371
      %v3373 = vrot.slane %v3365, %v3372
      %v3375 = vunpack.c.l.s4 1983009808
      %v3376 = vunpack.c.0.s8 %v3375
      %v3377 = vlaneseq
      %v3378 = vshrl.u32 %v3377, 7
      %v3379 = vsub.s32 %v3376, %v3378
      %v3380 = vrot.slane %v3366, %v3379
      %v3381 = vcombine.low %v3373, %v3380
      %v3383 = vunpack.c.l.s4 1983009808
      %v3384 = vunpack.c.0.s8 %v3383
      %v3385 = vlaneseq
      %v3386 = vshrl.u32 %v3385, 7
      %v3387 = vsub.s32 %v3384, %v3386
      %v3388 = vrot.slane %v2403, %v3387
      %v3389 = vcombine.low %v2402, %v2404
      %v3390 = vcombine.low %v2412, %v2420
      %v3392 = vunpack.c.l.s4 1983009808
      %v3393 = vunpack.c.0.s8 %v3392
      %v3394 = vlaneseq
      %v3395 = vshrl.u32 %v3394, 7
      %v3396 = vsub.s32 %v3393, %v3395
      %v3397 = vrot.slane %v3389, %v3396
      %v3399 = vunpack.c.l.s4 1983009808
      %v3400 = vunpack.c.0.s8 %v3399
      %v3401 = vlaneseq
      %v3402 = vshrl.u32 %v3401, 7
      %v3403 = vsub.s32 %v3400, %v3402
      %v3404 = vrot.slane %v3390, %v3403
      %v3405 = vcombine.low %v3397, %v3404
      %v3406 = vcombine.low %v2419, %v2421
      %v3407 = vcombine.low %v2429, %v2437
      %v3409 = vunpack.c.l.s4 1983009808
      %v3410 = vunpack.c.0.s8 %v3409
      %v3411 = vlaneseq
      %v3412 = vshrl.u32 %v3411, 7
      %v3413 = vsub.s32 %v3410, %v3412
      %v3414 = vrot.slane %v3406, %v3413
      %v3416 = vunpack.c.l.s4 1983009808
      %v3417 = vunpack.c.0.s8 %v3416
      %v3418 = vlaneseq
      %v3419 = vshrl.u32 %v3418, 7
      %v3420 = vsub.s32 %v3417, %v3419
      %v3421 = vrot.slane %v3407, %v3420
      %v3422 = vcombine.low %v3414, %v3421
      %v3424 = vunpack.c.l.s4 1983009808
      %v3425 = vunpack.c.0.s8 %v3424
      %v3426 = vlaneseq
      %v3427 = vshrl.u32 %v3426, 7
      %v3428 = vsub.s32 %v3425, %v3427
      %v3429 = vrot.slane %v2436, %v3428
      %v3430 = vcombine.low %v2438, %v2446
      %v3431 = vcombine.low %v2454, %v2453
      %v3433 = vunpack.c.l.s4 1983009808
      %v3434 = vunpack.c.0.s8 %v3433
      %v3435 = vlaneseq
      %v3436 = vshrl.u32 %v3435, 7
      %v3437 = vsub.s32 %v3434, %v3436
      %v3438 = vrot.slane %v3430, %v3437
      %v3440 = vunpack.c.l.s4 1983009808
      %v3441 = vunpack.c.0.s8 %v3440
      %v3442 = vlaneseq
      %v3443 = vshrl.u32 %v3442, 7
      %v3444 = vsub.s32 %v3441, %v3443
      %v3445 = vrot.slane %v3431, %v3444
      %v3446 = vcombine.low %v3438, %v3445
      %v3447 = vcombine.low %v2455, %v2463
      %v3448 = vcombine.low %v2471, %v2470
      %v3450 = vunpack.c.l.s4 1983009808
      %v3451 = vunpack.c.0.s8 %v3450
      %v3452 = vlaneseq
      %v3453 = vshrl.u32 %v3452, 7
      %v3454 = vsub.s32 %v3451, %v3453
      %v3455 = vrot.slane %v3447, %v3454
      %v3457 = vunpack.c.l.s4 1983009808
      %v3458 = vunpack.c.0.s8 %v3457
      %v3459 = vlaneseq
      %v3460 = vshrl.u32 %v3459, 7
      %v3461 = vsub.s32 %v3458, %v3460
      %v3462 = vrot.slane %v3448, %v3461
      %v3463 = vcombine.low %v3455, %v3462
      %v3465 = vunpack.c.l.s4 1983009808
      %v3466 = vunpack.c.0.s8 %v3465
      %v3467 = vlaneseq
      %v3468 = vshrl.u32 %v3467, 7
      %v3469 = vsub.s32 %v3466, %v3468
      %v3470 = vrot.slane %v2472, %v3469
      %v3471 = vcombine.low %v2480, %v2488
      %v3472 = vcombine.low %v2487, %v2489
      %v3474 = vunpack.c.l.s4 1983009808
      %v3475 = vunpack.c.0.s8 %v3474
      %v3476 = vlaneseq
      %v3477 = vshrl.u32 %v3476, 7
      %v3478 = vsub.s32 %v3475, %v3477
      %v3479 = vrot.slane %v3471, %v3478
      %v3481 = vunpack.c.l.s4 1983009808
      %v3482 = vunpack.c.0.s8 %v3481
      %v3483 = vlaneseq
      %v3484 = vshrl.u32 %v3483, 7
      %v3485 = vsub.s32 %v3482, %v3484
      %v3486 = vrot.slane %v3472, %v3485
      %v3487 = vcombine.low %v3479, %v3486
      %v3488 = vcombine.low %v2497, %v2505
      %v3489 = vcombine.low %v2504, %v2506
      %v3491 = vunpack.c.l.s4 1983009808
      %v3492 = vunpack.c.0.s8 %v3491
      %v3493 = vlaneseq
      %v3494 = vshrl.u32 %v3493, 7
      %v3495 = vsub.s32 %v3492, %v3494
      %v3496 = vrot.slane %v3488, %v3495
      %v3498 = vunpack.c.l.s4 1983009808
      %v3499 = vunpack.c.0.s8 %v3498
      %v3500 = vlaneseq
      %v3501 = vshrl.u32 %v3500, 7
      %v3502 = vsub.s32 %v3499, %v3501
      %v3503 = vrot.slane %v3489, %v3502
      %v3504 = vcombine.low %v3496, %v3503
      %v3506 = vunpack.c.l.s4 1983009808
      %v3507 = vunpack.c.0.s8 %v3506
      %v3508 = vlaneseq
      %v3509 = vshrl.u32 %v3508, 7
      %v3510 = vsub.s32 %v3507, %v3509
      %v3511 = vrot.slane %v2514, %v3510
      %v3512 = vcombine.low %v2522, %v2521
      %v3513 = vcombine.low %v2523, %v2531
      %v3515 = vunpack.c.l.s4 1983009808
      %v3516 = vunpack.c.0.s8 %v3515
      %v3517 = vlaneseq
      %v3518 = vshrl.u32 %v3517, 7
      %v3519 = vsub.s32 %v3516, %v3518
      %v3520 = vrot.slane %v3512, %v3519
      %v3522 = vunpack.c.l.s4 1983009808
      %v3523 = vunpack.c.0.s8 %v3522
      %v3524 = vlaneseq
      %v3525 = vshrl.u32 %v3524, 7
      %v3526 = vsub.s32 %v3523, %v3525
      %v3527 = vrot.slane %v3513, %v3526
      %v3528 = vcombine.low %v3520, %v3527
      %v3529 = vcombine.low %v2539, %v2538
      %v3530 = vcombine.low %v2540, %v2548
      %v3532 = vunpack.c.l.s4 1983009808
      %v3533 = vunpack.c.0.s8 %v3532
      %v3534 = vlaneseq
      %v3535 = vshrl.u32 %v3534, 7
      %v3536 = vsub.s32 %v3533, %v3535
      %v3537 = vrot.slane %v3529, %v3536
      %v3539 = vunpack.c.l.s4 1983009808
      %v3540 = vunpack.c.0.s8 %v3539
      %v3541 = vlaneseq
      %v3542 = vshrl.u32 %v3541, 7
      %v3543 = vsub.s32 %v3540, %v3542
      %v3544 = vrot.slane %v3530, %v3543
      %v3545 = vcombine.low %v3537, %v3544
      %v3547 = vunpack.c.l.s4 1983009808
      %v3548 = vunpack.c.0.s8 %v3547
      %v3549 = vlaneseq
      %v3550 = vshrl.u32 %v3549, 7
      %v3551 = vsub.s32 %v3548, %v3550
      %v3552 = vrot.slane %v2556, %v3551
      %v3553 = vcombine.low %v2555, %v2557
      %v3554 = vcombine.low %v2565, %v2573
      %v3556 = vunpack.c.l.s4 1983009808
      %v3557 = vunpack.c.0.s8 %v3556
      %v3558 = vlaneseq
      %v3559 = vshrl.u32 %v3558, 7
      %v3560 = vsub.s32 %v3557, %v3559
      %v3561 = vrot.slane %v3553, %v3560
      %v3563 = vunpack.c.l.s4 1983009808
      %v3564 = vunpack.c.0.s8 %v3563
      %v3565 = vlaneseq
      %v3566 = vshrl.u32 %v3565, 7
      %v3567 = vsub.s32 %v3564, %v3566
      %v3568 = vrot.slane %v3554, %v3567
      %v3569 = vcombine.low %v3561, %v3568
      %v3570 = vcombine.low %v2572, %v2574
      %v3571 = vcombine.low %v2582, %v2590
      %v3573 = vunpack.c.l.s4 1983009808
      %v3574 = vunpack.c.0.s8 %v3573
      %v3575 = vlaneseq
      %v3576 = vshrl.u32 %v3575, 7
      %v3577 = vsub.s32 %v3574, %v3576
      %v3578 = vrot.slane %v3570, %v3577
      %v3580 = vunpack.c.l.s4 1983009808
      %v3581 = vunpack.c.0.s8 %v3580
      %v3582 = vlaneseq
      %v3583 = vshrl.u32 %v3582, 7
      %v3584 = vsub.s32 %v3581, %v3583
      %v3585 = vrot.slane %v3571, %v3584
      %v3586 = vcombine.low %v3578, %v3585
      %v3588 = vunpack.c.l.s4 1983009808
      %v3589 = vunpack.c.0.s8 %v3588
      %v3590 = vlaneseq
      %v3591 = vshrl.u32 %v3590, 7
      %v3592 = vsub.s32 %v3589, %v3591
      %v3593 = vrot.slane %v2589, %v3592
      %v3594 = vcombine.low %v2591, %v2599
      %v3595 = vcombine.low %v2607, %v2606
      %v3597 = vunpack.c.l.s4 1983009808
      %v3598 = vunpack.c.0.s8 %v3597
      %v3599 = vlaneseq
      %v3600 = vshrl.u32 %v3599, 7
      %v3601 = vsub.s32 %v3598, %v3600
      %v3602 = vrot.slane %v3594, %v3601
      %v3604 = vunpack.c.l.s4 1983009808
      %v3605 = vunpack.c.0.s8 %v3604
      %v3606 = vlaneseq
      %v3607 = vshrl.u32 %v3606, 7
      %v3608 = vsub.s32 %v3605, %v3607
      %v3609 = vrot.slane %v3595, %v3608
      %v3610 = vcombine.low %v3602, %v3609
      %v3611 = vcombine.low %v2608, %v2616
      %v3612 = vcombine.low %v2624, %v2623
      %v3614 = vunpack.c.l.s4 1983009808
      %v3615 = vunpack.c.0.s8 %v3614
      %v3616 = vlaneseq
      %v3617 = vshrl.u32 %v3616, 7
      %v3618 = vsub.s32 %v3615, %v3617
      %v3619 = vrot.slane %v3611, %v3618
      %v3621 = vunpack.c.l.s4 1983009808
      %v3622 = vunpack.c.0.s8 %v3621
      %v3623 = vlaneseq
      %v3624 = vshrl.u32 %v3623, 7
      %v3625 = vsub.s32 %v3622, %v3624
      %v3626 = vrot.slane %v3612, %v3625
      %v3627 = vcombine.low %v3619, %v3626
      %v3629 = vunpack.c.l.s4 1983009808
      %v3630 = vunpack.c.0.s8 %v3629
      %v3631 = vlaneseq
      %v3632 = vshrl.u32 %v3631, 7
      %v3633 = vsub.s32 %v3630, %v3632
      %v3634 = vrot.slane %v2625, %v3633
      %v3635 = vcombine.low %v2633, %v2641
      %v3636 = vcombine.low %v2640, %v2642
      %v3638 = vunpack.c.l.s4 1983009808
      %v3639 = vunpack.c.0.s8 %v3638
      %v3640 = vlaneseq
      %v3641 = vshrl.u32 %v3640, 7
      %v3642 = vsub.s32 %v3639, %v3641
      %v3643 = vrot.slane %v3635, %v3642
      %v3645 = vunpack.c.l.s4 1983009808
      %v3646 = vunpack.c.0.s8 %v3645
      %v3647 = vlaneseq
      %v3648 = vshrl.u32 %v3647, 7
      %v3649 = vsub.s32 %v3646, %v3648
      %v3650 = vrot.slane %v3636, %v3649
      %v3651 = vcombine.low %v3643, %v3650
      %v3652 = vcombine.low %v2650, %v2658
      %v3653 = vcombine.low %v2657, %v2659
      %v3655 = vunpack.c.l.s4 1983009808
      %v3656 = vunpack.c.0.s8 %v3655
      %v3657 = vlaneseq
      %v3658 = vshrl.u32 %v3657, 7
      %v3659 = vsub.s32 %v3656, %v3658
      %v3660 = vrot.slane %v3652, %v3659
      %v3662 = vunpack.c.l.s4 1983009808
      %v3663 = vunpack.c.0.s8 %v3662
      %v3664 = vlaneseq
      %v3665 = vshrl.u32 %v3664, 7
      %v3666 = vsub.s32 %v3663, %v3665
      %v3667 = vrot.slane %v3653, %v3666
      %v3668 = vcombine.low %v3660, %v3667
      %v3670 = vunpack.c.l.s4 1983009808
      %v3671 = vunpack.c.0.s8 %v3670
      %v3672 = vlaneseq
      %v3673 = vshrl.u32 %v3672, 7
      %v3674 = vsub.s32 %v3671, %v3673
      %v3675 = vrot.slane %v2667, %v3674
      %v3676 = vcombine.low %v2675, %v2674
      %v3677 = vcombine.low %v2676, %v2684
      %v3679 = vunpack.c.l.s4 1983009808
      %v3680 = vunpack.c.0.s8 %v3679
      %v3681 = vlaneseq
      %v3682 = vshrl.u32 %v3681, 7
      %v3683 = vsub.s32 %v3680, %v3682
      %v3684 = vrot.slane %v3676, %v3683
      %v3686 = vunpack.c.l.s4 1983009808
      %v3687 = vunpack.c.0.s8 %v3686
      %v3688 = vlaneseq
      %v3689 = vshrl.u32 %v3688, 7
      %v3690 = vsub.s32 %v3687, %v3689
      %v3691 = vrot.slane %v3677, %v3690
      %v3692 = vcombine.low %v3684, %v3691
      %v3693 = vcombine.low %v2692, %v2691
      %v3694 = vcombine.low %v2693, %v2701
      %v3696 = vunpack.c.l.s4 1983009808
      %v3697 = vunpack.c.0.s8 %v3696
      %v3698 = vlaneseq
      %v3699 = vshrl.u32 %v3698, 7
      %v3700 = vsub.s32 %v3697, %v3699
      %v3701 = vrot.slane %v3693, %v3700
      %v3703 = vunpack.c.l.s4 1983009808
      %v3704 = vunpack.c.0.s8 %v3703
      %v3705 = vlaneseq
      %v3706 = vshrl.u32 %v3705, 7
      %v3707 = vsub.s32 %v3704, %v3706
      %v3708 = vrot.slane %v3694, %v3707
      %v3709 = vcombine.low %v3701, %v3708
      %v3711 = vunpack.c.l.s4 1983009808
      %v3712 = vunpack.c.0.s8 %v3711
      %v3713 = vlaneseq
      %v3714 = vshrl.u32 %v3713, 7
      %v3715 = vsub.s32 %v3712, %v3714
      %v3716 = vrot.slane %v2709, %v3715
      %v3717 = vcombine.low %v2708, %v2710
      %v3718 = vcombine.low %v2718, %v2726
      %v3720 = vunpack.c.l.s4 1983009808
      %v3721 = vunpack.c.0.s8 %v3720
      %v3722 = vlaneseq
      %v3723 = vshrl.u32 %v3722, 7
      %v3724 = vsub.s32 %v3721, %v3723
      %v3725 = vrot.slane %v3717, %v3724
      %v3727 = vunpack.c.l.s4 1983009808
      %v3728 = vunpack.c.0.s8 %v3727
      %v3729 = vlaneseq
      %v3730 = vshrl.u32 %v3729, 7
      %v3731 = vsub.s32 %v3728, %v3730
      %v3732 = vrot.slane %v3718, %v3731
      %v3733 = vcombine.low %v3725, %v3732
      %v3734 = vcombine.low %v2725, %v2727
      %v3735 = vcombine.low %v2735, %v2743
      %v3737 = vunpack.c.l.s4 1983009808
      %v3738 = vunpack.c.0.s8 %v3737
      %v3739 = vlaneseq
      %v3740 = vshrl.u32 %v3739, 7
      %v3741 = vsub.s32 %v3738, %v3740
      %v3742 = vrot.slane %v3734, %v3741
      %v3744 = vunpack.c.l.s4 1983009808
      %v3745 = vunpack.c.0.s8 %v3744
      %v3746 = vlaneseq
      %v3747 = vshrl.u32 %v3746, 7
      %v3748 = vsub.s32 %v3745, %v3747
      %v3749 = vrot.slane %v3735, %v3748
      %v3750 = vcombine.low %v3742, %v3749
      %v3752 = vunpack.c.l.s4 1983009808
      %v3753 = vunpack.c.0.s8 %v3752
      %v3754 = vlaneseq
      %v3755 = vshrl.u32 %v3754, 7
      %v3756 = vsub.s32 %v3753, %v3755
      %v3757 = vrot.slane %v2742, %v3756
      %v3758 = vcombine.low %v2744, %v2752
      %v3759 = vcombine.low %v2760, %v2759
      %v3761 = vunpack.c.l.s4 1983009808
      %v3762 = vunpack.c.0.s8 %v3761
      %v3763 = vlaneseq
      %v3764 = vshrl.u32 %v3763, 7
      %v3765 = vsub.s32 %v3762, %v3764
      %v3766 = vrot.slane %v3758, %v3765
      %v3768 = vunpack.c.l.s4 1983009808
      %v3769 = vunpack.c.0.s8 %v3768
      %v3770 = vlaneseq
      %v3771 = vshrl.u32 %v3770, 7
      %v3772 = vsub.s32 %v3769, %v3771
      %v3773 = vrot.slane %v3759, %v3772
      %v3774 = vcombine.low %v3766, %v3773
      %v3775 = vcombine.low %v2761, %v2769
      %v3776 = vcombine.low %v2777, %v2776
      %v3778 = vunpack.c.l.s4 1983009808
      %v3779 = vunpack.c.0.s8 %v3778
      %v3780 = vlaneseq
      %v3781 = vshrl.u32 %v3780, 7
      %v3782 = vsub.s32 %v3779, %v3781
      %v3783 = vrot.slane %v3775, %v3782
      %v3785 = vunpack.c.l.s4 1983009808
      %v3786 = vunpack.c.0.s8 %v3785
      %v3787 = vlaneseq
      %v3788 = vshrl.u32 %v3787, 7
      %v3789 = vsub.s32 %v3786, %v3788
      %v3790 = vrot.slane %v3776, %v3789
      %v3791 = vcombine.low %v3783, %v3790
      %v3793 = vunpack.c.l.s4 1983009808
      %v3794 = vunpack.c.0.s8 %v3793
      %v3795 = vlaneseq
      %v3796 = vshrl.u32 %v3795, 7
      %v3797 = vsub.s32 %v3794, %v3796
      %v3798 = vrot.slane %v2778, %v3797
      %v3799 = vcombine.low %v2786, %v2794
      %v3800 = vcombine.low %v2793, %v2795
      %v3802 = vunpack.c.l.s4 1983009808
      %v3803 = vunpack.c.0.s8 %v3802
      %v3804 = vlaneseq
      %v3805 = vshrl.u32 %v3804, 7
      %v3806 = vsub.s32 %v3803, %v3805
      %v3807 = vrot.slane %v3799, %v3806
      %v3809 = vunpack.c.l.s4 1983009808
      %v3810 = vunpack.c.0.s8 %v3809
      %v3811 = vlaneseq
      %v3812 = vshrl.u32 %v3811, 7
      %v3813 = vsub.s32 %v3810, %v3812
      %v3814 = vrot.slane %v3800, %v3813
      %v3815 = vcombine.low %v3807, %v3814
      %v3816 = vcombine.low %v2803, %v2811
      %v3817 = vcombine.low %v2810, %v2812
      %v3819 = vunpack.c.l.s4 1983009808
      %v3820 = vunpack.c.0.s8 %v3819
      %v3821 = vlaneseq
      %v3822 = vshrl.u32 %v3821, 7
      %v3823 = vsub.s32 %v3820, %v3822
      %v3824 = vrot.slane %v3816, %v3823
      %v3826 = vunpack.c.l.s4 1983009808
      %v3827 = vunpack.c.0.s8 %v3826
      %v3828 = vlaneseq
      %v3829 = vshrl.u32 %v3828, 7
      %v3830 = vsub.s32 %v3827, %v3829
      %v3831 = vrot.slane %v3817, %v3830
      %v3832 = vcombine.low %v3824, %v3831
      %v3834 = vunpack.c.l.s4 1983009808
      %v3835 = vunpack.c.0.s8 %v3834
      %v3836 = vlaneseq
      %v3837 = vshrl.u32 %v3836, 7
      %v3838 = vsub.s32 %v3835, %v3837
      %v3839 = vrot.slane %v2820, %v3838
      %v3840 = vcombine.low %v2828, %v2827
      %v3841 = vcombine.low %v2829, %v2837
      %v3843 = vunpack.c.l.s4 1983009808
      %v3844 = vunpack.c.0.s8 %v3843
      %v3845 = vlaneseq
      %v3846 = vshrl.u32 %v3845, 7
      %v3847 = vsub.s32 %v3844, %v3846
      %v3848 = vrot.slane %v3840, %v3847
      %v3850 = vunpack.c.l.s4 1983009808
      %v3851 = vunpack.c.0.s8 %v3850
      %v3852 = vlaneseq
      %v3853 = vshrl.u32 %v3852, 7
      %v3854 = vsub.s32 %v3851, %v3853
      %v3855 = vrot.slane %v3841, %v3854
      %v3856 = vcombine.low %v3848, %v3855
      %v3857 = vcombine.low %v2845, %v2844
      %v3858 = vcombine.low %v2846, %v2854
      %v3860 = vunpack.c.l.s4 1983009808
      %v3861 = vunpack.c.0.s8 %v3860
      %v3862 = vlaneseq
      %v3863 = vshrl.u32 %v3862, 7
      %v3864 = vsub.s32 %v3861, %v3863
      %v3865 = vrot.slane %v3857, %v3864
      %v3867 = vunpack.c.l.s4 1983009808
      %v3868 = vunpack.c.0.s8 %v3867
      %v3869 = vlaneseq
      %v3870 = vshrl.u32 %v3869, 7
      %v3871 = vsub.s32 %v3868, %v3870
      %v3872 = vrot.slane %v3858, %v3871
      %v3873 = vcombine.low %v3865, %v3872
      %v3875 = vunpack.c.l.s4 1983009808
      %v3876 = vunpack.c.0.s8 %v3875
      %v3877 = vlaneseq
      %v3878 = vshrl.u32 %v3877, 7
      %v3879 = vsub.s32 %v3876, %v3878
      %v3880 = vrot.slane %v2862, %v3879
      %v3881 = vcombine.low %v2861, %v2863
      %v3882 = vcombine.low %v2871, %v2879
      %v3884 = vunpack.c.l.s4 1983009808
      %v3885 = vunpack.c.0.s8 %v3884
      %v3886 = vlaneseq
      %v3887 = vshrl.u32 %v3886, 7
      %v3888 = vsub.s32 %v3885, %v3887
      %v3889 = vrot.slane %v3881, %v3888
      %v3891 = vunpack.c.l.s4 1983009808
      %v3892 = vunpack.c.0.s8 %v3891
      %v3893 = vlaneseq
      %v3894 = vshrl.u32 %v3893, 7
      %v3895 = vsub.s32 %v3892, %v3894
      %v3896 = vrot.slane %v3882, %v3895
      %v3897 = vcombine.low %v3889, %v3896
      %v3898 = vcombine.low %v2878, %v2880
      %v3899 = vcombine.low %v2888, %v2896
      %v3901 = vunpack.c.l.s4 1983009808
      %v3902 = vunpack.c.0.s8 %v3901
      %v3903 = vlaneseq
      %v3904 = vshrl.u32 %v3903, 7
      %v3905 = vsub.s32 %v3902, %v3904
      %v3906 = vrot.slane %v3898, %v3905
      %v3908 = vunpack.c.l.s4 1983009808
      %v3909 = vunpack.c.0.s8 %v3908
      %v3910 = vlaneseq
      %v3911 = vshrl.u32 %v3910, 7
      %v3912 = vsub.s32 %v3909, %v3911
      %v3913 = vrot.slane %v3899, %v3912
      %v3914 = vcombine.low %v3906, %v3913
      %v3916 = vunpack.c.l.s4 1983009808
      %v3917 = vunpack.c.0.s8 %v3916
      %v3918 = vlaneseq
      %v3919 = vshrl.u32 %v3918, 7
      %v3920 = vsub.s32 %v3917, %v3919
      %v3921 = vrot.slane %v2895, %v3920
      %v3922 = vcombine.low %v2897, %v2905
      %v3923 = vcombine.low %v2913, %v2912
      %v3925 = vunpack.c.l.s4 1983009808
      %v3926 = vunpack.c.0.s8 %v3925
      %v3927 = vlaneseq
      %v3928 = vshrl.u32 %v3927, 7
      %v3929 = vsub.s32 %v3926, %v3928
      %v3930 = vrot.slane %v3922, %v3929
      %v3932 = vunpack.c.l.s4 1983009808
      %v3933 = vunpack.c.0.s8 %v3932
      %v3934 = vlaneseq
      %v3935 = vshrl.u32 %v3934, 7
      %v3936 = vsub.s32 %v3933, %v3935
      %v3937 = vrot.slane %v3923, %v3936
      %v3938 = vcombine.low %v3930, %v3937
      %v3939 = vcombine.low %v2914, %v2922
      %v3940 = vcombine.low %v2930, %v2929
      %v3942 = vunpack.c.l.s4 1983009808
      %v3943 = vunpack.c.0.s8 %v3942
      %v3944 = vlaneseq
      %v3945 = vshrl.u32 %v3944, 7
      %v3946 = vsub.s32 %v3943, %v3945
      %v3947 = vrot.slane %v3939, %v3946
      %v3949 = vunpack.c.l.s4 1983009808
      %v3950 = vunpack.c.0.s8 %v3949
      %v3951 = vlaneseq
      %v3952 = vshrl.u32 %v3951, 7
      %v3953 = vsub.s32 %v3950, %v3952
      %v3954 = vrot.slane %v3940, %v3953
      %v3955 = vcombine.low %v3947, %v3954
      %v3957 = vunpack.c.l.s4 1983009808
      %v3958 = vunpack.c.0.s8 %v3957
      %v3959 = vlaneseq
      %v3960 = vshrl.u32 %v3959, 7
      %v3961 = vsub.s32 %v3958, %v3960
      %v3962 = vrot.slane %v2931, %v3961
      %v3963 = vcombine.low %v2939, %v2947
      %v3964 = vcombine.low %v2946, %v2948
      %v3966 = vunpack.c.l.s4 1983009808
      %v3967 = vunpack.c.0.s8 %v3966
      %v3968 = vlaneseq
      %v3969 = vshrl.u32 %v3968, 7
      %v3970 = vsub.s32 %v3967, %v3969
      %v3971 = vrot.slane %v3963, %v3970
      %v3973 = vunpack.c.l.s4 1983009808
      %v3974 = vunpack.c.0.s8 %v3973
      %v3975 = vlaneseq
      %v3976 = vshrl.u32 %v3975, 7
      %v3977 = vsub.s32 %v3974, %v3976
      %v3978 = vrot.slane %v3964, %v3977
      %v3979 = vcombine.low %v3971, %v3978
      %v3980 = vcombine.low %v2956, %v2964
      %v3981 = vcombine.low %v2963, %v2965
      %v3983 = vunpack.c.l.s4 1983009808
      %v3984 = vunpack.c.0.s8 %v3983
      %v3985 = vlaneseq
      %v3986 = vshrl.u32 %v3985, 7
      %v3987 = vsub.s32 %v3984, %v3986
      %v3988 = vrot.slane %v3980, %v3987
      %v3990 = vunpack.c.l.s4 1983009808
      %v3991 = vunpack.c.0.s8 %v3990
      %v3992 = vlaneseq
      %v3993 = vshrl.u32 %v3992, 7
      %v3994 = vsub.s32 %v3991, %v3993
      %v3995 = vrot.slane %v3981, %v3994
      %v3996 = vcombine.low %v3988, %v3995
      %v3998 = vunpack.c.l.s4 1983009808
      %v3999 = vunpack.c.0.s8 %v3998
      %v4000 = vlaneseq
      %v4001 = vshrl.u32 %v4000, 7
      %v4002 = vsub.s32 %v3999, %v4001
      %v4003 = vrot.slane %v2973, %v4002
      %v4004 = vcombine.low %v2981, %v2980
      %v4005 = vcombine.low %v2982, %v2990
      %v4007 = vunpack.c.l.s4 1983009808
      %v4008 = vunpack.c.0.s8 %v4007
      %v4009 = vlaneseq
      %v4010 = vshrl.u32 %v4009, 7
      %v4011 = vsub.s32 %v4008, %v4010
      %v4012 = vrot.slane %v4004, %v4011
      %v4014 = vunpack.c.l.s4 1983009808
      %v4015 = vunpack.c.0.s8 %v4014
      %v4016 = vlaneseq
      %v4017 = vshrl.u32 %v4016, 7
      %v4018 = vsub.s32 %v4015, %v4017
      %v4019 = vrot.slane %v4005, %v4018
      %v4020 = vcombine.low %v4012, %v4019
      %v4021 = vcombine.low %v2998, %v2997
      %v4022 = vcombine.low %v2999, %v3006
      %v4024 = vunpack.c.l.s4 1983009808
      %v4025 = vunpack.c.0.s8 %v4024
      %v4026 = vlaneseq
      %v4027 = vshrl.u32 %v4026, 7
      %v4028 = vsub.s32 %v4025, %v4027
      %v4029 = vrot.slane %v4021, %v4028
      %v4031 = vunpack.c.l.s4 1983009808
      %v4032 = vunpack.c.0.s8 %v4031
      %v4033 = vlaneseq
      %v4034 = vshrl.u32 %v4033, 7
      %v4035 = vsub.s32 %v4032, %v4034
      %v4036 = vrot.slane %v4022, %v4035
      %v4037 = vcombine.low %v4029, %v4036
      %v4039 = vunpack.c.l.s4 1983009808
      %v4040 = vunpack.c.0.s8 %v4039
      %v4041 = vlaneseq
      %v4042 = vshrl.u32 %v4041, 7
      %v4043 = vsub.s32 %v4040, %v4042
      %v4044 = vrot.slane %v3007, %v4043
      %v4099 = vsel %vm3253, %v3323, 0.0
      %v4100 = vsel %vm3254, %v3340, 0.0
      %v4101 = vsel %vm3255, %v3347, 0.0
      %v4102 = vsel %vm3256, %v3364, 0.0
      %v4103 = vsel %vm3257, %v3381, 0.0
      %v4104 = vsel %vm3258, %v3388, 0.0
      %v4105 = vsel %vm3259, %v3405, 0.0
      %v4106 = vsel %vm3260, %v3422, 0.0
      %v4107 = vsel %vm3261, %v3429, 0.0
      %v4108 = vsel %vm3262, %v3446, 0.0
      %v4109 = vsel %vm3263, %v3463, 0.0
      %v4110 = vsel %vm3264, %v3470, 0.0
      %v4111 = vsel %vm3265, %v3487, 0.0
      %v4112 = vsel %vm3266, %v3504, 0.0
      %v4113 = vsel %vm3267, %v3511, 0.0
      %v4114 = vsel %vm3268, %v3528, 0.0
      %v4115 = vsel %vm3269, %v3545, 0.0
      %v4116 = vsel %vm3270, %v3552, 0.0
      %v4117 = vsel %vm3271, %v3569, 0.0
      %v4118 = vsel %vm3272, %v3586, 0.0
      %v4119 = vsel %vm3273, %v3593, 0.0
      %v4120 = vsel %vm3274, %v3610, 0.0
      %v4121 = vsel %vm3275, %v3627, 0.0
      %v4122 = vsel %vm3276, %v3634, 0.0
      %v4123 = vsel %vm3277, %v3651, 0.0
      %v4124 = vsel %vm3278, %v3668, 0.0
      %v4125 = vsel %vm3279, %v3675, 0.0
      %v4126 = vsel %vm3280, %v3692, 0.0
      %v4127 = vsel %vm3281, %v3709, 0.0
      %v4128 = vsel %vm3282, %v3716, 0.0
      %v4129 = vsel %vm3283, %v3733, 0.0
      %v4130 = vsel %vm3284, %v3750, 0.0
      %v4131 = vsel %vm3285, %v3757, 0.0
      %v4132 = vsel %vm3286, %v3774, 0.0
      %v4133 = vsel %vm3287, %v3791, 0.0
      %v4134 = vsel %vm3288, %v3798, 0.0
      %v4135 = vsel %vm3289, %v3815, 0.0
      %v4136 = vsel %vm3290, %v3832, 0.0
      %v4137 = vsel %vm3291, %v3839, 0.0
      %v4138 = vsel %vm3292, %v3856, 0.0
      %v4139 = vsel %vm3293, %v3873, 0.0
      %v4140 = vsel %vm3294, %v3880, 0.0
      %v4141 = vsel %vm3295, %v3897, 0.0
      %v4142 = vsel %vm3296, %v3914, 0.0
      %v4143 = vsel %vm3297, %v3921, 0.0
      %v4144 = vsel %vm3298, %v3938, 0.0
      %v4145 = vsel %vm3299, %v3955, 0.0
      %v4146 = vsel %vm3300, %v3962, 0.0
      %v4147 = vsel %vm3301, %v3979, 0.0
      %v4148 = vsel %vm3302, %v3996, 0.0
      %v4149 = vsel %vm3303, %v4003, 0.0
      %v4150 = vsel %vm3304, %v4020, 0.0
      %v4151 = vsel %vm3305, %v4037, 0.0
      %v4152 = vsel %vm3306, %v4044, 0.0
      %v4153 = vld [vmem:[%s3] sm:$0x3]
      %vm4154 = vcmask 15360
      %v4156 = vsel %vm4154, %v4099, 0
      %v4159 = vsel %vm4154, %v4100, 0
      %v4162 = vsel %vm4154, %v4102, 0
      %v4165 = vsel %vm4154, %v4103, 0
      %v4168 = vsel %vm4154, %v4105, 0
      %v4171 = vsel %vm4154, %v4106, 0
      %v4174 = vsel %vm4154, %v4108, 0
      %v4177 = vsel %vm4154, %v4109, 0
      %v4180 = vsel %vm4154, %v4111, 0
      %v4183 = vsel %vm4154, %v4112, 0
      %v4186 = vsel %vm4154, %v4114, 0
      %v4189 = vsel %vm4154, %v4115, 0
      %v4192 = vsel %vm4154, %v4117, 0
      %v4195 = vsel %vm4154, %v4118, 0
      %v4198 = vsel %vm4154, %v4120, 0
      %v4201 = vsel %vm4154, %v4121, 0
      %v4204 = vsel %vm4154, %v4123, 0
      %v4207 = vsel %vm4154, %v4124, 0
      %v4210 = vsel %vm4154, %v4126, 0
      %v4213 = vsel %vm4154, %v4127, 0
      %v4216 = vsel %vm4154, %v4129, 0
      %v4219 = vsel %vm4154, %v4130, 0
      %v4222 = vsel %vm4154, %v4132, 0
      %v4225 = vsel %vm4154, %v4133, 0
      %v4228 = vsel %vm4154, %v4135, 0
      %v4231 = vsel %vm4154, %v4136, 0
      %v4234 = vsel %vm4154, %v4138, 0
      %v4237 = vsel %vm4154, %v4139, 0
      %v4240 = vsel %vm4154, %v4141, 0
      %v4243 = vsel %vm4154, %v4142, 0
      %v4246 = vsel %vm4154, %v4144, 0
      %v4249 = vsel %vm4154, %v4145, 0
      %vm4251 = vcmask 1041408
      %v4253 = vsel %vm4251, %v4153, 0
      %4255 = vmatprep.subr.mxu0 0.0
      %4256 = vmatpush1.msra.mxu0 %v4253
      %4257 = vmatprep.subr.mxu0 0.0
      %4258 = vmatpush1.msra.mxu0 0.0
      %4259 = vmatprep.subr.mxu0 0.0
      %4260 = vmatpush1.msra.mxu0 0.0
      %4261 = vmatprep.subr.mxu0 0.0
      %4262 = vmatpush1.msra.mxu0 0.0
      %4263 = vmatprep.subr.mxu0 0.0
      %4264 = vmatpush1.msra.mxu0 0.0
      %4265 = vmatprep.subr.mxu0 0.0
      %4266 = vmatpush1.msra.mxu0 0.0
      %4267 = vmatprep.subr.mxu0 0.0
      %4268 = vmatpush1.msra.mxu0 0.0
      %4269 = vmatprep.subr.mxu0 0.0
      %4270 = vmatpush1.msra.mxu0 0.0
      %4271 = vmatprep.subr.mxu0 0.0
      %4272 = vmatpush1.msra.mxu0 0.0
      %4273 = vmatprep.subr.mxu0 0.0
      %4274 = vmatpush1.msra.mxu0 0.0
      %4275 = vmatprep.subr.mxu0 0.0
      %4276 = vmatpush1.msra.mxu0 0.0
      %4277 = vmatprep.subr.mxu0 0.0
      %4278 = vmatpush1.msra.mxu0 0.0
      %4279 = vmatprep.subr.mxu0 0.0
      %4280 = vmatpush1.msra.mxu0 0.0
      %4281 = vmatprep.subr.mxu0 0.0
      %4282 = vmatpush1.msra.mxu0 0.0
      %4283 = vmatprep.subr.mxu0 0.0
      %4284 = vmatpush1.msra.mxu0 0.0
      %4285 = vmatprep.subr.mxu0 0.0
      %4286 = vmatpush1.msra.mxu0 0.0
      %4287 = vmatprep.subr.mxu0 0.0
      %4288 = vmatpush1.msra.mxu0 0.0
      %4289 = vmatprep.subr.mxu0 0.0
      %4290 = vmatpush1.msra.mxu0 0.0
      %4291 = vmatprep.subr.mxu0 0.0
      %4292 = vmatpush1.msra.mxu0 0.0
      %4293 = vmatprep.subr.mxu0 0.0
      %4294 = vmatpush1.msra.mxu0 0.0
      %4295 = vmatprep.subr.mxu0 0.0
      %4296 = vmatpush1.msra.mxu0 0.0
      %4297 = vmatprep.subr.mxu0 0.0
      %4298 = vmatpush1.msra.mxu0 0.0
      %4299 = vmatprep.subr.mxu0 0.0
      %4300 = vmatpush1.msra.mxu0 0.0
      %4301 = vmatprep.subr.mxu0 0.0
      %4302 = vmatpush1.msra.mxu0 0.0
      %4303 = vmatprep.subr.mxu0 0.0
      %4304 = vmatpush1.msra.mxu0 0.0
      %4305 = vmatprep.subr.mxu0 0.0
      %4306 = vmatpush1.msra.mxu0 0.0
      %4307 = vmatprep.subr.mxu0 0.0
      %4308 = vmatpush1.msra.mxu0 0.0
      %4309 = vmatprep.subr.mxu0 0.0
      %4310 = vmatpush1.msra.mxu0 0.0
      %4311 = vmatprep.subr.mxu0 0.0
      %4312 = vmatpush1.msra.mxu0 0.0
      %4313 = vmatprep.subr.mxu0 0.0
      %4314 = vmatpush1.msra.mxu0 0.0
      %4315 = vmatprep.subr.mxu0 0.0
      %4316 = vmatpush1.msra.mxu0 0.0
      %4317 = vmatprep.subr.mxu0 0.0
      %4318 = vmatpush1.msra.mxu0 0.0
      %4319 = vmatprep.mubr.f32.mxu0 0.0
      %4320 = vmatmul.mubr.f32.gmra.mrb[0].mxu0 %v4156
      %v4321 = vpop.f32.mrb[0].mxu0
      %v4322 = vadd.f32 0.0, %v4321
      %v4323 = vpop.f32.mrb[0].mxu0
      %4324 = vmatprep.mubr.f32.mxu0 0.0
      %4325 = vmatmul.mubr.f32.gmra.mrb[0].mxu0 %v4159
      %v4326 = vpop.f32.mrb[0].mxu0
      %v4327 = vadd.f32 0.0, %v4326
      %v4328 = vpop.f32.mrb[0].mxu0
      %4329 = vmatprep.mubr.f32.mxu0 0.0
      %4330 = vmatmul.mubr.f32.gmra.mrb[0].mxu0 %v4162
      %v4331 = vpop.f32.mrb[0].mxu0
      %v4332 = vadd.f32 0.0, %v4331
      %v4333 = vpop.f32.mrb[0].mxu0
      %4334 = vmatprep.mubr.f32.mxu0 0.0
      %4335 = vmatmul.mubr.f32.gmra.mrb[0].mxu0 %v4165
      %v4336 = vpop.f32.mrb[0].mxu0
      %v4337 = vadd.f32 0.0, %v4336
      %v4338 = vpop.f32.mrb[0].mxu0
      %4339 = vmatprep.mubr.f32.mxu0 0.0
      %4340 = vmatmul.mubr.f32.gmra.mrb[0].mxu0 %v4168
      %v4341 = vpop.f32.mrb[0].mxu0
      %v4342 = vadd.f32 0.0, %v4341
      %v4343 = vpop.f32.mrb[0].mxu0
      %4344 = vmatprep.mubr.f32.mxu0 0.0
      %4345 = vmatmul.mubr.f32.gmra.mrb[0].mxu0 %v4171
      %v4346 = vpop.f32.mrb[0].mxu0
      %v4347 = vadd.f32 0.0, %v4346
      %v4348 = vpop.f32.mrb[0].mxu0
      %4349 = vmatprep.mubr.f32.mxu0 0.0
      %4350 = vmatmul.mubr.f32.gmra.mrb[0].mxu0 %v4174
      %v4351 = vpop.f32.mrb[0].mxu0
      %v4352 = vadd.f32 0.0, %v4351
      %v4353 = vpop.f32.mrb[0].mxu0
      %4354 = vmatprep.mubr.f32.mxu0 0.0
      %4355 = vmatmul.mubr.f32.gmra.mrb[0].mxu0 %v4177
      %v4356 = vpop.f32.mrb[0].mxu0
      %v4357 = vadd.f32 0.0, %v4356
      %v4358 = vpop.f32.mrb[0].mxu0
      %4359 = vmatprep.mubr.f32.mxu0 0.0
      %4360 = vmatmul.mubr.f32.gmra.mrb[0].mxu0 %v4180
      %v4361 = vpop.f32.mrb[0].mxu0
      %v4362 = vadd.f32 0.0, %v4361
      %v4363 = vpop.f32.mrb[0].mxu0
      %4364 = vmatprep.mubr.f32.mxu0 0.0
      %4365 = vmatmul.mubr.f32.gmra.mrb[0].mxu0 %v4183
      %v4366 = vpop.f32.mrb[0].mxu0
      %v4367 = vadd.f32 0.0, %v4366
      %v4368 = vpop.f32.mrb[0].mxu0
      %4369 = vmatprep.mubr.f32.mxu0 0.0
      %4370 = vmatmul.mubr.f32.gmra.mrb[0].mxu0 %v4186
      %v4371 = vpop.f32.mrb[0].mxu0
      %v4372 = vadd.f32 0.0, %v4371
      %v4373 = vpop.f32.mrb[0].mxu0
      %4374 = vmatprep.mubr.f32.mxu0 0.0
      %4375 = vmatmul.mubr.f32.gmra.mrb[0].mxu0 %v4189
      %v4376 = vpop.f32.mrb[0].mxu0
      %v4377 = vadd.f32 0.0, %v4376
      %v4378 = vpop.f32.mrb[0].mxu0
      %4379 = vmatprep.mubr.f32.mxu0 0.0
      %4380 = vmatmul.mubr.f32.gmra.mrb[0].mxu0 %v4192
      %v4381 = vpop.f32.mrb[0].mxu0
      %v4382 = vadd.f32 0.0, %v4381
      %v4383 = vpop.f32.mrb[0].mxu0
      %4384 = vmatprep.mubr.f32.mxu0 0.0
      %4385 = vmatmul.mubr.f32.gmra.mrb[0].mxu0 %v4195
      %v4386 = vpop.f32.mrb[0].mxu0
      %v4387 = vadd.f32 0.0, %v4386
      %v4388 = vpop.f32.mrb[0].mxu0
      %4389 = vmatprep.mubr.f32.mxu0 0.0
      %4390 = vmatmul.mubr.f32.gmra.mrb[0].mxu0 %v4198
      %v4391 = vpop.f32.mrb[0].mxu0
      %v4392 = vadd.f32 0.0, %v4391
      %v4393 = vpop.f32.mrb[0].mxu0
      %4394 = vmatprep.mubr.f32.mxu0 0.0
      %4395 = vmatmul.mubr.f32.gmra.mrb[0].mxu0 %v4201
      %v4396 = vpop.f32.mrb[0].mxu0
      %v4397 = vadd.f32 0.0, %v4396
      %v4398 = vpop.f32.mrb[0].mxu0
      %4399 = vmatprep.mubr.f32.mxu0 0.0
      %4400 = vmatmul.mubr.f32.gmra.mrb[0].mxu0 %v4204
      %v4401 = vpop.f32.mrb[0].mxu0
      %v4402 = vadd.f32 0.0, %v4401
      %v4403 = vpop.f32.mrb[0].mxu0
      %4404 = vmatprep.mubr.f32.mxu0 0.0
      %4405 = vmatmul.mubr.f32.gmra.mrb[0].mxu0 %v4207
      %v4406 = vpop.f32.mrb[0].mxu0
      %v4407 = vadd.f32 0.0, %v4406
      %v4408 = vpop.f32.mrb[0].mxu0
      %4409 = vmatprep.mubr.f32.mxu0 0.0
      %4410 = vmatmul.mubr.f32.gmra.mrb[0].mxu0 %v4210
      %v4411 = vpop.f32.mrb[0].mxu0
      %v4412 = vadd.f32 0.0, %v4411
      %v4413 = vpop.f32.mrb[0].mxu0
      %4414 = vmatprep.mubr.f32.mxu0 0.0
      %4415 = vmatmul.mubr.f32.gmra.mrb[0].mxu0 %v4213
      %v4416 = vpop.f32.mrb[0].mxu0
      %v4417 = vadd.f32 0.0, %v4416
      %v4418 = vpop.f32.mrb[0].mxu0
      %4419 = vmatprep.mubr.f32.mxu0 0.0
      %4420 = vmatmul.mubr.f32.gmra.mrb[0].mxu0 %v4216
      %v4421 = vpop.f32.mrb[0].mxu0
      %v4422 = vadd.f32 0.0, %v4421
      %v4423 = vpop.f32.mrb[0].mxu0
      %4424 = vmatprep.mubr.f32.mxu0 0.0
      %4425 = vmatmul.mubr.f32.gmra.mrb[0].mxu0 %v4219
      %v4426 = vpop.f32.mrb[0].mxu0
      %v4427 = vadd.f32 0.0, %v4426
      %v4428 = vpop.f32.mrb[0].mxu0
      %4429 = vmatprep.mubr.f32.mxu0 0.0
      %4430 = vmatmul.mubr.f32.gmra.mrb[0].mxu0 %v4222
      %v4431 = vpop.f32.mrb[0].mxu0
      %v4432 = vadd.f32 0.0, %v4431
      %v4433 = vpop.f32.mrb[0].mxu0
      %4434 = vmatprep.mubr.f32.mxu0 0.0
      %4435 = vmatmul.mubr.f32.gmra.mrb[0].mxu0 %v4225
      %v4436 = vpop.f32.mrb[0].mxu0
      %v4437 = vadd.f32 0.0, %v4436
      %v4438 = vpop.f32.mrb[0].mxu0
      %4439 = vmatprep.mubr.f32.mxu0 0.0
      %4440 = vmatmul.mubr.f32.gmra.mrb[0].mxu0 %v4228
      %v4441 = vpop.f32.mrb[0].mxu0
      %v4442 = vadd.f32 0.0, %v4441
      %v4443 = vpop.f32.mrb[0].mxu0
      %4444 = vmatprep.mubr.f32.mxu0 0.0
      %4445 = vmatmul.mubr.f32.gmra.mrb[0].mxu0 %v4231
      %v4446 = vpop.f32.mrb[0].mxu0
      %v4447 = vadd.f32 0.0, %v4446
      %v4448 = vpop.f32.mrb[0].mxu0
      %4449 = vmatprep.mubr.f32.mxu0 0.0
      %4450 = vmatmul.mubr.f32.gmra.mrb[0].mxu0 %v4234
      %v4451 = vpop.f32.mrb[0].mxu0
      %v4452 = vadd.f32 0.0, %v4451
      %v4453 = vpop.f32.mrb[0].mxu0
      %4454 = vmatprep.mubr.f32.mxu0 0.0
      %4455 = vmatmul.mubr.f32.gmra.mrb[0].mxu0 %v4237
      %v4456 = vpop.f32.mrb[0].mxu0
      %v4457 = vadd.f32 0.0, %v4456
      %v4458 = vpop.f32.mrb[0].mxu0
      %4459 = vmatprep.mubr.f32.mxu0 0.0
      %4460 = vmatmul.mubr.f32.gmra.mrb[0].mxu0 %v4240
      %v4461 = vpop.f32.mrb[0].mxu0
      %v4462 = vadd.f32 0.0, %v4461
      %v4463 = vpop.f32.mrb[0].mxu0
      %4464 = vmatprep.mubr.f32.mxu0 0.0
      %4465 = vmatmul.mubr.f32.gmra.mrb[0].mxu0 %v4243
      %v4466 = vpop.f32.mrb[0].mxu0
      %v4467 = vadd.f32 0.0, %v4466
      %v4468 = vpop.f32.mrb[0].mxu0
      %4469 = vmatprep.mubr.f32.mxu0 0.0
      %4470 = vmatmul.mubr.f32.gmra.mrb[0].mxu0 %v4246
      %v4471 = vpop.f32.mrb[0].mxu0
      %v4472 = vadd.f32 0.0, %v4471
      %v4473 = vpop.f32.mrb[0].mxu0
      %4474 = vmatprep.mubr.f32.mxu0 0.0
      %4475 = vmatmul.mubr.f32.gmra.mrb[0].mxu0 %v4249
      %v4476 = vpop.f32.mrb[0].mxu0
      %v4477 = vadd.f32 0.0, %v4476
      %v4478 = vpop.f32.mrb[0].mxu0
      %4479 = vdwg.mxu0
      %4480 = vst.msk [vmem:[#allocation2] sm:$0xff] %vm1799, %v4322
      %4481 = vst.msk [vmem:[#allocation2 + $0x8] sm:$0xff] %vm1799, %v4327
      %4482 = vst.msk [vmem:[#allocation2 + $0x10] sm:$0xff] %vm1799, %v4332
      %4483 = vst.msk [vmem:[#allocation2 + $0x18] sm:$0xff] %vm1799, %v4337
      %4484 = vst.msk [vmem:[#allocation2 + $0x20] sm:$0xff] %vm1799, %v4342
      %4485 = vst.msk [vmem:[#allocation2 + $0x28] sm:$0xff] %vm1799, %v4347
      %4486 = vst.msk [vmem:[#allocation2 + $0x30] sm:$0xff] %vm1799, %v4352
      %4487 = vst.msk [vmem:[#allocation2 + $0x38] sm:$0xff] %vm1799, %v4357
      %4488 = vst.msk [vmem:[#allocation2 + $0x40] sm:$0xff] %vm1799, %v4362
      %4489 = vst.msk [vmem:[#allocation2 + $0x48] sm:$0xff] %vm1799, %v4367
      %4490 = vst.msk [vmem:[#allocation2 + $0x50] sm:$0xff] %vm1799, %v4372
      %4491 = vst.msk [vmem:[#allocation2 + $0x58] sm:$0xff] %vm1799, %v4377
      %4492 = vst.msk [vmem:[#allocation2 + $0x60] sm:$0xff] %vm1799, %v4382
      %4493 = vst.msk [vmem:[#allocation2 + $0x68] sm:$0xff] %vm1799, %v4387
      %4494 = vst.msk [vmem:[#allocation2 + $0x70] sm:$0xff] %vm1799, %v4392
      %4495 = vst.msk [vmem:[#allocation2 + $0x78] sm:$0xff] %vm1799, %v4397
      %4496 = vst.msk [vmem:[#allocation2 + $0x80] sm:$0xff] %vm1799, %v4402
      %4497 = vst.msk [vmem:[#allocation2 + $0x88] sm:$0xff] %vm1799, %v4407
      %4498 = vst.msk [vmem:[#allocation2 + $0x90] sm:$0xff] %vm1799, %v4412
      %4499 = vst.msk [vmem:[#allocation2 + $0x98] sm:$0xff] %vm1799, %v4417
      %4500 = vst.msk [vmem:[#allocation2 + $0xa0] sm:$0xff] %vm1799, %v4422
      %4501 = vst.msk [vmem:[#allocation2 + $0xa8] sm:$0xff] %vm1799, %v4427
      %4502 = vst.msk [vmem:[#allocation2 + $0xb0] sm:$0xff] %vm1799, %v4432
      %4503 = vst.msk [vmem:[#allocation2 + $0xb8] sm:$0xff] %vm1799, %v4437
      %4504 = vst.msk [vmem:[#allocation2 + $0xc0] sm:$0xff] %vm1799, %v4442
      %4505 = vst.msk [vmem:[#allocation2 + $0xc8] sm:$0xff] %vm1799, %v4447
      %4506 = vst.msk [vmem:[#allocation2 + $0xd0] sm:$0xff] %vm1799, %v4452
      %4507 = vst.msk [vmem:[#allocation2 + $0xd8] sm:$0xff] %vm1799, %v4457
      %4508 = vst.msk [vmem:[#allocation2 + $0xe0] sm:$0xff] %vm1799, %v4462
      %4509 = vst.msk [vmem:[#allocation2 + $0xe8] sm:$0xff] %vm1799, %v4467
      %4510 = vst.msk [vmem:[#allocation2 + $0xf0] sm:$0xff] %vm1799, %v4472
      %4511 = vst.msk [vmem:[#allocation2 + $0xf8] sm:$0xff] %vm1799, %v4477
      %vm4528 = vcmask 1046528
      %v4529 = vrot.slane %v4099, 1
      %v4530 = vrot.slane %v4100, 1
      %v4531 = vsel %vm4528, %v4529, %v4530
      %v4532 = vrot.slane %v4101, 1
      %v4533 = vsel %vm4528, %v4530, %v4532
      %v4534 = vrot.slane %v4102, 1
      %v4535 = vrot.slane %v4103, 1
      %v4536 = vsel %vm4528, %v4534, %v4535
      %v4537 = vrot.slane %v4104, 1
      %v4538 = vsel %vm4528, %v4535, %v4537
      %v4539 = vrot.slane %v4105, 1
      %v4540 = vrot.slane %v4106, 1
      %v4541 = vsel %vm4528, %v4539, %v4540
      %v4542 = vrot.slane %v4107, 1
      %v4543 = vsel %vm4528, %v4540, %v4542
      %v4544 = vrot.slane %v4108, 1
      %v4545 = vrot.slane %v4109, 1
      %v4546 = vsel %vm4528, %v4544, %v4545
      %v4547 = vrot.slane %v4110, 1
      %v4548 = vsel %vm4528, %v4545, %v4547
      %v4549 = vrot.slane %v4111, 1
      %v4550 = vrot.slane %v4112, 1
      %v4551 = vsel %vm4528, %v4549, %v4550
      %v4552 = vrot.slane %v4113, 1
      %v4553 = vsel %vm4528, %v4550, %v4552
      %v4554 = vrot.slane %v4114, 1
      %v4555 = vrot.slane %v4115, 1
      %v4556 = vsel %vm4528, %v4554, %v4555
      %v4557 = vrot.slane %v4116, 1
      %v4558 = vsel %vm4528, %v4555, %v4557
      %v4559 = vrot.slane %v4117, 1
      %v4560 = vrot.slane %v4118, 1
      %v4561 = vsel %vm4528, %v4559, %v4560
      %v4562 = vrot.slane %v4119, 1
      %v4563 = vsel %vm4528, %v4560, %v4562
      %v4564 = vrot.slane %v4120, 1
      %v4565 = vrot.slane %v4121, 1
      %v4566 = vsel %vm4528, %v4564, %v4565
      %v4567 = vrot.slane %v4122, 1
      %v4568 = vsel %vm4528, %v4565, %v4567
      %v4569 = vrot.slane %v4123, 1
      %v4570 = vrot.slane %v4124, 1
      %v4571 = vsel %vm4528, %v4569, %v4570
      %v4572 = vrot.slane %v4125, 1
      %v4573 = vsel %vm4528, %v4570, %v4572
      %v4574 = vrot.slane %v4126, 1
      %v4575 = vrot.slane %v4127, 1
      %v4576 = vsel %vm4528, %v4574, %v4575
      %v4577 = vrot.slane %v4128, 1
      %v4578 = vsel %vm4528, %v4575, %v4577
      %v4579 = vrot.slane %v4129, 1
      %v4580 = vrot.slane %v4130, 1
      %v4581 = vsel %vm4528, %v4579, %v4580
      %v4582 = vrot.slane %v4131, 1
      %v4583 = vsel %vm4528, %v4580, %v4582
      %v4584 = vrot.slane %v4132, 1
      %v4585 = vrot.slane %v4133, 1
      %v4586 = vsel %vm4528, %v4584, %v4585
      %v4587 = vrot.slane %v4134, 1
      %v4588 = vsel %vm4528, %v4585, %v4587
      %v4589 = vrot.slane %v4135, 1
      %v4590 = vrot.slane %v4136, 1
      %v4591 = vsel %vm4528, %v4589, %v4590
      %v4592 = vrot.slane %v4137, 1
      %v4593 = vsel %vm4528, %v4590, %v4592
      %v4594 = vrot.slane %v4138, 1
      %v4595 = vrot.slane %v4139, 1
      %v4596 = vsel %vm4528, %v4594, %v4595
      %v4597 = vrot.slane %v4140, 1
      %v4598 = vsel %vm4528, %v4595, %v4597
      %v4599 = vrot.slane %v4141, 1
      %v4600 = vrot.slane %v4142, 1
      %v4601 = vsel %vm4528, %v4599, %v4600
      %v4602 = vrot.slane %v4143, 1
      %v4603 = vsel %vm4528, %v4600, %v4602
      %v4604 = vrot.slane %v4144, 1
      %v4605 = vrot.slane %v4145, 1
      %v4606 = vsel %vm4528, %v4604, %v4605
      %v4607 = vrot.slane %v4146, 1
      %v4608 = vsel %vm4528, %v4605, %v4607
      %s4609 = scalar_lea.vmem %s3, 2
      %v4610 = vld [vmem:[%s4609] sm:$0x3]
      %v4611 = vsel %vm4154, %v4531, 0
      %v4613 = vsel %vm4154, %v4533, 0
      %v4615 = vsel %vm4154, %v4536, 0
      %v4617 = vsel %vm4154, %v4538, 0
      %v4619 = vsel %vm4154, %v4541, 0
      %v4621 = vsel %vm4154, %v4543, 0
      %v4623 = vsel %vm4154, %v4546, 0
      %v4625 = vsel %vm4154, %v4548, 0
      %v4627 = vsel %vm4154, %v4551, 0
      %v4629 = vsel %vm4154, %v4553, 0
      %v4631 = vsel %vm4154, %v4556, 0
      %v4633 = vsel %vm4154, %v4558, 0
      %v4635 = vsel %vm4154, %v4561, 0
      %v4637 = vsel %vm4154, %v4563, 0
      %v4639 = vsel %vm4154, %v4566, 0
      %v4641 = vsel %vm4154, %v4568, 0
      %v4643 = vsel %vm4154, %v4571, 0
      %v4645 = vsel %vm4154, %v4573, 0
      %v4647 = vsel %vm4154, %v4576, 0
      %v4649 = vsel %vm4154, %v4578, 0
      %v4651 = vsel %vm4154, %v4581, 0
      %v4653 = vsel %vm4154, %v4583, 0
      %v4655 = vsel %vm4154, %v4586, 0
      %v4657 = vsel %vm4154, %v4588, 0
      %v4659 = vsel %vm4154, %v4591, 0
      %v4661 = vsel %vm4154, %v4593, 0
      %v4663 = vsel %vm4154, %v4596, 0
      %v4665 = vsel %vm4154, %v4598, 0
      %v4667 = vsel %vm4154, %v4601, 0
      %v4669 = vsel %vm4154, %v4603, 0
      %v4671 = vsel %vm4154, %v4606, 0
      %v4673 = vsel %vm4154, %v4608, 0
      %v4676 = vsel %vm4251, %v4610, 0
      %4678 = vmatprep.subr.mxu0 0.0
      %4679 = vmatpush1.msra.mxu0 %v4676
      %4680 = vmatprep.subr.mxu0 0.0
      %4681 = vmatpush1.msra.mxu0 0.0
      %4682 = vmatprep.subr.mxu0 0.0
      %4683 = vmatpush1.msra.mxu0 0.0
      %4684 = vmatprep.subr.mxu0 0.0
      %4685 = vmatpush1.msra.mxu0 0.0
      %4686 = vmatprep.subr.mxu0 0.0
      %4687 = vmatpush1.msra.mxu0 0.0
      %4688 = vmatprep.subr.mxu0 0.0
      %4689 = vmatpush1.msra.mxu0 0.0
      %4690 = vmatprep.subr.mxu0 0.0
      %4691 = vmatpush1.msra.mxu0 0.0
      %4692 = vmatprep.subr.mxu0 0.0
      %4693 = vmatpush1.msra.mxu0 0.0
      %4694 = vmatprep.subr.mxu0 0.0
      %4695 = vmatpush1.msra.mxu0 0.0
      %4696 = vmatprep.subr.mxu0 0.0
      %4697 = vmatpush1.msra.mxu0 0.0
      %4698 = vmatprep.subr.mxu0 0.0
      %4699 = vmatpush1.msra.mxu0 0.0
      %4700 = vmatprep.subr.mxu0 0.0
      %4701 = vmatpush1.msra.mxu0 0.0
      %4702 = vmatprep.subr.mxu0 0.0
      %4703 = vmatpush1.msra.mxu0 0.0
      %4704 = vmatprep.subr.mxu0 0.0
      %4705 = vmatpush1.msra.mxu0 0.0
      %4706 = vmatprep.subr.mxu0 0.0
      %4707 = vmatpush1.msra.mxu0 0.0
      %4708 = vmatprep.subr.mxu0 0.0
      %4709 = vmatpush1.msra.mxu0 0.0
      %4710 = vmatprep.subr.mxu0 0.0
      %4711 = vmatpush1.msra.mxu0 0.0
      %4712 = vmatprep.subr.mxu0 0.0
      %4713 = vmatpush1.msra.mxu0 0.0
      %4714 = vmatprep.subr.mxu0 0.0
      %4715 = vmatpush1.msra.mxu0 0.0
      %4716 = vmatprep.subr.mxu0 0.0
      %4717 = vmatpush1.msra.mxu0 0.0
      %4718 = vmatprep.subr.mxu0 0.0
      %4719 = vmatpush1.msra.mxu0 0.0
      %4720 = vmatprep.subr.mxu0 0.0
      %4721 = vmatpush1.msra.mxu0 0.0
      %4722 = vmatprep.subr.mxu0 0.0
      %4723 = vmatpush1.msra.mxu0 0.0
      %4724 = vmatprep.subr.mxu0 0.0
      %4725 = vmatpush1.msra.mxu0 0.0
      %4726 = vmatprep.subr.mxu0 0.0
      %4727 = vmatpush1.msra.mxu0 0.0
      %4728 = vmatprep.subr.mxu0 0.0
      %4729 = vmatpush1.msra.mxu0 0.0
      %4730 = vmatprep.subr.mxu0 0.0
      %4731 = vmatpush1.msra.mxu0 0.0
      %4732 = vmatprep.subr.mxu0 0.0
      %4733 = vmatpush1.msra.mxu0 0.0
      %4734 = vmatprep.subr.mxu0 0.0
      %4735 = vmatpush1.msra.mxu0 0.0
      %4736 = vmatprep.subr.mxu0 0.0
      %4737 = vmatpush1.msra.mxu0 0.0
      %4738 = vmatprep.subr.mxu0 0.0
      %4739 = vmatpush1.msra.mxu0 0.0
      %4740 = vmatprep.subr.mxu0 0.0
      %4741 = vmatpush1.msra.mxu0 0.0
      %4742 = vmatprep.mubr.f32.mxu0 0.0
      %4743 = vmatmul.mubr.f32.gmra.mrb[0].mxu0 %v4611
      %v4744 = vpop.f32.mrb[0].mxu0
      %v4745 = vadd.f32 0.0, %v4744
      %v4746 = vpop.f32.mrb[0].mxu0
      %4747 = vmatprep.mubr.f32.mxu0 0.0
      %4748 = vmatmul.mubr.f32.gmra.mrb[0].mxu0 %v4613
      %v4749 = vpop.f32.mrb[0].mxu0
      %v4750 = vadd.f32 0.0, %v4749
      %v4751 = vpop.f32.mrb[0].mxu0
      %4752 = vmatprep.mubr.f32.mxu0 0.0
      %4753 = vmatmul.mubr.f32.gmra.mrb[0].mxu0 %v4615
      %v4754 = vpop.f32.mrb[0].mxu0
      %v4755 = vadd.f32 0.0, %v4754
      %v4756 = vpop.f32.mrb[0].mxu0
      %4757 = vmatprep.mubr.f32.mxu0 0.0
      %4758 = vmatmul.mubr.f32.gmra.mrb[0].mxu0 %v4617
      %v4759 = vpop.f32.mrb[0].mxu0
      %v4760 = vadd.f32 0.0, %v4759
      %v4761 = vpop.f32.mrb[0].mxu0
      %4762 = vmatprep.mubr.f32.mxu0 0.0
      %4763 = vmatmul.mubr.f32.gmra.mrb[0].mxu0 %v4619
      %v4764 = vpop.f32.mrb[0].mxu0
      %v4765 = vadd.f32 0.0, %v4764
      %v4766 = vpop.f32.mrb[0].mxu0
      %4767 = vmatprep.mubr.f32.mxu0 0.0
      %4768 = vmatmul.mubr.f32.gmra.mrb[0].mxu0 %v4621
      %v4769 = vpop.f32.mrb[0].mxu0
      %v4770 = vadd.f32 0.0, %v4769
      %v4771 = vpop.f32.mrb[0].mxu0
      %4772 = vmatprep.mubr.f32.mxu0 0.0
      %4773 = vmatmul.mubr.f32.gmra.mrb[0].mxu0 %v4623
      %v4774 = vpop.f32.mrb[0].mxu0
      %v4775 = vadd.f32 0.0, %v4774
      %v4776 = vpop.f32.mrb[0].mxu0
      %4777 = vmatprep.mubr.f32.mxu0 0.0
      %4778 = vmatmul.mubr.f32.gmra.mrb[0].mxu0 %v4625
      %v4779 = vpop.f32.mrb[0].mxu0
      %v4780 = vadd.f32 0.0, %v4779
      %v4781 = vpop.f32.mrb[0].mxu0
      %4782 = vmatprep.mubr.f32.mxu0 0.0
      %4783 = vmatmul.mubr.f32.gmra.mrb[0].mxu0 %v4627
      %v4784 = vpop.f32.mrb[0].mxu0
      %v4785 = vadd.f32 0.0, %v4784
      %v4786 = vpop.f32.mrb[0].mxu0
      %4787 = vmatprep.mubr.f32.mxu0 0.0
      %4788 = vmatmul.mubr.f32.gmra.mrb[0].mxu0 %v4629
      %v4789 = vpop.f32.mrb[0].mxu0
      %v4790 = vadd.f32 0.0, %v4789
      %v4791 = vpop.f32.mrb[0].mxu0
      %4792 = vmatprep.mubr.f32.mxu0 0.0
      %4793 = vmatmul.mubr.f32.gmra.mrb[0].mxu0 %v4631
      %v4794 = vpop.f32.mrb[0].mxu0
      %v4795 = vadd.f32 0.0, %v4794
      %v4796 = vpop.f32.mrb[0].mxu0
      %4797 = vmatprep.mubr.f32.mxu0 0.0
      %4798 = vmatmul.mubr.f32.gmra.mrb[0].mxu0 %v4633
      %v4799 = vpop.f32.mrb[0].mxu0
      %v4800 = vadd.f32 0.0, %v4799
      %v4801 = vpop.f32.mrb[0].mxu0
      %4802 = vmatprep.mubr.f32.mxu0 0.0
      %4803 = vmatmul.mubr.f32.gmra.mrb[0].mxu0 %v4635
      %v4804 = vpop.f32.mrb[0].mxu0
      %v4805 = vadd.f32 0.0, %v4804
      %v4806 = vpop.f32.mrb[0].mxu0
      %4807 = vmatprep.mubr.f32.mxu0 0.0
      %4808 = vmatmul.mubr.f32.gmra.mrb[0].mxu0 %v4637
      %v4809 = vpop.f32.mrb[0].mxu0
      %v4810 = vadd.f32 0.0, %v4809
      %v4811 = vpop.f32.mrb[0].mxu0
      %4812 = vmatprep.mubr.f32.mxu0 0.0
      %4813 = vmatmul.mubr.f32.gmra.mrb[0].mxu0 %v4639
      %v4814 = vpop.f32.mrb[0].mxu0
      %v4815 = vadd.f32 0.0, %v4814
      %v4816 = vpop.f32.mrb[0].mxu0
      %4817 = vmatprep.mubr.f32.mxu0 0.0
      %4818 = vmatmul.mubr.f32.gmra.mrb[0].mxu0 %v4641
      %v4819 = vpop.f32.mrb[0].mxu0
      %v4820 = vadd.f32 0.0, %v4819
      %v4821 = vpop.f32.mrb[0].mxu0
      %4822 = vmatprep.mubr.f32.mxu0 0.0
      %4823 = vmatmul.mubr.f32.gmra.mrb[0].mxu0 %v4643
      %v4824 = vpop.f32.mrb[0].mxu0
      %v4825 = vadd.f32 0.0, %v4824
      %v4826 = vpop.f32.mrb[0].mxu0
      %4827 = vmatprep.mubr.f32.mxu0 0.0
      %4828 = vmatmul.mubr.f32.gmra.mrb[0].mxu0 %v4645
      %v4829 = vpop.f32.mrb[0].mxu0
      %v4830 = vadd.f32 0.0, %v4829
      %v4831 = vpop.f32.mrb[0].mxu0
      %4832 = vmatprep.mubr.f32.mxu0 0.0
      %4833 = vmatmul.mubr.f32.gmra.mrb[0].mxu0 %v4647
      %v4834 = vpop.f32.mrb[0].mxu0
      %v4835 = vadd.f32 0.0, %v4834
      %v4836 = vpop.f32.mrb[0].mxu0
      %4837 = vmatprep.mubr.f32.mxu0 0.0
      %4838 = vmatmul.mubr.f32.gmra.mrb[0].mxu0 %v4649
      %v4839 = vpop.f32.mrb[0].mxu0
      %v4840 = vadd.f32 0.0, %v4839
      %v4841 = vpop.f32.mrb[0].mxu0
      %4842 = vmatprep.mubr.f32.mxu0 0.0
      %4843 = vmatmul.mubr.f32.gmra.mrb[0].mxu0 %v4651
      %v4844 = vpop.f32.mrb[0].mxu0
      %v4845 = vadd.f32 0.0, %v4844
      %v4846 = vpop.f32.mrb[0].mxu0
      %4847 = vmatprep.mubr.f32.mxu0 0.0
      %4848 = vmatmul.mubr.f32.gmra.mrb[0].mxu0 %v4653
      %v4849 = vpop.f32.mrb[0].mxu0
      %v4850 = vadd.f32 0.0, %v4849
      %v4851 = vpop.f32.mrb[0].mxu0
      %4852 = vmatprep.mubr.f32.mxu0 0.0
      %4853 = vmatmul.mubr.f32.gmra.mrb[0].mxu0 %v4655
      %v4854 = vpop.f32.mrb[0].mxu0
      %v4855 = vadd.f32 0.0, %v4854
      %v4856 = vpop.f32.mrb[0].mxu0
      %4857 = vmatprep.mubr.f32.mxu0 0.0
      %4858 = vmatmul.mubr.f32.gmra.mrb[0].mxu0 %v4657
      %v4859 = vpop.f32.mrb[0].mxu0
      %v4860 = vadd.f32 0.0, %v4859
      %v4861 = vpop.f32.mrb[0].mxu0
      %4862 = vmatprep.mubr.f32.mxu0 0.0
      %4863 = vmatmul.mubr.f32.gmra.mrb[0].mxu0 %v4659
      %v4864 = vpop.f32.mrb[0].mxu0
      %v4865 = vadd.f32 0.0, %v4864
      %v4866 = vpop.f32.mrb[0].mxu0
      %4867 = vmatprep.mubr.f32.mxu0 0.0
      %4868 = vmatmul.mubr.f32.gmra.mrb[0].mxu0 %v4661
      %v4869 = vpop.f32.mrb[0].mxu0
      %v4870 = vadd.f32 0.0, %v4869
      %v4871 = vpop.f32.mrb[0].mxu0
      %4872 = vmatprep.mubr.f32.mxu0 0.0
      %4873 = vmatmul.mubr.f32.gmra.mrb[0].mxu0 %v4663
      %v4874 = vpop.f32.mrb[0].mxu0
      %v4875 = vadd.f32 0.0, %v4874
      %v4876 = vpop.f32.mrb[0].mxu0
      %4877 = vmatprep.mubr.f32.mxu0 0.0
      %4878 = vmatmul.mubr.f32.gmra.mrb[0].mxu0 %v4665
      %v4879 = vpop.f32.mrb[0].mxu0
      %v4880 = vadd.f32 0.0, %v4879
      %v4881 = vpop.f32.mrb[0].mxu0
      %4882 = vmatprep.mubr.f32.mxu0 0.0
      %4883 = vmatmul.mubr.f32.gmra.mrb[0].mxu0 %v4667
      %v4884 = vpop.f32.mrb[0].mxu0
      %v4885 = vadd.f32 0.0, %v4884
      %v4886 = vpop.f32.mrb[0].mxu0
      %4887 = vmatprep.mubr.f32.mxu0 0.0
      %4888 = vmatmul.mubr.f32.gmra.mrb[0].mxu0 %v4669
      %v4889 = vpop.f32.mrb[0].mxu0
      %v4890 = vadd.f32 0.0, %v4889
      %v4891 = vpop.f32.mrb[0].mxu0
      %4892 = vmatprep.mubr.f32.mxu0 0.0
      %4893 = vmatmul.mubr.f32.gmra.mrb[0].mxu0 %v4671
      %v4894 = vpop.f32.mrb[0].mxu0
      %v4895 = vadd.f32 0.0, %v4894
      %v4896 = vpop.f32.mrb[0].mxu0
      %4897 = vmatprep.mubr.f32.mxu0 0.0
      %4898 = vmatmul.mubr.f32.gmra.mrb[0].mxu0 %v4673
      %v4899 = vpop.f32.mrb[0].mxu0
      %v4900 = vadd.f32 0.0, %v4899
      %v4901 = vpop.f32.mrb[0].mxu0
      %4902 = vdwg.mxu0
      %v4903 = vld [vmem:[#allocation2] sm:$0xff]
      %v4904 = vld [vmem:[#allocation2 + $0x8] sm:$0xff]
      %v4905 = vld [vmem:[#allocation2 + $0x10] sm:$0xff]
      %v4906 = vld [vmem:[#allocation2 + $0x18] sm:$0xff]
      %v4907 = vld [vmem:[#allocation2 + $0x20] sm:$0xff]
      %v4908 = vld [vmem:[#allocation2 + $0x28] sm:$0xff]
      %v4909 = vld [vmem:[#allocation2 + $0x30] sm:$0xff]
      %v4910 = vld [vmem:[#allocation2 + $0x38] sm:$0xff]
      %v4911 = vld [vmem:[#allocation2 + $0x40] sm:$0xff]
      %v4912 = vld [vmem:[#allocation2 + $0x48] sm:$0xff]
      %v4913 = vld [vmem:[#allocation2 + $0x50] sm:$0xff]
      %v4914 = vld [vmem:[#allocation2 + $0x58] sm:$0xff]
      %v4915 = vld [vmem:[#allocation2 + $0x60] sm:$0xff]
      %v4916 = vld [vmem:[#allocation2 + $0x68] sm:$0xff]
      %v4917 = vld [vmem:[#allocation2 + $0x70] sm:$0xff]
      %v4918 = vld [vmem:[#allocation2 + $0x78] sm:$0xff]
      %v4919 = vld [vmem:[#allocation2 + $0x80] sm:$0xff]
      %v4920 = vld [vmem:[#allocation2 + $0x88] sm:$0xff]
      %v4921 = vld [vmem:[#allocation2 + $0x90] sm:$0xff]
      %v4922 = vld [vmem:[#allocation2 + $0x98] sm:$0xff]
      %v4923 = vld [vmem:[#allocation2 + $0xa0] sm:$0xff]
      %v4924 = vld [vmem:[#allocation2 + $0xa8] sm:$0xff]
      %v4925 = vld [vmem:[#allocation2 + $0xb0] sm:$0xff]
      %v4926 = vld [vmem:[#allocation2 + $0xb8] sm:$0xff]
      %v4927 = vld [vmem:[#allocation2 + $0xc0] sm:$0xff]
      %v4928 = vld [vmem:[#allocation2 + $0xc8] sm:$0xff]
      %v4929 = vld [vmem:[#allocation2 + $0xd0] sm:$0xff]
      %v4930 = vld [vmem:[#allocation2 + $0xd8] sm:$0xff]
      %v4931 = vld [vmem:[#allocation2 + $0xe0] sm:$0xff]
      %v4932 = vld [vmem:[#allocation2 + $0xe8] sm:$0xff]
      %v4933 = vld [vmem:[#allocation2 + $0xf0] sm:$0xff]
      %v4934 = vld [vmem:[#allocation2 + $0xf8] sm:$0xff]
      %v4935 = vadd.f32 %v4903, %v4745
      %v4936 = vadd.f32 %v4904, %v4750
      %v4937 = vadd.f32 %v4905, %v4755
      %v4938 = vadd.f32 %v4906, %v4760
      %v4939 = vadd.f32 %v4907, %v4765
      %v4940 = vadd.f32 %v4908, %v4770
      %v4941 = vadd.f32 %v4909, %v4775
      %v4942 = vadd.f32 %v4910, %v4780
      %v4943 = vadd.f32 %v4911, %v4785
      %v4944 = vadd.f32 %v4912, %v4790
      %v4945 = vadd.f32 %v4913, %v4795
      %v4946 = vadd.f32 %v4914, %v4800
      %v4947 = vadd.f32 %v4915, %v4805
      %v4948 = vadd.f32 %v4916, %v4810
      %v4949 = vadd.f32 %v4917, %v4815
      %v4950 = vadd.f32 %v4918, %v4820
      %v4951 = vadd.f32 %v4919, %v4825
      %v4952 = vadd.f32 %v4920, %v4830
      %v4953 = vadd.f32 %v4921, %v4835
      %v4954 = vadd.f32 %v4922, %v4840
      %v4955 = vadd.f32 %v4923, %v4845
      %v4956 = vadd.f32 %v4924, %v4850
      %v4957 = vadd.f32 %v4925, %v4855
      %v4958 = vadd.f32 %v4926, %v4860
      %v4959 = vadd.f32 %v4927, %v4865
      %v4960 = vadd.f32 %v4928, %v4870
      %v4961 = vadd.f32 %v4929, %v4875
      %v4962 = vadd.f32 %v4930, %v4880
      %v4963 = vadd.f32 %v4931, %v4885
      %v4964 = vadd.f32 %v4932, %v4890
      %v4965 = vadd.f32 %v4933, %v4895
      %v4966 = vadd.f32 %v4934, %v4900
      %4967 = vst.msk [vmem:[#allocation2] sm:$0xff] %vm1799, %v4935
      %4968 = vst.msk [vmem:[#allocation2 + $0x8] sm:$0xff] %vm1799, %v4936
      %4969 = vst.msk [vmem:[#allocation2 + $0x10] sm:$0xff] %vm1799, %v4937
      %4970 = vst.msk [vmem:[#allocation2 + $0x18] sm:$0xff] %vm1799, %v4938
      %4971 = vst.msk [vmem:[#allocation2 + $0x20] sm:$0xff] %vm1799, %v4939
      %4972 = vst.msk [vmem:[#allocation2 + $0x28] sm:$0xff] %vm1799, %v4940
      %4973 = vst.msk [vmem:[#allocation2 + $0x30] sm:$0xff] %vm1799, %v4941
      %4974 = vst.msk [vmem:[#allocation2 + $0x38] sm:$0xff] %vm1799, %v4942
      %4975 = vst.msk [vmem:[#allocation2 + $0x40] sm:$0xff] %vm1799, %v4943
      %4976 = vst.msk [vmem:[#allocation2 + $0x48] sm:$0xff] %vm1799, %v4944
      %4977 = vst.msk [vmem:[#allocation2 + $0x50] sm:$0xff] %vm1799, %v4945
      %4978 = vst.msk [vmem:[#allocation2 + $0x58] sm:$0xff] %vm1799, %v4946
      %4979 = vst.msk [vmem:[#allocation2 + $0x60] sm:$0xff] %vm1799, %v4947
      %4980 = vst.msk [vmem:[#allocation2 + $0x68] sm:$0xff] %vm1799, %v4948
      %4981 = vst.msk [vmem:[#allocation2 + $0x70] sm:$0xff] %vm1799, %v4949
      %4982 = vst.msk [vmem:[#allocation2 + $0x78] sm:$0xff] %vm1799, %v4950
      %4983 = vst.msk [vmem:[#allocation2 + $0x80] sm:$0xff] %vm1799, %v4951
      %4984 = vst.msk [vmem:[#allocation2 + $0x88] sm:$0xff] %vm1799, %v4952
      %4985 = vst.msk [vmem:[#allocation2 + $0x90] sm:$0xff] %vm1799, %v4953
      %4986 = vst.msk [vmem:[#allocation2 + $0x98] sm:$0xff] %vm1799, %v4954
      %4987 = vst.msk [vmem:[#allocation2 + $0xa0] sm:$0xff] %vm1799, %v4955
      %4988 = vst.msk [vmem:[#allocation2 + $0xa8] sm:$0xff] %vm1799, %v4956
      %4989 = vst.msk [vmem:[#allocation2 + $0xb0] sm:$0xff] %vm1799, %v4957
      %4990 = vst.msk [vmem:[#allocation2 + $0xb8] sm:$0xff] %vm1799, %v4958
      %4991 = vst.msk [vmem:[#allocation2 + $0xc0] sm:$0xff] %vm1799, %v4959
      %4992 = vst.msk [vmem:[#allocation2 + $0xc8] sm:$0xff] %vm1799, %v4960
      %4993 = vst.msk [vmem:[#allocation2 + $0xd0] sm:$0xff] %vm1799, %v4961
      %4994 = vst.msk [vmem:[#allocation2 + $0xd8] sm:$0xff] %vm1799, %v4962
      %4995 = vst.msk [vmem:[#allocation2 + $0xe0] sm:$0xff] %vm1799, %v4963
      %4996 = vst.msk [vmem:[#allocation2 + $0xe8] sm:$0xff] %vm1799, %v4964
      %4997 = vst.msk [vmem:[#allocation2 + $0xf0] sm:$0xff] %vm1799, %v4965
      %4998 = vst.msk [vmem:[#allocation2 + $0xf8] sm:$0xff] %vm1799, %v4966
      %vm4999 = vcmask 1045504
      %v5000 = vrot.slane %v4099, 2
      %v5001 = vrot.slane %v4100, 2
      %v5002 = vsel %vm4999, %v5000, %v5001
      %v5003 = vrot.slane %v4101, 2
      %v5004 = vsel %vm4999, %v5001, %v5003
      %v5005 = vrot.slane %v4102, 2
      %v5006 = vrot.slane %v4103, 2
      %v5007 = vsel %vm4999, %v5005, %v5006
      %v5008 = vrot.slane %v4104, 2
      %v5009 = vsel %vm4999, %v5006, %v5008
      %v5010 = vrot.slane %v4105, 2
      %v5011 = vrot.slane %v4106, 2
      %v5012 = vsel %vm4999, %v5010, %v5011
      %v5013 = vrot.slane %v4107, 2
      %v5014 = vsel %vm4999, %v5011, %v5013
      %v5015 = vrot.slane %v4108, 2
      %v5016 = vrot.slane %v4109, 2
      %v5017 = vsel %vm4999, %v5015, %v5016
      %v5018 = vrot.slane %v4110, 2
      %v5019 = vsel %vm4999, %v5016, %v5018
      %v5020 = vrot.slane %v4111, 2
      %v5021 = vrot.slane %v4112, 2
      %v5022 = vsel %vm4999, %v5020, %v5021
      %v5023 = vrot.slane %v4113, 2
      %v5024 = vsel %vm4999, %v5021, %v5023
      %v5025 = vrot.slane %v4114, 2
      %v5026 = vrot.slane %v4115, 2
      %v5027 = vsel %vm4999, %v5025, %v5026
      %v5028 = vrot.slane %v4116, 2
      %v5029 = vsel %vm4999, %v5026, %v5028
      %v5030 = vrot.slane %v4117, 2
      %v5031 = vrot.slane %v4118, 2
      %v5032 = vsel %vm4999, %v5030, %v5031
      %v5033 = vrot.slane %v4119, 2
      %v5034 = vsel %vm4999, %v5031, %v5033
      %v5035 = vrot.slane %v4120, 2
      %v5036 = vrot.slane %v4121, 2
      %v5037 = vsel %vm4999, %v5035, %v5036
      %v5038 = vrot.slane %v4122, 2
      %v5039 = vsel %vm4999, %v5036, %v5038
      %v5040 = vrot.slane %v4123, 2
      %v5041 = vrot.slane %v4124, 2
      %v5042 = vsel %vm4999, %v5040, %v5041
      %v5043 = vrot.slane %v4125, 2
      %v5044 = vsel %vm4999, %v5041, %v5043
      %v5045 = vrot.slane %v4126, 2
      %v5046 = vrot.slane %v4127, 2
      %v5047 = vsel %vm4999, %v5045, %v5046
      %v5048 = vrot.slane %v4128, 2
      %v5049 = vsel %vm4999, %v5046, %v5048
      %v5050 = vrot.slane %v4129, 2
      %v5051 = vrot.slane %v4130, 2
      %v5052 = vsel %vm4999, %v5050, %v5051
      %v5053 = vrot.slane %v4131, 2
      %v5054 = vsel %vm4999, %v5051, %v5053
      %v5055 = vrot.slane %v4132, 2
      %v5056 = vrot.slane %v4133, 2
      %v5057 = vsel %vm4999, %v5055, %v5056
      %v5058 = vrot.slane %v4134, 2
      %v5059 = vsel %vm4999, %v5056, %v5058
      %v5060 = vrot.slane %v4135, 2
      %v5061 = vrot.slane %v4136, 2
      %v5062 = vsel %vm4999, %v5060, %v5061
      %v5063 = vrot.slane %v4137, 2
      %v5064 = vsel %vm4999, %v5061, %v5063
      %v5065 = vrot.slane %v4138, 2
      %v5066 = vrot.slane %v4139, 2
      %v5067 = vsel %vm4999, %v5065, %v5066
      %v5068 = vrot.slane %v4140, 2
      %v5069 = vsel %vm4999, %v5066, %v5068
      %v5070 = vrot.slane %v4141, 2
      %v5071 = vrot.slane %v4142, 2
      %v5072 = vsel %vm4999, %v5070, %v5071
      %v5073 = vrot.slane %v4143, 2
      %v5074 = vsel %vm4999, %v5071, %v5073
      %v5075 = vrot.slane %v4144, 2
      %v5076 = vrot.slane %v4145, 2
      %v5077 = vsel %vm4999, %v5075, %v5076
      %v5078 = vrot.slane %v4146, 2
      %v5079 = vsel %vm4999, %v5076, %v5078
      %s5080 = scalar_lea.vmem %s3, 4
      %v5081 = vld [vmem:[%s5080] sm:$0x3]
      %v5082 = vsel %vm4154, %v5002, 0
      %v5084 = vsel %vm4154, %v5004, 0
      %v5086 = vsel %vm4154, %v5007, 0
      %v5088 = vsel %vm4154, %v5009, 0
      %v5090 = vsel %vm4154, %v5012, 0
      %v5092 = vsel %vm4154, %v5014, 0
      %v5094 = vsel %vm4154, %v5017, 0
      %v5096 = vsel %vm4154, %v5019, 0
      %v5098 = vsel %vm4154, %v5022, 0
      %v5100 = vsel %vm4154, %v5024, 0
      %v5102 = vsel %vm4154, %v5027, 0
      %v5104 = vsel %vm4154, %v5029, 0
      %v5106 = vsel %vm4154, %v5032, 0
      %v5108 = vsel %vm4154, %v5034, 0
      %v5110 = vsel %vm4154, %v5037, 0
      %v5112 = vsel %vm4154, %v5039, 0
      %v5114 = vsel %vm4154, %v5042, 0
      %v5116 = vsel %vm4154, %v5044, 0
      %v5118 = vsel %vm4154, %v5047, 0
      %v5120 = vsel %vm4154, %v5049, 0
      %v5122 = vsel %vm4154, %v5052, 0
      %v5124 = vsel %vm4154, %v5054, 0
      %v5126 = vsel %vm4154, %v5057, 0
      %v5128 = vsel %vm4154, %v5059, 0
      %v5130 = vsel %vm4154, %v5062, 0
      %v5132 = vsel %vm4154, %v5064, 0
      %v5134 = vsel %vm4154, %v5067, 0
      %v5136 = vsel %vm4154, %v5069, 0
      %v5138 = vsel %vm4154, %v5072, 0
      %v5140 = vsel %vm4154, %v5074, 0
      %v5142 = vsel %vm4154, %v5077, 0
      %v5144 = vsel %vm4154, %v5079, 0
      %v5147 = vsel %vm4251, %v5081, 0
      %5149 = vmatprep.subr.mxu0 0.0
      %5150 = vmatpush1.msra.mxu0 %v5147
      %5151 = vmatprep.subr.mxu0 0.0
      %5152 = vmatpush1.msra.mxu0 0.0
      %5153 = vmatprep.subr.mxu0 0.0
      %5154 = vmatpush1.msra.mxu0 0.0
      %5155 = vmatprep.subr.mxu0 0.0
      %5156 = vmatpush1.msra.mxu0 0.0
      %5157 = vmatprep.subr.mxu0 0.0
      %5158 = vmatpush1.msra.mxu0 0.0
      %5159 = vmatprep.subr.mxu0 0.0
      %5160 = vmatpush1.msra.mxu0 0.0
      %5161 = vmatprep.subr.mxu0 0.0
      %5162 = vmatpush1.msra.mxu0 0.0
      %5163 = vmatprep.subr.mxu0 0.0
      %5164 = vmatpush1.msra.mxu0 0.0
      %5165 = vmatprep.subr.mxu0 0.0
      %5166 = vmatpush1.msra.mxu0 0.0
      %5167 = vmatprep.subr.mxu0 0.0
      %5168 = vmatpush1.msra.mxu0 0.0
      %5169 = vmatprep.subr.mxu0 0.0
      %5170 = vmatpush1.msra.mxu0 0.0
      %5171 = vmatprep.subr.mxu0 0.0
      %5172 = vmatpush1.msra.mxu0 0.0
      %5173 = vmatprep.subr.mxu0 0.0
      %5174 = vmatpush1.msra.mxu0 0.0
      %5175 = vmatprep.subr.mxu0 0.0
      %5176 = vmatpush1.msra.mxu0 0.0
      %5177 = vmatprep.subr.mxu0 0.0
      %5178 = vmatpush1.msra.mxu0 0.0
      %5179 = vmatprep.subr.mxu0 0.0
      %5180 = vmatpush1.msra.mxu0 0.0
      %5181 = vmatprep.subr.mxu0 0.0
      %5182 = vmatpush1.msra.mxu0 0.0
      %5183 = vmatprep.subr.mxu0 0.0
      %5184 = vmatpush1.msra.mxu0 0.0
      %5185 = vmatprep.subr.mxu0 0.0
      %5186 = vmatpush1.msra.mxu0 0.0
      %5187 = vmatprep.subr.mxu0 0.0
      %5188 = vmatpush1.msra.mxu0 0.0
      %5189 = vmatprep.subr.mxu0 0.0
      %5190 = vmatpush1.msra.mxu0 0.0
      %5191 = vmatprep.subr.mxu0 0.0
      %5192 = vmatpush1.msra.mxu0 0.0
      %5193 = vmatprep.subr.mxu0 0.0
      %5194 = vmatpush1.msra.mxu0 0.0
      %5195 = vmatprep.subr.mxu0 0.0
      %5196 = vmatpush1.msra.mxu0 0.0
      %5197 = vmatprep.subr.mxu0 0.0
      %5198 = vmatpush1.msra.mxu0 0.0
      %5199 = vmatprep.subr.mxu0 0.0
      %5200 = vmatpush1.msra.mxu0 0.0
      %5201 = vmatprep.subr.mxu0 0.0
      %5202 = vmatpush1.msra.mxu0 0.0
      %5203 = vmatprep.subr.mxu0 0.0
      %5204 = vmatpush1.msra.mxu0 0.0
      %5205 = vmatprep.subr.mxu0 0.0
      %5206 = vmatpush1.msra.mxu0 0.0
      %5207 = vmatprep.subr.mxu0 0.0
      %5208 = vmatpush1.msra.mxu0 0.0
      %5209 = vmatprep.subr.mxu0 0.0
      %5210 = vmatpush1.msra.mxu0 0.0
      %5211 = vmatprep.subr.mxu0 0.0
      %5212 = vmatpush1.msra.mxu0 0.0
      %5213 = vmatprep.mubr.f32.mxu0 0.0
      %5214 = vmatmul.mubr.f32.gmra.mrb[0].mxu0 %v5082
      %v5215 = vpop.f32.mrb[0].mxu0
      %v5216 = vadd.f32 0.0, %v5215
      %v5217 = vpop.f32.mrb[0].mxu0
      %5218 = vmatprep.mubr.f32.mxu0 0.0
      %5219 = vmatmul.mubr.f32.gmra.mrb[0].mxu0 %v5084
      %v5220 = vpop.f32.mrb[0].mxu0
      %v5221 = vadd.f32 0.0, %v5220
      %v5222 = vpop.f32.mrb[0].mxu0
      %5223 = vmatprep.mubr.f32.mxu0 0.0
      %5224 = vmatmul.mubr.f32.gmra.mrb[0].mxu0 %v5086
      %v5225 = vpop.f32.mrb[0].mxu0
      %v5226 = vadd.f32 0.0, %v5225
      %v5227 = vpop.f32.mrb[0].mxu0
      %5228 = vmatprep.mubr.f32.mxu0 0.0
      %5229 = vmatmul.mubr.f32.gmra.mrb[0].mxu0 %v5088
      %v5230 = vpop.f32.mrb[0].mxu0
      %v5231 = vadd.f32 0.0, %v5230
      %v5232 = vpop.f32.mrb[0].mxu0
      %5233 = vmatprep.mubr.f32.mxu0 0.0
      %5234 = vmatmul.mubr.f32.gmra.mrb[0].mxu0 %v5090
      %v5235 = vpop.f32.mrb[0].mxu0
      %v5236 = vadd.f32 0.0, %v5235
      %v5237 = vpop.f32.mrb[0].mxu0
      %5238 = vmatprep.mubr.f32.mxu0 0.0
      %5239 = vmatmul.mubr.f32.gmra.mrb[0].mxu0 %v5092
      %v5240 = vpop.f32.mrb[0].mxu0
      %v5241 = vadd.f32 0.0, %v5240
      %v5242 = vpop.f32.mrb[0].mxu0
      %5243 = vmatprep.mubr.f32.mxu0 0.0
      %5244 = vmatmul.mubr.f32.gmra.mrb[0].mxu0 %v5094
      %v5245 = vpop.f32.mrb[0].mxu0
      %v5246 = vadd.f32 0.0, %v5245
      %v5247 = vpop.f32.mrb[0].mxu0
      %5248 = vmatprep.mubr.f32.mxu0 0.0
      %5249 = vmatmul.mubr.f32.gmra.mrb[0].mxu0 %v5096
      %v5250 = vpop.f32.mrb[0].mxu0
      %v5251 = vadd.f32 0.0, %v5250
      %v5252 = vpop.f32.mrb[0].mxu0
      %5253 = vmatprep.mubr.f32.mxu0 0.0
      %5254 = vmatmul.mubr.f32.gmra.mrb[0].mxu0 %v5098
      %v5255 = vpop.f32.mrb[0].mxu0
      %v5256 = vadd.f32 0.0, %v5255
      %v5257 = vpop.f32.mrb[0].mxu0
      %5258 = vmatprep.mubr.f32.mxu0 0.0
      %5259 = vmatmul.mubr.f32.gmra.mrb[0].mxu0 %v5100
      %v5260 = vpop.f32.mrb[0].mxu0
      %v5261 = vadd.f32 0.0, %v5260
      %v5262 = vpop.f32.mrb[0].mxu0
      %5263 = vmatprep.mubr.f32.mxu0 0.0
      %5264 = vmatmul.mubr.f32.gmra.mrb[0].mxu0 %v5102
      %v5265 = vpop.f32.mrb[0].mxu0
      %v5266 = vadd.f32 0.0, %v5265
      %v5267 = vpop.f32.mrb[0].mxu0
      %5268 = vmatprep.mubr.f32.mxu0 0.0
      %5269 = vmatmul.mubr.f32.gmra.mrb[0].mxu0 %v5104
      %v5270 = vpop.f32.mrb[0].mxu0
      %v5271 = vadd.f32 0.0, %v5270
      %v5272 = vpop.f32.mrb[0].mxu0
      %5273 = vmatprep.mubr.f32.mxu0 0.0
      %5274 = vmatmul.mubr.f32.gmra.mrb[0].mxu0 %v5106
      %v5275 = vpop.f32.mrb[0].mxu0
      %v5276 = vadd.f32 0.0, %v5275
      %v5277 = vpop.f32.mrb[0].mxu0
      %5278 = vmatprep.mubr.f32.mxu0 0.0
      %5279 = vmatmul.mubr.f32.gmra.mrb[0].mxu0 %v5108
      %v5280 = vpop.f32.mrb[0].mxu0
      %v5281 = vadd.f32 0.0, %v5280
      %v5282 = vpop.f32.mrb[0].mxu0
      %5283 = vmatprep.mubr.f32.mxu0 0.0
      %5284 = vmatmul.mubr.f32.gmra.mrb[0].mxu0 %v5110
      %v5285 = vpop.f32.mrb[0].mxu0
      %v5286 = vadd.f32 0.0, %v5285
      %v5287 = vpop.f32.mrb[0].mxu0
      %5288 = vmatprep.mubr.f32.mxu0 0.0
      %5289 = vmatmul.mubr.f32.gmra.mrb[0].mxu0 %v5112
      %v5290 = vpop.f32.mrb[0].mxu0
      %v5291 = vadd.f32 0.0, %v5290
      %v5292 = vpop.f32.mrb[0].mxu0
      %5293 = vmatprep.mubr.f32.mxu0 0.0
      %5294 = vmatmul.mubr.f32.gmra.mrb[0].mxu0 %v5114
      %v5295 = vpop.f32.mrb[0].mxu0
      %v5296 = vadd.f32 0.0, %v5295
      %v5297 = vpop.f32.mrb[0].mxu0
      %5298 = vmatprep.mubr.f32.mxu0 0.0
      %5299 = vmatmul.mubr.f32.gmra.mrb[0].mxu0 %v5116
      %v5300 = vpop.f32.mrb[0].mxu0
      %v5301 = vadd.f32 0.0, %v5300
      %v5302 = vpop.f32.mrb[0].mxu0
      %5303 = vmatprep.mubr.f32.mxu0 0.0
      %5304 = vmatmul.mubr.f32.gmra.mrb[0].mxu0 %v5118
      %v5305 = vpop.f32.mrb[0].mxu0
      %v5306 = vadd.f32 0.0, %v5305
      %v5307 = vpop.f32.mrb[0].mxu0
      %5308 = vmatprep.mubr.f32.mxu0 0.0
      %5309 = vmatmul.mubr.f32.gmra.mrb[0].mxu0 %v5120
      %v5310 = vpop.f32.mrb[0].mxu0
      %v5311 = vadd.f32 0.0, %v5310
      %v5312 = vpop.f32.mrb[0].mxu0
      %5313 = vmatprep.mubr.f32.mxu0 0.0
      %5314 = vmatmul.mubr.f32.gmra.mrb[0].mxu0 %v5122
      %v5315 = vpop.f32.mrb[0].mxu0
      %v5316 = vadd.f32 0.0, %v5315
      %v5317 = vpop.f32.mrb[0].mxu0
      %5318 = vmatprep.mubr.f32.mxu0 0.0
      %5319 = vmatmul.mubr.f32.gmra.mrb[0].mxu0 %v5124
      %v5320 = vpop.f32.mrb[0].mxu0
      %v5321 = vadd.f32 0.0, %v5320
      %v5322 = vpop.f32.mrb[0].mxu0
      %5323 = vmatprep.mubr.f32.mxu0 0.0
      %5324 = vmatmul.mubr.f32.gmra.mrb[0].mxu0 %v5126
      %v5325 = vpop.f32.mrb[0].mxu0
      %v5326 = vadd.f32 0.0, %v5325
      %v5327 = vpop.f32.mrb[0].mxu0
      %5328 = vmatprep.mubr.f32.mxu0 0.0
      %5329 = vmatmul.mubr.f32.gmra.mrb[0].mxu0 %v5128
      %v5330 = vpop.f32.mrb[0].mxu0
      %v5331 = vadd.f32 0.0, %v5330
      %v5332 = vpop.f32.mrb[0].mxu0
      %5333 = vmatprep.mubr.f32.mxu0 0.0
      %5334 = vmatmul.mubr.f32.gmra.mrb[0].mxu0 %v5130
      %v5335 = vpop.f32.mrb[0].mxu0
      %v5336 = vadd.f32 0.0, %v5335
      %v5337 = vpop.f32.mrb[0].mxu0
      %5338 = vmatprep.mubr.f32.mxu0 0.0
      %5339 = vmatmul.mubr.f32.gmra.mrb[0].mxu0 %v5132
      %v5340 = vpop.f32.mrb[0].mxu0
      %v5341 = vadd.f32 0.0, %v5340
      %v5342 = vpop.f32.mrb[0].mxu0
      %5343 = vmatprep.mubr.f32.mxu0 0.0
      %5344 = vmatmul.mubr.f32.gmra.mrb[0].mxu0 %v5134
      %v5345 = vpop.f32.mrb[0].mxu0
      %v5346 = vadd.f32 0.0, %v5345
      %v5347 = vpop.f32.mrb[0].mxu0
      %5348 = vmatprep.mubr.f32.mxu0 0.0
      %5349 = vmatmul.mubr.f32.gmra.mrb[0].mxu0 %v5136
      %v5350 = vpop.f32.mrb[0].mxu0
      %v5351 = vadd.f32 0.0, %v5350
      %v5352 = vpop.f32.mrb[0].mxu0
      %5353 = vmatprep.mubr.f32.mxu0 0.0
      %5354 = vmatmul.mubr.f32.gmra.mrb[0].mxu0 %v5138
      %v5355 = vpop.f32.mrb[0].mxu0
      %v5356 = vadd.f32 0.0, %v5355
      %v5357 = vpop.f32.mrb[0].mxu0
      %5358 = vmatprep.mubr.f32.mxu0 0.0
      %5359 = vmatmul.mubr.f32.gmra.mrb[0].mxu0 %v5140
      %v5360 = vpop.f32.mrb[0].mxu0
      %v5361 = vadd.f32 0.0, %v5360
      %v5362 = vpop.f32.mrb[0].mxu0
      %5363 = vmatprep.mubr.f32.mxu0 0.0
      %5364 = vmatmul.mubr.f32.gmra.mrb[0].mxu0 %v5142
      %v5365 = vpop.f32.mrb[0].mxu0
      %v5366 = vadd.f32 0.0, %v5365
      %v5367 = vpop.f32.mrb[0].mxu0
      %5368 = vmatprep.mubr.f32.mxu0 0.0
      %5369 = vmatmul.mubr.f32.gmra.mrb[0].mxu0 %v5144
      %v5370 = vpop.f32.mrb[0].mxu0
      %v5371 = vadd.f32 0.0, %v5370
      %v5372 = vpop.f32.mrb[0].mxu0
      %5373 = vdwg.mxu0
      %v5374 = vld [vmem:[#allocation2] sm:$0xff]
      %v5375 = vld [vmem:[#allocation2 + $0x8] sm:$0xff]
      %v5376 = vld [vmem:[#allocation2 + $0x10] sm:$0xff]
      %v5377 = vld [vmem:[#allocation2 + $0x18] sm:$0xff]
      %v5378 = vld [vmem:[#allocation2 + $0x20] sm:$0xff]
      %v5379 = vld [vmem:[#allocation2 + $0x28] sm:$0xff]
      %v5380 = vld [vmem:[#allocation2 + $0x30] sm:$0xff]
      %v5381 = vld [vmem:[#allocation2 + $0x38] sm:$0xff]
      %v5382 = vld [vmem:[#allocation2 + $0x40] sm:$0xff]
      %v5383 = vld [vmem:[#allocation2 + $0x48] sm:$0xff]
      %v5384 = vld [vmem:[#allocation2 + $0x50] sm:$0xff]
      %v5385 = vld [vmem:[#allocation2 + $0x58] sm:$0xff]
      %v5386 = vld [vmem:[#allocation2 + $0x60] sm:$0xff]
      %v5387 = vld [vmem:[#allocation2 + $0x68] sm:$0xff]
      %v5388 = vld [vmem:[#allocation2 + $0x70] sm:$0xff]
      %v5389 = vld [vmem:[#allocation2 + $0x78] sm:$0xff]
      %v5390 = vld [vmem:[#allocation2 + $0x80] sm:$0xff]
      %v5391 = vld [vmem:[#allocation2 + $0x88] sm:$0xff]
      %v5392 = vld [vmem:[#allocation2 + $0x90] sm:$0xff]
      %v5393 = vld [vmem:[#allocation2 + $0x98] sm:$0xff]
      %v5394 = vld [vmem:[#allocation2 + $0xa0] sm:$0xff]
      %v5395 = vld [vmem:[#allocation2 + $0xa8] sm:$0xff]
      %v5396 = vld [vmem:[#allocation2 + $0xb0] sm:$0xff]
      %v5397 = vld [vmem:[#allocation2 + $0xb8] sm:$0xff]
      %v5398 = vld [vmem:[#allocation2 + $0xc0] sm:$0xff]
      %v5399 = vld [vmem:[#allocation2 + $0xc8] sm:$0xff]
      %v5400 = vld [vmem:[#allocation2 + $0xd0] sm:$0xff]
      %v5401 = vld [vmem:[#allocation2 + $0xd8] sm:$0xff]
      %v5402 = vld [vmem:[#allocation2 + $0xe0] sm:$0xff]
      %v5403 = vld [vmem:[#allocation2 + $0xe8] sm:$0xff]
      %v5404 = vld [vmem:[#allocation2 + $0xf0] sm:$0xff]
      %v5405 = vld [vmem:[#allocation2 + $0xf8] sm:$0xff]
      %v5406 = vadd.f32 %v5374, %v5216
      %v5407 = vadd.f32 %v5375, %v5221
      %v5408 = vadd.f32 %v5376, %v5226
      %v5409 = vadd.f32 %v5377, %v5231
      %v5410 = vadd.f32 %v5378, %v5236
      %v5411 = vadd.f32 %v5379, %v5241
      %v5412 = vadd.f32 %v5380, %v5246
      %v5413 = vadd.f32 %v5381, %v5251
      %v5414 = vadd.f32 %v5382, %v5256
      %v5415 = vadd.f32 %v5383, %v5261
      %v5416 = vadd.f32 %v5384, %v5266
      %v5417 = vadd.f32 %v5385, %v5271
      %v5418 = vadd.f32 %v5386, %v5276
      %v5419 = vadd.f32 %v5387, %v5281
      %v5420 = vadd.f32 %v5388, %v5286
      %v5421 = vadd.f32 %v5389, %v5291
      %v5422 = vadd.f32 %v5390, %v5296
      %v5423 = vadd.f32 %v5391, %v5301
      %v5424 = vadd.f32 %v5392, %v5306
      %v5425 = vadd.f32 %v5393, %v5311
      %v5426 = vadd.f32 %v5394, %v5316
      %v5427 = vadd.f32 %v5395, %v5321
      %v5428 = vadd.f32 %v5396, %v5326
      %v5429 = vadd.f32 %v5397, %v5331
      %v5430 = vadd.f32 %v5398, %v5336
      %v5431 = vadd.f32 %v5399, %v5341
      %v5432 = vadd.f32 %v5400, %v5346
      %v5433 = vadd.f32 %v5401, %v5351
      %v5434 = vadd.f32 %v5402, %v5356
      %v5435 = vadd.f32 %v5403, %v5361
      %v5436 = vadd.f32 %v5404, %v5366
      %v5437 = vadd.f32 %v5405, %v5371
      %5438 = vst.msk [vmem:[#allocation2] sm:$0xff] %vm1799, %v5406
      %5439 = vst.msk [vmem:[#allocation2 + $0x8] sm:$0xff] %vm1799, %v5407
      %5440 = vst.msk [vmem:[#allocation2 + $0x10] sm:$0xff] %vm1799, %v5408
      %5441 = vst.msk [vmem:[#allocation2 + $0x18] sm:$0xff] %vm1799, %v5409
      %5442 = vst.msk [vmem:[#allocation2 + $0x20] sm:$0xff] %vm1799, %v5410
      %5443 = vst.msk [vmem:[#allocation2 + $0x28] sm:$0xff] %vm1799, %v5411
      %5444 = vst.msk [vmem:[#allocation2 + $0x30] sm:$0xff] %vm1799, %v5412
      %5445 = vst.msk [vmem:[#allocation2 + $0x38] sm:$0xff] %vm1799, %v5413
      %5446 = vst.msk [vmem:[#allocation2 + $0x40] sm:$0xff] %vm1799, %v5414
      %5447 = vst.msk [vmem:[#allocation2 + $0x48] sm:$0xff] %vm1799, %v5415
      %5448 = vst.msk [vmem:[#allocation2 + $0x50] sm:$0xff] %vm1799, %v5416
      %5449 = vst.msk [vmem:[#allocation2 + $0x58] sm:$0xff] %vm1799, %v5417
      %5450 = vst.msk [vmem:[#allocation2 + $0x60] sm:$0xff] %vm1799, %v5418
      %5451 = vst.msk [vmem:[#allocation2 + $0x68] sm:$0xff] %vm1799, %v5419
      %5452 = vst.msk [vmem:[#allocation2 + $0x70] sm:$0xff] %vm1799, %v5420
      %5453 = vst.msk [vmem:[#allocation2 + $0x78] sm:$0xff] %vm1799, %v5421
      %5454 = vst.msk [vmem:[#allocation2 + $0x80] sm:$0xff] %vm1799, %v5422
      %5455 = vst.msk [vmem:[#allocation2 + $0x88] sm:$0xff] %vm1799, %v5423
      %5456 = vst.msk [vmem:[#allocation2 + $0x90] sm:$0xff] %vm1799, %v5424
      %5457 = vst.msk [vmem:[#allocation2 + $0x98] sm:$0xff] %vm1799, %v5425
      %5458 = vst.msk [vmem:[#allocation2 + $0xa0] sm:$0xff] %vm1799, %v5426
      %5459 = vst.msk [vmem:[#allocation2 + $0xa8] sm:$0xff] %vm1799, %v5427
      %5460 = vst.msk [vmem:[#allocation2 + $0xb0] sm:$0xff] %vm1799, %v5428
      %5461 = vst.msk [vmem:[#allocation2 + $0xb8] sm:$0xff] %vm1799, %v5429
      %5462 = vst.msk [vmem:[#allocation2 + $0xc0] sm:$0xff] %vm1799, %v5430
      %5463 = vst.msk [vmem:[#allocation2 + $0xc8] sm:$0xff] %vm1799, %v5431
      %5464 = vst.msk [vmem:[#allocation2 + $0xd0] sm:$0xff] %vm1799, %v5432
      %5465 = vst.msk [vmem:[#allocation2 + $0xd8] sm:$0xff] %vm1799, %v5433
      %5466 = vst.msk [vmem:[#allocation2 + $0xe0] sm:$0xff] %vm1799, %v5434
      %5467 = vst.msk [vmem:[#allocation2 + $0xe8] sm:$0xff] %vm1799, %v5435
      %5468 = vst.msk [vmem:[#allocation2 + $0xf0] sm:$0xff] %vm1799, %v5436
      %5469 = vst.msk [vmem:[#allocation2 + $0xf8] sm:$0xff] %vm1799, %v5437
      %s5470 = scalar_lea.vmem %s3, 6
      %v5471 = vld [vmem:[%s5470] sm:$0x3]
      %v5473 = vsel %vm4154, %v4147, 0
      %v5476 = vsel %vm4154, %v4148, 0
      %v5479 = vsel %vm4251, %v5471, 0
      %5481 = vmatprep.subr.mxu0 0.0
      %5482 = vmatpush1.msra.mxu0 %v5479
      %5483 = vmatprep.subr.mxu0 0.0
      %5484 = vmatpush1.msra.mxu0 0.0
      %5485 = vmatprep.subr.mxu0 0.0
      %5486 = vmatpush1.msra.mxu0 0.0
      %5487 = vmatprep.subr.mxu0 0.0
      %5488 = vmatpush1.msra.mxu0 0.0
      %5489 = vmatprep.subr.mxu0 0.0
      %5490 = vmatpush1.msra.mxu0 0.0
      %5491 = vmatprep.subr.mxu0 0.0
      %5492 = vmatpush1.msra.mxu0 0.0
      %5493 = vmatprep.subr.mxu0 0.0
      %5494 = vmatpush1.msra.mxu0 0.0
      %5495 = vmatprep.subr.mxu0 0.0
      %5496 = vmatpush1.msra.mxu0 0.0
      %5497 = vmatprep.subr.mxu0 0.0
      %5498 = vmatpush1.msra.mxu0 0.0
      %5499 = vmatprep.subr.mxu0 0.0
      %5500 = vmatpush1.msra.mxu0 0.0
      %5501 = vmatprep.subr.mxu0 0.0
      %5502 = vmatpush1.msra.mxu0 0.0
      %5503 = vmatprep.subr.mxu0 0.0
      %5504 = vmatpush1.msra.mxu0 0.0
      %5505 = vmatprep.subr.mxu0 0.0
      %5506 = vmatpush1.msra.mxu0 0.0
      %5507 = vmatprep.subr.mxu0 0.0
      %5508 = vmatpush1.msra.mxu0 0.0
      %5509 = vmatprep.subr.mxu0 0.0
      %5510 = vmatpush1.msra.mxu0 0.0
      %5511 = vmatprep.subr.mxu0 0.0
      %5512 = vmatpush1.msra.mxu0 0.0
      %5513 = vmatprep.subr.mxu0 0.0
      %5514 = vmatpush1.msra.mxu0 0.0
      %5515 = vmatprep.subr.mxu0 0.0
      %5516 = vmatpush1.msra.mxu0 0.0
      %5517 = vmatprep.subr.mxu0 0.0
      %5518 = vmatpush1.msra.mxu0 0.0
      %5519 = vmatprep.subr.mxu0 0.0
      %5520 = vmatpush1.msra.mxu0 0.0
      %5521 = vmatprep.subr.mxu0 0.0
      %5522 = vmatpush1.msra.mxu0 0.0
      %5523 = vmatprep.subr.mxu0 0.0
      %5524 = vmatpush1.msra.mxu0 0.0
      %5525 = vmatprep.subr.mxu0 0.0
      %5526 = vmatpush1.msra.mxu0 0.0
      %5527 = vmatprep.subr.mxu0 0.0
      %5528 = vmatpush1.msra.mxu0 0.0
      %5529 = vmatprep.subr.mxu0 0.0
      %5530 = vmatpush1.msra.mxu0 0.0
      %5531 = vmatprep.subr.mxu0 0.0
      %5532 = vmatpush1.msra.mxu0 0.0
      %5533 = vmatprep.subr.mxu0 0.0
      %5534 = vmatpush1.msra.mxu0 0.0
      %5535 = vmatprep.subr.mxu0 0.0
      %5536 = vmatpush1.msra.mxu0 0.0
      %5537 = vmatprep.subr.mxu0 0.0
      %5538 = vmatpush1.msra.mxu0 0.0
      %5539 = vmatprep.subr.mxu0 0.0
      %5540 = vmatpush1.msra.mxu0 0.0
      %5541 = vmatprep.subr.mxu0 0.0
      %5542 = vmatpush1.msra.mxu0 0.0
      %5543 = vmatprep.subr.mxu0 0.0
      %5544 = vmatpush1.msra.mxu0 0.0
      %5545 = vmatprep.mubr.f32.mxu0 0.0
      %5546 = vmatmul.mubr.f32.gmra.mrb[0].mxu0 %v4162
      %v5547 = vpop.f32.mrb[0].mxu0
      %v5548 = vadd.f32 0.0, %v5547
      %v5549 = vpop.f32.mrb[0].mxu0
      %5550 = vmatprep.mubr.f32.mxu0 0.0
      %5551 = vmatmul.mubr.f32.gmra.mrb[0].mxu0 %v4165
      %v5552 = vpop.f32.mrb[0].mxu0
      %v5553 = vadd.f32 0.0, %v5552
      %v5554 = vpop.f32.mrb[0].mxu0
      %5555 = vmatprep.mubr.f32.mxu0 0.0
      %5556 = vmatmul.mubr.f32.gmra.mrb[0].mxu0 %v4168
      %v5557 = vpop.f32.mrb[0].mxu0
      %v5558 = vadd.f32 0.0, %v5557
      %v5559 = vpop.f32.mrb[0].mxu0
      %5560 = vmatprep.mubr.f32.mxu0 0.0
      %5561 = vmatmul.mubr.f32.gmra.mrb[0].mxu0 %v4171
      %v5562 = vpop.f32.mrb[0].mxu0
      %v5563 = vadd.f32 0.0, %v5562
      %v5564 = vpop.f32.mrb[0].mxu0
      %5565 = vmatprep.mubr.f32.mxu0 0.0
      %5566 = vmatmul.mubr.f32.gmra.mrb[0].mxu0 %v4174
      %v5567 = vpop.f32.mrb[0].mxu0
      %v5568 = vadd.f32 0.0, %v5567
      %v5569 = vpop.f32.mrb[0].mxu0
      %5570 = vmatprep.mubr.f32.mxu0 0.0
      %5571 = vmatmul.mubr.f32.gmra.mrb[0].mxu0 %v4177
      %v5572 = vpop.f32.mrb[0].mxu0
      %v5573 = vadd.f32 0.0, %v5572
      %v5574 = vpop.f32.mrb[0].mxu0
      %5575 = vmatprep.mubr.f32.mxu0 0.0
      %5576 = vmatmul.mubr.f32.gmra.mrb[0].mxu0 %v4180
      %v5577 = vpop.f32.mrb[0].mxu0
      %v5578 = vadd.f32 0.0, %v5577
      %v5579 = vpop.f32.mrb[0].mxu0
      %5580 = vmatprep.mubr.f32.mxu0 0.0
      %5581 = vmatmul.mubr.f32.gmra.mrb[0].mxu0 %v4183
      %v5582 = vpop.f32.mrb[0].mxu0
      %v5583 = vadd.f32 0.0, %v5582
      %v5584 = vpop.f32.mrb[0].mxu0
      %5585 = vmatprep.mubr.f32.mxu0 0.0
      %5586 = vmatmul.mubr.f32.gmra.mrb[0].mxu0 %v4186
      %v5587 = vpop.f32.mrb[0].mxu0
      %v5588 = vadd.f32 0.0, %v5587
      %v5589 = vpop.f32.mrb[0].mxu0
      %5590 = vmatprep.mubr.f32.mxu0 0.0
      %5591 = vmatmul.mubr.f32.gmra.mrb[0].mxu0 %v4189
      %v5592 = vpop.f32.mrb[0].mxu0
      %v5593 = vadd.f32 0.0, %v5592
      %v5594 = vpop.f32.mrb[0].mxu0
      %5595 = vmatprep.mubr.f32.mxu0 0.0
      %5596 = vmatmul.mubr.f32.gmra.mrb[0].mxu0 %v4192
      %v5597 = vpop.f32.mrb[0].mxu0
      %v5598 = vadd.f32 0.0, %v5597
      %v5599 = vpop.f32.mrb[0].mxu0
      %5600 = vmatprep.mubr.f32.mxu0 0.0
      %5601 = vmatmul.mubr.f32.gmra.mrb[0].mxu0 %v4195
      %v5602 = vpop.f32.mrb[0].mxu0
      %v5603 = vadd.f32 0.0, %v5602
      %v5604 = vpop.f32.mrb[0].mxu0
      %5605 = vmatprep.mubr.f32.mxu0 0.0
      %5606 = vmatmul.mubr.f32.gmra.mrb[0].mxu0 %v4198
      %v5607 = vpop.f32.mrb[0].mxu0
      %v5608 = vadd.f32 0.0, %v5607
      %v5609 = vpop.f32.mrb[0].mxu0
      %5610 = vmatprep.mubr.f32.mxu0 0.0
      %5611 = vmatmul.mubr.f32.gmra.mrb[0].mxu0 %v4201
      %v5612 = vpop.f32.mrb[0].mxu0
      %v5613 = vadd.f32 0.0, %v5612
      %v5614 = vpop.f32.mrb[0].mxu0
      %5615 = vmatprep.mubr.f32.mxu0 0.0
      %5616 = vmatmul.mubr.f32.gmra.mrb[0].mxu0 %v4204
      %v5617 = vpop.f32.mrb[0].mxu0
      %v5618 = vadd.f32 0.0, %v5617
      %v5619 = vpop.f32.mrb[0].mxu0
      %5620 = vmatprep.mubr.f32.mxu0 0.0
      %5621 = vmatmul.mubr.f32.gmra.mrb[0].mxu0 %v4207
      %v5622 = vpop.f32.mrb[0].mxu0
      %v5623 = vadd.f32 0.0, %v5622
      %v5624 = vpop.f32.mrb[0].mxu0
      %5625 = vmatprep.mubr.f32.mxu0 0.0
      %5626 = vmatmul.mubr.f32.gmra.mrb[0].mxu0 %v4210
      %v5627 = vpop.f32.mrb[0].mxu0
      %v5628 = vadd.f32 0.0, %v5627
      %v5629 = vpop.f32.mrb[0].mxu0
      %5630 = vmatprep.mubr.f32.mxu0 0.0
      %5631 = vmatmul.mubr.f32.gmra.mrb[0].mxu0 %v4213
      %v5632 = vpop.f32.mrb[0].mxu0
      %v5633 = vadd.f32 0.0, %v5632
      %v5634 = vpop.f32.mrb[0].mxu0
      %5635 = vmatprep.mubr.f32.mxu0 0.0
      %5636 = vmatmul.mubr.f32.gmra.mrb[0].mxu0 %v4216
      %v5637 = vpop.f32.mrb[0].mxu0
      %v5638 = vadd.f32 0.0, %v5637
      %v5639 = vpop.f32.mrb[0].mxu0
      %5640 = vmatprep.mubr.f32.mxu0 0.0
      %5641 = vmatmul.mubr.f32.gmra.mrb[0].mxu0 %v4219
      %v5642 = vpop.f32.mrb[0].mxu0
      %v5643 = vadd.f32 0.0, %v5642
      %v5644 = vpop.f32.mrb[0].mxu0
      %5645 = vmatprep.mubr.f32.mxu0 0.0
      %5646 = vmatmul.mubr.f32.gmra.mrb[0].mxu0 %v4222
      %v5647 = vpop.f32.mrb[0].mxu0
      %v5648 = vadd.f32 0.0, %v5647
      %v5649 = vpop.f32.mrb[0].mxu0
      %5650 = vmatprep.mubr.f32.mxu0 0.0
      %5651 = vmatmul.mubr.f32.gmra.mrb[0].mxu0 %v4225
      %v5652 = vpop.f32.mrb[0].mxu0
      %v5653 = vadd.f32 0.0, %v5652
      %v5654 = vpop.f32.mrb[0].mxu0
      %5655 = vmatprep.mubr.f32.mxu0 0.0
      %5656 = vmatmul.mubr.f32.gmra.mrb[0].mxu0 %v4228
      %v5657 = vpop.f32.mrb[0].mxu0
      %v5658 = vadd.f32 0.0, %v5657
      %v5659 = vpop.f32.mrb[0].mxu0
      %5660 = vmatprep.mubr.f32.mxu0 0.0
      %5661 = vmatmul.mubr.f32.gmra.mrb[0].mxu0 %v4231
      %v5662 = vpop.f32.mrb[0].mxu0
      %v5663 = vadd.f32 0.0, %v5662
      %v5664 = vpop.f32.mrb[0].mxu0
      %5665 = vmatprep.mubr.f32.mxu0 0.0
      %5666 = vmatmul.mubr.f32.gmra.mrb[0].mxu0 %v4234
      %v5667 = vpop.f32.mrb[0].mxu0
      %v5668 = vadd.f32 0.0, %v5667
      %v5669 = vpop.f32.mrb[0].mxu0
      %5670 = vmatprep.mubr.f32.mxu0 0.0
      %5671 = vmatmul.mubr.f32.gmra.mrb[0].mxu0 %v4237
      %v5672 = vpop.f32.mrb[0].mxu0
      %v5673 = vadd.f32 0.0, %v5672
      %v5674 = vpop.f32.mrb[0].mxu0
      %5675 = vmatprep.mubr.f32.mxu0 0.0
      %5676 = vmatmul.mubr.f32.gmra.mrb[0].mxu0 %v4240
      %v5677 = vpop.f32.mrb[0].mxu0
      %v5678 = vadd.f32 0.0, %v5677
      %v5679 = vpop.f32.mrb[0].mxu0
      %5680 = vmatprep.mubr.f32.mxu0 0.0
      %5681 = vmatmul.mubr.f32.gmra.mrb[0].mxu0 %v4243
      %v5682 = vpop.f32.mrb[0].mxu0
      %v5683 = vadd.f32 0.0, %v5682
      %v5684 = vpop.f32.mrb[0].mxu0
      %5685 = vmatprep.mubr.f32.mxu0 0.0
      %5686 = vmatmul.mubr.f32.gmra.mrb[0].mxu0 %v4246
      %v5687 = vpop.f32.mrb[0].mxu0
      %v5688 = vadd.f32 0.0, %v5687
      %v5689 = vpop.f32.mrb[0].mxu0
      %5690 = vmatprep.mubr.f32.mxu0 0.0
      %5691 = vmatmul.mubr.f32.gmra.mrb[0].mxu0 %v4249
      %v5692 = vpop.f32.mrb[0].mxu0
      %v5693 = vadd.f32 0.0, %v5692
      %v5694 = vpop.f32.mrb[0].mxu0
      %5695 = vmatprep.mubr.f32.mxu0 0.0
      %5696 = vmatmul.mubr.f32.gmra.mrb[0].mxu0 %v5473
      %v5697 = vpop.f32.mrb[0].mxu0
      %v5698 = vadd.f32 0.0, %v5697
      %v5699 = vpop.f32.mrb[0].mxu0
      %5700 = vmatprep.mubr.f32.mxu0 0.0
      %5701 = vmatmul.mubr.f32.gmra.mrb[0].mxu0 %v5476
      %v5702 = vpop.f32.mrb[0].mxu0
      %v5703 = vadd.f32 0.0, %v5702
      %v5704 = vpop.f32.mrb[0].mxu0
      %5705 = vdwg.mxu0
      %v5706 = vld [vmem:[#allocation2] sm:$0xff]
      %v5707 = vld [vmem:[#allocation2 + $0x8] sm:$0xff]
      %v5708 = vld [vmem:[#allocation2 + $0x10] sm:$0xff]
      %v5709 = vld [vmem:[#allocation2 + $0x18] sm:$0xff]
      %v5710 = vld [vmem:[#allocation2 + $0x20] sm:$0xff]
      %v5711 = vld [vmem:[#allocation2 + $0x28] sm:$0xff]
      %v5712 = vld [vmem:[#allocation2 + $0x30] sm:$0xff]
      %v5713 = vld [vmem:[#allocation2 + $0x38] sm:$0xff]
      %v5714 = vld [vmem:[#allocation2 + $0x40] sm:$0xff]
      %v5715 = vld [vmem:[#allocation2 + $0x48] sm:$0xff]
      %v5716 = vld [vmem:[#allocation2 + $0x50] sm:$0xff]
      %v5717 = vld [vmem:[#allocation2 + $0x58] sm:$0xff]
      %v5718 = vld [vmem:[#allocation2 + $0x60] sm:$0xff]
      %v5719 = vld [vmem:[#allocation2 + $0x68] sm:$0xff]
      %v5720 = vld [vmem:[#allocation2 + $0x70] sm:$0xff]
      %v5721 = vld [vmem:[#allocation2 + $0x78] sm:$0xff]
      %v5722 = vld [vmem:[#allocation2 + $0x80] sm:$0xff]
      %v5723 = vld [vmem:[#allocation2 + $0x88] sm:$0xff]
      %v5724 = vld [vmem:[#allocation2 + $0x90] sm:$0xff]
      %v5725 = vld [vmem:[#allocation2 + $0x98] sm:$0xff]
      %v5726 = vld [vmem:[#allocation2 + $0xa0] sm:$0xff]
      %v5727 = vld [vmem:[#allocation2 + $0xa8] sm:$0xff]
      %v5728 = vld [vmem:[#allocation2 + $0xb0] sm:$0xff]
      %v5729 = vld [vmem:[#allocation2 + $0xb8] sm:$0xff]
      %v5730 = vld [vmem:[#allocation2 + $0xc0] sm:$0xff]
      %v5731 = vld [vmem:[#allocation2 + $0xc8] sm:$0xff]
      %v5732 = vld [vmem:[#allocation2 + $0xd0] sm:$0xff]
      %v5733 = vld [vmem:[#allocation2 + $0xd8] sm:$0xff]
      %v5734 = vld [vmem:[#allocation2 + $0xe0] sm:$0xff]
      %v5735 = vld [vmem:[#allocation2 + $0xe8] sm:$0xff]
      %v5736 = vld [vmem:[#allocation2 + $0xf0] sm:$0xff]
      %v5737 = vld [vmem:[#allocation2 + $0xf8] sm:$0xff]
      %v5738 = vadd.f32 %v5706, %v5548
      %v5739 = vadd.f32 %v5707, %v5553
      %v5740 = vadd.f32 %v5708, %v5558
      %v5741 = vadd.f32 %v5709, %v5563
      %v5742 = vadd.f32 %v5710, %v5568
      %v5743 = vadd.f32 %v5711, %v5573
      %v5744 = vadd.f32 %v5712, %v5578
      %v5745 = vadd.f32 %v5713, %v5583
      %v5746 = vadd.f32 %v5714, %v5588
      %v5747 = vadd.f32 %v5715, %v5593
      %v5748 = vadd.f32 %v5716, %v5598
      %v5749 = vadd.f32 %v5717, %v5603
      %v5750 = vadd.f32 %v5718, %v5608
      %v5751 = vadd.f32 %v5719, %v5613
      %v5752 = vadd.f32 %v5720, %v5618
      %v5753 = vadd.f32 %v5721, %v5623
      %v5754 = vadd.f32 %v5722, %v5628
      %v5755 = vadd.f32 %v5723, %v5633
      %v5756 = vadd.f32 %v5724, %v5638
      %v5757 = vadd.f32 %v5725, %v5643
      %v5758 = vadd.f32 %v5726, %v5648
      %v5759 = vadd.f32 %v5727, %v5653
      %v5760 = vadd.f32 %v5728, %v5658
      %v5761 = vadd.f32 %v5729, %v5663
      %v5762 = vadd.f32 %v5730, %v5668
      %v5763 = vadd.f32 %v5731, %v5673
      %v5764 = vadd.f32 %v5732, %v5678
      %v5765 = vadd.f32 %v5733, %v5683
      %v5766 = vadd.f32 %v5734, %v5688
      %v5767 = vadd.f32 %v5735, %v5693
      %v5768 = vadd.f32 %v5736, %v5698
      %v5769 = vadd.f32 %v5737, %v5703
      %5770 = vst.msk [vmem:[#allocation2] sm:$0xff] %vm1799, %v5738
      %5771 = vst.msk [vmem:[#allocation2 + $0x8] sm:$0xff] %vm1799, %v5739
      %5772 = vst.msk [vmem:[#allocation2 + $0x10] sm:$0xff] %vm1799, %v5740
      %5773 = vst.msk [vmem:[#allocation2 + $0x18] sm:$0xff] %vm1799, %v5741
      %5774 = vst.msk [vmem:[#allocation2 + $0x20] sm:$0xff] %vm1799, %v5742
      %5775 = vst.msk [vmem:[#allocation2 + $0x28] sm:$0xff] %vm1799, %v5743
      %5776 = vst.msk [vmem:[#allocation2 + $0x30] sm:$0xff] %vm1799, %v5744
      %5777 = vst.msk [vmem:[#allocation2 + $0x38] sm:$0xff] %vm1799, %v5745
      %5778 = vst.msk [vmem:[#allocation2 + $0x40] sm:$0xff] %vm1799, %v5746
      %5779 = vst.msk [vmem:[#allocation2 + $0x48] sm:$0xff] %vm1799, %v5747
      %5780 = vst.msk [vmem:[#allocation2 + $0x50] sm:$0xff] %vm1799, %v5748
      %5781 = vst.msk [vmem:[#allocation2 + $0x58] sm:$0xff] %vm1799, %v5749
      %5782 = vst.msk [vmem:[#allocation2 + $0x60] sm:$0xff] %vm1799, %v5750
      %5783 = vst.msk [vmem:[#allocation2 + $0x68] sm:$0xff] %vm1799, %v5751
      %5784 = vst.msk [vmem:[#allocation2 + $0x70] sm:$0xff] %vm1799, %v5752
      %5785 = vst.msk [vmem:[#allocation2 + $0x78] sm:$0xff] %vm1799, %v5753
      %5786 = vst.msk [vmem:[#allocation2 + $0x80] sm:$0xff] %vm1799, %v5754
      %5787 = vst.msk [vmem:[#allocation2 + $0x88] sm:$0xff] %vm1799, %v5755
      %5788 = vst.msk [vmem:[#allocation2 + $0x90] sm:$0xff] %vm1799, %v5756
      %5789 = vst.msk [vmem:[#allocation2 + $0x98] sm:$0xff] %vm1799, %v5757
      %5790 = vst.msk [vmem:[#allocation2 + $0xa0] sm:$0xff] %vm1799, %v5758
      %5791 = vst.msk [vmem:[#allocation2 + $0xa8] sm:$0xff] %vm1799, %v5759
      %5792 = vst.msk [vmem:[#allocation2 + $0xb0] sm:$0xff] %vm1799, %v5760
      %5793 = vst.msk [vmem:[#allocation2 + $0xb8] sm:$0xff] %vm1799, %v5761
      %5794 = vst.msk [vmem:[#allocation2 + $0xc0] sm:$0xff] %vm1799, %v5762
      %5795 = vst.msk [vmem:[#allocation2 + $0xc8] sm:$0xff] %vm1799, %v5763
      %5796 = vst.msk [vmem:[#allocation2 + $0xd0] sm:$0xff] %vm1799, %v5764
      %5797 = vst.msk [vmem:[#allocation2 + $0xd8] sm:$0xff] %vm1799, %v5765
      %5798 = vst.msk [vmem:[#allocation2 + $0xe0] sm:$0xff] %vm1799, %v5766
      %5799 = vst.msk [vmem:[#allocation2 + $0xe8] sm:$0xff] %vm1799, %v5767
      %5800 = vst.msk [vmem:[#allocation2 + $0xf0] sm:$0xff] %vm1799, %v5768
      %5801 = vst.msk [vmem:[#allocation2 + $0xf8] sm:$0xff] %vm1799, %v5769
      %v5803 = vrot.slane %v4147, 1
      %v5804 = vrot.slane %v4148, 1
      %v5805 = vsel %vm4528, %v5803, %v5804
      %v5806 = vrot.slane %v4149, 1
      %v5807 = vsel %vm4528, %v5804, %v5806
      %s5808 = scalar_lea.vmem %s3, 8
      %v5809 = vld [vmem:[%s5808] sm:$0x3]
      %v5810 = vsel %vm4154, %v5805, 0
      %v5812 = vsel %vm4154, %v5807, 0
      %v5815 = vsel %vm4251, %v5809, 0
      %5817 = vmatprep.subr.mxu0 0.0
      %5818 = vmatpush1.msra.mxu0 %v5815
      %5819 = vmatprep.subr.mxu0 0.0
      %5820 = vmatpush1.msra.mxu0 0.0
      %5821 = vmatprep.subr.mxu0 0.0
      %5822 = vmatpush1.msra.mxu0 0.0
      %5823 = vmatprep.subr.mxu0 0.0
      %5824 = vmatpush1.msra.mxu0 0.0
      %5825 = vmatprep.subr.mxu0 0.0
      %5826 = vmatpush1.msra.mxu0 0.0
      %5827 = vmatprep.subr.mxu0 0.0
      %5828 = vmatpush1.msra.mxu0 0.0
      %5829 = vmatprep.subr.mxu0 0.0
      %5830 = vmatpush1.msra.mxu0 0.0
      %5831 = vmatprep.subr.mxu0 0.0
      %5832 = vmatpush1.msra.mxu0 0.0
      %5833 = vmatprep.subr.mxu0 0.0
      %5834 = vmatpush1.msra.mxu0 0.0
      %5835 = vmatprep.subr.mxu0 0.0
      %5836 = vmatpush1.msra.mxu0 0.0
      %5837 = vmatprep.subr.mxu0 0.0
      %5838 = vmatpush1.msra.mxu0 0.0
      %5839 = vmatprep.subr.mxu0 0.0
      %5840 = vmatpush1.msra.mxu0 0.0
      %5841 = vmatprep.subr.mxu0 0.0
      %5842 = vmatpush1.msra.mxu0 0.0
      %5843 = vmatprep.subr.mxu0 0.0
      %5844 = vmatpush1.msra.mxu0 0.0
      %5845 = vmatprep.subr.mxu0 0.0
      %5846 = vmatpush1.msra.mxu0 0.0
      %5847 = vmatprep.subr.mxu0 0.0
      %5848 = vmatpush1.msra.mxu0 0.0
      %5849 = vmatprep.subr.mxu0 0.0
      %5850 = vmatpush1.msra.mxu0 0.0
      %5851 = vmatprep.subr.mxu0 0.0
      %5852 = vmatpush1.msra.mxu0 0.0
      %5853 = vmatprep.subr.mxu0 0.0
      %5854 = vmatpush1.msra.mxu0 0.0
      %5855 = vmatprep.subr.mxu0 0.0
      %5856 = vmatpush1.msra.mxu0 0.0
      %5857 = vmatprep.subr.mxu0 0.0
      %5858 = vmatpush1.msra.mxu0 0.0
      %5859 = vmatprep.subr.mxu0 0.0
      %5860 = vmatpush1.msra.mxu0 0.0
      %5861 = vmatprep.subr.mxu0 0.0
      %5862 = vmatpush1.msra.mxu0 0.0
      %5863 = vmatprep.subr.mxu0 0.0
      %5864 = vmatpush1.msra.mxu0 0.0
      %5865 = vmatprep.subr.mxu0 0.0
      %5866 = vmatpush1.msra.mxu0 0.0
      %5867 = vmatprep.subr.mxu0 0.0
      %5868 = vmatpush1.msra.mxu0 0.0
      %5869 = vmatprep.subr.mxu0 0.0
      %5870 = vmatpush1.msra.mxu0 0.0
      %5871 = vmatprep.subr.mxu0 0.0
      %5872 = vmatpush1.msra.mxu0 0.0
      %5873 = vmatprep.subr.mxu0 0.0
      %5874 = vmatpush1.msra.mxu0 0.0
      %5875 = vmatprep.subr.mxu0 0.0
      %5876 = vmatpush1.msra.mxu0 0.0
      %5877 = vmatprep.subr.mxu0 0.0
      %5878 = vmatpush1.msra.mxu0 0.0
      %5879 = vmatprep.subr.mxu0 0.0
      %5880 = vmatpush1.msra.mxu0 0.0
      %5881 = vmatprep.mubr.f32.mxu0 0.0
      %5882 = vmatmul.mubr.f32.gmra.mrb[0].mxu0 %v4615
      %v5883 = vpop.f32.mrb[0].mxu0
      %v5884 = vadd.f32 0.0, %v5883
      %v5885 = vpop.f32.mrb[0].mxu0
      %5886 = vmatprep.mubr.f32.mxu0 0.0
      %5887 = vmatmul.mubr.f32.gmra.mrb[0].mxu0 %v4617
      %v5888 = vpop.f32.mrb[0].mxu0
      %v5889 = vadd.f32 0.0, %v5888
      %v5890 = vpop.f32.mrb[0].mxu0
      %5891 = vmatprep.mubr.f32.mxu0 0.0
      %5892 = vmatmul.mubr.f32.gmra.mrb[0].mxu0 %v4619
      %v5893 = vpop.f32.mrb[0].mxu0
      %v5894 = vadd.f32 0.0, %v5893
      %v5895 = vpop.f32.mrb[0].mxu0
      %5896 = vmatprep.mubr.f32.mxu0 0.0
      %5897 = vmatmul.mubr.f32.gmra.mrb[0].mxu0 %v4621
      %v5898 = vpop.f32.mrb[0].mxu0
      %v5899 = vadd.f32 0.0, %v5898
      %v5900 = vpop.f32.mrb[0].mxu0
      %5901 = vmatprep.mubr.f32.mxu0 0.0
      %5902 = vmatmul.mubr.f32.gmra.mrb[0].mxu0 %v4623
      %v5903 = vpop.f32.mrb[0].mxu0
      %v5904 = vadd.f32 0.0, %v5903
      %v5905 = vpop.f32.mrb[0].mxu0
      %5906 = vmatprep.mubr.f32.mxu0 0.0
      %5907 = vmatmul.mubr.f32.gmra.mrb[0].mxu0 %v4625
      %v5908 = vpop.f32.mrb[0].mxu0
      %v5909 = vadd.f32 0.0, %v5908
      %v5910 = vpop.f32.mrb[0].mxu0
      %5911 = vmatprep.mubr.f32.mxu0 0.0
      %5912 = vmatmul.mubr.f32.gmra.mrb[0].mxu0 %v4627
      %v5913 = vpop.f32.mrb[0].mxu0
      %v5914 = vadd.f32 0.0, %v5913
      %v5915 = vpop.f32.mrb[0].mxu0
      %5916 = vmatprep.mubr.f32.mxu0 0.0
      %5917 = vmatmul.mubr.f32.gmra.mrb[0].mxu0 %v4629
      %v5918 = vpop.f32.mrb[0].mxu0
      %v5919 = vadd.f32 0.0, %v5918
      %v5920 = vpop.f32.mrb[0].mxu0
      %5921 = vmatprep.mubr.f32.mxu0 0.0
      %5922 = vmatmul.mubr.f32.gmra.mrb[0].mxu0 %v4631
      %v5923 = vpop.f32.mrb[0].mxu0
      %v5924 = vadd.f32 0.0, %v5923
      %v5925 = vpop.f32.mrb[0].mxu0
      %5926 = vmatprep.mubr.f32.mxu0 0.0
      %5927 = vmatmul.mubr.f32.gmra.mrb[0].mxu0 %v4633
      %v5928 = vpop.f32.mrb[0].mxu0
      %v5929 = vadd.f32 0.0, %v5928
      %v5930 = vpop.f32.mrb[0].mxu0
      %5931 = vmatprep.mubr.f32.mxu0 0.0
      %5932 = vmatmul.mubr.f32.gmra.mrb[0].mxu0 %v4635
      %v5933 = vpop.f32.mrb[0].mxu0
      %v5934 = vadd.f32 0.0, %v5933
      %v5935 = vpop.f32.mrb[0].mxu0
      %5936 = vmatprep.mubr.f32.mxu0 0.0
      %5937 = vmatmul.mubr.f32.gmra.mrb[0].mxu0 %v4637
      %v5938 = vpop.f32.mrb[0].mxu0
      %v5939 = vadd.f32 0.0, %v5938
      %v5940 = vpop.f32.mrb[0].mxu0
      %5941 = vmatprep.mubr.f32.mxu0 0.0
      %5942 = vmatmul.mubr.f32.gmra.mrb[0].mxu0 %v4639
      %v5943 = vpop.f32.mrb[0].mxu0
      %v5944 = vadd.f32 0.0, %v5943
      %v5945 = vpop.f32.mrb[0].mxu0
      %5946 = vmatprep.mubr.f32.mxu0 0.0
      %5947 = vmatmul.mubr.f32.gmra.mrb[0].mxu0 %v4641
      %v5948 = vpop.f32.mrb[0].mxu0
      %v5949 = vadd.f32 0.0, %v5948
      %v5950 = vpop.f32.mrb[0].mxu0
      %5951 = vmatprep.mubr.f32.mxu0 0.0
      %5952 = vmatmul.mubr.f32.gmra.mrb[0].mxu0 %v4643
      %v5953 = vpop.f32.mrb[0].mxu0
      %v5954 = vadd.f32 0.0, %v5953
      %v5955 = vpop.f32.mrb[0].mxu0
      %5956 = vmatprep.mubr.f32.mxu0 0.0
      %5957 = vmatmul.mubr.f32.gmra.mrb[0].mxu0 %v4645
      %v5958 = vpop.f32.mrb[0].mxu0
      %v5959 = vadd.f32 0.0, %v5958
      %v5960 = vpop.f32.mrb[0].mxu0
      %5961 = vmatprep.mubr.f32.mxu0 0.0
      %5962 = vmatmul.mubr.f32.gmra.mrb[0].mxu0 %v4647
      %v5963 = vpop.f32.mrb[0].mxu0
      %v5964 = vadd.f32 0.0, %v5963
      %v5965 = vpop.f32.mrb[0].mxu0
      %5966 = vmatprep.mubr.f32.mxu0 0.0
      %5967 = vmatmul.mubr.f32.gmra.mrb[0].mxu0 %v4649
      %v5968 = vpop.f32.mrb[0].mxu0
      %v5969 = vadd.f32 0.0, %v5968
      %v5970 = vpop.f32.mrb[0].mxu0
      %5971 = vmatprep.mubr.f32.mxu0 0.0
      %5972 = vmatmul.mubr.f32.gmra.mrb[0].mxu0 %v4651
      %v5973 = vpop.f32.mrb[0].mxu0
      %v5974 = vadd.f32 0.0, %v5973
      %v5975 = vpop.f32.mrb[0].mxu0
      %5976 = vmatprep.mubr.f32.mxu0 0.0
      %5977 = vmatmul.mubr.f32.gmra.mrb[0].mxu0 %v4653
      %v5978 = vpop.f32.mrb[0].mxu0
      %v5979 = vadd.f32 0.0, %v5978
      %v5980 = vpop.f32.mrb[0].mxu0
      %5981 = vmatprep.mubr.f32.mxu0 0.0
      %5982 = vmatmul.mubr.f32.gmra.mrb[0].mxu0 %v4655
      %v5983 = vpop.f32.mrb[0].mxu0
      %v5984 = vadd.f32 0.0, %v5983
      %v5985 = vpop.f32.mrb[0].mxu0
      %5986 = vmatprep.mubr.f32.mxu0 0.0
      %5987 = vmatmul.mubr.f32.gmra.mrb[0].mxu0 %v4657
      %v5988 = vpop.f32.mrb[0].mxu0
      %v5989 = vadd.f32 0.0, %v5988
      %v5990 = vpop.f32.mrb[0].mxu0
      %5991 = vmatprep.mubr.f32.mxu0 0.0
      %5992 = vmatmul.mubr.f32.gmra.mrb[0].mxu0 %v4659
      %v5993 = vpop.f32.mrb[0].mxu0
      %v5994 = vadd.f32 0.0, %v5993
      %v5995 = vpop.f32.mrb[0].mxu0
      %5996 = vmatprep.mubr.f32.mxu0 0.0
      %5997 = vmatmul.mubr.f32.gmra.mrb[0].mxu0 %v4661
      %v5998 = vpop.f32.mrb[0].mxu0
      %v5999 = vadd.f32 0.0, %v5998
      %v6000 = vpop.f32.mrb[0].mxu0
      %6001 = vmatprep.mubr.f32.mxu0 0.0
      %6002 = vmatmul.mubr.f32.gmra.mrb[0].mxu0 %v4663
      %v6003 = vpop.f32.mrb[0].mxu0
      %v6004 = vadd.f32 0.0, %v6003
      %v6005 = vpop.f32.mrb[0].mxu0
      %6006 = vmatprep.mubr.f32.mxu0 0.0
      %6007 = vmatmul.mubr.f32.gmra.mrb[0].mxu0 %v4665
      %v6008 = vpop.f32.mrb[0].mxu0
      %v6009 = vadd.f32 0.0, %v6008
      %v6010 = vpop.f32.mrb[0].mxu0
      %6011 = vmatprep.mubr.f32.mxu0 0.0
      %6012 = vmatmul.mubr.f32.gmra.mrb[0].mxu0 %v4667
      %v6013 = vpop.f32.mrb[0].mxu0
      %v6014 = vadd.f32 0.0, %v6013
      %v6015 = vpop.f32.mrb[0].mxu0
      %6016 = vmatprep.mubr.f32.mxu0 0.0
      %6017 = vmatmul.mubr.f32.gmra.mrb[0].mxu0 %v4669
      %v6018 = vpop.f32.mrb[0].mxu0
      %v6019 = vadd.f32 0.0, %v6018
      %v6020 = vpop.f32.mrb[0].mxu0
      %6021 = vmatprep.mubr.f32.mxu0 0.0
      %6022 = vmatmul.mubr.f32.gmra.mrb[0].mxu0 %v4671
      %v6023 = vpop.f32.mrb[0].mxu0
      %v6024 = vadd.f32 0.0, %v6023
      %v6025 = vpop.f32.mrb[0].mxu0
      %6026 = vmatprep.mubr.f32.mxu0 0.0
      %6027 = vmatmul.mubr.f32.gmra.mrb[0].mxu0 %v4673
      %v6028 = vpop.f32.mrb[0].mxu0
      %v6029 = vadd.f32 0.0, %v6028
      %v6030 = vpop.f32.mrb[0].mxu0
      %6031 = vmatprep.mubr.f32.mxu0 0.0
      %6032 = vmatmul.mubr.f32.gmra.mrb[0].mxu0 %v5810
      %v6033 = vpop.f32.mrb[0].mxu0
      %v6034 = vadd.f32 0.0, %v6033
      %v6035 = vpop.f32.mrb[0].mxu0
      %6036 = vmatprep.mubr.f32.mxu0 0.0
      %6037 = vmatmul.mubr.f32.gmra.mrb[0].mxu0 %v5812
      %v6038 = vpop.f32.mrb[0].mxu0
      %v6039 = vadd.f32 0.0, %v6038
      %v6040 = vpop.f32.mrb[0].mxu0
      %6041 = vdwg.mxu0
      %v6042 = vld [vmem:[#allocation2] sm:$0xff]
      %v6043 = vld [vmem:[#allocation2 + $0x8] sm:$0xff]
      %v6044 = vld [vmem:[#allocation2 + $0x10] sm:$0xff]
      %v6045 = vld [vmem:[#allocation2 + $0x18] sm:$0xff]
      %v6046 = vld [vmem:[#allocation2 + $0x20] sm:$0xff]
      %v6047 = vld [vmem:[#allocation2 + $0x28] sm:$0xff]
      %v6048 = vld [vmem:[#allocation2 + $0x30] sm:$0xff]
      %v6049 = vld [vmem:[#allocation2 + $0x38] sm:$0xff]
      %v6050 = vld [vmem:[#allocation2 + $0x40] sm:$0xff]
      %v6051 = vld [vmem:[#allocation2 + $0x48] sm:$0xff]
      %v6052 = vld [vmem:[#allocation2 + $0x50] sm:$0xff]
      %v6053 = vld [vmem:[#allocation2 + $0x58] sm:$0xff]
      %v6054 = vld [vmem:[#allocation2 + $0x60] sm:$0xff]
      %v6055 = vld [vmem:[#allocation2 + $0x68] sm:$0xff]
      %v6056 = vld [vmem:[#allocation2 + $0x70] sm:$0xff]
      %v6057 = vld [vmem:[#allocation2 + $0x78] sm:$0xff]
      %v6058 = vld [vmem:[#allocation2 + $0x80] sm:$0xff]
      %v6059 = vld [vmem:[#allocation2 + $0x88] sm:$0xff]
      %v6060 = vld [vmem:[#allocation2 + $0x90] sm:$0xff]
      %v6061 = vld [vmem:[#allocation2 + $0x98] sm:$0xff]
      %v6062 = vld [vmem:[#allocation2 + $0xa0] sm:$0xff]
      %v6063 = vld [vmem:[#allocation2 + $0xa8] sm:$0xff]
      %v6064 = vld [vmem:[#allocation2 + $0xb0] sm:$0xff]
      %v6065 = vld [vmem:[#allocation2 + $0xb8] sm:$0xff]
      %v6066 = vld [vmem:[#allocation2 + $0xc0] sm:$0xff]
      %v6067 = vld [vmem:[#allocation2 + $0xc8] sm:$0xff]
      %v6068 = vld [vmem:[#allocation2 + $0xd0] sm:$0xff]
      %v6069 = vld [vmem:[#allocation2 + $0xd8] sm:$0xff]
      %v6070 = vld [vmem:[#allocation2 + $0xe0] sm:$0xff]
      %v6071 = vld [vmem:[#allocation2 + $0xe8] sm:$0xff]
      %v6072 = vld [vmem:[#allocation2 + $0xf0] sm:$0xff]
      %v6073 = vld [vmem:[#allocation2 + $0xf8] sm:$0xff]
      %v6074 = vadd.f32 %v6042, %v5884
      %v6075 = vadd.f32 %v6043, %v5889
      %v6076 = vadd.f32 %v6044, %v5894
      %v6077 = vadd.f32 %v6045, %v5899
      %v6078 = vadd.f32 %v6046, %v5904
      %v6079 = vadd.f32 %v6047, %v5909
      %v6080 = vadd.f32 %v6048, %v5914
      %v6081 = vadd.f32 %v6049, %v5919
      %v6082 = vadd.f32 %v6050, %v5924
      %v6083 = vadd.f32 %v6051, %v5929
      %v6084 = vadd.f32 %v6052, %v5934
      %v6085 = vadd.f32 %v6053, %v5939
      %v6086 = vadd.f32 %v6054, %v5944
      %v6087 = vadd.f32 %v6055, %v5949
      %v6088 = vadd.f32 %v6056, %v5954
      %v6089 = vadd.f32 %v6057, %v5959
      %v6090 = vadd.f32 %v6058, %v5964
      %v6091 = vadd.f32 %v6059, %v5969
      %v6092 = vadd.f32 %v6060, %v5974
      %v6093 = vadd.f32 %v6061, %v5979
      %v6094 = vadd.f32 %v6062, %v5984
      %v6095 = vadd.f32 %v6063, %v5989
      %v6096 = vadd.f32 %v6064, %v5994
      %v6097 = vadd.f32 %v6065, %v5999
      %v6098 = vadd.f32 %v6066, %v6004
      %v6099 = vadd.f32 %v6067, %v6009
      %v6100 = vadd.f32 %v6068, %v6014
      %v6101 = vadd.f32 %v6069, %v6019
      %v6102 = vadd.f32 %v6070, %v6024
      %v6103 = vadd.f32 %v6071, %v6029
      %v6104 = vadd.f32 %v6072, %v6034
      %v6105 = vadd.f32 %v6073, %v6039
      %6106 = vst.msk [vmem:[#allocation2] sm:$0xff] %vm1799, %v6074
      %6107 = vst.msk [vmem:[#allocation2 + $0x8] sm:$0xff] %vm1799, %v6075
      %6108 = vst.msk [vmem:[#allocation2 + $0x10] sm:$0xff] %vm1799, %v6076
      %6109 = vst.msk [vmem:[#allocation2 + $0x18] sm:$0xff] %vm1799, %v6077
      %6110 = vst.msk [vmem:[#allocation2 + $0x20] sm:$0xff] %vm1799, %v6078
      %6111 = vst.msk [vmem:[#allocation2 + $0x28] sm:$0xff] %vm1799, %v6079
      %6112 = vst.msk [vmem:[#allocation2 + $0x30] sm:$0xff] %vm1799, %v6080
      %6113 = vst.msk [vmem:[#allocation2 + $0x38] sm:$0xff] %vm1799, %v6081
      %6114 = vst.msk [vmem:[#allocation2 + $0x40] sm:$0xff] %vm1799, %v6082
      %6115 = vst.msk [vmem:[#allocation2 + $0x48] sm:$0xff] %vm1799, %v6083
      %6116 = vst.msk [vmem:[#allocation2 + $0x50] sm:$0xff] %vm1799, %v6084
      %6117 = vst.msk [vmem:[#allocation2 + $0x58] sm:$0xff] %vm1799, %v6085
      %6118 = vst.msk [vmem:[#allocation2 + $0x60] sm:$0xff] %vm1799, %v6086
      %6119 = vst.msk [vmem:[#allocation2 + $0x68] sm:$0xff] %vm1799, %v6087
      %6120 = vst.msk [vmem:[#allocation2 + $0x70] sm:$0xff] %vm1799, %v6088
      %6121 = vst.msk [vmem:[#allocation2 + $0x78] sm:$0xff] %vm1799, %v6089
      %6122 = vst.msk [vmem:[#allocation2 + $0x80] sm:$0xff] %vm1799, %v6090
      %6123 = vst.msk [vmem:[#allocation2 + $0x88] sm:$0xff] %vm1799, %v6091
      %6124 = vst.msk [vmem:[#allocation2 + $0x90] sm:$0xff] %vm1799, %v6092
      %6125 = vst.msk [vmem:[#allocation2 + $0x98] sm:$0xff] %vm1799, %v6093
      %6126 = vst.msk [vmem:[#allocation2 + $0xa0] sm:$0xff] %vm1799, %v6094
      %6127 = vst.msk [vmem:[#allocation2 + $0xa8] sm:$0xff] %vm1799, %v6095
      %6128 = vst.msk [vmem:[#allocation2 + $0xb0] sm:$0xff] %vm1799, %v6096
      %6129 = vst.msk [vmem:[#allocation2 + $0xb8] sm:$0xff] %vm1799, %v6097
      %6130 = vst.msk [vmem:[#allocation2 + $0xc0] sm:$0xff] %vm1799, %v6098
      %6131 = vst.msk [vmem:[#allocation2 + $0xc8] sm:$0xff] %vm1799, %v6099
      %6132 = vst.msk [vmem:[#allocation2 + $0xd0] sm:$0xff] %vm1799, %v6100
      %6133 = vst.msk [vmem:[#allocation2 + $0xd8] sm:$0xff] %vm1799, %v6101
      %6134 = vst.msk [vmem:[#allocation2 + $0xe0] sm:$0xff] %vm1799, %v6102
      %6135 = vst.msk [vmem:[#allocation2 + $0xe8] sm:$0xff] %vm1799, %v6103
      %6136 = vst.msk [vmem:[#allocation2 + $0xf0] sm:$0xff] %vm1799, %v6104
      %6137 = vst.msk [vmem:[#allocation2 + $0xf8] sm:$0xff] %vm1799, %v6105
      %v6138 = vrot.slane %v4147, 2
      %v6139 = vrot.slane %v4148, 2
      %v6140 = vsel %vm4999, %v6138, %v6139
      %v6141 = vrot.slane %v4149, 2
      %v6142 = vsel %vm4999, %v6139, %v6141
      %s6143 = scalar_lea.vmem %s3, 10
      %v6144 = vld [vmem:[%s6143] sm:$0x3]
      %v6145 = vsel %vm4154, %v6140, 0
      %v6147 = vsel %vm4154, %v6142, 0
      %v6150 = vsel %vm4251, %v6144, 0
      %6152 = vmatprep.subr.mxu0 0.0
      %6153 = vmatpush1.msra.mxu0 %v6150
      %6154 = vmatprep.subr.mxu0 0.0
      %6155 = vmatpush1.msra.mxu0 0.0
      %6156 = vmatprep.subr.mxu0 0.0
      %6157 = vmatpush1.msra.mxu0 0.0
      %6158 = vmatprep.subr.mxu0 0.0
      %6159 = vmatpush1.msra.mxu0 0.0
      %6160 = vmatprep.subr.mxu0 0.0
      %6161 = vmatpush1.msra.mxu0 0.0
      %6162 = vmatprep.subr.mxu0 0.0
      %6163 = vmatpush1.msra.mxu0 0.0
      %6164 = vmatprep.subr.mxu0 0.0
      %6165 = vmatpush1.msra.mxu0 0.0
      %6166 = vmatprep.subr.mxu0 0.0
      %6167 = vmatpush1.msra.mxu0 0.0
      %6168 = vmatprep.subr.mxu0 0.0
      %6169 = vmatpush1.msra.mxu0 0.0
      %6170 = vmatprep.subr.mxu0 0.0
      %6171 = vmatpush1.msra.mxu0 0.0
      %6172 = vmatprep.subr.mxu0 0.0
      %6173 = vmatpush1.msra.mxu0 0.0
      %6174 = vmatprep.subr.mxu0 0.0
      %6175 = vmatpush1.msra.mxu0 0.0
      %6176 = vmatprep.subr.mxu0 0.0
      %6177 = vmatpush1.msra.mxu0 0.0
      %6178 = vmatprep.subr.mxu0 0.0
      %6179 = vmatpush1.msra.mxu0 0.0
      %6180 = vmatprep.subr.mxu0 0.0
      %6181 = vmatpush1.msra.mxu0 0.0
      %6182 = vmatprep.subr.mxu0 0.0
      %6183 = vmatpush1.msra.mxu0 0.0
      %6184 = vmatprep.subr.mxu0 0.0
      %6185 = vmatpush1.msra.mxu0 0.0
      %6186 = vmatprep.subr.mxu0 0.0
      %6187 = vmatpush1.msra.mxu0 0.0
      %6188 = vmatprep.subr.mxu0 0.0
      %6189 = vmatpush1.msra.mxu0 0.0
      %6190 = vmatprep.subr.mxu0 0.0
      %6191 = vmatpush1.msra.mxu0 0.0
      %6192 = vmatprep.subr.mxu0 0.0
      %6193 = vmatpush1.msra.mxu0 0.0
      %6194 = vmatprep.subr.mxu0 0.0
      %6195 = vmatpush1.msra.mxu0 0.0
      %6196 = vmatprep.subr.mxu0 0.0
      %6197 = vmatpush1.msra.mxu0 0.0
      %6198 = vmatprep.subr.mxu0 0.0
      %6199 = vmatpush1.msra.mxu0 0.0
      %6200 = vmatprep.subr.mxu0 0.0
      %6201 = vmatpush1.msra.mxu0 0.0
      %6202 = vmatprep.subr.mxu0 0.0
      %6203 = vmatpush1.msra.mxu0 0.0
      %6204 = vmatprep.subr.mxu0 0.0
      %6205 = vmatpush1.msra.mxu0 0.0
      %6206 = vmatprep.subr.mxu0 0.0
      %6207 = vmatpush1.msra.mxu0 0.0
      %6208 = vmatprep.subr.mxu0 0.0
      %6209 = vmatpush1.msra.mxu0 0.0
      %6210 = vmatprep.subr.mxu0 0.0
      %6211 = vmatpush1.msra.mxu0 0.0
      %6212 = vmatprep.subr.mxu0 0.0
      %6213 = vmatpush1.msra.mxu0 0.0
      %6214 = vmatprep.subr.mxu0 0.0
      %6215 = vmatpush1.msra.mxu0 0.0
      %6216 = vmatprep.mubr.f32.mxu0 0.0
      %6217 = vmatmul.mubr.f32.gmra.mrb[0].mxu0 %v5086
      %v6218 = vpop.f32.mrb[0].mxu0
      %v6219 = vadd.f32 0.0, %v6218
      %v6220 = vpop.f32.mrb[0].mxu0
      %6221 = vmatprep.mubr.f32.mxu0 0.0
      %6222 = vmatmul.mubr.f32.gmra.mrb[0].mxu0 %v5088
      %v6223 = vpop.f32.mrb[0].mxu0
      %v6224 = vadd.f32 0.0, %v6223
      %v6225 = vpop.f32.mrb[0].mxu0
      %6226 = vmatprep.mubr.f32.mxu0 0.0
      %6227 = vmatmul.mubr.f32.gmra.mrb[0].mxu0 %v5090
      %v6228 = vpop.f32.mrb[0].mxu0
      %v6229 = vadd.f32 0.0, %v6228
      %v6230 = vpop.f32.mrb[0].mxu0
      %6231 = vmatprep.mubr.f32.mxu0 0.0
      %6232 = vmatmul.mubr.f32.gmra.mrb[0].mxu0 %v5092
      %v6233 = vpop.f32.mrb[0].mxu0
      %v6234 = vadd.f32 0.0, %v6233
      %v6235 = vpop.f32.mrb[0].mxu0
      %6236 = vmatprep.mubr.f32.mxu0 0.0
      %6237 = vmatmul.mubr.f32.gmra.mrb[0].mxu0 %v5094
      %v6238 = vpop.f32.mrb[0].mxu0
      %v6239 = vadd.f32 0.0, %v6238
      %v6240 = vpop.f32.mrb[0].mxu0
      %6241 = vmatprep.mubr.f32.mxu0 0.0
      %6242 = vmatmul.mubr.f32.gmra.mrb[0].mxu0 %v5096
      %v6243 = vpop.f32.mrb[0].mxu0
      %v6244 = vadd.f32 0.0, %v6243
      %v6245 = vpop.f32.mrb[0].mxu0
      %6246 = vmatprep.mubr.f32.mxu0 0.0
      %6247 = vmatmul.mubr.f32.gmra.mrb[0].mxu0 %v5098
      %v6248 = vpop.f32.mrb[0].mxu0
      %v6249 = vadd.f32 0.0, %v6248
      %v6250 = vpop.f32.mrb[0].mxu0
      %6251 = vmatprep.mubr.f32.mxu0 0.0
      %6252 = vmatmul.mubr.f32.gmra.mrb[0].mxu0 %v5100
      %v6253 = vpop.f32.mrb[0].mxu0
      %v6254 = vadd.f32 0.0, %v6253
      %v6255 = vpop.f32.mrb[0].mxu0
      %6256 = vmatprep.mubr.f32.mxu0 0.0
      %6257 = vmatmul.mubr.f32.gmra.mrb[0].mxu0 %v5102
      %v6258 = vpop.f32.mrb[0].mxu0
      %v6259 = vadd.f32 0.0, %v6258
      %v6260 = vpop.f32.mrb[0].mxu0
      %6261 = vmatprep.mubr.f32.mxu0 0.0
      %6262 = vmatmul.mubr.f32.gmra.mrb[0].mxu0 %v5104
      %v6263 = vpop.f32.mrb[0].mxu0
      %v6264 = vadd.f32 0.0, %v6263
      %v6265 = vpop.f32.mrb[0].mxu0
      %6266 = vmatprep.mubr.f32.mxu0 0.0
      %6267 = vmatmul.mubr.f32.gmra.mrb[0].mxu0 %v5106
      %v6268 = vpop.f32.mrb[0].mxu0
      %v6269 = vadd.f32 0.0, %v6268
      %v6270 = vpop.f32.mrb[0].mxu0
      %6271 = vmatprep.mubr.f32.mxu0 0.0
      %6272 = vmatmul.mubr.f32.gmra.mrb[0].mxu0 %v5108
      %v6273 = vpop.f32.mrb[0].mxu0
      %v6274 = vadd.f32 0.0, %v6273
      %v6275 = vpop.f32.mrb[0].mxu0
      %6276 = vmatprep.mubr.f32.mxu0 0.0
      %6277 = vmatmul.mubr.f32.gmra.mrb[0].mxu0 %v5110
      %v6278 = vpop.f32.mrb[0].mxu0
      %v6279 = vadd.f32 0.0, %v6278
      %v6280 = vpop.f32.mrb[0].mxu0
      %6281 = vmatprep.mubr.f32.mxu0 0.0
      %6282 = vmatmul.mubr.f32.gmra.mrb[0].mxu0 %v5112
      %v6283 = vpop.f32.mrb[0].mxu0
      %v6284 = vadd.f32 0.0, %v6283
      %v6285 = vpop.f32.mrb[0].mxu0
      %6286 = vmatprep.mubr.f32.mxu0 0.0
      %6287 = vmatmul.mubr.f32.gmra.mrb[0].mxu0 %v5114
      %v6288 = vpop.f32.mrb[0].mxu0
      %v6289 = vadd.f32 0.0, %v6288
      %v6290 = vpop.f32.mrb[0].mxu0
      %6291 = vmatprep.mubr.f32.mxu0 0.0
      %6292 = vmatmul.mubr.f32.gmra.mrb[0].mxu0 %v5116
      %v6293 = vpop.f32.mrb[0].mxu0
      %v6294 = vadd.f32 0.0, %v6293
      %v6295 = vpop.f32.mrb[0].mxu0
      %6296 = vmatprep.mubr.f32.mxu0 0.0
      %6297 = vmatmul.mubr.f32.gmra.mrb[0].mxu0 %v5118
      %v6298 = vpop.f32.mrb[0].mxu0
      %v6299 = vadd.f32 0.0, %v6298
      %v6300 = vpop.f32.mrb[0].mxu0
      %6301 = vmatprep.mubr.f32.mxu0 0.0
      %6302 = vmatmul.mubr.f32.gmra.mrb[0].mxu0 %v5120
      %v6303 = vpop.f32.mrb[0].mxu0
      %v6304 = vadd.f32 0.0, %v6303
      %v6305 = vpop.f32.mrb[0].mxu0
      %6306 = vmatprep.mubr.f32.mxu0 0.0
      %6307 = vmatmul.mubr.f32.gmra.mrb[0].mxu0 %v5122
      %v6308 = vpop.f32.mrb[0].mxu0
      %v6309 = vadd.f32 0.0, %v6308
      %v6310 = vpop.f32.mrb[0].mxu0
      %6311 = vmatprep.mubr.f32.mxu0 0.0
      %6312 = vmatmul.mubr.f32.gmra.mrb[0].mxu0 %v5124
      %v6313 = vpop.f32.mrb[0].mxu0
      %v6314 = vadd.f32 0.0, %v6313
      %v6315 = vpop.f32.mrb[0].mxu0
      %6316 = vmatprep.mubr.f32.mxu0 0.0
      %6317 = vmatmul.mubr.f32.gmra.mrb[0].mxu0 %v5126
      %v6318 = vpop.f32.mrb[0].mxu0
      %v6319 = vadd.f32 0.0, %v6318
      %v6320 = vpop.f32.mrb[0].mxu0
      %6321 = vmatprep.mubr.f32.mxu0 0.0
      %6322 = vmatmul.mubr.f32.gmra.mrb[0].mxu0 %v5128
      %v6323 = vpop.f32.mrb[0].mxu0
      %v6324 = vadd.f32 0.0, %v6323
      %v6325 = vpop.f32.mrb[0].mxu0
      %6326 = vmatprep.mubr.f32.mxu0 0.0
      %6327 = vmatmul.mubr.f32.gmra.mrb[0].mxu0 %v5130
      %v6328 = vpop.f32.mrb[0].mxu0
      %v6329 = vadd.f32 0.0, %v6328
      %v6330 = vpop.f32.mrb[0].mxu0
      %6331 = vmatprep.mubr.f32.mxu0 0.0
      %6332 = vmatmul.mubr.f32.gmra.mrb[0].mxu0 %v5132
      %v6333 = vpop.f32.mrb[0].mxu0
      %v6334 = vadd.f32 0.0, %v6333
      %v6335 = vpop.f32.mrb[0].mxu0
      %6336 = vmatprep.mubr.f32.mxu0 0.0
      %6337 = vmatmul.mubr.f32.gmra.mrb[0].mxu0 %v5134
      %v6338 = vpop.f32.mrb[0].mxu0
      %v6339 = vadd.f32 0.0, %v6338
      %v6340 = vpop.f32.mrb[0].mxu0
      %6341 = vmatprep.mubr.f32.mxu0 0.0
      %6342 = vmatmul.mubr.f32.gmra.mrb[0].mxu0 %v5136
      %v6343 = vpop.f32.mrb[0].mxu0
      %v6344 = vadd.f32 0.0, %v6343
      %v6345 = vpop.f32.mrb[0].mxu0
      %6346 = vmatprep.mubr.f32.mxu0 0.0
      %6347 = vmatmul.mubr.f32.gmra.mrb[0].mxu0 %v5138
      %v6348 = vpop.f32.mrb[0].mxu0
      %v6349 = vadd.f32 0.0, %v6348
      %v6350 = vpop.f32.mrb[0].mxu0
      %6351 = vmatprep.mubr.f32.mxu0 0.0
      %6352 = vmatmul.mubr.f32.gmra.mrb[0].mxu0 %v5140
      %v6353 = vpop.f32.mrb[0].mxu0
      %v6354 = vadd.f32 0.0, %v6353
      %v6355 = vpop.f32.mrb[0].mxu0
      %6356 = vmatprep.mubr.f32.mxu0 0.0
      %6357 = vmatmul.mubr.f32.gmra.mrb[0].mxu0 %v5142
      %v6358 = vpop.f32.mrb[0].mxu0
      %v6359 = vadd.f32 0.0, %v6358
      %v6360 = vpop.f32.mrb[0].mxu0
      %6361 = vmatprep.mubr.f32.mxu0 0.0
      %6362 = vmatmul.mubr.f32.gmra.mrb[0].mxu0 %v5144
      %v6363 = vpop.f32.mrb[0].mxu0
      %v6364 = vadd.f32 0.0, %v6363
      %v6365 = vpop.f32.mrb[0].mxu0
      %6366 = vmatprep.mubr.f32.mxu0 0.0
      %6367 = vmatmul.mubr.f32.gmra.mrb[0].mxu0 %v6145
      %v6368 = vpop.f32.mrb[0].mxu0
      %v6369 = vadd.f32 0.0, %v6368
      %v6370 = vpop.f32.mrb[0].mxu0
      %6371 = vmatprep.mubr.f32.mxu0 0.0
      %6372 = vmatmul.mubr.f32.gmra.mrb[0].mxu0 %v6147
      %v6373 = vpop.f32.mrb[0].mxu0
      %v6374 = vadd.f32 0.0, %v6373
      %v6375 = vpop.f32.mrb[0].mxu0
      %6376 = vdwg.mxu0
      %v6377 = vld [vmem:[#allocation2] sm:$0xff]
      %v6378 = vld [vmem:[#allocation2 + $0x8] sm:$0xff]
      %v6379 = vld [vmem:[#allocation2 + $0x10] sm:$0xff]
      %v6380 = vld [vmem:[#allocation2 + $0x18] sm:$0xff]
      %v6381 = vld [vmem:[#allocation2 + $0x20] sm:$0xff]
      %v6382 = vld [vmem:[#allocation2 + $0x28] sm:$0xff]
      %v6383 = vld [vmem:[#allocation2 + $0x30] sm:$0xff]
      %v6384 = vld [vmem:[#allocation2 + $0x38] sm:$0xff]
      %v6385 = vld [vmem:[#allocation2 + $0x40] sm:$0xff]
      %v6386 = vld [vmem:[#allocation2 + $0x48] sm:$0xff]
      %v6387 = vld [vmem:[#allocation2 + $0x50] sm:$0xff]
      %v6388 = vld [vmem:[#allocation2 + $0x58] sm:$0xff]
      %v6389 = vld [vmem:[#allocation2 + $0x60] sm:$0xff]
      %v6390 = vld [vmem:[#allocation2 + $0x68] sm:$0xff]
      %v6391 = vld [vmem:[#allocation2 + $0x70] sm:$0xff]
      %v6392 = vld [vmem:[#allocation2 + $0x78] sm:$0xff]
      %v6393 = vld [vmem:[#allocation2 + $0x80] sm:$0xff]
      %v6394 = vld [vmem:[#allocation2 + $0x88] sm:$0xff]
      %v6395 = vld [vmem:[#allocation2 + $0x90] sm:$0xff]
      %v6396 = vld [vmem:[#allocation2 + $0x98] sm:$0xff]
      %v6397 = vld [vmem:[#allocation2 + $0xa0] sm:$0xff]
      %v6398 = vld [vmem:[#allocation2 + $0xa8] sm:$0xff]
      %v6399 = vld [vmem:[#allocation2 + $0xb0] sm:$0xff]
      %v6400 = vld [vmem:[#allocation2 + $0xb8] sm:$0xff]
      %v6401 = vld [vmem:[#allocation2 + $0xc0] sm:$0xff]
      %v6402 = vld [vmem:[#allocation2 + $0xc8] sm:$0xff]
      %v6403 = vld [vmem:[#allocation2 + $0xd0] sm:$0xff]
      %v6404 = vld [vmem:[#allocation2 + $0xd8] sm:$0xff]
      %v6405 = vld [vmem:[#allocation2 + $0xe0] sm:$0xff]
      %v6406 = vld [vmem:[#allocation2 + $0xe8] sm:$0xff]
      %v6407 = vld [vmem:[#allocation2 + $0xf0] sm:$0xff]
      %v6408 = vld [vmem:[#allocation2 + $0xf8] sm:$0xff]
      %v6409 = vadd.f32 %v6377, %v6219
      %v6410 = vadd.f32 %v6378, %v6224
      %v6411 = vadd.f32 %v6379, %v6229
      %v6412 = vadd.f32 %v6380, %v6234
      %v6413 = vadd.f32 %v6381, %v6239
      %v6414 = vadd.f32 %v6382, %v6244
      %v6415 = vadd.f32 %v6383, %v6249
      %v6416 = vadd.f32 %v6384, %v6254
      %v6417 = vadd.f32 %v6385, %v6259
      %v6418 = vadd.f32 %v6386, %v6264
      %v6419 = vadd.f32 %v6387, %v6269
      %v6420 = vadd.f32 %v6388, %v6274
      %v6421 = vadd.f32 %v6389, %v6279
      %v6422 = vadd.f32 %v6390, %v6284
      %v6423 = vadd.f32 %v6391, %v6289
      %v6424 = vadd.f32 %v6392, %v6294
      %v6425 = vadd.f32 %v6393, %v6299
      %v6426 = vadd.f32 %v6394, %v6304
      %v6427 = vadd.f32 %v6395, %v6309
      %v6428 = vadd.f32 %v6396, %v6314
      %v6429 = vadd.f32 %v6397, %v6319
      %v6430 = vadd.f32 %v6398, %v6324
      %v6431 = vadd.f32 %v6399, %v6329
      %v6432 = vadd.f32 %v6400, %v6334
      %v6433 = vadd.f32 %v6401, %v6339
      %v6434 = vadd.f32 %v6402, %v6344
      %v6435 = vadd.f32 %v6403, %v6349
      %v6436 = vadd.f32 %v6404, %v6354
      %v6437 = vadd.f32 %v6405, %v6359
      %v6438 = vadd.f32 %v6406, %v6364
      %v6439 = vadd.f32 %v6407, %v6369
      %v6440 = vadd.f32 %v6408, %v6374
      %6441 = vst.msk [vmem:[#allocation2] sm:$0xff] %vm1799, %v6409
      %6442 = vst.msk [vmem:[#allocation2 + $0x8] sm:$0xff] %vm1799, %v6410
      %6443 = vst.msk [vmem:[#allocation2 + $0x10] sm:$0xff] %vm1799, %v6411
      %6444 = vst.msk [vmem:[#allocation2 + $0x18] sm:$0xff] %vm1799, %v6412
      %6445 = vst.msk [vmem:[#allocation2 + $0x20] sm:$0xff] %vm1799, %v6413
      %6446 = vst.msk [vmem:[#allocation2 + $0x28] sm:$0xff] %vm1799, %v6414
      %6447 = vst.msk [vmem:[#allocation2 + $0x30] sm:$0xff] %vm1799, %v6415
      %6448 = vst.msk [vmem:[#allocation2 + $0x38] sm:$0xff] %vm1799, %v6416
      %6449 = vst.msk [vmem:[#allocation2 + $0x40] sm:$0xff] %vm1799, %v6417
      %6450 = vst.msk [vmem:[#allocation2 + $0x48] sm:$0xff] %vm1799, %v6418
      %6451 = vst.msk [vmem:[#allocation2 + $0x50] sm:$0xff] %vm1799, %v6419
      %6452 = vst.msk [vmem:[#allocation2 + $0x58] sm:$0xff] %vm1799, %v6420
      %6453 = vst.msk [vmem:[#allocation2 + $0x60] sm:$0xff] %vm1799, %v6421
      %6454 = vst.msk [vmem:[#allocation2 + $0x68] sm:$0xff] %vm1799, %v6422
      %6455 = vst.msk [vmem:[#allocation2 + $0x70] sm:$0xff] %vm1799, %v6423
      %6456 = vst.msk [vmem:[#allocation2 + $0x78] sm:$0xff] %vm1799, %v6424
      %6457 = vst.msk [vmem:[#allocation2 + $0x80] sm:$0xff] %vm1799, %v6425
      %6458 = vst.msk [vmem:[#allocation2 + $0x88] sm:$0xff] %vm1799, %v6426
      %6459 = vst.msk [vmem:[#allocation2 + $0x90] sm:$0xff] %vm1799, %v6427
      %6460 = vst.msk [vmem:[#allocation2 + $0x98] sm:$0xff] %vm1799, %v6428
      %6461 = vst.msk [vmem:[#allocation2 + $0xa0] sm:$0xff] %vm1799, %v6429
      %6462 = vst.msk [vmem:[#allocation2 + $0xa8] sm:$0xff] %vm1799, %v6430
      %6463 = vst.msk [vmem:[#allocation2 + $0xb0] sm:$0xff] %vm1799, %v6431
      %6464 = vst.msk [vmem:[#allocation2 + $0xb8] sm:$0xff] %vm1799, %v6432
      %6465 = vst.msk [vmem:[#allocation2 + $0xc0] sm:$0xff] %vm1799, %v6433
      %6466 = vst.msk [vmem:[#allocation2 + $0xc8] sm:$0xff] %vm1799, %v6434
      %6467 = vst.msk [vmem:[#allocation2 + $0xd0] sm:$0xff] %vm1799, %v6435
      %6468 = vst.msk [vmem:[#allocation2 + $0xd8] sm:$0xff] %vm1799, %v6436
      %6469 = vst.msk [vmem:[#allocation2 + $0xe0] sm:$0xff] %vm1799, %v6437
      %6470 = vst.msk [vmem:[#allocation2 + $0xe8] sm:$0xff] %vm1799, %v6438
      %6471 = vst.msk [vmem:[#allocation2 + $0xf0] sm:$0xff] %vm1799, %v6439
      %6472 = vst.msk [vmem:[#allocation2 + $0xf8] sm:$0xff] %vm1799, %v6440
      %s6473 = scalar_lea.vmem %s3, 12
      %v6474 = vld [vmem:[%s6473] sm:$0x3]
      %v6476 = vsel %vm4154, %v4150, 0
      %v6479 = vsel %vm4154, %v4151, 0
      %v6482 = vsel %vm4251, %v6474, 0
      %6484 = vmatprep.subr.mxu0 0.0
      %6485 = vmatpush1.msra.mxu0 %v6482
      %6486 = vmatprep.subr.mxu0 0.0
      %6487 = vmatpush1.msra.mxu0 0.0
      %6488 = vmatprep.subr.mxu0 0.0
      %6489 = vmatpush1.msra.mxu0 0.0
      %6490 = vmatprep.subr.mxu0 0.0
      %6491 = vmatpush1.msra.mxu0 0.0
      %6492 = vmatprep.subr.mxu0 0.0
      %6493 = vmatpush1.msra.mxu0 0.0
      %6494 = vmatprep.subr.mxu0 0.0
      %6495 = vmatpush1.msra.mxu0 0.0
      %6496 = vmatprep.subr.mxu0 0.0
      %6497 = vmatpush1.msra.mxu0 0.0
      %6498 = vmatprep.subr.mxu0 0.0
      %6499 = vmatpush1.msra.mxu0 0.0
      %6500 = vmatprep.subr.mxu0 0.0
      %6501 = vmatpush1.msra.mxu0 0.0
      %6502 = vmatprep.subr.mxu0 0.0
      %6503 = vmatpush1.msra.mxu0 0.0
      %6504 = vmatprep.subr.mxu0 0.0
      %6505 = vmatpush1.msra.mxu0 0.0
      %6506 = vmatprep.subr.mxu0 0.0
      %6507 = vmatpush1.msra.mxu0 0.0
      %6508 = vmatprep.subr.mxu0 0.0
      %6509 = vmatpush1.msra.mxu0 0.0
      %6510 = vmatprep.subr.mxu0 0.0
      %6511 = vmatpush1.msra.mxu0 0.0
      %6512 = vmatprep.subr.mxu0 0.0
      %6513 = vmatpush1.msra.mxu0 0.0
      %6514 = vmatprep.subr.mxu0 0.0
      %6515 = vmatpush1.msra.mxu0 0.0
      %6516 = vmatprep.subr.mxu0 0.0
      %6517 = vmatpush1.msra.mxu0 0.0
      %6518 = vmatprep.subr.mxu0 0.0
      %6519 = vmatpush1.msra.mxu0 0.0
      %6520 = vmatprep.subr.mxu0 0.0
      %6521 = vmatpush1.msra.mxu0 0.0
      %6522 = vmatprep.subr.mxu0 0.0
      %6523 = vmatpush1.msra.mxu0 0.0
      %6524 = vmatprep.subr.mxu0 0.0
      %6525 = vmatpush1.msra.mxu0 0.0
      %6526 = vmatprep.subr.mxu0 0.0
      %6527 = vmatpush1.msra.mxu0 0.0
      %6528 = vmatprep.subr.mxu0 0.0
      %6529 = vmatpush1.msra.mxu0 0.0
      %6530 = vmatprep.subr.mxu0 0.0
      %6531 = vmatpush1.msra.mxu0 0.0
      %6532 = vmatprep.subr.mxu0 0.0
      %6533 = vmatpush1.msra.mxu0 0.0
      %6534 = vmatprep.subr.mxu0 0.0
      %6535 = vmatpush1.msra.mxu0 0.0
      %6536 = vmatprep.subr.mxu0 0.0
      %6537 = vmatpush1.msra.mxu0 0.0
      %6538 = vmatprep.subr.mxu0 0.0
      %6539 = vmatpush1.msra.mxu0 0.0
      %6540 = vmatprep.subr.mxu0 0.0
      %6541 = vmatpush1.msra.mxu0 0.0
      %6542 = vmatprep.subr.mxu0 0.0
      %6543 = vmatpush1.msra.mxu0 0.0
      %6544 = vmatprep.subr.mxu0 0.0
      %6545 = vmatpush1.msra.mxu0 0.0
      %6546 = vmatprep.subr.mxu0 0.0
      %6547 = vmatpush1.msra.mxu0 0.0
      %6548 = vmatprep.mubr.f32.mxu0 0.0
      %6549 = vmatmul.mubr.f32.gmra.mrb[0].mxu0 %v4168
      %v6550 = vpop.f32.mrb[0].mxu0
      %v6551 = vadd.f32 0.0, %v6550
      %v6552 = vpop.f32.mrb[0].mxu0
      %6553 = vmatprep.mubr.f32.mxu0 0.0
      %6554 = vmatmul.mubr.f32.gmra.mrb[0].mxu0 %v4171
      %v6555 = vpop.f32.mrb[0].mxu0
      %v6556 = vadd.f32 0.0, %v6555
      %v6557 = vpop.f32.mrb[0].mxu0
      %6558 = vmatprep.mubr.f32.mxu0 0.0
      %6559 = vmatmul.mubr.f32.gmra.mrb[0].mxu0 %v4174
      %v6560 = vpop.f32.mrb[0].mxu0
      %v6561 = vadd.f32 0.0, %v6560
      %v6562 = vpop.f32.mrb[0].mxu0
      %6563 = vmatprep.mubr.f32.mxu0 0.0
      %6564 = vmatmul.mubr.f32.gmra.mrb[0].mxu0 %v4177
      %v6565 = vpop.f32.mrb[0].mxu0
      %v6566 = vadd.f32 0.0, %v6565
      %v6567 = vpop.f32.mrb[0].mxu0
      %6568 = vmatprep.mubr.f32.mxu0 0.0
      %6569 = vmatmul.mubr.f32.gmra.mrb[0].mxu0 %v4180
      %v6570 = vpop.f32.mrb[0].mxu0
      %v6571 = vadd.f32 0.0, %v6570
      %v6572 = vpop.f32.mrb[0].mxu0
      %6573 = vmatprep.mubr.f32.mxu0 0.0
      %6574 = vmatmul.mubr.f32.gmra.mrb[0].mxu0 %v4183
      %v6575 = vpop.f32.mrb[0].mxu0
      %v6576 = vadd.f32 0.0, %v6575
      %v6577 = vpop.f32.mrb[0].mxu0
      %6578 = vmatprep.mubr.f32.mxu0 0.0
      %6579 = vmatmul.mubr.f32.gmra.mrb[0].mxu0 %v4186
      %v6580 = vpop.f32.mrb[0].mxu0
      %v6581 = vadd.f32 0.0, %v6580
      %v6582 = vpop.f32.mrb[0].mxu0
      %6583 = vmatprep.mubr.f32.mxu0 0.0
      %6584 = vmatmul.mubr.f32.gmra.mrb[0].mxu0 %v4189
      %v6585 = vpop.f32.mrb[0].mxu0
      %v6586 = vadd.f32 0.0, %v6585
      %v6587 = vpop.f32.mrb[0].mxu0
      %6588 = vmatprep.mubr.f32.mxu0 0.0
      %6589 = vmatmul.mubr.f32.gmra.mrb[0].mxu0 %v4192
      %v6590 = vpop.f32.mrb[0].mxu0
      %v6591 = vadd.f32 0.0, %v6590
      %v6592 = vpop.f32.mrb[0].mxu0
      %6593 = vmatprep.mubr.f32.mxu0 0.0
      %6594 = vmatmul.mubr.f32.gmra.mrb[0].mxu0 %v4195
      %v6595 = vpop.f32.mrb[0].mxu0
      %v6596 = vadd.f32 0.0, %v6595
      %v6597 = vpop.f32.mrb[0].mxu0
      %6598 = vmatprep.mubr.f32.mxu0 0.0
      %6599 = vmatmul.mubr.f32.gmra.mrb[0].mxu0 %v4198
      %v6600 = vpop.f32.mrb[0].mxu0
      %v6601 = vadd.f32 0.0, %v6600
      %v6602 = vpop.f32.mrb[0].mxu0
      %6603 = vmatprep.mubr.f32.mxu0 0.0
      %6604 = vmatmul.mubr.f32.gmra.mrb[0].mxu0 %v4201
      %v6605 = vpop.f32.mrb[0].mxu0
      %v6606 = vadd.f32 0.0, %v6605
      %v6607 = vpop.f32.mrb[0].mxu0
      %6608 = vmatprep.mubr.f32.mxu0 0.0
      %6609 = vmatmul.mubr.f32.gmra.mrb[0].mxu0 %v4204
      %v6610 = vpop.f32.mrb[0].mxu0
      %v6611 = vadd.f32 0.0, %v6610
      %v6612 = vpop.f32.mrb[0].mxu0
      %6613 = vmatprep.mubr.f32.mxu0 0.0
      %6614 = vmatmul.mubr.f32.gmra.mrb[0].mxu0 %v4207
      %v6615 = vpop.f32.mrb[0].mxu0
      %v6616 = vadd.f32 0.0, %v6615
      %v6617 = vpop.f32.mrb[0].mxu0
      %6618 = vmatprep.mubr.f32.mxu0 0.0
      %6619 = vmatmul.mubr.f32.gmra.mrb[0].mxu0 %v4210
      %v6620 = vpop.f32.mrb[0].mxu0
      %v6621 = vadd.f32 0.0, %v6620
      %v6622 = vpop.f32.mrb[0].mxu0
      %6623 = vmatprep.mubr.f32.mxu0 0.0
      %6624 = vmatmul.mubr.f32.gmra.mrb[0].mxu0 %v4213
      %v6625 = vpop.f32.mrb[0].mxu0
      %v6626 = vadd.f32 0.0, %v6625
      %v6627 = vpop.f32.mrb[0].mxu0
      %6628 = vmatprep.mubr.f32.mxu0 0.0
      %6629 = vmatmul.mubr.f32.gmra.mrb[0].mxu0 %v4216
      %v6630 = vpop.f32.mrb[0].mxu0
      %v6631 = vadd.f32 0.0, %v6630
      %v6632 = vpop.f32.mrb[0].mxu0
      %6633 = vmatprep.mubr.f32.mxu0 0.0
      %6634 = vmatmul.mubr.f32.gmra.mrb[0].mxu0 %v4219
      %v6635 = vpop.f32.mrb[0].mxu0
      %v6636 = vadd.f32 0.0, %v6635
      %v6637 = vpop.f32.mrb[0].mxu0
      %6638 = vmatprep.mubr.f32.mxu0 0.0
      %6639 = vmatmul.mubr.f32.gmra.mrb[0].mxu0 %v4222
      %v6640 = vpop.f32.mrb[0].mxu0
      %v6641 = vadd.f32 0.0, %v6640
      %v6642 = vpop.f32.mrb[0].mxu0
      %6643 = vmatprep.mubr.f32.mxu0 0.0
      %6644 = vmatmul.mubr.f32.gmra.mrb[0].mxu0 %v4225
      %v6645 = vpop.f32.mrb[0].mxu0
      %v6646 = vadd.f32 0.0, %v6645
      %v6647 = vpop.f32.mrb[0].mxu0
      %6648 = vmatprep.mubr.f32.mxu0 0.0
      %6649 = vmatmul.mubr.f32.gmra.mrb[0].mxu0 %v4228
      %v6650 = vpop.f32.mrb[0].mxu0
      %v6651 = vadd.f32 0.0, %v6650
      %v6652 = vpop.f32.mrb[0].mxu0
      %6653 = vmatprep.mubr.f32.mxu0 0.0
      %6654 = vmatmul.mubr.f32.gmra.mrb[0].mxu0 %v4231
      %v6655 = vpop.f32.mrb[0].mxu0
      %v6656 = vadd.f32 0.0, %v6655
      %v6657 = vpop.f32.mrb[0].mxu0
      %6658 = vmatprep.mubr.f32.mxu0 0.0
      %6659 = vmatmul.mubr.f32.gmra.mrb[0].mxu0 %v4234
      %v6660 = vpop.f32.mrb[0].mxu0
      %v6661 = vadd.f32 0.0, %v6660
      %v6662 = vpop.f32.mrb[0].mxu0
      %6663 = vmatprep.mubr.f32.mxu0 0.0
      %6664 = vmatmul.mubr.f32.gmra.mrb[0].mxu0 %v4237
      %v6665 = vpop.f32.mrb[0].mxu0
      %v6666 = vadd.f32 0.0, %v6665
      %v6667 = vpop.f32.mrb[0].mxu0
      %6668 = vmatprep.mubr.f32.mxu0 0.0
      %6669 = vmatmul.mubr.f32.gmra.mrb[0].mxu0 %v4240
      %v6670 = vpop.f32.mrb[0].mxu0
      %v6671 = vadd.f32 0.0, %v6670
      %v6672 = vpop.f32.mrb[0].mxu0
      %6673 = vmatprep.mubr.f32.mxu0 0.0
      %6674 = vmatmul.mubr.f32.gmra.mrb[0].mxu0 %v4243
      %v6675 = vpop.f32.mrb[0].mxu0
      %v6676 = vadd.f32 0.0, %v6675
      %v6677 = vpop.f32.mrb[0].mxu0
      %6678 = vmatprep.mubr.f32.mxu0 0.0
      %6679 = vmatmul.mubr.f32.gmra.mrb[0].mxu0 %v4246
      %v6680 = vpop.f32.mrb[0].mxu0
      %v6681 = vadd.f32 0.0, %v6680
      %v6682 = vpop.f32.mrb[0].mxu0
      %6683 = vmatprep.mubr.f32.mxu0 0.0
      %6684 = vmatmul.mubr.f32.gmra.mrb[0].mxu0 %v4249
      %v6685 = vpop.f32.mrb[0].mxu0
      %v6686 = vadd.f32 0.0, %v6685
      %v6687 = vpop.f32.mrb[0].mxu0
      %6688 = vmatprep.mubr.f32.mxu0 0.0
      %6689 = vmatmul.mubr.f32.gmra.mrb[0].mxu0 %v5473
      %v6690 = vpop.f32.mrb[0].mxu0
      %v6691 = vadd.f32 0.0, %v6690
      %v6692 = vpop.f32.mrb[0].mxu0
      %6693 = vmatprep.mubr.f32.mxu0 0.0
      %6694 = vmatmul.mubr.f32.gmra.mrb[0].mxu0 %v5476
      %v6695 = vpop.f32.mrb[0].mxu0
      %v6696 = vadd.f32 0.0, %v6695
      %v6697 = vpop.f32.mrb[0].mxu0
      %6698 = vmatprep.mubr.f32.mxu0 0.0
      %6699 = vmatmul.mubr.f32.gmra.mrb[0].mxu0 %v6476
      %v6700 = vpop.f32.mrb[0].mxu0
      %v6701 = vadd.f32 0.0, %v6700
      %v6702 = vpop.f32.mrb[0].mxu0
      %6703 = vmatprep.mubr.f32.mxu0 0.0
      %6704 = vmatmul.mubr.f32.gmra.mrb[0].mxu0 %v6479
      %v6705 = vpop.f32.mrb[0].mxu0
      %v6706 = vadd.f32 0.0, %v6705
      %v6707 = vpop.f32.mrb[0].mxu0
      %6708 = vdwg.mxu0
      %v6709 = vld [vmem:[#allocation2] sm:$0xff]
      %v6710 = vld [vmem:[#allocation2 + $0x8] sm:$0xff]
      %v6711 = vld [vmem:[#allocation2 + $0x10] sm:$0xff]
      %v6712 = vld [vmem:[#allocation2 + $0x18] sm:$0xff]
      %v6713 = vld [vmem:[#allocation2 + $0x20] sm:$0xff]
      %v6714 = vld [vmem:[#allocation2 + $0x28] sm:$0xff]
      %v6715 = vld [vmem:[#allocation2 + $0x30] sm:$0xff]
      %v6716 = vld [vmem:[#allocation2 + $0x38] sm:$0xff]
      %v6717 = vld [vmem:[#allocation2 + $0x40] sm:$0xff]
      %v6718 = vld [vmem:[#allocation2 + $0x48] sm:$0xff]
      %v6719 = vld [vmem:[#allocation2 + $0x50] sm:$0xff]
      %v6720 = vld [vmem:[#allocation2 + $0x58] sm:$0xff]
      %v6721 = vld [vmem:[#allocation2 + $0x60] sm:$0xff]
      %v6722 = vld [vmem:[#allocation2 + $0x68] sm:$0xff]
      %v6723 = vld [vmem:[#allocation2 + $0x70] sm:$0xff]
      %v6724 = vld [vmem:[#allocation2 + $0x78] sm:$0xff]
      %v6725 = vld [vmem:[#allocation2 + $0x80] sm:$0xff]
      %v6726 = vld [vmem:[#allocation2 + $0x88] sm:$0xff]
      %v6727 = vld [vmem:[#allocation2 + $0x90] sm:$0xff]
      %v6728 = vld [vmem:[#allocation2 + $0x98] sm:$0xff]
      %v6729 = vld [vmem:[#allocation2 + $0xa0] sm:$0xff]
      %v6730 = vld [vmem:[#allocation2 + $0xa8] sm:$0xff]
      %v6731 = vld [vmem:[#allocation2 + $0xb0] sm:$0xff]
      %v6732 = vld [vmem:[#allocation2 + $0xb8] sm:$0xff]
      %v6733 = vld [vmem:[#allocation2 + $0xc0] sm:$0xff]
      %v6734 = vld [vmem:[#allocation2 + $0xc8] sm:$0xff]
      %v6735 = vld [vmem:[#allocation2 + $0xd0] sm:$0xff]
      %v6736 = vld [vmem:[#allocation2 + $0xd8] sm:$0xff]
      %v6737 = vld [vmem:[#allocation2 + $0xe0] sm:$0xff]
      %v6738 = vld [vmem:[#allocation2 + $0xe8] sm:$0xff]
      %v6739 = vld [vmem:[#allocation2 + $0xf0] sm:$0xff]
      %v6740 = vld [vmem:[#allocation2 + $0xf8] sm:$0xff]
      %v6741 = vadd.f32 %v6709, %v6551
      %v6742 = vadd.f32 %v6710, %v6556
      %v6743 = vadd.f32 %v6711, %v6561
      %v6744 = vadd.f32 %v6712, %v6566
      %v6745 = vadd.f32 %v6713, %v6571
      %v6746 = vadd.f32 %v6714, %v6576
      %v6747 = vadd.f32 %v6715, %v6581
      %v6748 = vadd.f32 %v6716, %v6586
      %v6749 = vadd.f32 %v6717, %v6591
      %v6750 = vadd.f32 %v6718, %v6596
      %v6751 = vadd.f32 %v6719, %v6601
      %v6752 = vadd.f32 %v6720, %v6606
      %v6753 = vadd.f32 %v6721, %v6611
      %v6754 = vadd.f32 %v6722, %v6616
      %v6755 = vadd.f32 %v6723, %v6621
      %v6756 = vadd.f32 %v6724, %v6626
      %v6757 = vadd.f32 %v6725, %v6631
      %v6758 = vadd.f32 %v6726, %v6636
      %v6759 = vadd.f32 %v6727, %v6641
      %v6760 = vadd.f32 %v6728, %v6646
      %v6761 = vadd.f32 %v6729, %v6651
      %v6762 = vadd.f32 %v6730, %v6656
      %v6763 = vadd.f32 %v6731, %v6661
      %v6764 = vadd.f32 %v6732, %v6666
      %v6765 = vadd.f32 %v6733, %v6671
      %v6766 = vadd.f32 %v6734, %v6676
      %v6767 = vadd.f32 %v6735, %v6681
      %v6768 = vadd.f32 %v6736, %v6686
      %v6769 = vadd.f32 %v6737, %v6691
      %v6770 = vadd.f32 %v6738, %v6696
      %v6771 = vadd.f32 %v6739, %v6701
      %v6772 = vadd.f32 %v6740, %v6706
      %6773 = vst.msk [vmem:[#allocation2] sm:$0xff] %vm1799, %v6741
      %6774 = vst.msk [vmem:[#allocation2 + $0x8] sm:$0xff] %vm1799, %v6742
      %6775 = vst.msk [vmem:[#allocation2 + $0x10] sm:$0xff] %vm1799, %v6743
      %6776 = vst.msk [vmem:[#allocation2 + $0x18] sm:$0xff] %vm1799, %v6744
      %6777 = vst.msk [vmem:[#allocation2 + $0x20] sm:$0xff] %vm1799, %v6745
      %6778 = vst.msk [vmem:[#allocation2 + $0x28] sm:$0xff] %vm1799, %v6746
      %6779 = vst.msk [vmem:[#allocation2 + $0x30] sm:$0xff] %vm1799, %v6747
      %6780 = vst.msk [vmem:[#allocation2 + $0x38] sm:$0xff] %vm1799, %v6748
      %6781 = vst.msk [vmem:[#allocation2 + $0x40] sm:$0xff] %vm1799, %v6749
      %6782 = vst.msk [vmem:[#allocation2 + $0x48] sm:$0xff] %vm1799, %v6750
      %6783 = vst.msk [vmem:[#allocation2 + $0x50] sm:$0xff] %vm1799, %v6751
      %6784 = vst.msk [vmem:[#allocation2 + $0x58] sm:$0xff] %vm1799, %v6752
      %6785 = vst.msk [vmem:[#allocation2 + $0x60] sm:$0xff] %vm1799, %v6753
      %6786 = vst.msk [vmem:[#allocation2 + $0x68] sm:$0xff] %vm1799, %v6754
      %6787 = vst.msk [vmem:[#allocation2 + $0x70] sm:$0xff] %vm1799, %v6755
      %6788 = vst.msk [vmem:[#allocation2 + $0x78] sm:$0xff] %vm1799, %v6756
      %6789 = vst.msk [vmem:[#allocation2 + $0x80] sm:$0xff] %vm1799, %v6757
      %6790 = vst.msk [vmem:[#allocation2 + $0x88] sm:$0xff] %vm1799, %v6758
      %6791 = vst.msk [vmem:[#allocation2 + $0x90] sm:$0xff] %vm1799, %v6759
      %6792 = vst.msk [vmem:[#allocation2 + $0x98] sm:$0xff] %vm1799, %v6760
      %6793 = vst.msk [vmem:[#allocation2 + $0xa0] sm:$0xff] %vm1799, %v6761
      %6794 = vst.msk [vmem:[#allocation2 + $0xa8] sm:$0xff] %vm1799, %v6762
      %6795 = vst.msk [vmem:[#allocation2 + $0xb0] sm:$0xff] %vm1799, %v6763
      %6796 = vst.msk [vmem:[#allocation2 + $0xb8] sm:$0xff] %vm1799, %v6764
      %6797 = vst.msk [vmem:[#allocation2 + $0xc0] sm:$0xff] %vm1799, %v6765
      %6798 = vst.msk [vmem:[#allocation2 + $0xc8] sm:$0xff] %vm1799, %v6766
      %6799 = vst.msk [vmem:[#allocation2 + $0xd0] sm:$0xff] %vm1799, %v6767
      %6800 = vst.msk [vmem:[#allocation2 + $0xd8] sm:$0xff] %vm1799, %v6768
      %6801 = vst.msk [vmem:[#allocation2 + $0xe0] sm:$0xff] %vm1799, %v6769
      %6802 = vst.msk [vmem:[#allocation2 + $0xe8] sm:$0xff] %vm1799, %v6770
      %6803 = vst.msk [vmem:[#allocation2 + $0xf0] sm:$0xff] %vm1799, %v6771
      %6804 = vst.msk [vmem:[#allocation2 + $0xf8] sm:$0xff] %vm1799, %v6772
      %v6806 = vrot.slane %v4150, 1
      %v6807 = vrot.slane %v4151, 1
      %v6808 = vsel %vm4528, %v6806, %v6807
      %v6809 = vrot.slane %v4152, 1
      %v6810 = vsel %vm4528, %v6807, %v6809
      %s6811 = scalar_lea.vmem %s3, 14
      %v6812 = vld [vmem:[%s6811] sm:$0x3]
      %v6813 = vsel %vm4154, %v6808, 0
      %v6815 = vsel %vm4154, %v6810, 0
      %v6818 = vsel %vm4251, %v6812, 0
      %6820 = vmatprep.subr.mxu0 0.0
      %6821 = vmatpush1.msra.mxu0 %v6818
      %6822 = vmatprep.subr.mxu0 0.0
      %6823 = vmatpush1.msra.mxu0 0.0
      %6824 = vmatprep.subr.mxu0 0.0
      %6825 = vmatpush1.msra.mxu0 0.0
      %6826 = vmatprep.subr.mxu0 0.0
      %6827 = vmatpush1.msra.mxu0 0.0
      %6828 = vmatprep.subr.mxu0 0.0
      %6829 = vmatpush1.msra.mxu0 0.0
      %6830 = vmatprep.subr.mxu0 0.0
      %6831 = vmatpush1.msra.mxu0 0.0
      %6832 = vmatprep.subr.mxu0 0.0
      %6833 = vmatpush1.msra.mxu0 0.0
      %6834 = vmatprep.subr.mxu0 0.0
      %6835 = vmatpush1.msra.mxu0 0.0
      %6836 = vmatprep.subr.mxu0 0.0
      %6837 = vmatpush1.msra.mxu0 0.0
      %6838 = vmatprep.subr.mxu0 0.0
      %6839 = vmatpush1.msra.mxu0 0.0
      %6840 = vmatprep.subr.mxu0 0.0
      %6841 = vmatpush1.msra.mxu0 0.0
      %6842 = vmatprep.subr.mxu0 0.0
      %6843 = vmatpush1.msra.mxu0 0.0
      %6844 = vmatprep.subr.mxu0 0.0
      %6845 = vmatpush1.msra.mxu0 0.0
      %6846 = vmatprep.subr.mxu0 0.0
      %6847 = vmatpush1.msra.mxu0 0.0
      %6848 = vmatprep.subr.mxu0 0.0
      %6849 = vmatpush1.msra.mxu0 0.0
      %6850 = vmatprep.subr.mxu0 0.0
      %6851 = vmatpush1.msra.mxu0 0.0
      %6852 = vmatprep.subr.mxu0 0.0
      %6853 = vmatpush1.msra.mxu0 0.0
      %6854 = vmatprep.subr.mxu0 0.0
      %6855 = vmatpush1.msra.mxu0 0.0
      %6856 = vmatprep.subr.mxu0 0.0
      %6857 = vmatpush1.msra.mxu0 0.0
      %6858 = vmatprep.subr.mxu0 0.0
      %6859 = vmatpush1.msra.mxu0 0.0
      %6860 = vmatprep.subr.mxu0 0.0
      %6861 = vmatpush1.msra.mxu0 0.0
      %6862 = vmatprep.subr.mxu0 0.0
      %6863 = vmatpush1.msra.mxu0 0.0
      %6864 = vmatprep.subr.mxu0 0.0
      %6865 = vmatpush1.msra.mxu0 0.0
      %6866 = vmatprep.subr.mxu0 0.0
      %6867 = vmatpush1.msra.mxu0 0.0
      %6868 = vmatprep.subr.mxu0 0.0
      %6869 = vmatpush1.msra.mxu0 0.0
      %6870 = vmatprep.subr.mxu0 0.0
      %6871 = vmatpush1.msra.mxu0 0.0
      %6872 = vmatprep.subr.mxu0 0.0
      %6873 = vmatpush1.msra.mxu0 0.0
      %6874 = vmatprep.subr.mxu0 0.0
      %6875 = vmatpush1.msra.mxu0 0.0
      %6876 = vmatprep.subr.mxu0 0.0
      %6877 = vmatpush1.msra.mxu0 0.0
      %6878 = vmatprep.subr.mxu0 0.0
      %6879 = vmatpush1.msra.mxu0 0.0
      %6880 = vmatprep.subr.mxu0 0.0
      %6881 = vmatpush1.msra.mxu0 0.0
      %6882 = vmatprep.subr.mxu0 0.0
      %6883 = vmatpush1.msra.mxu0 0.0
      %6884 = vmatprep.mubr.f32.mxu0 0.0
      %6885 = vmatmul.mubr.f32.gmra.mrb[0].mxu0 %v4619
      %v6886 = vpop.f32.mrb[0].mxu0
      %v6887 = vadd.f32 0.0, %v6886
      %v6888 = vpop.f32.mrb[0].mxu0
      %6889 = vmatprep.mubr.f32.mxu0 0.0
      %6890 = vmatmul.mubr.f32.gmra.mrb[0].mxu0 %v4621
      %v6891 = vpop.f32.mrb[0].mxu0
      %v6892 = vadd.f32 0.0, %v6891
      %v6893 = vpop.f32.mrb[0].mxu0
      %6894 = vmatprep.mubr.f32.mxu0 0.0
      %6895 = vmatmul.mubr.f32.gmra.mrb[0].mxu0 %v4623
      %v6896 = vpop.f32.mrb[0].mxu0
      %v6897 = vadd.f32 0.0, %v6896
      %v6898 = vpop.f32.mrb[0].mxu0
      %6899 = vmatprep.mubr.f32.mxu0 0.0
      %6900 = vmatmul.mubr.f32.gmra.mrb[0].mxu0 %v4625
      %v6901 = vpop.f32.mrb[0].mxu0
      %v6902 = vadd.f32 0.0, %v6901
      %v6903 = vpop.f32.mrb[0].mxu0
      %6904 = vmatprep.mubr.f32.mxu0 0.0
      %6905 = vmatmul.mubr.f32.gmra.mrb[0].mxu0 %v4627
      %v6906 = vpop.f32.mrb[0].mxu0
      %v6907 = vadd.f32 0.0, %v6906
      %v6908 = vpop.f32.mrb[0].mxu0
      %6909 = vmatprep.mubr.f32.mxu0 0.0
      %6910 = vmatmul.mubr.f32.gmra.mrb[0].mxu0 %v4629
      %v6911 = vpop.f32.mrb[0].mxu0
      %v6912 = vadd.f32 0.0, %v6911
      %v6913 = vpop.f32.mrb[0].mxu0
      %6914 = vmatprep.mubr.f32.mxu0 0.0
      %6915 = vmatmul.mubr.f32.gmra.mrb[0].mxu0 %v4631
      %v6916 = vpop.f32.mrb[0].mxu0
      %v6917 = vadd.f32 0.0, %v6916
      %v6918 = vpop.f32.mrb[0].mxu0
      %6919 = vmatprep.mubr.f32.mxu0 0.0
      %6920 = vmatmul.mubr.f32.gmra.mrb[0].mxu0 %v4633
      %v6921 = vpop.f32.mrb[0].mxu0
      %v6922 = vadd.f32 0.0, %v6921
      %v6923 = vpop.f32.mrb[0].mxu0
      %6924 = vmatprep.mubr.f32.mxu0 0.0
      %6925 = vmatmul.mubr.f32.gmra.mrb[0].mxu0 %v4635
      %v6926 = vpop.f32.mrb[0].mxu0
      %v6927 = vadd.f32 0.0, %v6926
      %v6928 = vpop.f32.mrb[0].mxu0
      %6929 = vmatprep.mubr.f32.mxu0 0.0
      %6930 = vmatmul.mubr.f32.gmra.mrb[0].mxu0 %v4637
      %v6931 = vpop.f32.mrb[0].mxu0
      %v6932 = vadd.f32 0.0, %v6931
      %v6933 = vpop.f32.mrb[0].mxu0
      %6934 = vmatprep.mubr.f32.mxu0 0.0
      %6935 = vmatmul.mubr.f32.gmra.mrb[0].mxu0 %v4639
      %v6936 = vpop.f32.mrb[0].mxu0
      %v6937 = vadd.f32 0.0, %v6936
      %v6938 = vpop.f32.mrb[0].mxu0
      %6939 = vmatprep.mubr.f32.mxu0 0.0
      %6940 = vmatmul.mubr.f32.gmra.mrb[0].mxu0 %v4641
      %v6941 = vpop.f32.mrb[0].mxu0
      %v6942 = vadd.f32 0.0, %v6941
      %v6943 = vpop.f32.mrb[0].mxu0
      %6944 = vmatprep.mubr.f32.mxu0 0.0
      %6945 = vmatmul.mubr.f32.gmra.mrb[0].mxu0 %v4643
      %v6946 = vpop.f32.mrb[0].mxu0
      %v6947 = vadd.f32 0.0, %v6946
      %v6948 = vpop.f32.mrb[0].mxu0
      %6949 = vmatprep.mubr.f32.mxu0 0.0
      %6950 = vmatmul.mubr.f32.gmra.mrb[0].mxu0 %v4645
      %v6951 = vpop.f32.mrb[0].mxu0
      %v6952 = vadd.f32 0.0, %v6951
      %v6953 = vpop.f32.mrb[0].mxu0
      %6954 = vmatprep.mubr.f32.mxu0 0.0
      %6955 = vmatmul.mubr.f32.gmra.mrb[0].mxu0 %v4647
      %v6956 = vpop.f32.mrb[0].mxu0
      %v6957 = vadd.f32 0.0, %v6956
      %v6958 = vpop.f32.mrb[0].mxu0
      %6959 = vmatprep.mubr.f32.mxu0 0.0
      %6960 = vmatmul.mubr.f32.gmra.mrb[0].mxu0 %v4649
      %v6961 = vpop.f32.mrb[0].mxu0
      %v6962 = vadd.f32 0.0, %v6961
      %v6963 = vpop.f32.mrb[0].mxu0
      %6964 = vmatprep.mubr.f32.mxu0 0.0
      %6965 = vmatmul.mubr.f32.gmra.mrb[0].mxu0 %v4651
      %v6966 = vpop.f32.mrb[0].mxu0
      %v6967 = vadd.f32 0.0, %v6966
      %v6968 = vpop.f32.mrb[0].mxu0
      %6969 = vmatprep.mubr.f32.mxu0 0.0
      %6970 = vmatmul.mubr.f32.gmra.mrb[0].mxu0 %v4653
      %v6971 = vpop.f32.mrb[0].mxu0
      %v6972 = vadd.f32 0.0, %v6971
      %v6973 = vpop.f32.mrb[0].mxu0
      %6974 = vmatprep.mubr.f32.mxu0 0.0
      %6975 = vmatmul.mubr.f32.gmra.mrb[0].mxu0 %v4655
      %v6976 = vpop.f32.mrb[0].mxu0
      %v6977 = vadd.f32 0.0, %v6976
      %v6978 = vpop.f32.mrb[0].mxu0
      %6979 = vmatprep.mubr.f32.mxu0 0.0
      %6980 = vmatmul.mubr.f32.gmra.mrb[0].mxu0 %v4657
      %v6981 = vpop.f32.mrb[0].mxu0
      %v6982 = vadd.f32 0.0, %v6981
      %v6983 = vpop.f32.mrb[0].mxu0
      %6984 = vmatprep.mubr.f32.mxu0 0.0
      %6985 = vmatmul.mubr.f32.gmra.mrb[0].mxu0 %v4659
      %v6986 = vpop.f32.mrb[0].mxu0
      %v6987 = vadd.f32 0.0, %v6986
      %v6988 = vpop.f32.mrb[0].mxu0
      %6989 = vmatprep.mubr.f32.mxu0 0.0
      %6990 = vmatmul.mubr.f32.gmra.mrb[0].mxu0 %v4661
      %v6991 = vpop.f32.mrb[0].mxu0
      %v6992 = vadd.f32 0.0, %v6991
      %v6993 = vpop.f32.mrb[0].mxu0
      %6994 = vmatprep.mubr.f32.mxu0 0.0
      %6995 = vmatmul.mubr.f32.gmra.mrb[0].mxu0 %v4663
      %v6996 = vpop.f32.mrb[0].mxu0
      %v6997 = vadd.f32 0.0, %v6996
      %v6998 = vpop.f32.mrb[0].mxu0
      %6999 = vmatprep.mubr.f32.mxu0 0.0
      %7000 = vmatmul.mubr.f32.gmra.mrb[0].mxu0 %v4665
      %v7001 = vpop.f32.mrb[0].mxu0
      %v7002 = vadd.f32 0.0, %v7001
      %v7003 = vpop.f32.mrb[0].mxu0
      %7004 = vmatprep.mubr.f32.mxu0 0.0
      %7005 = vmatmul.mubr.f32.gmra.mrb[0].mxu0 %v4667
      %v7006 = vpop.f32.mrb[0].mxu0
      %v7007 = vadd.f32 0.0, %v7006
      %v7008 = vpop.f32.mrb[0].mxu0
      %7009 = vmatprep.mubr.f32.mxu0 0.0
      %7010 = vmatmul.mubr.f32.gmra.mrb[0].mxu0 %v4669
      %v7011 = vpop.f32.mrb[0].mxu0
      %v7012 = vadd.f32 0.0, %v7011
      %v7013 = vpop.f32.mrb[0].mxu0
      %7014 = vmatprep.mubr.f32.mxu0 0.0
      %7015 = vmatmul.mubr.f32.gmra.mrb[0].mxu0 %v4671
      %v7016 = vpop.f32.mrb[0].mxu0
      %v7017 = vadd.f32 0.0, %v7016
      %v7018 = vpop.f32.mrb[0].mxu0
      %7019 = vmatprep.mubr.f32.mxu0 0.0
      %7020 = vmatmul.mubr.f32.gmra.mrb[0].mxu0 %v4673
      %v7021 = vpop.f32.mrb[0].mxu0
      %v7022 = vadd.f32 0.0, %v7021
      %v7023 = vpop.f32.mrb[0].mxu0
      %7024 = vmatprep.mubr.f32.mxu0 0.0
      %7025 = vmatmul.mubr.f32.gmra.mrb[0].mxu0 %v5810
      %v7026 = vpop.f32.mrb[0].mxu0
      %v7027 = vadd.f32 0.0, %v7026
      %v7028 = vpop.f32.mrb[0].mxu0
      %7029 = vmatprep.mubr.f32.mxu0 0.0
      %7030 = vmatmul.mubr.f32.gmra.mrb[0].mxu0 %v5812
      %v7031 = vpop.f32.mrb[0].mxu0
      %v7032 = vadd.f32 0.0, %v7031
      %v7033 = vpop.f32.mrb[0].mxu0
      %7034 = vmatprep.mubr.f32.mxu0 0.0
      %7035 = vmatmul.mubr.f32.gmra.mrb[0].mxu0 %v6813
      %v7036 = vpop.f32.mrb[0].mxu0
      %v7037 = vadd.f32 0.0, %v7036
      %v7038 = vpop.f32.mrb[0].mxu0
      %7039 = vmatprep.mubr.f32.mxu0 0.0
      %7040 = vmatmul.mubr.f32.gmra.mrb[0].mxu0 %v6815
      %v7041 = vpop.f32.mrb[0].mxu0
      %v7042 = vadd.f32 0.0, %v7041
      %v7043 = vpop.f32.mrb[0].mxu0
      %7044 = vdwg.mxu0
      %v7045 = vld [vmem:[#allocation2] sm:$0xff]
      %v7046 = vld [vmem:[#allocation2 + $0x8] sm:$0xff]
      %v7047 = vld [vmem:[#allocation2 + $0x10] sm:$0xff]
      %v7048 = vld [vmem:[#allocation2 + $0x18] sm:$0xff]
      %v7049 = vld [vmem:[#allocation2 + $0x20] sm:$0xff]
      %v7050 = vld [vmem:[#allocation2 + $0x28] sm:$0xff]
      %v7051 = vld [vmem:[#allocation2 + $0x30] sm:$0xff]
      %v7052 = vld [vmem:[#allocation2 + $0x38] sm:$0xff]
      %v7053 = vld [vmem:[#allocation2 + $0x40] sm:$0xff]
      %v7054 = vld [vmem:[#allocation2 + $0x48] sm:$0xff]
      %v7055 = vld [vmem:[#allocation2 + $0x50] sm:$0xff]
      %v7056 = vld [vmem:[#allocation2 + $0x58] sm:$0xff]
      %v7057 = vld [vmem:[#allocation2 + $0x60] sm:$0xff]
      %v7058 = vld [vmem:[#allocation2 + $0x68] sm:$0xff]
      %v7059 = vld [vmem:[#allocation2 + $0x70] sm:$0xff]
      %v7060 = vld [vmem:[#allocation2 + $0x78] sm:$0xff]
      %v7061 = vld [vmem:[#allocation2 + $0x80] sm:$0xff]
      %v7062 = vld [vmem:[#allocation2 + $0x88] sm:$0xff]
      %v7063 = vld [vmem:[#allocation2 + $0x90] sm:$0xff]
      %v7064 = vld [vmem:[#allocation2 + $0x98] sm:$0xff]
      %v7065 = vld [vmem:[#allocation2 + $0xa0] sm:$0xff]
      %v7066 = vld [vmem:[#allocation2 + $0xa8] sm:$0xff]
      %v7067 = vld [vmem:[#allocation2 + $0xb0] sm:$0xff]
      %v7068 = vld [vmem:[#allocation2 + $0xb8] sm:$0xff]
      %v7069 = vld [vmem:[#allocation2 + $0xc0] sm:$0xff]
      %v7070 = vld [vmem:[#allocation2 + $0xc8] sm:$0xff]
      %v7071 = vld [vmem:[#allocation2 + $0xd0] sm:$0xff]
      %v7072 = vld [vmem:[#allocation2 + $0xd8] sm:$0xff]
      %v7073 = vld [vmem:[#allocation2 + $0xe0] sm:$0xff]
      %v7074 = vld [vmem:[#allocation2 + $0xe8] sm:$0xff]
      %v7075 = vld [vmem:[#allocation2 + $0xf0] sm:$0xff]
      %v7076 = vld [vmem:[#allocation2 + $0xf8] sm:$0xff]
      %v7077 = vadd.f32 %v7045, %v6887
      %v7078 = vadd.f32 %v7046, %v6892
      %v7079 = vadd.f32 %v7047, %v6897
      %v7080 = vadd.f32 %v7048, %v6902
      %v7081 = vadd.f32 %v7049, %v6907
      %v7082 = vadd.f32 %v7050, %v6912
      %v7083 = vadd.f32 %v7051, %v6917
      %v7084 = vadd.f32 %v7052, %v6922
      %v7085 = vadd.f32 %v7053, %v6927
      %v7086 = vadd.f32 %v7054, %v6932
      %v7087 = vadd.f32 %v7055, %v6937
      %v7088 = vadd.f32 %v7056, %v6942
      %v7089 = vadd.f32 %v7057, %v6947
      %v7090 = vadd.f32 %v7058, %v6952
      %v7091 = vadd.f32 %v7059, %v6957
      %v7092 = vadd.f32 %v7060, %v6962
      %v7093 = vadd.f32 %v7061, %v6967
      %v7094 = vadd.f32 %v7062, %v6972
      %v7095 = vadd.f32 %v7063, %v6977
      %v7096 = vadd.f32 %v7064, %v6982
      %v7097 = vadd.f32 %v7065, %v6987
      %v7098 = vadd.f32 %v7066, %v6992
      %v7099 = vadd.f32 %v7067, %v6997
      %v7100 = vadd.f32 %v7068, %v7002
      %v7101 = vadd.f32 %v7069, %v7007
      %v7102 = vadd.f32 %v7070, %v7012
      %v7103 = vadd.f32 %v7071, %v7017
      %v7104 = vadd.f32 %v7072, %v7022
      %v7105 = vadd.f32 %v7073, %v7027
      %v7106 = vadd.f32 %v7074, %v7032
      %v7107 = vadd.f32 %v7075, %v7037
      %v7108 = vadd.f32 %v7076, %v7042
      %7109 = vst.msk [vmem:[#allocation2] sm:$0xff] %vm1799, %v7077
      %7110 = vst.msk [vmem:[#allocation2 + $0x8] sm:$0xff] %vm1799, %v7078
      %7111 = vst.msk [vmem:[#allocation2 + $0x10] sm:$0xff] %vm1799, %v7079
      %7112 = vst.msk [vmem:[#allocation2 + $0x18] sm:$0xff] %vm1799, %v7080
      %7113 = vst.msk [vmem:[#allocation2 + $0x20] sm:$0xff] %vm1799, %v7081
      %7114 = vst.msk [vmem:[#allocation2 + $0x28] sm:$0xff] %vm1799, %v7082
      %7115 = vst.msk [vmem:[#allocation2 + $0x30] sm:$0xff] %vm1799, %v7083
      %7116 = vst.msk [vmem:[#allocation2 + $0x38] sm:$0xff] %vm1799, %v7084
      %7117 = vst.msk [vmem:[#allocation2 + $0x40] sm:$0xff] %vm1799, %v7085
      %7118 = vst.msk [vmem:[#allocation2 + $0x48] sm:$0xff] %vm1799, %v7086
      %7119 = vst.msk [vmem:[#allocation2 + $0x50] sm:$0xff] %vm1799, %v7087
      %7120 = vst.msk [vmem:[#allocation2 + $0x58] sm:$0xff] %vm1799, %v7088
      %7121 = vst.msk [vmem:[#allocation2 + $0x60] sm:$0xff] %vm1799, %v7089
      %7122 = vst.msk [vmem:[#allocation2 + $0x68] sm:$0xff] %vm1799, %v7090
      %7123 = vst.msk [vmem:[#allocation2 + $0x70] sm:$0xff] %vm1799, %v7091
      %7124 = vst.msk [vmem:[#allocation2 + $0x78] sm:$0xff] %vm1799, %v7092
      %7125 = vst.msk [vmem:[#allocation2 + $0x80] sm:$0xff] %vm1799, %v7093
      %7126 = vst.msk [vmem:[#allocation2 + $0x88] sm:$0xff] %vm1799, %v7094
      %7127 = vst.msk [vmem:[#allocation2 + $0x90] sm:$0xff] %vm1799, %v7095
      %7128 = vst.msk [vmem:[#allocation2 + $0x98] sm:$0xff] %vm1799, %v7096
      %7129 = vst.msk [vmem:[#allocation2 + $0xa0] sm:$0xff] %vm1799, %v7097
      %7130 = vst.msk [vmem:[#allocation2 + $0xa8] sm:$0xff] %vm1799, %v7098
      %7131 = vst.msk [vmem:[#allocation2 + $0xb0] sm:$0xff] %vm1799, %v7099
      %7132 = vst.msk [vmem:[#allocation2 + $0xb8] sm:$0xff] %vm1799, %v7100
      %7133 = vst.msk [vmem:[#allocation2 + $0xc0] sm:$0xff] %vm1799, %v7101
      %7134 = vst.msk [vmem:[#allocation2 + $0xc8] sm:$0xff] %vm1799, %v7102
      %7135 = vst.msk [vmem:[#allocation2 + $0xd0] sm:$0xff] %vm1799, %v7103
      %7136 = vst.msk [vmem:[#allocation2 + $0xd8] sm:$0xff] %vm1799, %v7104
      %7137 = vst.msk [vmem:[#allocation2 + $0xe0] sm:$0xff] %vm1799, %v7105
      %7138 = vst.msk [vmem:[#allocation2 + $0xe8] sm:$0xff] %vm1799, %v7106
      %7139 = vst.msk [vmem:[#allocation2 + $0xf0] sm:$0xff] %vm1799, %v7107
      %7140 = vst.msk [vmem:[#allocation2 + $0xf8] sm:$0xff] %vm1799, %v7108
      %v7141 = vrot.slane %v4150, 2
      %v7142 = vrot.slane %v4151, 2
      %v7143 = vsel %vm4999, %v7141, %v7142
      %v7144 = vrot.slane %v4152, 2
      %v7145 = vsel %vm4999, %v7142, %v7144
      %s7146 = scalar_lea.vmem %s3, 16
      %v7147 = vld [vmem:[%s7146] sm:$0x3]
      %v7148 = vsel %vm4154, %v7143, 0
      %v7150 = vsel %vm4154, %v7145, 0
      %v7153 = vsel %vm4251, %v7147, 0
      %7155 = vmatprep.subr.mxu0 0.0
      %7156 = vmatpush1.msra.mxu0 %v7153
      %7157 = vmatprep.subr.mxu0 0.0
      %7158 = vmatpush1.msra.mxu0 0.0
      %7159 = vmatprep.subr.mxu0 0.0
      %7160 = vmatpush1.msra.mxu0 0.0
      %7161 = vmatprep.subr.mxu0 0.0
      %7162 = vmatpush1.msra.mxu0 0.0
      %7163 = vmatprep.subr.mxu0 0.0
      %7164 = vmatpush1.msra.mxu0 0.0
      %7165 = vmatprep.subr.mxu0 0.0
      %7166 = vmatpush1.msra.mxu0 0.0
      %7167 = vmatprep.subr.mxu0 0.0
      %7168 = vmatpush1.msra.mxu0 0.0
      %7169 = vmatprep.subr.mxu0 0.0
      %7170 = vmatpush1.msra.mxu0 0.0
      %7171 = vmatprep.subr.mxu0 0.0
      %7172 = vmatpush1.msra.mxu0 0.0
      %7173 = vmatprep.subr.mxu0 0.0
      %7174 = vmatpush1.msra.mxu0 0.0
      %7175 = vmatprep.subr.mxu0 0.0
      %7176 = vmatpush1.msra.mxu0 0.0
      %7177 = vmatprep.subr.mxu0 0.0
      %7178 = vmatpush1.msra.mxu0 0.0
      %7179 = vmatprep.subr.mxu0 0.0
      %7180 = vmatpush1.msra.mxu0 0.0
      %7181 = vmatprep.subr.mxu0 0.0
      %7182 = vmatpush1.msra.mxu0 0.0
      %7183 = vmatprep.subr.mxu0 0.0
      %7184 = vmatpush1.msra.mxu0 0.0
      %7185 = vmatprep.subr.mxu0 0.0
      %7186 = vmatpush1.msra.mxu0 0.0
      %7187 = vmatprep.subr.mxu0 0.0
      %7188 = vmatpush1.msra.mxu0 0.0
      %7189 = vmatprep.subr.mxu0 0.0
      %7190 = vmatpush1.msra.mxu0 0.0
      %7191 = vmatprep.subr.mxu0 0.0
      %7192 = vmatpush1.msra.mxu0 0.0
      %7193 = vmatprep.subr.mxu0 0.0
      %7194 = vmatpush1.msra.mxu0 0.0
      %7195 = vmatprep.subr.mxu0 0.0
      %7196 = vmatpush1.msra.mxu0 0.0
      %7197 = vmatprep.subr.mxu0 0.0
      %7198 = vmatpush1.msra.mxu0 0.0
      %7199 = vmatprep.subr.mxu0 0.0
      %7200 = vmatpush1.msra.mxu0 0.0
      %7201 = vmatprep.subr.mxu0 0.0
      %7202 = vmatpush1.msra.mxu0 0.0
      %7203 = vmatprep.subr.mxu0 0.0
      %7204 = vmatpush1.msra.mxu0 0.0
      %7205 = vmatprep.subr.mxu0 0.0
      %7206 = vmatpush1.msra.mxu0 0.0
      %7207 = vmatprep.subr.mxu0 0.0
      %7208 = vmatpush1.msra.mxu0 0.0
      %7209 = vmatprep.subr.mxu0 0.0
      %7210 = vmatpush1.msra.mxu0 0.0
      %7211 = vmatprep.subr.mxu0 0.0
      %7212 = vmatpush1.msra.mxu0 0.0
      %7213 = vmatprep.subr.mxu0 0.0
      %7214 = vmatpush1.msra.mxu0 0.0
      %7215 = vmatprep.subr.mxu0 0.0
      %7216 = vmatpush1.msra.mxu0 0.0
      %7217 = vmatprep.subr.mxu0 0.0
      %7218 = vmatpush1.msra.mxu0 0.0
      %7219 = vmatprep.mubr.f32.mxu0 0.0
      %7220 = vmatmul.mubr.f32.gmra.mrb[0].mxu0 %v5090
      %v7221 = vpop.f32.mrb[0].mxu0
      %v7222 = vadd.f32 0.0, %v7221
      %v7223 = vpop.f32.mrb[0].mxu0
      %7224 = vmatprep.mubr.f32.mxu0 0.0
      %7225 = vmatmul.mubr.f32.gmra.mrb[0].mxu0 %v5092
      %v7226 = vpop.f32.mrb[0].mxu0
      %v7227 = vadd.f32 0.0, %v7226
      %v7228 = vpop.f32.mrb[0].mxu0
      %7229 = vmatprep.mubr.f32.mxu0 0.0
      %7230 = vmatmul.mubr.f32.gmra.mrb[0].mxu0 %v5094
      %v7231 = vpop.f32.mrb[0].mxu0
      %v7232 = vadd.f32 0.0, %v7231
      %v7233 = vpop.f32.mrb[0].mxu0
      %7234 = vmatprep.mubr.f32.mxu0 0.0
      %7235 = vmatmul.mubr.f32.gmra.mrb[0].mxu0 %v5096
      %v7236 = vpop.f32.mrb[0].mxu0
      %v7237 = vadd.f32 0.0, %v7236
      %v7238 = vpop.f32.mrb[0].mxu0
      %7239 = vmatprep.mubr.f32.mxu0 0.0
      %7240 = vmatmul.mubr.f32.gmra.mrb[0].mxu0 %v5098
      %v7241 = vpop.f32.mrb[0].mxu0
      %v7242 = vadd.f32 0.0, %v7241
      %v7243 = vpop.f32.mrb[0].mxu0
      %7244 = vmatprep.mubr.f32.mxu0 0.0
      %7245 = vmatmul.mubr.f32.gmra.mrb[0].mxu0 %v5100
      %v7246 = vpop.f32.mrb[0].mxu0
      %v7247 = vadd.f32 0.0, %v7246
      %v7248 = vpop.f32.mrb[0].mxu0
      %7249 = vmatprep.mubr.f32.mxu0 0.0
      %7250 = vmatmul.mubr.f32.gmra.mrb[0].mxu0 %v5102
      %v7251 = vpop.f32.mrb[0].mxu0
      %v7252 = vadd.f32 0.0, %v7251
      %v7253 = vpop.f32.mrb[0].mxu0
      %7254 = vmatprep.mubr.f32.mxu0 0.0
      %7255 = vmatmul.mubr.f32.gmra.mrb[0].mxu0 %v5104
      %v7256 = vpop.f32.mrb[0].mxu0
      %v7257 = vadd.f32 0.0, %v7256
      %v7258 = vpop.f32.mrb[0].mxu0
      %7259 = vmatprep.mubr.f32.mxu0 0.0
      %7260 = vmatmul.mubr.f32.gmra.mrb[0].mxu0 %v5106
      %v7261 = vpop.f32.mrb[0].mxu0
      %v7262 = vadd.f32 0.0, %v7261
      %v7263 = vpop.f32.mrb[0].mxu0
      %7264 = vmatprep.mubr.f32.mxu0 0.0
      %7265 = vmatmul.mubr.f32.gmra.mrb[0].mxu0 %v5108
      %v7266 = vpop.f32.mrb[0].mxu0
      %v7267 = vadd.f32 0.0, %v7266
      %v7268 = vpop.f32.mrb[0].mxu0
      %7269 = vmatprep.mubr.f32.mxu0 0.0
      %7270 = vmatmul.mubr.f32.gmra.mrb[0].mxu0 %v5110
      %v7271 = vpop.f32.mrb[0].mxu0
      %v7272 = vadd.f32 0.0, %v7271
      %v7273 = vpop.f32.mrb[0].mxu0
      %7274 = vmatprep.mubr.f32.mxu0 0.0
      %7275 = vmatmul.mubr.f32.gmra.mrb[0].mxu0 %v5112
      %v7276 = vpop.f32.mrb[0].mxu0
      %v7277 = vadd.f32 0.0, %v7276
      %v7278 = vpop.f32.mrb[0].mxu0
      %7279 = vmatprep.mubr.f32.mxu0 0.0
      %7280 = vmatmul.mubr.f32.gmra.mrb[0].mxu0 %v5114
      %v7281 = vpop.f32.mrb[0].mxu0
      %v7282 = vadd.f32 0.0, %v7281
      %v7283 = vpop.f32.mrb[0].mxu0
      %7284 = vmatprep.mubr.f32.mxu0 0.0
      %7285 = vmatmul.mubr.f32.gmra.mrb[0].mxu0 %v5116
      %v7286 = vpop.f32.mrb[0].mxu0
      %v7287 = vadd.f32 0.0, %v7286
      %v7288 = vpop.f32.mrb[0].mxu0
      %7289 = vmatprep.mubr.f32.mxu0 0.0
      %7290 = vmatmul.mubr.f32.gmra.mrb[0].mxu0 %v5118
      %v7291 = vpop.f32.mrb[0].mxu0
      %v7292 = vadd.f32 0.0, %v7291
      %v7293 = vpop.f32.mrb[0].mxu0
      %7294 = vmatprep.mubr.f32.mxu0 0.0
      %7295 = vmatmul.mubr.f32.gmra.mrb[0].mxu0 %v5120
      %v7296 = vpop.f32.mrb[0].mxu0
      %v7297 = vadd.f32 0.0, %v7296
      %v7298 = vpop.f32.mrb[0].mxu0
      %7299 = vmatprep.mubr.f32.mxu0 0.0
      %7300 = vmatmul.mubr.f32.gmra.mrb[0].mxu0 %v5122
      %v7301 = vpop.f32.mrb[0].mxu0
      %v7302 = vadd.f32 0.0, %v7301
      %v7303 = vpop.f32.mrb[0].mxu0
      %7304 = vmatprep.mubr.f32.mxu0 0.0
      %7305 = vmatmul.mubr.f32.gmra.mrb[0].mxu0 %v5124
      %v7306 = vpop.f32.mrb[0].mxu0
      %v7307 = vadd.f32 0.0, %v7306
      %v7308 = vpop.f32.mrb[0].mxu0
      %7309 = vmatprep.mubr.f32.mxu0 0.0
      %7310 = vmatmul.mubr.f32.gmra.mrb[0].mxu0 %v5126
      %v7311 = vpop.f32.mrb[0].mxu0
      %v7312 = vadd.f32 0.0, %v7311
      %v7313 = vpop.f32.mrb[0].mxu0
      %7314 = vmatprep.mubr.f32.mxu0 0.0
      %7315 = vmatmul.mubr.f32.gmra.mrb[0].mxu0 %v5128
      %v7316 = vpop.f32.mrb[0].mxu0
      %v7317 = vadd.f32 0.0, %v7316
      %v7318 = vpop.f32.mrb[0].mxu0
      %7319 = vmatprep.mubr.f32.mxu0 0.0
      %7320 = vmatmul.mubr.f32.gmra.mrb[0].mxu0 %v5130
      %v7321 = vpop.f32.mrb[0].mxu0
      %v7322 = vadd.f32 0.0, %v7321
      %v7323 = vpop.f32.mrb[0].mxu0
      %7324 = vmatprep.mubr.f32.mxu0 0.0
      %7325 = vmatmul.mubr.f32.gmra.mrb[0].mxu0 %v5132
      %v7326 = vpop.f32.mrb[0].mxu0
      %v7327 = vadd.f32 0.0, %v7326
      %v7328 = vpop.f32.mrb[0].mxu0
      %7329 = vmatprep.mubr.f32.mxu0 0.0
      %7330 = vmatmul.mubr.f32.gmra.mrb[0].mxu0 %v5134
      %v7331 = vpop.f32.mrb[0].mxu0
      %v7332 = vadd.f32 0.0, %v7331
      %v7333 = vpop.f32.mrb[0].mxu0
      %7334 = vmatprep.mubr.f32.mxu0 0.0
      %7335 = vmatmul.mubr.f32.gmra.mrb[0].mxu0 %v5136
      %v7336 = vpop.f32.mrb[0].mxu0
      %v7337 = vadd.f32 0.0, %v7336
      %v7338 = vpop.f32.mrb[0].mxu0
      %7339 = vmatprep.mubr.f32.mxu0 0.0
      %7340 = vmatmul.mubr.f32.gmra.mrb[0].mxu0 %v5138
      %v7341 = vpop.f32.mrb[0].mxu0
      %v7342 = vadd.f32 0.0, %v7341
      %v7343 = vpop.f32.mrb[0].mxu0
      %7344 = vmatprep.mubr.f32.mxu0 0.0
      %7345 = vmatmul.mubr.f32.gmra.mrb[0].mxu0 %v5140
      %v7346 = vpop.f32.mrb[0].mxu0
      %v7347 = vadd.f32 0.0, %v7346
      %v7348 = vpop.f32.mrb[0].mxu0
      %7349 = vmatprep.mubr.f32.mxu0 0.0
      %7350 = vmatmul.mubr.f32.gmra.mrb[0].mxu0 %v5142
      %v7351 = vpop.f32.mrb[0].mxu0
      %v7352 = vadd.f32 0.0, %v7351
      %v7353 = vpop.f32.mrb[0].mxu0
      %7354 = vmatprep.mubr.f32.mxu0 0.0
      %7355 = vmatmul.mubr.f32.gmra.mrb[0].mxu0 %v5144
      %v7356 = vpop.f32.mrb[0].mxu0
      %v7357 = vadd.f32 0.0, %v7356
      %v7358 = vpop.f32.mrb[0].mxu0
      %7359 = vmatprep.mubr.f32.mxu0 0.0
      %7360 = vmatmul.mubr.f32.gmra.mrb[0].mxu0 %v6145
      %v7361 = vpop.f32.mrb[0].mxu0
      %v7362 = vadd.f32 0.0, %v7361
      %v7363 = vpop.f32.mrb[0].mxu0
      %7364 = vmatprep.mubr.f32.mxu0 0.0
      %7365 = vmatmul.mubr.f32.gmra.mrb[0].mxu0 %v6147
      %v7366 = vpop.f32.mrb[0].mxu0
      %v7367 = vadd.f32 0.0, %v7366
      %v7368 = vpop.f32.mrb[0].mxu0
      %7369 = vmatprep.mubr.f32.mxu0 0.0
      %7370 = vmatmul.mubr.f32.gmra.mrb[0].mxu0 %v7148
      %v7371 = vpop.f32.mrb[0].mxu0
      %v7372 = vadd.f32 0.0, %v7371
      %v7373 = vpop.f32.mrb[0].mxu0
      %7374 = vmatprep.mubr.f32.mxu0 0.0
      %7375 = vmatmul.mubr.f32.gmra.mrb[0].mxu0 %v7150
      %v7376 = vpop.f32.mrb[0].mxu0
      %v7377 = vadd.f32 0.0, %v7376
      %v7378 = vpop.f32.mrb[0].mxu0
      %7379 = vdwg.mxu0
      %v7380 = vld [vmem:[#allocation2] sm:$0xff]
      %v7381 = vld [vmem:[#allocation2 + $0x8] sm:$0xff]
      %v7382 = vld [vmem:[#allocation2 + $0x10] sm:$0xff]
      %v7383 = vld [vmem:[#allocation2 + $0x18] sm:$0xff]
      %v7384 = vld [vmem:[#allocation2 + $0x20] sm:$0xff]
      %v7385 = vld [vmem:[#allocation2 + $0x28] sm:$0xff]
      %v7386 = vld [vmem:[#allocation2 + $0x30] sm:$0xff]
      %v7387 = vld [vmem:[#allocation2 + $0x38] sm:$0xff]
      %v7388 = vld [vmem:[#allocation2 + $0x40] sm:$0xff]
      %v7389 = vld [vmem:[#allocation2 + $0x48] sm:$0xff]
      %v7390 = vld [vmem:[#allocation2 + $0x50] sm:$0xff]
      %v7391 = vld [vmem:[#allocation2 + $0x58] sm:$0xff]
      %v7392 = vld [vmem:[#allocation2 + $0x60] sm:$0xff]
      %v7393 = vld [vmem:[#allocation2 + $0x68] sm:$0xff]
      %v7394 = vld [vmem:[#allocation2 + $0x70] sm:$0xff]
      %v7395 = vld [vmem:[#allocation2 + $0x78] sm:$0xff]
      %v7396 = vld [vmem:[#allocation2 + $0x80] sm:$0xff]
      %v7397 = vld [vmem:[#allocation2 + $0x88] sm:$0xff]
      %v7398 = vld [vmem:[#allocation2 + $0x90] sm:$0xff]
      %v7399 = vld [vmem:[#allocation2 + $0x98] sm:$0xff]
      %v7400 = vld [vmem:[#allocation2 + $0xa0] sm:$0xff]
      %v7401 = vld [vmem:[#allocation2 + $0xa8] sm:$0xff]
      %v7402 = vld [vmem:[#allocation2 + $0xb0] sm:$0xff]
      %v7403 = vld [vmem:[#allocation2 + $0xb8] sm:$0xff]
      %v7404 = vld [vmem:[#allocation2 + $0xc0] sm:$0xff]
      %v7405 = vld [vmem:[#allocation2 + $0xc8] sm:$0xff]
      %v7406 = vld [vmem:[#allocation2 + $0xd0] sm:$0xff]
      %v7407 = vld [vmem:[#allocation2 + $0xd8] sm:$0xff]
      %v7408 = vld [vmem:[#allocation2 + $0xe0] sm:$0xff]
      %v7409 = vld [vmem:[#allocation2 + $0xe8] sm:$0xff]
      %v7410 = vld [vmem:[#allocation2 + $0xf0] sm:$0xff]
      %v7411 = vld [vmem:[#allocation2 + $0xf8] sm:$0xff]
      %v7412 = vadd.f32 %v7380, %v7222
      %v7413 = vadd.f32 %v7381, %v7227
      %v7414 = vadd.f32 %v7382, %v7232
      %v7415 = vadd.f32 %v7383, %v7237
      %v7416 = vadd.f32 %v7384, %v7242
      %v7417 = vadd.f32 %v7385, %v7247
      %v7418 = vadd.f32 %v7386, %v7252
      %v7419 = vadd.f32 %v7387, %v7257
      %v7420 = vadd.f32 %v7388, %v7262
      %v7421 = vadd.f32 %v7389, %v7267
      %v7422 = vadd.f32 %v7390, %v7272
      %v7423 = vadd.f32 %v7391, %v7277
      %v7424 = vadd.f32 %v7392, %v7282
      %v7425 = vadd.f32 %v7393, %v7287
      %v7426 = vadd.f32 %v7394, %v7292
      %v7427 = vadd.f32 %v7395, %v7297
      %v7428 = vadd.f32 %v7396, %v7302
      %v7429 = vadd.f32 %v7397, %v7307
      %v7430 = vadd.f32 %v7398, %v7312
      %v7431 = vadd.f32 %v7399, %v7317
      %v7432 = vadd.f32 %v7400, %v7322
      %v7433 = vadd.f32 %v7401, %v7327
      %v7434 = vadd.f32 %v7402, %v7332
      %v7435 = vadd.f32 %v7403, %v7337
      %v7436 = vadd.f32 %v7404, %v7342
      %v7437 = vadd.f32 %v7405, %v7347
      %v7438 = vadd.f32 %v7406, %v7352
      %v7439 = vadd.f32 %v7407, %v7357
      %v7440 = vadd.f32 %v7408, %v7362
      %v7441 = vadd.f32 %v7409, %v7367
      %v7442 = vadd.f32 %v7410, %v7372
      %v7443 = vadd.f32 %v7411, %v7377
      %7444 = vst.msk [vmem:[#allocation2] sm:$0xff] %vm1799, %v7412
      %7445 = vst.msk [vmem:[#allocation2 + $0x8] sm:$0xff] %vm1799, %v7413
      %7446 = vst.msk [vmem:[#allocation2 + $0x10] sm:$0xff] %vm1799, %v7414
      %7447 = vst.msk [vmem:[#allocation2 + $0x18] sm:$0xff] %vm1799, %v7415
      %7448 = vst.msk [vmem:[#allocation2 + $0x20] sm:$0xff] %vm1799, %v7416
      %7449 = vst.msk [vmem:[#allocation2 + $0x28] sm:$0xff] %vm1799, %v7417
      %7450 = vst.msk [vmem:[#allocation2 + $0x30] sm:$0xff] %vm1799, %v7418
      %7451 = vst.msk [vmem:[#allocation2 + $0x38] sm:$0xff] %vm1799, %v7419
      %7452 = vst.msk [vmem:[#allocation2 + $0x40] sm:$0xff] %vm1799, %v7420
      %7453 = vst.msk [vmem:[#allocation2 + $0x48] sm:$0xff] %vm1799, %v7421
      %7454 = vst.msk [vmem:[#allocation2 + $0x50] sm:$0xff] %vm1799, %v7422
      %7455 = vst.msk [vmem:[#allocation2 + $0x58] sm:$0xff] %vm1799, %v7423
      %7456 = vst.msk [vmem:[#allocation2 + $0x60] sm:$0xff] %vm1799, %v7424
      %7457 = vst.msk [vmem:[#allocation2 + $0x68] sm:$0xff] %vm1799, %v7425
      %7458 = vst.msk [vmem:[#allocation2 + $0x70] sm:$0xff] %vm1799, %v7426
      %7459 = vst.msk [vmem:[#allocation2 + $0x78] sm:$0xff] %vm1799, %v7427
      %7460 = vst.msk [vmem:[#allocation2 + $0x80] sm:$0xff] %vm1799, %v7428
      %7461 = vst.msk [vmem:[#allocation2 + $0x88] sm:$0xff] %vm1799, %v7429
      %7462 = vst.msk [vmem:[#allocation2 + $0x90] sm:$0xff] %vm1799, %v7430
      %7463 = vst.msk [vmem:[#allocation2 + $0x98] sm:$0xff] %vm1799, %v7431
      %7464 = vst.msk [vmem:[#allocation2 + $0xa0] sm:$0xff] %vm1799, %v7432
      %7465 = vst.msk [vmem:[#allocation2 + $0xa8] sm:$0xff] %vm1799, %v7433
      %7466 = vst.msk [vmem:[#allocation2 + $0xb0] sm:$0xff] %vm1799, %v7434
      %7467 = vst.msk [vmem:[#allocation2 + $0xb8] sm:$0xff] %vm1799, %v7435
      %7468 = vst.msk [vmem:[#allocation2 + $0xc0] sm:$0xff] %vm1799, %v7436
      %7469 = vst.msk [vmem:[#allocation2 + $0xc8] sm:$0xff] %vm1799, %v7437
      %7470 = vst.msk [vmem:[#allocation2 + $0xd0] sm:$0xff] %vm1799, %v7438
      %7471 = vst.msk [vmem:[#allocation2 + $0xd8] sm:$0xff] %vm1799, %v7439
      %7472 = vst.msk [vmem:[#allocation2 + $0xe0] sm:$0xff] %vm1799, %v7440
      %7473 = vst.msk [vmem:[#allocation2 + $0xe8] sm:$0xff] %vm1799, %v7441
      %7474 = vst.msk [vmem:[#allocation2 + $0xf0] sm:$0xff] %vm1799, %v7442
      %7475 = vst.msk [vmem:[#allocation2 + $0xf8] sm:$0xff] %vm1799, %v7443
      %v7476 = vld [vmem:[#allocation2] sm:$0xff]
      %v7477 = vld [vmem:[#allocation2 + $0x8] sm:$0xff]
      %v7478 = vld [vmem:[#allocation2 + $0x10] sm:$0xff]
      %v7479 = vld [vmem:[#allocation2 + $0x18] sm:$0xff]
      %v7480 = vld [vmem:[#allocation2 + $0x20] sm:$0xff]
      %v7481 = vld [vmem:[#allocation2 + $0x28] sm:$0xff]
      %v7482 = vld [vmem:[#allocation2 + $0x30] sm:$0xff]
      %v7483 = vld [vmem:[#allocation2 + $0x38] sm:$0xff]
      %v7484 = vld [vmem:[#allocation2 + $0x40] sm:$0xff]
      %v7485 = vld [vmem:[#allocation2 + $0x48] sm:$0xff]
      %v7486 = vld [vmem:[#allocation2 + $0x50] sm:$0xff]
      %v7487 = vld [vmem:[#allocation2 + $0x58] sm:$0xff]
      %v7488 = vld [vmem:[#allocation2 + $0x60] sm:$0xff]
      %v7489 = vld [vmem:[#allocation2 + $0x68] sm:$0xff]
      %v7490 = vld [vmem:[#allocation2 + $0x70] sm:$0xff]
      %v7491 = vld [vmem:[#allocation2 + $0x78] sm:$0xff]
      %v7492 = vld [vmem:[#allocation2 + $0x80] sm:$0xff]
      %v7493 = vld [vmem:[#allocation2 + $0x88] sm:$0xff]
      %v7494 = vld [vmem:[#allocation2 + $0x90] sm:$0xff]
      %v7495 = vld [vmem:[#allocation2 + $0x98] sm:$0xff]
      %v7496 = vld [vmem:[#allocation2 + $0xa0] sm:$0xff]
      %v7497 = vld [vmem:[#allocation2 + $0xa8] sm:$0xff]
      %v7498 = vld [vmem:[#allocation2 + $0xb0] sm:$0xff]
      %v7499 = vld [vmem:[#allocation2 + $0xb8] sm:$0xff]
      %v7500 = vld [vmem:[#allocation2 + $0xc0] sm:$0xff]
      %v7501 = vld [vmem:[#allocation2 + $0xc8] sm:$0xff]
      %v7502 = vld [vmem:[#allocation2 + $0xd0] sm:$0xff]
      %v7503 = vld [vmem:[#allocation2 + $0xd8] sm:$0xff]
      %v7504 = vld [vmem:[#allocation2 + $0xe0] sm:$0xff]
      %v7505 = vld [vmem:[#allocation2 + $0xe8] sm:$0xff]
      %v7506 = vld [vmem:[#allocation2 + $0xf0] sm:$0xff]
      %v7507 = vld [vmem:[#allocation2 + $0xf8] sm:$0xff]
      %v7508 = vld [vmem:[%s4] sm:$0x1]
      %v7510 = vlaneseq
      %v7511 = vshrl.u32 %v7510, 7
      %v7512 = vsub.s32 0, %v7511
      %v7513 = vrot.slane %v7508, %v7512
      %v7515 = vadd.f32 %v7476, %v7513
      %v7516 = vadd.f32 %v7477, %v7513
      %v7517 = vadd.f32 %v7478, %v7513
      %v7518 = vadd.f32 %v7479, %v7513
      %v7519 = vadd.f32 %v7480, %v7513
      %v7520 = vadd.f32 %v7481, %v7513
      %v7521 = vadd.f32 %v7482, %v7513
      %v7522 = vadd.f32 %v7483, %v7513
      %v7523 = vadd.f32 %v7484, %v7513
      %v7524 = vadd.f32 %v7485, %v7513
      %v7525 = vadd.f32 %v7486, %v7513
      %v7526 = vadd.f32 %v7487, %v7513
      %v7527 = vadd.f32 %v7488, %v7513
      %v7528 = vadd.f32 %v7489, %v7513
      %v7529 = vadd.f32 %v7490, %v7513
      %v7530 = vadd.f32 %v7491, %v7513
      %v7531 = vadd.f32 %v7492, %v7513
      %v7532 = vadd.f32 %v7493, %v7513
      %v7533 = vadd.f32 %v7494, %v7513
      %v7534 = vadd.f32 %v7495, %v7513
      %v7535 = vadd.f32 %v7496, %v7513
      %v7536 = vadd.f32 %v7497, %v7513
      %v7537 = vadd.f32 %v7498, %v7513
      %v7538 = vadd.f32 %v7499, %v7513
      %v7539 = vadd.f32 %v7500, %v7513
      %v7540 = vadd.f32 %v7501, %v7513
      %v7541 = vadd.f32 %v7502, %v7513
      %v7542 = vadd.f32 %v7503, %v7513
      %v7543 = vadd.f32 %v7504, %v7513
      %v7544 = vadd.f32 %v7505, %v7513
      %v7545 = vadd.f32 %v7506, %v7513
      %v7546 = vadd.f32 %v7507, %v7513
      %vm7547 = vcmp.gt.f32.partialorder %v7515, 0.0
      %vm7548 = vcmp.gt.f32.partialorder %v7516, 0.0
      %vm7549 = vcmp.gt.f32.partialorder %v7517, 0.0
      %vm7550 = vcmp.gt.f32.partialorder %v7518, 0.0
      %vm7551 = vcmp.gt.f32.partialorder %v7519, 0.0
      %vm7552 = vcmp.gt.f32.partialorder %v7520, 0.0
      %vm7553 = vcmp.gt.f32.partialorder %v7521, 0.0
      %vm7554 = vcmp.gt.f32.partialorder %v7522, 0.0
      %vm7555 = vcmp.gt.f32.partialorder %v7523, 0.0
      %vm7556 = vcmp.gt.f32.partialorder %v7524, 0.0
      %vm7557 = vcmp.gt.f32.partialorder %v7525, 0.0
      %vm7558 = vcmp.gt.f32.partialorder %v7526, 0.0
      %vm7559 = vcmp.gt.f32.partialorder %v7527, 0.0
      %vm7560 = vcmp.gt.f32.partialorder %v7528, 0.0
      %vm7561 = vcmp.gt.f32.partialorder %v7529, 0.0
      %vm7562 = vcmp.gt.f32.partialorder %v7530, 0.0
      %vm7563 = vcmp.gt.f32.partialorder %v7531, 0.0
      %vm7564 = vcmp.gt.f32.partialorder %v7532, 0.0
      %vm7565 = vcmp.gt.f32.partialorder %v7533, 0.0
      %vm7566 = vcmp.gt.f32.partialorder %v7534, 0.0
      %vm7567 = vcmp.gt.f32.partialorder %v7535, 0.0
      %vm7568 = vcmp.gt.f32.partialorder %v7536, 0.0
      %vm7569 = vcmp.gt.f32.partialorder %v7537, 0.0
      %vm7570 = vcmp.gt.f32.partialorder %v7538, 0.0
      %vm7571 = vcmp.gt.f32.partialorder %v7539, 0.0
      %vm7572 = vcmp.gt.f32.partialorder %v7540, 0.0
      %vm7573 = vcmp.gt.f32.partialorder %v7541, 0.0
      %vm7574 = vcmp.gt.f32.partialorder %v7542, 0.0
      %vm7575 = vcmp.gt.f32.partialorder %v7543, 0.0
      %vm7576 = vcmp.gt.f32.partialorder %v7544, 0.0
      %vm7577 = vcmp.gt.f32.partialorder %v7545, 0.0
      %vm7578 = vcmp.gt.f32.partialorder %v7546, 0.0
      %v7579 = vmul.f32 %v7515, 0.1
      %v7580 = vmul.f32 %v7516, 0.1
      %v7581 = vmul.f32 %v7517, 0.1
      %v7582 = vmul.f32 %v7518, 0.1
      %v7583 = vmul.f32 %v7519, 0.1
      %v7584 = vmul.f32 %v7520, 0.1
      %v7585 = vmul.f32 %v7521, 0.1
      %v7586 = vmul.f32 %v7522, 0.1
      %v7587 = vmul.f32 %v7523, 0.1
      %v7588 = vmul.f32 %v7524, 0.1
      %v7589 = vmul.f32 %v7525, 0.1
      %v7590 = vmul.f32 %v7526, 0.1
      %v7591 = vmul.f32 %v7527, 0.1
      %v7592 = vmul.f32 %v7528, 0.1
      %v7593 = vmul.f32 %v7529, 0.1
      %v7594 = vmul.f32 %v7530, 0.1
      %v7595 = vmul.f32 %v7531, 0.1
      %v7596 = vmul.f32 %v7532, 0.1
      %v7597 = vmul.f32 %v7533, 0.1
      %v7598 = vmul.f32 %v7534, 0.1
      %v7599 = vmul.f32 %v7535, 0.1
      %v7600 = vmul.f32 %v7536, 0.1
      %v7601 = vmul.f32 %v7537, 0.1
      %v7602 = vmul.f32 %v7538, 0.1
      %v7603 = vmul.f32 %v7539, 0.1
      %v7604 = vmul.f32 %v7540, 0.1
      %v7605 = vmul.f32 %v7541, 0.1
      %v7606 = vmul.f32 %v7542, 0.1
      %v7607 = vmul.f32 %v7543, 0.1
      %v7608 = vmul.f32 %v7544, 0.1
      %v7609 = vmul.f32 %v7545, 0.1
      %v7610 = vmul.f32 %v7546, 0.1
      %v7611 = vsel %vm7547, %v7515, %v7579
      %v7612 = vsel %vm7548, %v7516, %v7580
      %v7613 = vsel %vm7549, %v7517, %v7581
      %v7614 = vsel %vm7550, %v7518, %v7582
      %v7615 = vsel %vm7551, %v7519, %v7583
      %v7616 = vsel %vm7552, %v7520, %v7584
      %v7617 = vsel %vm7553, %v7521, %v7585
      %v7618 = vsel %vm7554, %v7522, %v7586
      %v7619 = vsel %vm7555, %v7523, %v7587
      %v7620 = vsel %vm7556, %v7524, %v7588
      %v7621 = vsel %vm7557, %v7525, %v7589
      %v7622 = vsel %vm7558, %v7526, %v7590
      %v7623 = vsel %vm7559, %v7527, %v7591
      %v7624 = vsel %vm7560, %v7528, %v7592
      %v7625 = vsel %vm7561, %v7529, %v7593
      %v7626 = vsel %vm7562, %v7530, %v7594
      %v7627 = vsel %vm7563, %v7531, %v7595
      %v7628 = vsel %vm7564, %v7532, %v7596
      %v7629 = vsel %vm7565, %v7533, %v7597
      %v7630 = vsel %vm7566, %v7534, %v7598
      %v7631 = vsel %vm7567, %v7535, %v7599
      %v7632 = vsel %vm7568, %v7536, %v7600
      %v7633 = vsel %vm7569, %v7537, %v7601
      %v7634 = vsel %vm7570, %v7538, %v7602
      %v7635 = vsel %vm7571, %v7539, %v7603
      %v7636 = vsel %vm7572, %v7540, %v7604
      %v7637 = vsel %vm7573, %v7541, %v7605
      %v7638 = vsel %vm7574, %v7542, %v7606
      %v7639 = vsel %vm7575, %v7543, %v7607
      %v7640 = vsel %vm7576, %v7544, %v7608
      %v7641 = vsel %vm7577, %v7545, %v7609
      %v7642 = vsel %vm7578, %v7546, %v7610
      %v7643 = vrot.slane %v260, 1
      %v7644 = vrot.slane %v261, 1
      %v7645 = vsel %vm4528, %v7643, %v7644
      %v7646 = vrot.slane %v262, 1
      %v7647 = vsel %vm4528, %v7644, %v7646
      %v7648 = vrot.slane %v263, 1
      %v7649 = vrot.slane %v264, 1
      %v7650 = vsel %vm4528, %v7648, %v7649
      %v7651 = vrot.slane %v265, 1
      %v7652 = vsel %vm4528, %v7649, %v7651
      %v7653 = vrot.slane %v266, 1
      %v7654 = vrot.slane %v267, 1
      %v7655 = vsel %vm4528, %v7653, %v7654
      %v7656 = vrot.slane %v268, 1
      %v7657 = vsel %vm4528, %v7654, %v7656
      %v7658 = vrot.slane %v269, 1
      %v7659 = vrot.slane %v270, 1
      %v7660 = vsel %vm4528, %v7658, %v7659
      %v7661 = vrot.slane %v271, 1
      %v7662 = vsel %vm4528, %v7659, %v7661
      %v7663 = vrot.slane %v272, 1
      %v7664 = vrot.slane %v273, 1
      %v7665 = vsel %vm4528, %v7663, %v7664
      %v7666 = vrot.slane %v274, 1
      %v7667 = vsel %vm4528, %v7664, %v7666
      %v7668 = vrot.slane %v275, 1
      %v7669 = vrot.slane %v276, 1
      %v7670 = vsel %vm4528, %v7668, %v7669
      %v7671 = vrot.slane %v277, 1
      %v7672 = vsel %vm4528, %v7669, %v7671
      %v7673 = vrot.slane %v278, 1
      %v7674 = vrot.slane %v279, 1
      %v7675 = vsel %vm4528, %v7673, %v7674
      %v7676 = vrot.slane %v280, 1
      %v7677 = vsel %vm4528, %v7674, %v7676
      %v7678 = vrot.slane %v281, 1
      %v7679 = vrot.slane %v282, 1
      %v7680 = vsel %vm4528, %v7678, %v7679
      %v7681 = vrot.slane %v283, 1
      %v7682 = vsel %vm4528, %v7679, %v7681
      %v7683 = vrot.slane %v284, 1
      %v7684 = vrot.slane %v285, 1
      %v7685 = vsel %vm4528, %v7683, %v7684
      %v7686 = vrot.slane %v286, 1
      %v7687 = vsel %vm4528, %v7684, %v7686
      %v7688 = vrot.slane %v287, 1
      %v7689 = vrot.slane %v288, 1
      %v7690 = vsel %vm4528, %v7688, %v7689
      %v7691 = vrot.slane %v289, 1
      %v7692 = vsel %vm4528, %v7689, %v7691
      %v7693 = vrot.slane %v290, 1
      %v7694 = vrot.slane %v291, 1
      %v7695 = vsel %vm4528, %v7693, %v7694
      %v7696 = vrot.slane %v292, 1
      %v7697 = vsel %vm4528, %v7694, %v7696
      %v7698 = vrot.slane %v293, 1
      %v7699 = vrot.slane %v294, 1
      %v7700 = vsel %vm4528, %v7698, %v7699
      %v7701 = vrot.slane %v295, 1
      %v7702 = vsel %vm4528, %v7699, %v7701
      %v7703 = vrot.slane %v296, 1
      %v7704 = vrot.slane %v297, 1
      %v7705 = vsel %vm4528, %v7703, %v7704
      %v7706 = vrot.slane %v298, 1
      %v7707 = vsel %vm4528, %v7704, %v7706
      %v7708 = vrot.slane %v299, 1
      %v7709 = vrot.slane %v300, 1
      %v7710 = vsel %vm4528, %v7708, %v7709
      %v7711 = vrot.slane %v301, 1
      %v7712 = vsel %vm4528, %v7709, %v7711
      %v7713 = vrot.slane %v302, 1
      %v7714 = vrot.slane %v303, 1
      %v7715 = vsel %vm4528, %v7713, %v7714
      %v7716 = vrot.slane %v304, 1
      %v7717 = vsel %vm4528, %v7714, %v7716
      %v7718 = vrot.slane %v305, 1
      %v7719 = vrot.slane %v306, 1
      %v7720 = vsel %vm4528, %v7718, %v7719
      %v7721 = vrot.slane %v307, 1
      %v7722 = vsel %vm4528, %v7719, %v7721
      %v7755 = vadd.f32 %v7611, %v7645
      %v7756 = vadd.f32 %v7612, %v7647
      %v7757 = vadd.f32 %v7613, %v7650
      %v7758 = vadd.f32 %v7614, %v7652
      %v7759 = vadd.f32 %v7615, %v7655
      %v7760 = vadd.f32 %v7616, %v7657
      %v7761 = vadd.f32 %v7617, %v7660
      %v7762 = vadd.f32 %v7618, %v7662
      %v7763 = vadd.f32 %v7619, %v7665
      %v7764 = vadd.f32 %v7620, %v7667
      %v7765 = vadd.f32 %v7621, %v7670
      %v7766 = vadd.f32 %v7622, %v7672
      %v7767 = vadd.f32 %v7623, %v7675
      %v7768 = vadd.f32 %v7624, %v7677
      %v7769 = vadd.f32 %v7625, %v7680
      %v7770 = vadd.f32 %v7626, %v7682
      %v7771 = vadd.f32 %v7627, %v7685
      %v7772 = vadd.f32 %v7628, %v7687
      %v7773 = vadd.f32 %v7629, %v7690
      %v7774 = vadd.f32 %v7630, %v7692
      %v7775 = vadd.f32 %v7631, %v7695
      %v7776 = vadd.f32 %v7632, %v7697
      %v7777 = vadd.f32 %v7633, %v7700
      %v7778 = vadd.f32 %v7634, %v7702
      %v7779 = vadd.f32 %v7635, %v7705
      %v7780 = vadd.f32 %v7636, %v7707
      %v7781 = vadd.f32 %v7637, %v7710
      %v7782 = vadd.f32 %v7638, %v7712
      %v7783 = vadd.f32 %v7639, %v7715
      %v7784 = vadd.f32 %v7640, %v7717
      %v7785 = vadd.f32 %v7641, %v7720
      %v7786 = vadd.f32 %v7642, %v7722
      %7787 = vst.msk [vmem:[%s255] sm:$0xff] %vm1799, %v7755
      %7788 = vst.msk [vmem:[%s255 + $0x8] sm:$0xff] %vm1799, %v7756
      %7789 = vst.msk [vmem:[%s255 + $0x10] sm:$0xff] %vm1799, %v7757
      %7790 = vst.msk [vmem:[%s255 + $0x18] sm:$0xff] %vm1799, %v7758
      %7791 = vst.msk [vmem:[%s255 + $0x20] sm:$0xff] %vm1799, %v7759
      %7792 = vst.msk [vmem:[%s255 + $0x28] sm:$0xff] %vm1799, %v7760
      %7793 = vst.msk [vmem:[%s255 + $0x30] sm:$0xff] %vm1799, %v7761
      %7794 = vst.msk [vmem:[%s255 + $0x38] sm:$0xff] %vm1799, %v7762
      %7795 = vst.msk [vmem:[%s255 + $0x40] sm:$0xff] %vm1799, %v7763
      %7796 = vst.msk [vmem:[%s255 + $0x48] sm:$0xff] %vm1799, %v7764
      %7797 = vst.msk [vmem:[%s255 + $0x50] sm:$0xff] %vm1799, %v7765
      %7798 = vst.msk [vmem:[%s255 + $0x58] sm:$0xff] %vm1799, %v7766
      %7799 = vst.msk [vmem:[%s255 + $0x60] sm:$0xff] %vm1799, %v7767
      %7800 = vst.msk [vmem:[%s255 + $0x68] sm:$0xff] %vm1799, %v7768
      %7801 = vst.msk [vmem:[%s255 + $0x70] sm:$0xff] %vm1799, %v7769
      %7802 = vst.msk [vmem:[%s255 + $0x78] sm:$0xff] %vm1799, %v7770
      %7803 = vst.msk [vmem:[%s255 + $0x80] sm:$0xff] %vm1799, %v7771
      %7804 = vst.msk [vmem:[%s255 + $0x88] sm:$0xff] %vm1799, %v7772
      %7805 = vst.msk [vmem:[%s255 + $0x90] sm:$0xff] %vm1799, %v7773
      %7806 = vst.msk [vmem:[%s255 + $0x98] sm:$0xff] %vm1799, %v7774
      %7807 = vst.msk [vmem:[%s255 + $0xa0] sm:$0xff] %vm1799, %v7775
      %7808 = vst.msk [vmem:[%s255 + $0xa8] sm:$0xff] %vm1799, %v7776
      %7809 = vst.msk [vmem:[%s255 + $0xb0] sm:$0xff] %vm1799, %v7777
      %7810 = vst.msk [vmem:[%s255 + $0xb8] sm:$0xff] %vm1799, %v7778
      %7811 = vst.msk [vmem:[%s255 + $0xc0] sm:$0xff] %vm1799, %v7779
      %7812 = vst.msk [vmem:[%s255 + $0xc8] sm:$0xff] %vm1799, %v7780
      %7813 = vst.msk [vmem:[%s255 + $0xd0] sm:$0xff] %vm1799, %v7781
      %7814 = vst.msk [vmem:[%s255 + $0xd8] sm:$0xff] %vm1799, %v7782
      %7815 = vst.msk [vmem:[%s255 + $0xe0] sm:$0xff] %vm1799, %v7783
      %7816 = vst.msk [vmem:[%s255 + $0xe8] sm:$0xff] %vm1799, %v7784
      %7817 = vst.msk [vmem:[%s255 + $0xf0] sm:$0xff] %vm1799, %v7785
      %7818 = vst.msk [vmem:[%s255 + $0xf8] sm:$0xff] %vm1799, %v7786
      %s7819 = smul.u32 16, %s21
      %p7820 = scmp.lt.s32.totalorder %s20, 1
      %s7821 = scalar_select %p7820, %s20, 1
      %p7822 = scmp.lt.s32.totalorder %s7819, 15
      %s7823 = scalar_select %p7822, %s7819, 15
      %s7824 = smul.addr %s7823, 2
      %s7825 = smul.addr %s7821, 32
      %s7826 = sadd.s32 %s7824, %s7825
      %s7827 = smul.addr %s7826, 8
      %s7828 = scalar_lea.vmem %s5, %s7827
      // Predicated region
      $region41: #{res_layer_forward.1} parent=39 // pred_check
        %p7829 = pneg %p160
      $region42: #{res_layer_forward.1} parent=39 // pred_check_branch
        %7831 = sbr.rel (%p7829) target = $region44
      $region43: #{res_layer_forward.1} parent=39 // pred_region
        %s7832 = smul.u32 16, %s21
      $region44: #{res_layer_forward.1} parent=39 // pred_fallthru
        _
    $region40: #{res_layer_forward.1} parent=5 // pred_fallthru
      _
    %p7833 = scmp.le.s32.totalorder 2, %s11
    // Predicated region
    $region45: #{res_layer_forward.1} parent=5 // pred_check
      %p7834 = pneg %p7833
    $region46: #{res_layer_forward.1} parent=5 // pred_check_branch
      %7836 = sbr.rel (%p7834) target = $region48
    $region47: #{res_layer_forward.1} parent=5 // pred_region
      %s7837 = ssub.s32 %s11, 2
      // Predicated region
      $region49: #{res_layer_forward.1} parent=47 // pred_check
        %p7838 = pneg %p166
      $region50: #{res_layer_forward.1} parent=47 // pred_check_branch
        %7840 = sbr.rel (%p7838) target = $region52
      $region51: #{res_layer_forward.1} parent=47 // pred_region
        %s7841 = smul.u32 16, %s23
        %p7842 = scmp.lt.s32.totalorder %s22, 1
        %s7843 = scalar_select %p7842, %s22, 1
        %p7844 = scmp.lt.s32.totalorder %s7841, 15
        %s7845 = scalar_select %p7844, %s7841, 15
        %s7846 = smul.addr %s7845, 2
        %s7847 = smul.addr %s7843, 32
        %s7848 = sadd.s32 %s7846, %s7847
        %s7849 = smul.addr %s7848, 8
        %s7850 = scalar_lea.vmem %s5, %s7849
      $region52: #{res_layer_forward.1} parent=47 // pred_fallthru
        _
    $region48: #{res_layer_forward.1} parent=5 // pred_fallthru
      _
  $region6: #{res_layer_forward.1} parent=0 // loop_footer
    %s15 = sadd.s32 1, %s11
  $region7: #{res_layer_forward.1} parent=0 // loop_footer_branch
    %10 = sbr.rel target = $region3
  $region8: #{res_layer_forward.1} parent=0 // loop_exit
    _

</llo_original>
